<compile_context>
chip_gen: v7x
topology: tpu7x:2x2x1
jax: 0.10.0
libtpu: 0.0.40
codegen_flags: <defaults>
</compile_context>

<pallas_src>
import functools

import jax
import jax.numpy as jnp
from jax.experimental import pallas as pl
from jax.experimental.pallas import tpu as pltpu


_SQRT_HALF = 0.7071067811865476
_LN_EPS = 1e-5
_VMEM_LIMIT = 32 * 1024 * 1024   # explicit scoped-VMEM cap (ok on v5e/v6e/v7x)


# ----------------------------------------------------------------------------
# In-kernel helpers (f32 math)
# ----------------------------------------------------------------------------
def _ln(x, g, b):
    mean = jnp.mean(x, axis=-1, keepdims=True)
    xc = x - mean
    var = jnp.mean(xc * xc, axis=-1, keepdims=True)
    return xc * jax.lax.rsqrt(var + _LN_EPS) * g + b


def _gelu(x):
    # Exact (erf-based) GELU, matching torch.nn.GELU default.
    return 0.5 * x * (1.0 + jax.lax.erf(x * _SQRT_HALF))


def _softmax_rows(s):
    s = s - jnp.max(s, axis=-1, keepdims=True)
    p = jnp.exp(s)
    return p * pl.reciprocal(jnp.sum(p, axis=-1, keepdims=True), approx=True)


def _dot_bf16(a_f32, b_bf16):
    return jnp.dot(a_f32.astype(jnp.bfloat16), b_bf16,
                   preferred_element_type=jnp.float32)


# ----------------------------------------------------------------------------
# Fused whole-block kernels (one pallas_call per transformer / cross-attn block)
# ----------------------------------------------------------------------------
def _block_kernel(x_ref, g1_ref, b1_ref, wqkv_ref, bqkv_ref, wproj_ref,
                  bproj_ref, g2_ref, b2_ref, wfc1_ref, bfc1_ref, wfc2_ref,
                  bfc2_ref, o_ref, *, num_heads, scale):
    """One timm-style Block for one batch element: x -> x (N, C), all in VMEM."""
    x = x_ref[...]                                   # (N, C) f32
    n, c = x.shape
    dh = c // num_heads

    # --- LN1 -> fused qkv projection ---
    h1 = _ln(x, g1_ref[...], b1_ref[...])
    qkv = _dot_bf16(h1, wqkv_ref[...]) + bqkv_ref[...]        # (N, 3C) f32

    # --- multi-head attention; per-head output folded straight into proj ---
    wproj = wproj_ref[...]                           # (C, C) f32 (row-slices are tile-aligned)
    proj = jnp.zeros((n, c), jnp.float32)
    for h in range(num_heads):                       # static, unrolled
        lo = h * dh
        qh = (qkv[:, lo:lo + dh] * scale).astype(jnp.bfloat16)        # scale folded into q
        kh = qkv[:, c + lo:c + lo + dh].astype(jnp.bfloat16)
        vh = qkv[:, 2 * c + lo:2 * c + lo + dh].astype(jnp.bfloat16)
        s = jax.lax.dot_general(qh, kh, (((1,), (1,)), ((), ())),
                                preferred_element_type=jnp.float32)   # (N, N)
        p = _softmax_rows(s)
        oh = jnp.dot(p.astype(jnp.bfloat16), vh,
                     preferred_element_type=jnp.float32)              # (N, dh)
        proj = proj + jnp.dot(oh.astype(jnp.bfloat16),
                              wproj[lo:lo + dh, :].astype(jnp.bfloat16),
                              preferred_element_type=jnp.float32)
    x2 = x + proj + bproj_ref[...]                   # attention residual (+ proj bias)

    # --- LN2 -> fc1 -> GELU -> fc2 + residual ---
    h2 = _ln(x2, g2_ref[...], b2_ref[...])
    hid = _gelu(_dot_bf16(h2, wfc1_ref[...]) + bfc1_ref[...])
    o_ref[...] = x2 + _dot_bf16(hid, wfc2_ref[...]) + bfc2_ref[...]


def _cross_block_kernel(x_ref, g1_ref, b1_ref, wq_ref, bq_ref, wkv_ref,
                        bkv_ref, wproj_ref, bproj_ref, o_ref, *,
                        num_heads, scale):
    """CrossAttentionBlock (has_mlp=False) for one batch element -> cls row (1, C)."""
    x = x_ref[...]                                   # (N, C) f32
    n, c = x.shape
    dh = c // num_heads

    hx = _ln(x, g1_ref[...], b1_ref[...])
    # wq only on the cls row; wk|wv fused over all tokens.
    q = (_dot_bf16(hx[0:1, :], wq_ref[...]) + bq_ref[...]) * scale     # (1, C)
    kv = _dot_bf16(hx, wkv_ref[...]) + bkv_ref[...]                    # (N, 2C)

    wproj = wproj_ref[...]                           # (C, C) f32
    proj = jnp.zeros((1, c), jnp.float32)
    for h in range(num_heads):                       # static, unrolled
        lo = h * dh
        qh = q[:, lo:lo + dh].astype(jnp.bfloat16)
        kh = kv[:, lo:lo + dh].astype(jnp.bfloat16)
        vh = kv[:, c + lo:c + lo + dh].astype(jnp.bfloat16)
        s = jax.lax.dot_general(qh, kh, (((1,), (1,)), ((), ())),
                                preferred_element_type=jnp.float32)    # (1, N)
        p = _softmax_rows(s)
        oh = jnp.dot(p.astype(jnp.bfloat16), vh,
                     preferred_element_type=jnp.float32)               # (1, dh)
        proj = proj + jnp.dot(oh.astype(jnp.bfloat16),
                              wproj[lo:lo + dh, :].astype(jnp.bfloat16),
                              preferred_element_type=jnp.float32)
    o_ref[...] = x[0:1, :] + proj + bproj_ref[...]   # residual on the cls row


# ----------------------------------------------------------------------------
# Small fused linear kernels (patch embed, cls-token projections, head)
# ----------------------------------------------------------------------------
def _linear_kernel(x_ref, w_ref, bias_ref, o_ref):
    o_ref[...] = _dot_bf16(x_ref[...], w_ref[...]) + bias_ref[...]


def _ln_linear_kernel(x_ref, g_ref, b_ref, w_ref, bias_ref, o_ref):
    h = _ln(x_ref[...], g_ref[...], b_ref[...])
    o_ref[...] = _dot_bf16(h, w_ref[...]) + bias_ref[...]


def _ln_gelu_linear_kernel(x_ref, g_ref, b_ref, w_ref, bias_ref, o_ref):
    h = _gelu(_ln(x_ref[...], g_ref[...], b_ref[...]))
    o_ref[...] = _dot_bf16(h, w_ref[...]) + bias_ref[...]


# ----------------------------------------------------------------------------
# pallas_call wrappers
# ----------------------------------------------------------------------------
def _const_spec(a):
    zeros = (0,) * a.ndim
    return pl.BlockSpec(a.shape, lambda i: zeros)


def _row_call(kernel, row_inputs, bcast_inputs, out_cols):
    """Row-tiled pallas_call: row_inputs tile over M, bcast_inputs stay resident."""
    m = row_inputs[0].shape[0]
    if m <= 512:
        tm, m_pad = m, m
    else:
        tm = 256                                # conservative for v7x's 64 MiB VMEM
        m_pad = ((m + tm - 1) // tm) * tm
        if m_pad != m:                          # pad ragged M instead of whole-array block
            row_inputs = [jnp.pad(a, ((0, m_pad - m), (0, 0))) for a in row_inputs]
    in_specs = (
        [pl.BlockSpec((tm, a.shape[1]), lambda i: (i, 0)) for a in row_inputs]
        + [_const_spec(a) for a in bcast_inputs])
    out = pl.pallas_call(
        kernel,
        grid=(m_pad // tm,),
        in_specs=in_specs,
        out_specs=pl.BlockSpec((tm, out_cols), lambda i: (i, 0)),
        out_shape=jax.ShapeDtypeStruct((m_pad, out_cols), jnp.float32),
        compiler_params=pltpu.CompilerParams(
            dimension_semantics=("parallel",),
            vmem_limit_bytes=_VMEM_LIMIT),
    )(*row_inputs, *bcast_inputs)
    return out if m_pad == m else out[:m]


def linear(x, w, b):
    return _row_call(_linear_kernel, [x], [w, b.reshape(1, -1)], w.shape[1])


def ln_linear(x, g, b, w, bias):
    return _row_call(_ln_linear_kernel, [x],
                     [g.reshape(1, -1), b.reshape(1, -1), w, bias.reshape(1, -1)],
                     w.shape[1])


def ln_gelu_linear(x, g, b, w, bias):
    return _row_call(_ln_gelu_linear_kernel, [x],
                     [g.reshape(1, -1), b.reshape(1, -1), w, bias.reshape(1, -1)],
                     w.shape[1])


def _row(v):
    return v.reshape(1, -1)


def transformer_block(x, p, num_heads):
    """One fused pallas_call per Block: (B, N, C) -> (B, N, C)."""
    B, N, C = x.shape
    scale = (C // num_heads) ** -0.5
    kern = functools.partial(_block_kernel, num_heads=num_heads, scale=scale)
    inputs = [
        x,
        _row(p["norm1"]["g"]), _row(p["norm1"]["b"]),
        p["qkv"]["w"], _row(p["qkv"]["b"]),
        p["proj"]["w"], _row(p["proj"]["b"]),
        _row(p["norm2"]["g"]), _row(p["norm2"]["b"]),
        p["fc1"]["w"], _row(p["fc1"]["b"]),
        p["fc2"]["w"], _row(p["fc2"]["b"]),
    ]
    in_specs = ([pl.BlockSpec((None, N, C), lambda b: (b, 0, 0))]
                + [_const_spec(a) for a in inputs[1:]])
    return pl.pallas_call(
        kern,
        grid=(B,),
        in_specs=in_specs,
        out_specs=pl.BlockSpec((None, N, C), lambda b: (b, 0, 0)),
        out_shape=jax.ShapeDtypeStruct((B, N, C), jnp.float32),
        compiler_params=pltpu.CompilerParams(
            dimension_semantics=("parallel",),
            vmem_limit_bytes=_VMEM_LIMIT),
    )(*inputs)


def cross_attention_block(x, p, num_heads):
    """One fused pallas_call per CrossAttentionBlock (has_mlp=False): -> (B, 1, C)."""
    B, N, C = x.shape
    scale = (C // num_heads) ** -0.5
    kern = functools.partial(_cross_block_kernel, num_heads=num_heads, scale=scale)
    inputs = [
        x,
        _row(p["norm1"]["g"]), _row(p["norm1"]["b"]),
        p["wq"]["w"], _row(p["wq"]["b"]),
        p["wkv"]["w"], _row(p["wkv"]["b"]),
        p["proj"]["w"], _row(p["proj"]["b"]),
    ]
    in_specs = ([pl.BlockSpec((None, N, C), lambda b: (b, 0, 0))]
                + [_const_spec(a) for a in inputs[1:]])
    return pl.pallas_call(
        kern,
        grid=(B,),
        in_specs=in_specs,
        out_specs=pl.BlockSpec((None, 1, C), lambda b: (b, 0, 0)),
        out_shape=jax.ShapeDtypeStruct((B, 1, C), jnp.float32),
        compiler_params=pltpu.CompilerParams(
            dimension_semantics=("parallel",),
            vmem_limit_bytes=_VMEM_LIMIT),
    )(*inputs)


# ----------------------------------------------------------------------------
# Model forward (glue in plain JAX, compute in the fused kernels above)
# ----------------------------------------------------------------------------
def patch_embed(x, w, b, patch):
    """Conv2d(kernel=stride=patch) == im2col + matmul.  x: (B, C, H, W).
    NOTE: w must be the torch conv weight flattened in (C, p, p) order and
    transposed to (C*p*p, embed_dim)."""
    B, C, H, W = x.shape
    hp, wp = H // patch, W // patch
    xp = x.reshape(B, C, hp, patch, wp, patch)
    xp = jnp.transpose(xp, (0, 2, 4, 1, 3, 5))            # (B, hp, wp, C, p, p)
    xp = xp.reshape(B * hp * wp, C * patch * patch)
    out = linear(xp, w, b)
    return out.reshape(B, hp * wp, -1)


def _proj_path(x, p):
    # nn.Sequential(LayerNorm, GELU, Linear), fused in one kernel.  x: (B, 1, C)
    B, _, C = x.shape
    out = ln_gelu_linear(x.reshape(B, C), p["ln"]["g"], p["ln"]["b"],
                         p["lin"]["w"], p["lin"]["b"])
    return out.reshape(B, 1, -1)


def multi_scale_block(xs, bp, cfg):
    nb = len(cfg["embed_dim"])
    nh = cfg["num_heads"]
    # per-branch transformer blocks (one fused kernel each)
    outs_b = []
    for d in range(nb):
        h = xs[d]
        for blkp in bp["blocks"][d]:
            h = transformer_block(h, blkp, nh[d])
        outs_b.append(h)
    # project cls tokens to the neighbouring branch's dim
    proj_cls = [_proj_path(outs_b[d][:, 0:1], bp["projs"][d]) for d in range(nb)]
    # cross-attention fusion (one fused kernel per CrossAttentionBlock)
    outs = []
    for i in range(nb):
        j = (i + 1) % nb
        tmp = jnp.concatenate([proj_cls[i], outs_b[j][:, 1:]], axis=1)
        for cbp in bp["fusion"][i]:
            cls = cross_attention_block(tmp, cbp, nh[j])
            tmp = jnp.concatenate([cls, tmp[:, 1:]], axis=1)
        rev = _proj_path(tmp[:, 0:1], bp["revert_projs"][i])
        outs.append(jnp.concatenate([rev, outs_b[i][:, 1:]], axis=1))
    return outs


def forward(params, x, cfg):
    # TODO(synk): F.interpolate(mode='bicubic') resize path not implemented; the
    # example uses H == img_size so the interpolation branch is never taken.
    nb = len(cfg["patch_size"])
    ed = cfg["embed_dim"]
    B = x.shape[0]
    xs = []
    for i in range(nb):
        tok = patch_embed(x, params["patch_embed"][i]["w"],
                          params["patch_embed"][i]["b"], cfg["patch_size"][i])
        cls = jnp.broadcast_to(params["cls_token"][i], (B, 1, ed[i]))
        tok = jnp.concatenate([cls, tok], axis=1) + params["pos_embed"][i]
        xs.append(tok)                     # pos_drop: Dropout(p=0.0) == identity
    for bi in range(len(cfg["depth"])):
        xs = multi_scale_block(xs, params["blocks"][bi], cfg)
    logits = []
    for i in range(nb):
        # LayerNorm is per-token, so LN of the cls row only == LN of all rows then
        # slicing.  Fused LN + (128-lane-padded) head linear in one kernel.
        cls = xs[i][:, 0]                  # (B, C)
        lg = ln_linear(cls, params["norm"][i]["g"], params["norm"][i]["b"],
                       params["head"][i]["w"], params["head"][i]["b"])
        logits.append(lg[:, :cfg["num_classes"]])
    return jnp.mean(jnp.stack(logits, axis=0), axis=0)


# ----------------------------------------------------------------------------
# Deterministic parameter construction (matmul weights stored in bf16,
# attention-proj weights in f32 so 8-row head slices stay tile-aligned)
# ----------------------------------------------------------------------------
class _KeyGen:
    def __init__(self, key):
        self._key = key
        self._i = 0

    def __call__(self):
        self._i += 1
        return jax.random.fold_in(self._key, self._i)


def init_params(key, cfg):
    kg = _KeyGen(key)
    nb = len(cfg["patch_size"])
    ed = cfg["embed_dim"]
    Cin = cfg["in_channels"]
    num_patches = [(cfg["img_size"] // p) ** 2 for p in cfg["patch_size"]]
    nc = cfg["num_classes"]
    nc_pad = ((nc + 127) // 128) * 128     # lane-dense head output

    def tn(shape):  # trunc_normal_(std=0.02) stand-in
        return 0.02 * jax.random.normal(kg(), shape, jnp.float32)

    def tnb(shape):  # bf16 matmul weight
        return tn(shape).astype(jnp.bfloat16)

    def zeros(shape):
        return jnp.zeros(shape, jnp.float32)

    def ln_p(d):
        return dict(g=jnp.ones((d,), jnp.float32), b=zeros((d,)))

    def block_p(dim, mlp_ratio):
        hidden = int(dim * mlp_ratio)
        return dict(
            norm1=ln_p(dim),
            qkv=dict(w=tnb((dim, 3 * dim)), b=zeros((3 * dim,))),  # qkv_bias=False
            proj=dict(w=tn((dim, dim)), b=zeros((dim,))),          # f32 (sliced per head)
            norm2=ln_p(dim),
            fc1=dict(w=tnb((dim, hidden)), b=zeros((hidden,))),
            fc2=dict(w=tnb((hidden, dim)), b=zeros((dim,))),
        )

    def cross_block_p(dim):
        return dict(
            norm1=ln_p(dim),
            wq=dict(w=tnb((dim, dim)), b=zeros((dim,))),           # applied to cls row only
            wkv=dict(w=tnb((dim, 2 * dim)), b=zeros((2 * dim,))),  # wk | wv fused
            proj=dict(w=tn((dim, dim)), b=zeros((dim,))),          # f32 (sliced per head)
        )

    def head_p(dim):
        w = tn((dim, nc))
        w = jnp.pad(w, ((0, 0), (0, nc_pad - nc)))        # zero-pad to 128 lanes
        return dict(w=w.astype(jnp.bfloat16), b=zeros((nc_pad,)))

    params = dict(
        patch_embed=[dict(w=tnb((Cin * cfg["patch_size"][i] ** 2, ed[i])),
                          b=zeros((ed[i],))) for i in range(nb)],
        pos_embed=[tn((1, 1 + num_patches[i], ed[i])) for i in range(nb)],
        cls_token=[tn((1, 1, ed[i])) for i in range(nb)],
        blocks=[],
        norm=[ln_p(ed[i]) for i in range(nb)],
        head=[head_p(ed[i]) for i in range(nb)],
    )
    for blk_depth in cfg["depth"]:
        msb = dict(
            blocks=[[block_p(ed[d], cfg["mlp_ratio"][d]) for _ in range(blk_depth[d])]
                    for d in range(nb)],
            projs=[dict(ln=ln_p(ed[d]),
                        lin=dict(w=tnb((ed[d], ed[(d + 1) % nb])),
                                 b=zeros((ed[(d + 1) % nb],)))) for d in range(nb)],
            fusion=[[cross_block_p(ed[(d + 1) % nb]) for _ in range(blk_depth[-1])]
                    for d in range(nb)],
            revert_projs=[dict(ln=ln_p(ed[(d + 1) % nb]),
                               lin=dict(w=tnb((ed[(d + 1) % nb], ed[d])),
                                        b=zeros((ed[d],)))) for d in range(nb)],
        )
        params["blocks"].append(msb)
    return params


# ----------------------------------------------------------------------------
if __name__ == "__main__":
    cfg = dict(
        img_size=16,
        patch_size=(4, 8),        # -> 16 and 4 patches per branch
        in_channels=3,
        num_classes=10,
        embed_dim=(32, 64),
        depth=([1, 2, 1],),       # one MultiScaleBlock: branch depths [1,2], fusion depth 1
        num_heads=(4, 8),
        mlp_ratio=(2.0, 2.0, 4.0),
        qkv_bias=False,
    )

    key = jax.random.PRNGKey(0)
    pkey, xkey = jax.random.split(key)
    params = init_params(pkey, cfg)
    x = jax.random.normal(xkey, (2, cfg["in_channels"], cfg["img_size"], cfg["img_size"]),
                          jnp.float32)

    fwd = jax.jit(lambda p, xx: forward(p, xx, cfg))
    out = fwd(params, x)
    jax.block_until_ready(out)
    assert out.shape == (2, cfg["num_classes"])
    print("KERNEL_OK")
</pallas_src>

<mosaic_0001>
module attributes {stable_mosaic.version = 11 : i64} {
  func.func @_linear_kernel(%arg0: i32, %arg1: memref<32x48xf32, #tpu.memory_space<vmem>>, %arg2: memref<48x32xbf16, #tpu.memory_space<vmem>>, %arg3: memref<1x32xf32, #tpu.memory_space<vmem>>, %arg4: memref<32x32xf32, #tpu.memory_space<vmem>>) attributes {dimension_semantics = [#tpu.dimension_semantics<parallel>], iteration_bounds = array<i64: 1>, scalar_prefetch = 0 : i64, scratch_operands = 0 : i64, tpu.core_type = #tpu.core_type<tc>, window_params = [{transform_indices = @transform_0, window_bounds = array<i64: 32, 48>}, {pipeline_mode = #tpu.pipeline_mode<synchronous>, transform_indices = @transform_1, window_bounds = array<i64: 48, 32>}, {pipeline_mode = #tpu.pipeline_mode<synchronous>, transform_indices = @transform_2, window_bounds = array<i64: 1, 32>}, {transform_indices = @transform_3, window_bounds = array<i64: 32, 32>}]} {
    %c0 = arith.constant 0 : index
    %c0_0 = arith.constant 0 : index
    %0 = vector.load %arg1[%c0, %c0_0] : memref<32x48xf32, #tpu.memory_space<vmem>>, vector<32x48xf32>
    %c0_1 = arith.constant 0 : index
    %c0_2 = arith.constant 0 : index
    %1 = vector.load %arg2[%c0_1, %c0_2] : memref<48x32xbf16, #tpu.memory_space<vmem>>, vector<48x32xbf16>
    %2 = arith.truncf %0 : vector<32x48xf32> to vector<32x48xbf16>
    %cst = arith.constant dense<0.000000e+00> : vector<32x32xf32>
    %3 = tpu.matmul %2, %1, %cst {dimension_numbers = #tpu.dot_dimension_numbers<[1], [0], [0], [1], [0, 0, 1, 1], [], []>} : vector<32x48xbf16>, vector<48x32xbf16>, vector<32x32xf32> -> vector<32x32xf32>
    %c0_3 = arith.constant 0 : index
    %c0_4 = arith.constant 0 : index
    %4 = vector.load %arg3[%c0_3, %c0_4] : memref<1x32xf32, #tpu.memory_space<vmem>>, vector<1x32xf32>
    %5 = vector.broadcast %4 : vector<1x32xf32> to vector<32x32xf32>
    %6 = arith.addf %3, %5 : vector<32x32xf32>
    %c0_5 = arith.constant 0 : index
    %c0_6 = arith.constant 0 : index
    %7 = vector.load %arg4[%c0_5, %c0_6] : memref<32x32xf32, #tpu.memory_space<vmem>>, vector<32x32xf32>
    tpu.vector_store %arg4[%c0_5, %c0_6], %6 {strides = array<i32>} : memref<32x32xf32, #tpu.memory_space<vmem>>, vector<32x32xf32>,
    return
  }
  func.func @transform_0(%arg0: i32) -> (i32, i32) {
    %c0_i32 = arith.constant 0 : i32
    %c0_i32_0 = arith.constant 0 : i32
    return %arg0, %c0_i32 : i32, i32
  }
  func.func @transform_1(%arg0: i32) -> (i32, i32) {
    %c0_i32 = arith.constant 0 : i32
    %c0_i32_0 = arith.constant 0 : i32
    %c0_i32_1 = arith.constant 0 : i32
    return %c0_i32, %c0_i32_0 : i32, i32
  }
  func.func @transform_2(%arg0: i32) -> (i32, i32) {
    %c0_i32 = arith.constant 0 : i32
    %c0_i32_0 = arith.constant 0 : i32
    %c0_i32_1 = arith.constant 0 : i32
    return %c0_i32, %c0_i32_0 : i32, i32
  }
  func.func @transform_3(%arg0: i32) -> (i32, i32) {
    %c0_i32 = arith.constant 0 : i32
    %c0_i32_0 = arith.constant 0 : i32
    return %arg0, %c0_i32 : i32, i32
  }
}

module attributes {stable_mosaic.version = 11 : i64} {
  func.func @_block_kernel(%arg0: i32, %arg1: memref<1x17x32xf32, #tpu.memory_space<vmem>>, %arg2: memref<1x32xf32, #tpu.memory_space<vmem>>, %arg3: memref<1x32xf32, #tpu.memory_space<vmem>>, %arg4: memref<32x96xbf16, #tpu.memory_space<vmem>>, %arg5: memref<1x96xf32, #tpu.memory_space<vmem>>, %arg6: memref<32x32xf32, #tpu.memory_space<vmem>>, %arg7: memref<1x32xf32, #tpu.memory_space<vmem>>, %arg8: memref<1x32xf32, #tpu.memory_space<vmem>>, %arg9: memref<1x32xf32, #tpu.memory_space<vmem>>, %arg10: memref<32x64xbf16, #tpu.memory_space<vmem>>, %arg11: memref<1x64xf32, #tpu.memory_space<vmem>>, %arg12: memref<64x32xbf16, #tpu.memory_space<vmem>>, %arg13: memref<1x32xf32, #tpu.memory_space<vmem>>, %arg14: memref<1x17x32xf32, #tpu.memory_space<vmem>>) attributes {dimension_semantics = [#tpu.dimension_semantics<parallel>], iteration_bounds = array<i64: 2>, scalar_prefetch = 0 : i64, scratch_operands = 0 : i64, tpu.core_type = #tpu.core_type<tc>, window_params = [{transform_indices = @transform_0, window_bounds = array<i64: 1, 17, 32>}, {pipeline_mode = #tpu.pipeline_mode<synchronous>, transform_indices = @transform_1, window_bounds = array<i64: 1, 32>}, {pipeline_mode = #tpu.pipeline_mode<synchronous>, transform_indices = @transform_2, window_bounds = array<i64: 1, 32>}, {pipeline_mode = #tpu.pipeline_mode<synchronous>, transform_indices = @transform_3, window_bounds = array<i64: 32, 96>}, {pipeline_mode = #tpu.pipeline_mode<synchronous>, transform_indices = @transform_4, window_bounds = array<i64: 1, 96>}, {pipeline_mode = #tpu.pipeline_mode<synchronous>, transform_indices = @transform_5, window_bounds = array<i64: 32, 32>}, {pipeline_mode = #tpu.pipeline_mode<synchronous>, transform_indices = @transform_6, window_bounds = array<i64: 1, 32>}, {pipeline_mode = #tpu.pipeline_mode<synchronous>, transform_indices = @transform_7, window_bounds = array<i64: 1, 32>}, {pipeline_mode = #tpu.pipeline_mode<synchronous>, transform_indices = @transform_8, window_bounds = array<i64: 1, 32>}, {pipeline_mode = #tpu.pipeline_mode<synchronous>, transform_indices = @transform_9, window_bounds = array<i64: 32, 64>}, {pipeline_mode = #tpu.pipeline_mode<synchronous>, transform_indices = @transform_10, window_bounds = array<i64: 1, 64>}, {pipeline_mode = #tpu.pipeline_mode<synchronous>, transform_indices = @transform_11, window_bounds = array<i64: 64, 32>}, {pipeline_mode = #tpu.pipeline_mode<synchronous>, transform_indices = @transform_12, window_bounds = array<i64: 1, 32>}, {transform_indices = @transform_13, window_bounds = array<i64: 1, 17, 32>}]} {
    %c0 = arith.constant 0 : index
    %c0_0 = arith.constant 0 : index
    %c0_1 = arith.constant 0 : index
    %0 = vector.load %arg1[%c0, %c0_0, %c0_1] : memref<1x17x32xf32, #tpu.memory_space<vmem>>, vector<1x17x32xf32>
    %1 = vector.shape_cast %0 : vector<1x17x32xf32> to vector<17x32xf32>
    %c0_2 = arith.constant 0 : index
    %c0_3 = arith.constant 0 : index
    %2 = vector.load %arg2[%c0_2, %c0_3] : memref<1x32xf32, #tpu.memory_space<vmem>>, vector<1x32xf32>
    %c0_4 = arith.constant 0 : index
    %c0_5 = arith.constant 0 : index
    %3 = vector.load %arg3[%c0_4, %c0_5] : memref<1x32xf32, #tpu.memory_space<vmem>>, vector<1x32xf32>
    %cst = arith.constant dense<0.000000e+00> : vector<17xf32>
    %4 = vector.multi_reduction <add>, %1, %cst [1] : vector<17x32xf32> to vector<17xf32>
    %5 = vector.shape_cast %4 : vector<17xf32> to vector<17x1xf32>
    %cst_6 = arith.constant 3.200000e+01 : f32
    %6 = vector.broadcast %cst_6 : f32 to vector<17x1xf32>
    %7 = arith.divf %5, %6 : vector<17x1xf32>
    %8 = vector.broadcast %7 : vector<17x1xf32> to vector<17x32xf32>
    %9 = arith.subf %1, %8 : vector<17x32xf32>
    %10 = arith.mulf %9, %9 : vector<17x32xf32>
    %cst_7 = arith.constant dense<0.000000e+00> : vector<17xf32>
    %11 = vector.multi_reduction <add>, %10, %cst_7 [1] : vector<17x32xf32> to vector<17xf32>
    %12 = vector.shape_cast %11 : vector<17xf32> to vector<17x1xf32>
    %cst_8 = arith.constant 3.200000e+01 : f32
    %13 = vector.broadcast %cst_8 : f32 to vector<17x1xf32>
    %14 = arith.divf %12, %13 : vector<17x1xf32>
    %cst_9 = arith.constant 9.99999974E-6 : f32
    %15 = vector.broadcast %cst_9 : f32 to vector<17x1xf32>
    %16 = arith.addf %14, %15 : vector<17x1xf32>
    %17 = math.rsqrt %16 : vector<17x1xf32>
    %18 = vector.broadcast %17 : vector<17x1xf32> to vector<17x32xf32>
    %19 = arith.mulf %9, %18 : vector<17x32xf32>
    %20 = vector.broadcast %2 : vector<1x32xf32> to vector<17x32xf32>
    %21 = arith.mulf %19, %20 : vector<17x32xf32>
    %22 = vector.broadcast %3 : vector<1x32xf32> to vector<17x32xf32>
    %23 = arith.addf %21, %22 : vector<17x32xf32>
    %c0_10 = arith.constant 0 : index
    %c0_11 = arith.constant 0 : index
    %24 = vector.load %arg4[%c0_10, %c0_11] : memref<32x96xbf16, #tpu.memory_space<vmem>>, vector<32x96xbf16>
    %25 = arith.truncf %23 : vector<17x32xf32> to vector<17x32xbf16>
    %cst_12 = arith.constant dense<0.000000e+00> : vector<17x96xf32>
    %26 = tpu.matmul %25, %24, %cst_12 {dimension_numbers = #tpu.dot_dimension_numbers<[1], [0], [0], [1], [0, 0, 1, 1], [], []>} : vector<17x32xbf16>, vector<32x96xbf16>, vector<17x96xf32> -> vector<17x96xf32>
    %c0_13 = arith.constant 0 : index
    %c0_14 = arith.constant 0 : index
    %27 = vector.load %arg5[%c0_13, %c0_14] : memref<1x96xf32, #tpu.memory_space<vmem>>, vector<1x96xf32>
    %28 = vector.broadcast %27 : vector<1x96xf32> to vector<17x96xf32>
    %29 = arith.addf %26, %28 : vector<17x96xf32>
    %c0_15 = arith.constant 0 : index
    %c0_16 = arith.constant 0 : index
    %30 = vector.load %arg6[%c0_15, %c0_16] : memref<32x32xf32, #tpu.memory_space<vmem>>, vector<32x32xf32>
    %cst_17 = arith.constant 0.000000e+00 : f32
    %31 = vector.broadcast %cst_17 : f32 to vector<17x32xf32>
    %32 = vector.extract_strided_slice %29 {offsets = [0, 0], sizes = [17, 8], strides = [1, 1]} : vector<17x96xf32> to vector<17x8xf32>
    %cst_18 = arith.constant 0.353553385 : f32
    %33 = vector.broadcast %cst_18 : f32 to vector<17x8xf32>
    %34 = arith.mulf %32, %33 : vector<17x8xf32>
    %35 = arith.truncf %34 : vector<17x8xf32> to vector<17x8xbf16>
    %36 = vector.extract_strided_slice %29 {offsets = [0, 32], sizes = [17, 8], strides = [1, 1]} : vector<17x96xf32> to vector<17x8xf32>
    %37 = arith.truncf %36 : vector<17x8xf32> to vector<17x8xbf16>
    %38 = vector.extract_strided_slice %29 {offsets = [0, 64], sizes = [17, 8], strides = [1, 1]} : vector<17x96xf32> to vector<17x8xf32>
    %39 = arith.truncf %38 : vector<17x8xf32> to vector<17x8xbf16>
    %cst_19 = arith.constant dense<0.000000e+00> : vector<17x17xf32>
    %40 = tpu.matmul %35, %37, %cst_19 {dimension_numbers = #tpu.dot_dimension_numbers<[1], [1], [0], [0], [0, 0, 1, 0], [], []>} : vector<17x8xbf16>, vector<17x8xbf16>, vector<17x17xf32> -> vector<17x17xf32>
    %cst_20 = arith.constant dense<0xFF800000> : vector<17xf32>
    %41 = vector.multi_reduction <maximumf>, %40, %cst_20 [1] : vector<17x17xf32> to vector<17xf32>
    %42 = vector.shape_cast %41 : vector<17xf32> to vector<17x1xf32>
    %43 = vector.broadcast %42 : vector<17x1xf32> to vector<17x17xf32>
    %44 = arith.subf %40, %43 : vector<17x17xf32>
    %45 = math.exp %44 : vector<17x17xf32>
    %cst_21 = arith.constant dense<0.000000e+00> : vector<17xf32>
    %46 = vector.multi_reduction <add>, %45, %cst_21 [1] : vector<17x17xf32> to vector<17xf32>
    %47 = vector.shape_cast %46 : vector<17xf32> to vector<17x1xf32>
    %48 = tpu.reciprocal %47 {approx = true} : vector<17x1xf32> -> vector<17x1xf32>
    %49 = vector.broadcast %48 : vector<17x1xf32> to vector<17x17xf32>
    %50 = arith.mulf %45, %49 : vector<17x17xf32>
    %51 = arith.truncf %50 : vector<17x17xf32> to vector<17x17xbf16>
    %cst_22 = arith.constant dense<0.000000e+00> : vector<17x8xf32>
    %52 = tpu.matmul %51, %39, %cst_22 {dimension_numbers = #tpu.dot_dimension_numbers<[1], [0], [0], [1], [0, 0, 1, 1], [], []>} : vector<17x17xbf16>, vector<17x8xbf16>, vector<17x8xf32> -> vector<17x8xf32>
    %53 = arith.truncf %52 : vector<17x8xf32> to vector<17x8xbf16>
    %54 = vector.extract_strided_slice %30 {offsets = [0, 0], sizes = [8, 32], strides = [1, 1]} : vector<32x32xf32> to vector<8x32xf32>
    %55 = arith.truncf %54 : vector<8x32xf32> to vector<8x32xbf16>
    %cst_23 = arith.constant dense<0.000000e+00> : vector<17x32xf32>
    %56 = tpu.matmul %53, %55, %cst_23 {dimension_numbers = #tpu.dot_dimension_numbers<[1], [0], [0], [1], [0, 0, 1, 1], [], []>} : vector<17x8xbf16>, vector<8x32xbf16>, vector<17x32xf32> -> vector<17x32xf32>
    %57 = arith.addf %31, %56 : vector<17x32xf32>
    %58 = vector.extract_strided_slice %29 {offsets = [0, 8], sizes = [17, 8], strides = [1, 1]} : vector<17x96xf32> to vector<17x8xf32>
    %cst_24 = arith.constant 0.353553385 : f32
    %59 = vector.broadcast %cst_24 : f32 to vector<17x8xf32>
    %60 = arith.mulf %58, %59 : vector<17x8xf32>
    %61 = arith.truncf %60 : vector<17x8xf32> to vector<17x8xbf16>
    %62 = vector.extract_strided_slice %29 {offsets = [0, 40], sizes = [17, 8], strides = [1, 1]} : vector<17x96xf32> to vector<17x8xf32>
    %63 = arith.truncf %62 : vector<17x8xf32> to vector<17x8xbf16>
    %64 = vector.extract_strided_slice %29 {offsets = [0, 72], sizes = [17, 8], strides = [1, 1]} : vector<17x96xf32> to vector<17x8xf32>
    %65 = arith.truncf %64 : vector<17x8xf32> to vector<17x8xbf16>
    %cst_25 = arith.constant dense<0.000000e+00> : vector<17x17xf32>
    %66 = tpu.matmul %61, %63, %cst_25 {dimension_numbers = #tpu.dot_dimension_numbers<[1], [1], [0], [0], [0, 0, 1, 0], [], []>} : vector<17x8xbf16>, vector<17x8xbf16>, vector<17x17xf32> -> vector<17x17xf32>
    %cst_26 = arith.constant dense<0xFF800000> : vector<17xf32>
    %67 = vector.multi_reduction <maximumf>, %66, %cst_26 [1] : vector<17x17xf32> to vector<17xf32>
    %68 = vector.shape_cast %67 : vector<17xf32> to vector<17x1xf32>
    %69 = vector.broadcast %68 : vector<17x1xf32> to vector<17x17xf32>
    %70 = arith.subf %66, %69 : vector<17x17xf32>
    %71 = math.exp %70 : vector<17x17xf32>
    %cst_27 = arith.constant dense<0.000000e+00> : vector<17xf32>
    %72 = vector.multi_reduction <add>, %71, %cst_27 [1] : vector<17x17xf32> to vector<17xf32>
    %73 = vector.shape_cast %72 : vector<17xf32> to vector<17x1xf32>
    %74 = tpu.reciprocal %73 {approx = true} : vector<17x1xf32> -> vector<17x1xf32>
    %75 = vector.broadcast %74 : vector<17x1xf32> to vector<17x17xf32>
    %76 = arith.mulf %71, %75 : vector<17x17xf32>
    %77 = arith.truncf %76 : vector<17x17xf32> to vector<17x17xbf16>
    %cst_28 = arith.constant dense<0.000000e+00> : vector<17x8xf32>
    %78 = tpu.matmul %77, %65, %cst_28 {dimension_numbers = #tpu.dot_dimension_numbers<[1], [0], [0], [1], [0, 0, 1, 1], [], []>} : vector<17x17xbf16>, vector<17x8xbf16>, vector<17x8xf32> -> vector<17x8xf32>
    %79 = arith.truncf %78 : vector<17x8xf32> to vector<17x8xbf16>
    %80 = vector.extract_strided_slice %30 {offsets = [8, 0], sizes = [8, 32], strides = [1, 1]} : vector<32x32xf32> to vector<8x32xf32>
    %81 = arith.truncf %80 : vector<8x32xf32> to vector<8x32xbf16>
    %cst_29 = arith.constant dense<0.000000e+00> : vector<17x32xf32>
    %82 = tpu.matmul %79, %81, %cst_29 {dimension_numbers = #tpu.dot_dimension_numbers<[1], [0], [0], [1], [0, 0, 1, 1], [], []>} : vector<17x8xbf16>, vector<8x32xbf16>, vector<17x32xf32> -> vector<17x32xf32>
    %83 = arith.addf %57, %82 : vector<17x32xf32>
    %84 = vector.extract_strided_slice %29 {offsets = [0, 16], sizes = [17, 8], strides = [1, 1]} : vector<17x96xf32> to vector<17x8xf32>
    %cst_30 = arith.constant 0.353553385 : f32
    %85 = vector.broadcast %cst_30 : f32 to vector<17x8xf32>
    %86 = arith.mulf %84, %85 : vector<17x8xf32>
    %87 = arith.truncf %86 : vector<17x8xf32> to vector<17x8xbf16>
    %88 = vector.extract_strided_slice %29 {offsets = [0, 48], sizes = [17, 8], strides = [1, 1]} : vector<17x96xf32> to vector<17x8xf32>
    %89 = arith.truncf %88 : vector<17x8xf32> to vector<17x8xbf16>
    %90 = vector.extract_strided_slice %29 {offsets = [0, 80], sizes = [17, 8], strides = [1, 1]} : vector<17x96xf32> to vector<17x8xf32>
    %91 = arith.truncf %90 : vector<17x8xf32> to vector<17x8xbf16>
    %cst_31 = arith.constant dense<0.000000e+00> : vector<17x17xf32>
    %92 = tpu.matmul %87, %89, %cst_31 {dimension_numbers = #tpu.dot_dimension_numbers<[1], [1], [0], [0], [0, 0, 1, 0], [], []>} : vector<17x8xbf16>, vector<17x8xbf16>, vector<17x17xf32> -> vector<17x17xf32>
    %cst_32 = arith.constant dense<0xFF800000> : vector<17xf32>
    %93 = vector.multi_reduction <maximumf>, %92, %cst_32 [1] : vector<17x17xf32> to vector<17xf32>
    %94 = vector.shape_cast %93 : vector<17xf32> to vector<17x1xf32>
    %95 = vector.broadcast %94 : vector<17x1xf32> to vector<17x17xf32>
    %96 = arith.subf %92, %95 : vector<17x17xf32>
    %97 = math.exp %96 : vector<17x17xf32>
    %cst_33 = arith.constant dense<0.000000e+00> : vector<17xf32>
    %98 = vector.multi_reduction <add>, %97, %cst_33 [1] : vector<17x17xf32> to vector<17xf32>
    %99 = vector.shape_cast %98 : vector<17xf32> to vector<17x1xf32>
    %100 = tpu.reciprocal %99 {approx = true} : vector<17x1xf32> -> vector<17x1xf32>
    %101 = vector.broadcast %100 : vector<17x1xf32> to vector<17x17xf32>
    %102 = arith.mulf %97, %101 : vector<17x17xf32>
    %103 = arith.truncf %102 : vector<17x17xf32> to vector<17x17xbf16>
    %cst_34 = arith.constant dense<0.000000e+00> : vector<17x8xf32>
    %104 = tpu.matmul %103, %91, %cst_34 {dimension_numbers = #tpu.dot_dimension_numbers<[1], [0], [0], [1], [0, 0, 1, 1], [], []>} : vector<17x17xbf16>, vector<17x8xbf16>, vector<17x8xf32> -> vector<17x8xf32>
    %105 = arith.truncf %104 : vector<17x8xf32> to vector<17x8xbf16>
    %106 = vector.extract_strided_slice %30 {offsets = [16, 0], sizes = [8, 32], strides = [1, 1]} : vector<32x32xf32> to vector<8x32xf32>
    %107 = arith.truncf %106 : vector<8x32xf32> to vector<8x32xbf16>
    %cst_35 = arith.constant dense<0.000000e+00> : vector<17x32xf32>
    %108 = tpu.matmul %105, %107, %cst_35 {dimension_numbers = #tpu.dot_dimension_numbers<[1], [0], [0], [1], [0, 0, 1, 1], [], []>} : vector<17x8xbf16>, vector<8x32xbf16>, vector<17x32xf32> -> vector<17x32xf32>
    %109 = arith.addf %83, %108 : vector<17x32xf32>
    %110 = vector.extract_strided_slice %29 {offsets = [0, 24], sizes = [17, 8], strides = [1, 1]} : vector<17x96xf32> to vector<17x8xf32>
    %cst_36 = arith.constant 0.353553385 : f32
    %111 = vector.broadcast %cst_36 : f32 to vector<17x8xf32>
    %112 = arith.mulf %110, %111 : vector<17x8xf32>
    %113 = arith.truncf %112 : vector<17x8xf32> to vector<17x8xbf16>
    %114 = vector.extract_strided_slice %29 {offsets = [0, 56], sizes = [17, 8], strides = [1, 1]} : vector<17x96xf32> to vector<17x8xf32>
    %115 = arith.truncf %114 : vector<17x8xf32> to vector<17x8xbf16>
    %116 = vector.extract_strided_slice %29 {offsets = [0, 88], sizes = [17, 8], strides = [1, 1]} : vector<17x96xf32> to vector<17x8xf32>
    %117 = arith.truncf %116 : vector<17x8xf32> to vector<17x8xbf16>
    %cst_37 = arith.constant dense<0.000000e+00> : vector<17x17xf32>
    %118 = tpu.matmul %113, %115, %cst_37 {dimension_numbers = #tpu.dot_dimension_numbers<[1], [1], [0], [0], [0, 0, 1, 0], [], []>} : vector<17x8xbf16>, vector<17x8xbf16>, vector<17x17xf32> -> vector<17x17xf32>
    %cst_38 = arith.constant dense<0xFF800000> : vector<17xf32>
    %119 = vector.multi_reduction <maximumf>, %118, %cst_38 [1] : vector<17x17xf32> to vector<17xf32>
    %120 = vector.shape_cast %119 : vector<17xf32> to vector<17x1xf32>
    %121 = vector.broadcast %120 : vector<17x1xf32> to vector<17x17xf32>
    %122 = arith.subf %118, %121 : vector<17x17xf32>
    %123 = math.exp %122 : vector<17x17xf32>
    %cst_39 = arith.constant dense<0.000000e+00> : vector<17xf32>
    %124 = vector.multi_reduction <add>, %123, %cst_39 [1] : vector<17x17xf32> to vector<17xf32>
    %125 = vector.shape_cast %124 : vector<17xf32> to vector<17x1xf32>
    %126 = tpu.reciprocal %125 {approx = true} : vector<17x1xf32> -> vector<17x1xf32>
    %127 = vector.broadcast %126 : vector<17x1xf32> to vector<17x17xf32>
    %128 = arith.mulf %123, %127 : vector<17x17xf32>
    %129 = arith.truncf %128 : vector<17x17xf32> to vector<17x17xbf16>
    %cst_40 = arith.constant dense<0.000000e+00> : vector<17x8xf32>
    %130 = tpu.matmul %129, %117, %cst_40 {dimension_numbers = #tpu.dot_dimension_numbers<[1], [0], [0], [1], [0, 0, 1, 1], [], []>} : vector<17x17xbf16>, vector<17x8xbf16>, vector<17x8xf32> -> vector<17x8xf32>
    %131 = arith.truncf %130 : vector<17x8xf32> to vector<17x8xbf16>
    %132 = vector.extract_strided_slice %30 {offsets = [24, 0], sizes = [8, 32], strides = [1, 1]} : vector<32x32xf32> to vector<8x32xf32>
    %133 = arith.truncf %132 : vector<8x32xf32> to vector<8x32xbf16>
    %cst_41 = arith.constant dense<0.000000e+00> : vector<17x32xf32>
    %134 = tpu.matmul %131, %133, %cst_41 {dimension_numbers = #tpu.dot_dimension_numbers<[1], [0], [0], [1], [0, 0, 1, 1], [], []>} : vector<17x8xbf16>, vector<8x32xbf16>, vector<17x32xf32> -> vector<17x32xf32>
    %135 = arith.addf %109, %134 : vector<17x32xf32>
    %136 = arith.addf %1, %135 : vector<17x32xf32>
    %c0_42 = arith.constant 0 : index
    %c0_43 = arith.constant 0 : index
    %137 = vector.load %arg7[%c0_42, %c0_43] : memref<1x32xf32, #tpu.memory_space<vmem>>, vector<1x32xf32>
    %138 = vector.broadcast %137 : vector<1x32xf32> to vector<17x32xf32>
    %139 = arith.addf %136, %138 : vector<17x32xf32>
    %c0_44 = arith.constant 0 : index
    %c0_45 = arith.constant 0 : index
    %140 = vector.load %arg8[%c0_44, %c0_45] : memref<1x32xf32, #tpu.memory_space<vmem>>, vector<1x32xf32>
    %c0_46 = arith.constant 0 : index
    %c0_47 = arith.constant 0 : index
    %141 = vector.load %arg9[%c0_46, %c0_47] : memref<1x32xf32, #tpu.memory_space<vmem>>, vector<1x32xf32>
    %cst_48 = arith.constant dense<0.000000e+00> : vector<17xf32>
    %142 = vector.multi_reduction <add>, %139, %cst_48 [1] : vector<17x32xf32> to vector<17xf32>
    %143 = vector.shape_cast %142 : vector<17xf32> to vector<17x1xf32>
    %cst_49 = arith.constant 3.200000e+01 : f32
    %144 = vector.broadcast %cst_49 : f32 to vector<17x1xf32>
    %145 = arith.divf %143, %144 : vector<17x1xf32>
    %146 = vector.broadcast %145 : vector<17x1xf32> to vector<17x32xf32>
    %147 = arith.subf %139, %146 : vector<17x32xf32>
    %148 = arith.mulf %147, %147 : vector<17x32xf32>
    %cst_50 = arith.constant dense<0.000000e+00> : vector<17xf32>
    %149 = vector.multi_reduction <add>, %148, %cst_50 [1] : vector<17x32xf32> to vector<17xf32>
    %150 = vector.shape_cast %149 : vector<17xf32> to vector<17x1xf32>
    %cst_51 = arith.constant 3.200000e+01 : f32
    %151 = vector.broadcast %cst_51 : f32 to vector<17x1xf32>
    %152 = arith.divf %150, %151 : vector<17x1xf32>
    %cst_52 = arith.constant 9.99999974E-6 : f32
    %153 = vector.broadcast %cst_52 : f32 to vector<17x1xf32>
    %154 = arith.addf %152, %153 : vector<17x1xf32>
    %155 = math.rsqrt %154 : vector<17x1xf32>
    %156 = vector.broadcast %155 : vector<17x1xf32> to vector<17x32xf32>
    %157 = arith.mulf %147, %156 : vector<17x32xf32>
    %158 = vector.broadcast %140 : vector<1x32xf32> to vector<17x32xf32>
    %159 = arith.mulf %157, %158 : vector<17x32xf32>
    %160 = vector.broadcast %141 : vector<1x32xf32> to vector<17x32xf32>
    %161 = arith.addf %159, %160 : vector<17x32xf32>
    %c0_53 = arith.constant 0 : index
    %c0_54 = arith.constant 0 : index
    %162 = vector.load %arg10[%c0_53, %c0_54] : memref<32x64xbf16, #tpu.memory_space<vmem>>, vector<32x64xbf16>
    %163 = arith.truncf %161 : vector<17x32xf32> to vector<17x32xbf16>
    %cst_55 = arith.constant dense<0.000000e+00> : vector<17x64xf32>
    %164 = tpu.matmul %163, %162, %cst_55 {dimension_numbers = #tpu.dot_dimension_numbers<[1], [0], [0], [1], [0, 0, 1, 1], [], []>} : vector<17x32xbf16>, vector<32x64xbf16>, vector<17x64xf32> -> vector<17x64xf32>
    %c0_56 = arith.constant 0 : index
    %c0_57 = arith.constant 0 : index
    %165 = vector.load %arg11[%c0_56, %c0_57] : memref<1x64xf32, #tpu.memory_space<vmem>>, vector<1x64xf32>
    %166 = vector.broadcast %165 : vector<1x64xf32> to vector<17x64xf32>
    %167 = arith.addf %164, %166 : vector<17x64xf32>
    %cst_58 = arith.constant 5.000000e-01 : f32
    %168 = vector.broadcast %cst_58 : f32 to vector<17x64xf32>
    %169 = arith.mulf %168, %167 : vector<17x64xf32>
    %cst_59 = arith.constant 0.707106769 : f32
    %170 = vector.broadcast %cst_59 : f32 to vector<17x64xf32>
    %171 = arith.mulf %167, %170 : vector<17x64xf32>
    %172 = math.erf %171 : vector<17x64xf32>
    %cst_60 = arith.constant 1.000000e+00 : f32
    %173 = vector.broadcast %cst_60 : f32 to vector<17x64xf32>
    %174 = arith.addf %173, %172 : vector<17x64xf32>
    %175 = arith.mulf %169, %174 : vector<17x64xf32>
    %c0_61 = arith.constant 0 : index
    %c0_62 = arith.constant 0 : index
    %176 = vector.load %arg12[%c0_61, %c0_62] : memref<64x32xbf16, #tpu.memory_space<vmem>>, vector<64x32xbf16>
    %177 = arith.truncf %175 : vector<17x64xf32> to vector<17x64xbf16>
    %cst_63 = arith.constant dense<0.000000e+00> : vector<17x32xf32>
    %178 = tpu.matmul %177, %176, %cst_63 {dimension_numbers = #tpu.dot_dimension_numbers<[1], [0], [0], [1], [0, 0, 1, 1], [], []>} : vector<17x64xbf16>, vector<64x32xbf16>, vector<17x32xf32> -> vector<17x32xf32>
    %179 = arith.addf %139, %178 : vector<17x32xf32>
    %c0_64 = arith.constant 0 : index
    %c0_65 = arith.constant 0 : index
    %180 = vector.load %arg13[%c0_64, %c0_65] : memref<1x32xf32, #tpu.memory_space<vmem>>, vector<1x32xf32>
    %181 = vector.broadcast %180 : vector<1x32xf32> to vector<17x32xf32>
    %182 = arith.addf %179, %181 : vector<17x32xf32>
    %c0_66 = arith.constant 0 : index
    %c0_67 = arith.constant 0 : index
    %c0_68 = arith.constant 0 : index
    %183 = vector.load %arg14[%c0_66, %c0_67, %c0_68] : memref<1x17x32xf32, #tpu.memory_space<vmem>>, vector<1x17x32xf32>
    %184 = vector.shape_cast %183 : vector<1x17x32xf32> to vector<17x32xf32>
    %185 = vector.shape_cast %182 : vector<17x32xf32> to vector<1x17x32xf32>
    tpu.vector_store %arg14[%c0_66, %c0_67, %c0_68], %185 {strides = array<i32>} : memref<1x17x32xf32, #tpu.memory_space<vmem>>, vector<1x17x32xf32>,
    return
  }
  func.func @transform_0(%arg0: i32) -> (i32, i32, i32) {
    %c0_i32 = arith.constant 0 : i32
    %c0_i32_0 = arith.constant 0 : i32
    %c0_i32_1 = arith.constant 0 : i32
    return %arg0, %c0_i32, %c0_i32_0 : i32, i32, i32
  }
  func.func @transform_1(%arg0: i32) -> (i32, i32) {
    %c0_i32 = arith.constant 0 : i32
    %c0_i32_0 = arith.constant 0 : i32
    %c0_i32_1 = arith.constant 0 : i32
    return %c0_i32, %c0_i32_0 : i32, i32
  }
  func.func @transform_2(%arg0: i32) -> (i32, i32) {
    %c0_i32 = arith.constant 0 : i32
    %c0_i32_0 = arith.constant 0 : i32
    %c0_i32_1 = arith.constant 0 : i32
    return %c0_i32, %c0_i32_0 : i32, i32
  }
  func.func @transform_3(%arg0: i32) -> (i32, i32) {
    %c0_i32 = arith.constant 0 : i32
    %c0_i32_0 = arith.constant 0 : i32
    %c0_i32_1 = arith.constant 0 : i32
    return %c0_i32, %c0_i32_0 : i32, i32
  }
  func.func @transform_4(%arg0: i32) -> (i32, i32) {
    %c0_i32 = arith.constant 0 : i32
    %c0_i32_0 = arith.constant 0 : i32
    %c0_i32_1 = arith.constant 0 : i32
    return %c0_i32, %c0_i32_0 : i32, i32
  }
  func.func @transform_5(%arg0: i32) -> (i32, i32) {
    %c0_i32 = arith.constant 0 : i32
    %c0_i32_0 = arith.constant 0 : i32
    %c0_i32_1 = arith.constant 0 : i32
    return %c0_i32, %c0_i32_0 : i32, i32
  }
  func.func @transform_6(%arg0: i32) -> (i32, i32) {
    %c0_i32 = arith.constant 0 : i32
    %c0_i32_0 = arith.constant 0 : i32
    %c0_i32_1 = arith.constant 0 : i32
    return %c0_i32, %c0_i32_0 : i32, i32
  }
  func.func @transform_7(%arg0: i32) -> (i32, i32) {
    %c0_i32 = arith.constant 0 : i32
    %c0_i32_0 = arith.constant 0 : i32
    %c0_i32_1 = arith.constant 0 : i32
    return %c0_i32, %c0_i32_0 : i32, i32
  }
  func.func @transform_8(%arg0: i32) -> (i32, i32) {
    %c0_i32 = arith.constant 0 : i32
    %c0_i32_0 = arith.constant 0 : i32
    %c0_i32_1 = arith.constant 0 : i32
    return %c0_i32, %c0_i32_0 : i32, i32
  }
  func.func @transform_9(%arg0: i32) -> (i32, i32) {
    %c0_i32 = arith.constant 0 : i32
    %c0_i32_0 = arith.constant 0 : i32
    %c0_i32_1 = arith.constant 0 : i32
    return %c0_i32, %c0_i32_0 : i32, i32
  }
  func.func @transform_10(%arg0: i32) -> (i32, i32) {
    %c0_i32 = arith.constant 0 : i32
    %c0_i32_0 = arith.constant 0 : i32
    %c0_i32_1 = arith.constant 0 : i32
    return %c0_i32, %c0_i32_0 : i32, i32
  }
  func.func @transform_11(%arg0: i32) -> (i32, i32) {
    %c0_i32 = arith.constant 0 : i32
    %c0_i32_0 = arith.constant 0 : i32
    %c0_i32_1 = arith.constant 0 : i32
    return %c0_i32, %c0_i32_0 : i32, i32
  }
  func.func @transform_12(%arg0: i32) -> (i32, i32) {
    %c0_i32 = arith.constant 0 : i32
    %c0_i32_0 = arith.constant 0 : i32
    %c0_i32_1 = arith.constant 0 : i32
    return %c0_i32, %c0_i32_0 : i32, i32
  }
  func.func @transform_13(%arg0: i32) -> (i32, i32, i32) {
    %c0_i32 = arith.constant 0 : i32
    %c0_i32_0 = arith.constant 0 : i32
    %c0_i32_1 = arith.constant 0 : i32
    return %arg0, %c0_i32, %c0_i32_0 : i32, i32, i32
  }
}

module attributes {stable_mosaic.version = 11 : i64} {
  func.func @_linear_kernel(%arg0: i32, %arg1: memref<8x192xf32, #tpu.memory_space<vmem>>, %arg2: memref<192x64xbf16, #tpu.memory_space<vmem>>, %arg3: memref<1x64xf32, #tpu.memory_space<vmem>>, %arg4: memref<8x64xf32, #tpu.memory_space<vmem>>) attributes {dimension_semantics = [#tpu.dimension_semantics<parallel>], iteration_bounds = array<i64: 1>, scalar_prefetch = 0 : i64, scratch_operands = 0 : i64, tpu.core_type = #tpu.core_type<tc>, window_params = [{transform_indices = @transform_0, window_bounds = array<i64: 8, 192>}, {pipeline_mode = #tpu.pipeline_mode<synchronous>, transform_indices = @transform_1, window_bounds = array<i64: 192, 64>}, {pipeline_mode = #tpu.pipeline_mode<synchronous>, transform_indices = @transform_2, window_bounds = array<i64: 1, 64>}, {transform_indices = @transform_3, window_bounds = array<i64: 8, 64>}]} {
    %c0 = arith.constant 0 : index
    %c0_0 = arith.constant 0 : index
    %0 = vector.load %arg1[%c0, %c0_0] : memref<8x192xf32, #tpu.memory_space<vmem>>, vector<8x192xf32>
    %c0_1 = arith.constant 0 : index
    %c0_2 = arith.constant 0 : index
    %1 = vector.load %arg2[%c0_1, %c0_2] : memref<192x64xbf16, #tpu.memory_space<vmem>>, vector<192x64xbf16>
    %2 = arith.truncf %0 : vector<8x192xf32> to vector<8x192xbf16>
    %cst = arith.constant dense<0.000000e+00> : vector<8x64xf32>
    %3 = tpu.matmul %2, %1, %cst {dimension_numbers = #tpu.dot_dimension_numbers<[1], [0], [0], [1], [0, 0, 1, 1], [], []>} : vector<8x192xbf16>, vector<192x64xbf16>, vector<8x64xf32> -> vector<8x64xf32>
    %c0_3 = arith.constant 0 : index
    %c0_4 = arith.constant 0 : index
    %4 = vector.load %arg3[%c0_3, %c0_4] : memref<1x64xf32, #tpu.memory_space<vmem>>, vector<1x64xf32>
    %5 = vector.broadcast %4 : vector<1x64xf32> to vector<8x64xf32>
    %6 = arith.addf %3, %5 : vector<8x64xf32>
    %c0_5 = arith.constant 0 : index
    %c0_6 = arith.constant 0 : index
    %7 = vector.load %arg4[%c0_5, %c0_6] : memref<8x64xf32, #tpu.memory_space<vmem>>, vector<8x64xf32>
    tpu.vector_store %arg4[%c0_5, %c0_6], %6 {strides = array<i32>} : memref<8x64xf32, #tpu.memory_space<vmem>>, vector<8x64xf32>,
    return
  }
  func.func @transform_0(%arg0: i32) -> (i32, i32) {
    %c0_i32 = arith.constant 0 : i32
    %c0_i32_0 = arith.constant 0 : i32
    return %arg0, %c0_i32 : i32, i32
  }
  func.func @transform_1(%arg0: i32) -> (i32, i32) {
    %c0_i32 = arith.constant 0 : i32
    %c0_i32_0 = arith.constant 0 : i32
    %c0_i32_1 = arith.constant 0 : i32
    return %c0_i32, %c0_i32_0 : i32, i32
  }
  func.func @transform_2(%arg0: i32) -> (i32, i32) {
    %c0_i32 = arith.constant 0 : i32
    %c0_i32_0 = arith.constant 0 : i32
    %c0_i32_1 = arith.constant 0 : i32
    return %c0_i32, %c0_i32_0 : i32, i32
  }
  func.func @transform_3(%arg0: i32) -> (i32, i32) {
    %c0_i32 = arith.constant 0 : i32
    %c0_i32_0 = arith.constant 0 : i32
    return %arg0, %c0_i32 : i32, i32
  }
}

module attributes {stable_mosaic.version = 11 : i64} {
  func.func @_block_kernel(%arg0: i32, %arg1: memref<1x5x64xf32, #tpu.memory_space<vmem>>, %arg2: memref<1x64xf32, #tpu.memory_space<vmem>>, %arg3: memref<1x64xf32, #tpu.memory_space<vmem>>, %arg4: memref<64x192xbf16, #tpu.memory_space<vmem>>, %arg5: memref<1x192xf32, #tpu.memory_space<vmem>>, %arg6: memref<64x64xf32, #tpu.memory_space<vmem>>, %arg7: memref<1x64xf32, #tpu.memory_space<vmem>>, %arg8: memref<1x64xf32, #tpu.memory_space<vmem>>, %arg9: memref<1x64xf32, #tpu.memory_space<vmem>>, %arg10: memref<64x128xbf16, #tpu.memory_space<vmem>>, %arg11: memref<1x128xf32, #tpu.memory_space<vmem>>, %arg12: memref<128x64xbf16, #tpu.memory_space<vmem>>, %arg13: memref<1x64xf32, #tpu.memory_space<vmem>>, %arg14: memref<1x5x64xf32, #tpu.memory_space<vmem>>) attributes {dimension_semantics = [#tpu.dimension_semantics<parallel>], iteration_bounds = array<i64: 2>, scalar_prefetch = 0 : i64, scratch_operands = 0 : i64, tpu.core_type = #tpu.core_type<tc>, window_params = [{transform_indices = @transform_0, window_bounds = array<i64: 1, 5, 64>}, {pipeline_mode = #tpu.pipeline_mode<synchronous>, transform_indices = @transform_1, window_bounds = array<i64: 1, 64>}, {pipeline_mode = #tpu.pipeline_mode<synchronous>, transform_indices = @transform_2, window_bounds = array<i64: 1, 64>}, {pipeline_mode = #tpu.pipeline_mode<synchronous>, transform_indices = @transform_3, window_bounds = array<i64: 64, 192>}, {pipeline_mode = #tpu.pipeline_mode<synchronous>, transform_indices = @transform_4, window_bounds = array<i64: 1, 192>}, {pipeline_mode = #tpu.pipeline_mode<synchronous>, transform_indices = @transform_5, window_bounds = array<i64: 64, 64>}, {pipeline_mode = #tpu.pipeline_mode<synchronous>, transform_indices = @transform_6, window_bounds = array<i64: 1, 64>}, {pipeline_mode = #tpu.pipeline_mode<synchronous>, transform_indices = @transform_7, window_bounds = array<i64: 1, 64>}, {pipeline_mode = #tpu.pipeline_mode<synchronous>, transform_indices = @transform_8, window_bounds = array<i64: 1, 64>}, {pipeline_mode = #tpu.pipeline_mode<synchronous>, transform_indices = @transform_9, window_bounds = array<i64: 64, 128>}, {pipeline_mode = #tpu.pipeline_mode<synchronous>, transform_indices = @transform_10, window_bounds = array<i64: 1, 128>}, {pipeline_mode = #tpu.pipeline_mode<synchronous>, transform_indices = @transform_11, window_bounds = array<i64: 128, 64>}, {pipeline_mode = #tpu.pipeline_mode<synchronous>, transform_indices = @transform_12, window_bounds = array<i64: 1, 64>}, {transform_indices = @transform_13, window_bounds = array<i64: 1, 5, 64>}]} {
    %c0 = arith.constant 0 : index
    %c0_0 = arith.constant 0 : index
    %c0_1 = arith.constant 0 : index
    %0 = vector.load %arg1[%c0, %c0_0, %c0_1] : memref<1x5x64xf32, #tpu.memory_space<vmem>>, vector<1x5x64xf32>
    %1 = vector.shape_cast %0 : vector<1x5x64xf32> to vector<5x64xf32>
    %c0_2 = arith.constant 0 : index
    %c0_3 = arith.constant 0 : index
    %2 = vector.load %arg2[%c0_2, %c0_3] : memref<1x64xf32, #tpu.memory_space<vmem>>, vector<1x64xf32>
    %c0_4 = arith.constant 0 : index
    %c0_5 = arith.constant 0 : index
    %3 = vector.load %arg3[%c0_4, %c0_5] : memref<1x64xf32, #tpu.memory_space<vmem>>, vector<1x64xf32>
    %cst = arith.constant dense<0.000000e+00> : vector<5xf32>
    %4 = vector.multi_reduction <add>, %1, %cst [1] : vector<5x64xf32> to vector<5xf32>
    %5 = vector.shape_cast %4 : vector<5xf32> to vector<5x1xf32>
    %cst_6 = arith.constant 6.400000e+01 : f32
    %6 = vector.broadcast %cst_6 : f32 to vector<5x1xf32>
    %7 = arith.divf %5, %6 : vector<5x1xf32>
    %8 = vector.broadcast %7 : vector<5x1xf32> to vector<5x64xf32>
    %9 = arith.subf %1, %8 : vector<5x64xf32>
    %10 = arith.mulf %9, %9 : vector<5x64xf32>
    %cst_7 = arith.constant dense<0.000000e+00> : vector<5xf32>
    %11 = vector.multi_reduction <add>, %10, %cst_7 [1] : vector<5x64xf32> to vector<5xf32>
    %12 = vector.shape_cast %11 : vector<5xf32> to vector<5x1xf32>
    %cst_8 = arith.constant 6.400000e+01 : f32
    %13 = vector.broadcast %cst_8 : f32 to vector<5x1xf32>
    %14 = arith.divf %12, %13 : vector<5x1xf32>
    %cst_9 = arith.constant 9.99999974E-6 : f32
    %15 = vector.broadcast %cst_9 : f32 to vector<5x1xf32>
    %16 = arith.addf %14, %15 : vector<5x1xf32>
    %17 = math.rsqrt %16 : vector<5x1xf32>
    %18 = vector.broadcast %17 : vector<5x1xf32> to vector<5x64xf32>
    %19 = arith.mulf %9, %18 : vector<5x64xf32>
    %20 = vector.broadcast %2 : vector<1x64xf32> to vector<5x64xf32>
    %21 = arith.mulf %19, %20 : vector<5x64xf32>
    %22 = vector.broadcast %3 : vector<1x64xf32> to vector<5x64xf32>
    %23 = arith.addf %21, %22 : vector<5x64xf32>
    %c0_10 = arith.constant 0 : index
    %c0_11 = arith.constant 0 : index
    %24 = vector.load %arg4[%c0_10, %c0_11] : memref<64x192xbf16, #tpu.memory_space<vmem>>, vector<64x192xbf16>
    %25 = arith.truncf %23 : vector<5x64xf32> to vector<5x64xbf16>
    %cst_12 = arith.constant dense<0.000000e+00> : vector<5x192xf32>
    %26 = tpu.matmul %25, %24, %cst_12 {dimension_numbers = #tpu.dot_dimension_numbers<[1], [0], [0], [1], [0, 0, 1, 1], [], []>} : vector<5x64xbf16>, vector<64x192xbf16>, vector<5x192xf32> -> vector<5x192xf32>
    %c0_13 = arith.constant 0 : index
    %c0_14 = arith.constant 0 : index
    %27 = vector.load %arg5[%c0_13, %c0_14] : memref<1x192xf32, #tpu.memory_space<vmem>>, vector<1x192xf32>
    %28 = vector.broadcast %27 : vector<1x192xf32> to vector<5x192xf32>
    %29 = arith.addf %26, %28 : vector<5x192xf32>
    %c0_15 = arith.constant 0 : index
    %c0_16 = arith.constant 0 : index
    %30 = vector.load %arg6[%c0_15, %c0_16] : memref<64x64xf32, #tpu.memory_space<vmem>>, vector<64x64xf32>
    %cst_17 = arith.constant 0.000000e+00 : f32
    %31 = vector.broadcast %cst_17 : f32 to vector<5x64xf32>
    %32 = vector.extract_strided_slice %29 {offsets = [0, 0], sizes = [5, 8], strides = [1, 1]} : vector<5x192xf32> to vector<5x8xf32>
    %cst_18 = arith.constant 0.353553385 : f32
    %33 = vector.broadcast %cst_18 : f32 to vector<5x8xf32>
    %34 = arith.mulf %32, %33 : vector<5x8xf32>
    %35 = arith.truncf %34 : vector<5x8xf32> to vector<5x8xbf16>
    %36 = vector.extract_strided_slice %29 {offsets = [0, 64], sizes = [5, 8], strides = [1, 1]} : vector<5x192xf32> to vector<5x8xf32>
    %37 = arith.truncf %36 : vector<5x8xf32> to vector<5x8xbf16>
    %38 = vector.extract_strided_slice %29 {offsets = [0, 128], sizes = [5, 8], strides = [1, 1]} : vector<5x192xf32> to vector<5x8xf32>
    %39 = arith.truncf %38 : vector<5x8xf32> to vector<5x8xbf16>
    %cst_19 = arith.constant dense<0.000000e+00> : vector<5x5xf32>
    %40 = tpu.matmul %35, %37, %cst_19 {dimension_numbers = #tpu.dot_dimension_numbers<[1], [1], [0], [0], [0, 0, 1, 0], [], []>} : vector<5x8xbf16>, vector<5x8xbf16>, vector<5x5xf32> -> vector<5x5xf32>
    %cst_20 = arith.constant dense<0xFF800000> : vector<5xf32>
    %41 = vector.multi_reduction <maximumf>, %40, %cst_20 [1] : vector<5x5xf32> to vector<5xf32>
    %42 = vector.shape_cast %41 : vector<5xf32> to vector<5x1xf32>
    %43 = vector.broadcast %42 : vector<5x1xf32> to vector<5x5xf32>
    %44 = arith.subf %40, %43 : vector<5x5xf32>
    %45 = math.exp %44 : vector<5x5xf32>
    %cst_21 = arith.constant dense<0.000000e+00> : vector<5xf32>
    %46 = vector.multi_reduction <add>, %45, %cst_21 [1] : vector<5x5xf32> to vector<5xf32>
    %47 = vector.shape_cast %46 : vector<5xf32> to vector<5x1xf32>
    %48 = tpu.reciprocal %47 {approx = true} : vector<5x1xf32> -> vector<5x1xf32>
    %49 = vector.broadcast %48 : vector<5x1xf32> to vector<5x5xf32>
    %50 = arith.mulf %45, %49 : vector<5x5xf32>
    %51 = arith.truncf %50 : vector<5x5xf32> to vector<5x5xbf16>
    %cst_22 = arith.constant dense<0.000000e+00> : vector<5x8xf32>
    %52 = tpu.matmul %51, %39, %cst_22 {dimension_numbers = #tpu.dot_dimension_numbers<[1], [0], [0], [1], [0, 0, 1, 1], [], []>} : vector<5x5xbf16>, vector<5x8xbf16>, vector<5x8xf32> -> vector<5x8xf32>
    %53 = arith.truncf %52 : vector<5x8xf32> to vector<5x8xbf16>
    %54 = vector.extract_strided_slice %30 {offsets = [0, 0], sizes = [8, 64], strides = [1, 1]} : vector<64x64xf32> to vector<8x64xf32>
    %55 = arith.truncf %54 : vector<8x64xf32> to vector<8x64xbf16>
    %cst_23 = arith.constant dense<0.000000e+00> : vector<5x64xf32>
    %56 = tpu.matmul %53, %55, %cst_23 {dimension_numbers = #tpu.dot_dimension_numbers<[1], [0], [0], [1], [0, 0, 1, 1], [], []>} : vector<5x8xbf16>, vector<8x64xbf16>, vector<5x64xf32> -> vector<5x64xf32>
    %57 = arith.addf %31, %56 : vector<5x64xf32>
    %58 = vector.extract_strided_slice %29 {offsets = [0, 8], sizes = [5, 8], strides = [1, 1]} : vector<5x192xf32> to vector<5x8xf32>
    %cst_24 = arith.constant 0.353553385 : f32
    %59 = vector.broadcast %cst_24 : f32 to vector<5x8xf32>
    %60 = arith.mulf %58, %59 : vector<5x8xf32>
    %61 = arith.truncf %60 : vector<5x8xf32> to vector<5x8xbf16>
    %62 = vector.extract_strided_slice %29 {offsets = [0, 72], sizes = [5, 8], strides = [1, 1]} : vector<5x192xf32> to vector<5x8xf32>
    %63 = arith.truncf %62 : vector<5x8xf32> to vector<5x8xbf16>
    %64 = vector.extract_strided_slice %29 {offsets = [0, 136], sizes = [5, 8], strides = [1, 1]} : vector<5x192xf32> to vector<5x8xf32>
    %65 = arith.truncf %64 : vector<5x8xf32> to vector<5x8xbf16>
    %cst_25 = arith.constant dense<0.000000e+00> : vector<5x5xf32>
    %66 = tpu.matmul %61, %63, %cst_25 {dimension_numbers = #tpu.dot_dimension_numbers<[1], [1], [0], [0], [0, 0, 1, 0], [], []>} : vector<5x8xbf16>, vector<5x8xbf16>, vector<5x5xf32> -> vector<5x5xf32>
    %cst_26 = arith.constant dense<0xFF800000> : vector<5xf32>
    %67 = vector.multi_reduction <maximumf>, %66, %cst_26 [1] : vector<5x5xf32> to vector<5xf32>
    %68 = vector.shape_cast %67 : vector<5xf32> to vector<5x1xf32>
    %69 = vector.broadcast %68 : vector<5x1xf32> to vector<5x5xf32>
    %70 = arith.subf %66, %69 : vector<5x5xf32>
    %71 = math.exp %70 : vector<5x5xf32>
    %cst_27 = arith.constant dense<0.000000e+00> : vector<5xf32>
    %72 = vector.multi_reduction <add>, %71, %cst_27 [1] : vector<5x5xf32> to vector<5xf32>
    %73 = vector.shape_cast %72 : vector<5xf32> to vector<5x1xf32>
    %74 = tpu.reciprocal %73 {approx = true} : vector<5x1xf32> -> vector<5x1xf32>
    %75 = vector.broadcast %74 : vector<5x1xf32> to vector<5x5xf32>
    %76 = arith.mulf %71, %75 : vector<5x5xf32>
    %77 = arith.truncf %76 : vector<5x5xf32> to vector<5x5xbf16>
    %cst_28 = arith.constant dense<0.000000e+00> : vector<5x8xf32>
    %78 = tpu.matmul %77, %65, %cst_28 {dimension_numbers = #tpu.dot_dimension_numbers<[1], [0], [0], [1], [0, 0, 1, 1], [], []>} : vector<5x5xbf16>, vector<5x8xbf16>, vector<5x8xf32> -> vector<5x8xf32>
    %79 = arith.truncf %78 : vector<5x8xf32> to vector<5x8xbf16>
    %80 = vector.extract_strided_slice %30 {offsets = [8, 0], sizes = [8, 64], strides = [1, 1]} : vector<64x64xf32> to vector<8x64xf32>
    %81 = arith.truncf %80 : vector<8x64xf32> to vector<8x64xbf16>
    %cst_29 = arith.constant dense<0.000000e+00> : vector<5x64xf32>
    %82 = tpu.matmul %79, %81, %cst_29 {dimension_numbers = #tpu.dot_dimension_numbers<[1], [0], [0], [1], [0, 0, 1, 1], [], []>} : vector<5x8xbf16>, vector<8x64xbf16>, vector<5x64xf32> -> vector<5x64xf32>
    %83 = arith.addf %57, %82 : vector<5x64xf32>
    %84 = vector.extract_strided_slice %29 {offsets = [0, 16], sizes = [5, 8], strides = [1, 1]} : vector<5x192xf32> to vector<5x8xf32>
    %cst_30 = arith.constant 0.353553385 : f32
    %85 = vector.broadcast %cst_30 : f32 to vector<5x8xf32>
    %86 = arith.mulf %84, %85 : vector<5x8xf32>
    %87 = arith.truncf %86 : vector<5x8xf32> to vector<5x8xbf16>
    %88 = vector.extract_strided_slice %29 {offsets = [0, 80], sizes = [5, 8], strides = [1, 1]} : vector<5x192xf32> to vector<5x8xf32>
    %89 = arith.truncf %88 : vector<5x8xf32> to vector<5x8xbf16>
    %90 = vector.extract_strided_slice %29 {offsets = [0, 144], sizes = [5, 8], strides = [1, 1]} : vector<5x192xf32> to vector<5x8xf32>
    %91 = arith.truncf %90 : vector<5x8xf32> to vector<5x8xbf16>
    %cst_31 = arith.constant dense<0.000000e+00> : vector<5x5xf32>
    %92 = tpu.matmul %87, %89, %cst_31 {dimension_numbers = #tpu.dot_dimension_numbers<[1], [1], [0], [0], [0, 0, 1, 0], [], []>} : vector<5x8xbf16>, vector<5x8xbf16>, vector<5x5xf32> -> vector<5x5xf32>
    %cst_32 = arith.constant dense<0xFF800000> : vector<5xf32>
    %93 = vector.multi_reduction <maximumf>, %92, %cst_32 [1] : vector<5x5xf32> to vector<5xf32>
    %94 = vector.shape_cast %93 : vector<5xf32> to vector<5x1xf32>
    %95 = vector.broadcast %94 : vector<5x1xf32> to vector<5x5xf32>
    %96 = arith.subf %92, %95 : vector<5x5xf32>
    %97 = math.exp %96 : vector<5x5xf32>
    %cst_33 = arith.constant dense<0.000000e+00> : vector<5xf32>
    %98 = vector.multi_reduction <add>, %97, %cst_33 [1] : vector<5x5xf32> to vector<5xf32>
    %99 = vector.shape_cast %98 : vector<5xf32> to vector<5x1xf32>
    %100 = tpu.reciprocal %99 {approx = true} : vector<5x1xf32> -> vector<5x1xf32>
    %101 = vector.broadcast %100 : vector<5x1xf32> to vector<5x5xf32>
    %102 = arith.mulf %97, %101 : vector<5x5xf32>
    %103 = arith.truncf %102 : vector<5x5xf32> to vector<5x5xbf16>
    %cst_34 = arith.constant dense<0.000000e+00> : vector<5x8xf32>
    %104 = tpu.matmul %103, %91, %cst_34 {dimension_numbers = #tpu.dot_dimension_numbers<[1], [0], [0], [1], [0, 0, 1, 1], [], []>} : vector<5x5xbf16>, vector<5x8xbf16>, vector<5x8xf32> -> vector<5x8xf32>
    %105 = arith.truncf %104 : vector<5x8xf32> to vector<5x8xbf16>
    %106 = vector.extract_strided_slice %30 {offsets = [16, 0], sizes = [8, 64], strides = [1, 1]} : vector<64x64xf32> to vector<8x64xf32>
    %107 = arith.truncf %106 : vector<8x64xf32> to vector<8x64xbf16>
    %cst_35 = arith.constant dense<0.000000e+00> : vector<5x64xf32>
    %108 = tpu.matmul %105, %107, %cst_35 {dimension_numbers = #tpu.dot_dimension_numbers<[1], [0], [0], [1], [0, 0, 1, 1], [], []>} : vector<5x8xbf16>, vector<8x64xbf16>, vector<5x64xf32> -> vector<5x64xf32>
    %109 = arith.addf %83, %108 : vector<5x64xf32>
    %110 = vector.extract_strided_slice %29 {offsets = [0, 24], sizes = [5, 8], strides = [1, 1]} : vector<5x192xf32> to vector<5x8xf32>
    %cst_36 = arith.constant 0.353553385 : f32
    %111 = vector.broadcast %cst_36 : f32 to vector<5x8xf32>
    %112 = arith.mulf %110, %111 : vector<5x8xf32>
    %113 = arith.truncf %112 : vector<5x8xf32> to vector<5x8xbf16>
    %114 = vector.extract_strided_slice %29 {offsets = [0, 88], sizes = [5, 8], strides = [1, 1]} : vector<5x192xf32> to vector<5x8xf32>
    %115 = arith.truncf %114 : vector<5x8xf32> to vector<5x8xbf16>
    %116 = vector.extract_strided_slice %29 {offsets = [0, 152], sizes = [5, 8], strides = [1, 1]} : vector<5x192xf32> to vector<5x8xf32>
    %117 = arith.truncf %116 : vector<5x8xf32> to vector<5x8xbf16>
    %cst_37 = arith.constant dense<0.000000e+00> : vector<5x5xf32>
    %118 = tpu.matmul %113, %115, %cst_37 {dimension_numbers = #tpu.dot_dimension_numbers<[1], [1], [0], [0], [0, 0, 1, 0], [], []>} : vector<5x8xbf16>, vector<5x8xbf16>, vector<5x5xf32> -> vector<5x5xf32>
    %cst_38 = arith.constant dense<0xFF800000> : vector<5xf32>
    %119 = vector.multi_reduction <maximumf>, %118, %cst_38 [1] : vector<5x5xf32> to vector<5xf32>
    %120 = vector.shape_cast %119 : vector<5xf32> to vector<5x1xf32>
    %121 = vector.broadcast %120 : vector<5x1xf32> to vector<5x5xf32>
    %122 = arith.subf %118, %121 : vector<5x5xf32>
    %123 = math.exp %122 : vector<5x5xf32>
    %cst_39 = arith.constant dense<0.000000e+00> : vector<5xf32>
    %124 = vector.multi_reduction <add>, %123, %cst_39 [1] : vector<5x5xf32> to vector<5xf32>
    %125 = vector.shape_cast %124 : vector<5xf32> to vector<5x1xf32>
    %126 = tpu.reciprocal %125 {approx = true} : vector<5x1xf32> -> vector<5x1xf32>
    %127 = vector.broadcast %126 : vector<5x1xf32> to vector<5x5xf32>
    %128 = arith.mulf %123, %127 : vector<5x5xf32>
    %129 = arith.truncf %128 : vector<5x5xf32> to vector<5x5xbf16>
    %cst_40 = arith.constant dense<0.000000e+00> : vector<5x8xf32>
    %130 = tpu.matmul %129, %117, %cst_40 {dimension_numbers = #tpu.dot_dimension_numbers<[1], [0], [0], [1], [0, 0, 1, 1], [], []>} : vector<5x5xbf16>, vector<5x8xbf16>, vector<5x8xf32> -> vector<5x8xf32>
    %131 = arith.truncf %130 : vector<5x8xf32> to vector<5x8xbf16>
    %132 = vector.extract_strided_slice %30 {offsets = [24, 0], sizes = [8, 64], strides = [1, 1]} : vector<64x64xf32> to vector<8x64xf32>
    %133 = arith.truncf %132 : vector<8x64xf32> to vector<8x64xbf16>
    %cst_41 = arith.constant dense<0.000000e+00> : vector<5x64xf32>
    %134 = tpu.matmul %131, %133, %cst_41 {dimension_numbers = #tpu.dot_dimension_numbers<[1], [0], [0], [1], [0, 0, 1, 1], [], []>} : vector<5x8xbf16>, vector<8x64xbf16>, vector<5x64xf32> -> vector<5x64xf32>
    %135 = arith.addf %109, %134 : vector<5x64xf32>
    %136 = vector.extract_strided_slice %29 {offsets = [0, 32], sizes = [5, 8], strides = [1, 1]} : vector<5x192xf32> to vector<5x8xf32>
    %cst_42 = arith.constant 0.353553385 : f32
    %137 = vector.broadcast %cst_42 : f32 to vector<5x8xf32>
    %138 = arith.mulf %136, %137 : vector<5x8xf32>
    %139 = arith.truncf %138 : vector<5x8xf32> to vector<5x8xbf16>
    %140 = vector.extract_strided_slice %29 {offsets = [0, 96], sizes = [5, 8], strides = [1, 1]} : vector<5x192xf32> to vector<5x8xf32>
    %141 = arith.truncf %140 : vector<5x8xf32> to vector<5x8xbf16>
    %142 = vector.extract_strided_slice %29 {offsets = [0, 160], sizes = [5, 8], strides = [1, 1]} : vector<5x192xf32> to vector<5x8xf32>
    %143 = arith.truncf %142 : vector<5x8xf32> to vector<5x8xbf16>
    %cst_43 = arith.constant dense<0.000000e+00> : vector<5x5xf32>
    %144 = tpu.matmul %139, %141, %cst_43 {dimension_numbers = #tpu.dot_dimension_numbers<[1], [1], [0], [0], [0, 0, 1, 0], [], []>} : vector<5x8xbf16>, vector<5x8xbf16>, vector<5x5xf32> -> vector<5x5xf32>
    %cst_44 = arith.constant dense<0xFF800000> : vector<5xf32>
    %145 = vector.multi_reduction <maximumf>, %144, %cst_44 [1] : vector<5x5xf32> to vector<5xf32>
    %146 = vector.shape_cast %145 : vector<5xf32> to vector<5x1xf32>
    %147 = vector.broadcast %146 : vector<5x1xf32> to vector<5x5xf32>
    %148 = arith.subf %144, %147 : vector<5x5xf32>
    %149 = math.exp %148 : vector<5x5xf32>
    %cst_45 = arith.constant dense<0.000000e+00> : vector<5xf32>
    %150 = vector.multi_reduction <add>, %149, %cst_45 [1] : vector<5x5xf32> to vector<5xf32>
    %151 = vector.shape_cast %150 : vector<5xf32> to vector<5x1xf32>
    %152 = tpu.reciprocal %151 {approx = true} : vector<5x1xf32> -> vector<5x1xf32>
    %153 = vector.broadcast %152 : vector<5x1xf32> to vector<5x5xf32>
    %154 = arith.mulf %149, %153 : vector<5x5xf32>
    %155 = arith.truncf %154 : vector<5x5xf32> to vector<5x5xbf16>
    %cst_46 = arith.constant dense<0.000000e+00> : vector<5x8xf32>
    %156 = tpu.matmul %155, %143, %cst_46 {dimension_numbers = #tpu.dot_dimension_numbers<[1], [0], [0], [1], [0, 0, 1, 1], [], []>} : vector<5x5xbf16>, vector<5x8xbf16>, vector<5x8xf32> -> vector<5x8xf32>
    %157 = arith.truncf %156 : vector<5x8xf32> to vector<5x8xbf16>
    %158 = vector.extract_strided_slice %30 {offsets = [32, 0], sizes = [8, 64], strides = [1, 1]} : vector<64x64xf32> to vector<8x64xf32>
    %159 = arith.truncf %158 : vector<8x64xf32> to vector<8x64xbf16>
    %cst_47 = arith.constant dense<0.000000e+00> : vector<5x64xf32>
    %160 = tpu.matmul %157, %159, %cst_47 {dimension_numbers = #tpu.dot_dimension_numbers<[1], [0], [0], [1], [0, 0, 1, 1], [], []>} : vector<5x8xbf16>, vector<8x64xbf16>, vector<5x64xf32> -> vector<5x64xf32>
    %161 = arith.addf %135, %160 : vector<5x64xf32>
    %162 = vector.extract_strided_slice %29 {offsets = [0, 40], sizes = [5, 8], strides = [1, 1]} : vector<5x192xf32> to vector<5x8xf32>
    %cst_48 = arith.constant 0.353553385 : f32
    %163 = vector.broadcast %cst_48 : f32 to vector<5x8xf32>
    %164 = arith.mulf %162, %163 : vector<5x8xf32>
    %165 = arith.truncf %164 : vector<5x8xf32> to vector<5x8xbf16>
    %166 = vector.extract_strided_slice %29 {offsets = [0, 104], sizes = [5, 8], strides = [1, 1]} : vector<5x192xf32> to vector<5x8xf32>
    %167 = arith.truncf %166 : vector<5x8xf32> to vector<5x8xbf16>
    %168 = vector.extract_strided_slice %29 {offsets = [0, 168], sizes = [5, 8], strides = [1, 1]} : vector<5x192xf32> to vector<5x8xf32>
    %169 = arith.truncf %168 : vector<5x8xf32> to vector<5x8xbf16>
    %cst_49 = arith.constant dense<0.000000e+00> : vector<5x5xf32>
    %170 = tpu.matmul %165, %167, %cst_49 {dimension_numbers = #tpu.dot_dimension_numbers<[1], [1], [0], [0], [0, 0, 1, 0], [], []>} : vector<5x8xbf16>, vector<5x8xbf16>, vector<5x5xf32> -> vector<5x5xf32>
    %cst_50 = arith.constant dense<0xFF800000> : vector<5xf32>
    %171 = vector.multi_reduction <maximumf>, %170, %cst_50 [1] : vector<5x5xf32> to vector<5xf32>
    %172 = vector.shape_cast %171 : vector<5xf32> to vector<5x1xf32>
    %173 = vector.broadcast %172 : vector<5x1xf32> to vector<5x5xf32>
    %174 = arith.subf %170, %173 : vector<5x5xf32>
    %175 = math.exp %174 : vector<5x5xf32>
    %cst_51 = arith.constant dense<0.000000e+00> : vector<5xf32>
    %176 = vector.multi_reduction <add>, %175, %cst_51 [1] : vector<5x5xf32> to vector<5xf32>
    %177 = vector.shape_cast %176 : vector<5xf32> to vector<5x1xf32>
    %178 = tpu.reciprocal %177 {approx = true} : vector<5x1xf32> -> vector<5x1xf32>
    %179 = vector.broadcast %178 : vector<5x1xf32> to vector<5x5xf32>
    %180 = arith.mulf %175, %179 : vector<5x5xf32>
    %181 = arith.truncf %180 : vector<5x5xf32> to vector<5x5xbf16>
    %cst_52 = arith.constant dense<0.000000e+00> : vector<5x8xf32>
    %182 = tpu.matmul %181, %169, %cst_52 {dimension_numbers = #tpu.dot_dimension_numbers<[1], [0], [0], [1], [0, 0, 1, 1], [], []>} : vector<5x5xbf16>, vector<5x8xbf16>, vector<5x8xf32> -> vector<5x8xf32>
    %183 = arith.truncf %182 : vector<5x8xf32> to vector<5x8xbf16>
    %184 = vector.extract_strided_slice %30 {offsets = [40, 0], sizes = [8, 64], strides = [1, 1]} : vector<64x64xf32> to vector<8x64xf32>
    %185 = arith.truncf %184 : vector<8x64xf32> to vector<8x64xbf16>
    %cst_53 = arith.constant dense<0.000000e+00> : vector<5x64xf32>
    %186 = tpu.matmul %183, %185, %cst_53 {dimension_numbers = #tpu.dot_dimension_numbers<[1], [0], [0], [1], [0, 0, 1, 1], [], []>} : vector<5x8xbf16>, vector<8x64xbf16>, vector<5x64xf32> -> vector<5x64xf32>
    %187 = arith.addf %161, %186 : vector<5x64xf32>
    %188 = vector.extract_strided_slice %29 {offsets = [0, 48], sizes = [5, 8], strides = [1, 1]} : vector<5x192xf32> to vector<5x8xf32>
    %cst_54 = arith.constant 0.353553385 : f32
    %189 = vector.broadcast %cst_54 : f32 to vector<5x8xf32>
    %190 = arith.mulf %188, %189 : vector<5x8xf32>
    %191 = arith.truncf %190 : vector<5x8xf32> to vector<5x8xbf16>
    %192 = vector.extract_strided_slice %29 {offsets = [0, 112], sizes = [5, 8], strides = [1, 1]} : vector<5x192xf32> to vector<5x8xf32>
    %193 = arith.truncf %192 : vector<5x8xf32> to vector<5x8xbf16>
    %194 = vector.extract_strided_slice %29 {offsets = [0, 176], sizes = [5, 8], strides = [1, 1]} : vector<5x192xf32> to vector<5x8xf32>
    %195 = arith.truncf %194 : vector<5x8xf32> to vector<5x8xbf16>
    %cst_55 = arith.constant dense<0.000000e+00> : vector<5x5xf32>
    %196 = tpu.matmul %191, %193, %cst_55 {dimension_numbers = #tpu.dot_dimension_numbers<[1], [1], [0], [0], [0, 0, 1, 0], [], []>} : vector<5x8xbf16>, vector<5x8xbf16>, vector<5x5xf32> -> vector<5x5xf32>
    %cst_56 = arith.constant dense<0xFF800000> : vector<5xf32>
    %197 = vector.multi_reduction <maximumf>, %196, %cst_56 [1] : vector<5x5xf32> to vector<5xf32>
    %198 = vector.shape_cast %197 : vector<5xf32> to vector<5x1xf32>
    %199 = vector.broadcast %198 : vector<5x1xf32> to vector<5x5xf32>
    %200 = arith.subf %196, %199 : vector<5x5xf32>
    %201 = math.exp %200 : vector<5x5xf32>
    %cst_57 = arith.constant dense<0.000000e+00> : vector<5xf32>
    %202 = vector.multi_reduction <add>, %201, %cst_57 [1] : vector<5x5xf32> to vector<5xf32>
    %203 = vector.shape_cast %202 : vector<5xf32> to vector<5x1xf32>
    %204 = tpu.reciprocal %203 {approx = true} : vector<5x1xf32> -> vector<5x1xf32>
    %205 = vector.broadcast %204 : vector<5x1xf32> to vector<5x5xf32>
    %206 = arith.mulf %201, %205 : vector<5x5xf32>
    %207 = arith.truncf %206 : vector<5x5xf32> to vector<5x5xbf16>
    %cst_58 = arith.constant dense<0.000000e+00> : vector<5x8xf32>
    %208 = tpu.matmul %207, %195, %cst_58 {dimension_numbers = #tpu.dot_dimension_numbers<[1], [0], [0], [1], [0, 0, 1, 1], [], []>} : vector<5x5xbf16>, vector<5x8xbf16>, vector<5x8xf32> -> vector<5x8xf32>
    %209 = arith.truncf %208 : vector<5x8xf32> to vector<5x8xbf16>
    %210 = vector.extract_strided_slice %30 {offsets = [48, 0], sizes = [8, 64], strides = [1, 1]} : vector<64x64xf32> to vector<8x64xf32>
    %211 = arith.truncf %210 : vector<8x64xf32> to vector<8x64xbf16>
    %cst_59 = arith.constant dense<0.000000e+00> : vector<5x64xf32>
    %212 = tpu.matmul %209, %211, %cst_59 {dimension_numbers = #tpu.dot_dimension_numbers<[1], [0], [0], [1], [0, 0, 1, 1], [], []>} : vector<5x8xbf16>, vector<8x64xbf16>, vector<5x64xf32> -> vector<5x64xf32>
    %213 = arith.addf %187, %212 : vector<5x64xf32>
    %214 = vector.extract_strided_slice %29 {offsets = [0, 56], sizes = [5, 8], strides = [1, 1]} : vector<5x192xf32> to vector<5x8xf32>
    %cst_60 = arith.constant 0.353553385 : f32
    %215 = vector.broadcast %cst_60 : f32 to vector<5x8xf32>
    %216 = arith.mulf %214, %215 : vector<5x8xf32>
    %217 = arith.truncf %216 : vector<5x8xf32> to vector<5x8xbf16>
    %218 = vector.extract_strided_slice %29 {offsets = [0, 120], sizes = [5, 8], strides = [1, 1]} : vector<5x192xf32> to vector<5x8xf32>
    %219 = arith.truncf %218 : vector<5x8xf32> to vector<5x8xbf16>
    %220 = vector.extract_strided_slice %29 {offsets = [0, 184], sizes = [5, 8], strides = [1, 1]} : vector<5x192xf32> to vector<5x8xf32>
    %221 = arith.truncf %220 : vector<5x8xf32> to vector<5x8xbf16>
    %cst_61 = arith.constant dense<0.000000e+00> : vector<5x5xf32>
    %222 = tpu.matmul %217, %219, %cst_61 {dimension_numbers = #tpu.dot_dimension_numbers<[1], [1], [0], [0], [0, 0, 1, 0], [], []>} : vector<5x8xbf16>, vector<5x8xbf16>, vector<5x5xf32> -> vector<5x5xf32>
    %cst_62 = arith.constant dense<0xFF800000> : vector<5xf32>
    %223 = vector.multi_reduction <maximumf>, %222, %cst_62 [1] : vector<5x5xf32> to vector<5xf32>
    %224 = vector.shape_cast %223 : vector<5xf32> to vector<5x1xf32>
    %225 = vector.broadcast %224 : vector<5x1xf32> to vector<5x5xf32>
    %226 = arith.subf %222, %225 : vector<5x5xf32>
    %227 = math.exp %226 : vector<5x5xf32>
    %cst_63 = arith.constant dense<0.000000e+00> : vector<5xf32>
    %228 = vector.multi_reduction <add>, %227, %cst_63 [1] : vector<5x5xf32> to vector<5xf32>
    %229 = vector.shape_cast %228 : vector<5xf32> to vector<5x1xf32>
    %230 = tpu.reciprocal %229 {approx = true} : vector<5x1xf32> -> vector<5x1xf32>
    %231 = vector.broadcast %230 : vector<5x1xf32> to vector<5x5xf32>
    %232 = arith.mulf %227, %231 : vector<5x5xf32>
    %233 = arith.truncf %232 : vector<5x5xf32> to vector<5x5xbf16>
    %cst_64 = arith.constant dense<0.000000e+00> : vector<5x8xf32>
    %234 = tpu.matmul %233, %221, %cst_64 {dimension_numbers = #tpu.dot_dimension_numbers<[1], [0], [0], [1], [0, 0, 1, 1], [], []>} : vector<5x5xbf16>, vector<5x8xbf16>, vector<5x8xf32> -> vector<5x8xf32>
    %235 = arith.truncf %234 : vector<5x8xf32> to vector<5x8xbf16>
    %236 = vector.extract_strided_slice %30 {offsets = [56, 0], sizes = [8, 64], strides = [1, 1]} : vector<64x64xf32> to vector<8x64xf32>
    %237 = arith.truncf %236 : vector<8x64xf32> to vector<8x64xbf16>
    %cst_65 = arith.constant dense<0.000000e+00> : vector<5x64xf32>
    %238 = tpu.matmul %235, %237, %cst_65 {dimension_numbers = #tpu.dot_dimension_numbers<[1], [0], [0], [1], [0, 0, 1, 1], [], []>} : vector<5x8xbf16>, vector<8x64xbf16>, vector<5x64xf32> -> vector<5x64xf32>
    %239 = arith.addf %213, %238 : vector<5x64xf32>
    %240 = arith.addf %1, %239 : vector<5x64xf32>
    %c0_66 = arith.constant 0 : index
    %c0_67 = arith.constant 0 : index
    %241 = vector.load %arg7[%c0_66, %c0_67] : memref<1x64xf32, #tpu.memory_space<vmem>>, vector<1x64xf32>
    %242 = vector.broadcast %241 : vector<1x64xf32> to vector<5x64xf32>
    %243 = arith.addf %240, %242 : vector<5x64xf32>
    %c0_68 = arith.constant 0 : index
    %c0_69 = arith.constant 0 : index
    %244 = vector.load %arg8[%c0_68, %c0_69] : memref<1x64xf32, #tpu.memory_space<vmem>>, vector<1x64xf32>
    %c0_70 = arith.constant 0 : index
    %c0_71 = arith.constant 0 : index
    %245 = vector.load %arg9[%c0_70, %c0_71] : memref<1x64xf32, #tpu.memory_space<vmem>>, vector<1x64xf32>
    %cst_72 = arith.constant dense<0.000000e+00> : vector<5xf32>
    %246 = vector.multi_reduction <add>, %243, %cst_72 [1] : vector<5x64xf32> to vector<5xf32>
    %247 = vector.shape_cast %246 : vector<5xf32> to vector<5x1xf32>
    %cst_73 = arith.constant 6.400000e+01 : f32
    %248 = vector.broadcast %cst_73 : f32 to vector<5x1xf32>
    %249 = arith.divf %247, %248 : vector<5x1xf32>
    %250 = vector.broadcast %249 : vector<5x1xf32> to vector<5x64xf32>
    %251 = arith.subf %243, %250 : vector<5x64xf32>
    %252 = arith.mulf %251, %251 : vector<5x64xf32>
    %cst_74 = arith.constant dense<0.000000e+00> : vector<5xf32>
    %253 = vector.multi_reduction <add>, %252, %cst_74 [1] : vector<5x64xf32> to vector<5xf32>
    %254 = vector.shape_cast %253 : vector<5xf32> to vector<5x1xf32>
    %cst_75 = arith.constant 6.400000e+01 : f32
    %255 = vector.broadcast %cst_75 : f32 to vector<5x1xf32>
    %256 = arith.divf %254, %255 : vector<5x1xf32>
    %cst_76 = arith.constant 9.99999974E-6 : f32
    %257 = vector.broadcast %cst_76 : f32 to vector<5x1xf32>
    %258 = arith.addf %256, %257 : vector<5x1xf32>
    %259 = math.rsqrt %258 : vector<5x1xf32>
    %260 = vector.broadcast %259 : vector<5x1xf32> to vector<5x64xf32>
    %261 = arith.mulf %251, %260 : vector<5x64xf32>
    %262 = vector.broadcast %244 : vector<1x64xf32> to vector<5x64xf32>
    %263 = arith.mulf %261, %262 : vector<5x64xf32>
    %264 = vector.broadcast %245 : vector<1x64xf32> to vector<5x64xf32>
    %265 = arith.addf %263, %264 : vector<5x64xf32>
    %c0_77 = arith.constant 0 : index
    %c0_78 = arith.constant 0 : index
    %266 = vector.load %arg10[%c0_77, %c0_78] : memref<64x128xbf16, #tpu.memory_space<vmem>>, vector<64x128xbf16>
    %267 = arith.truncf %265 : vector<5x64xf32> to vector<5x64xbf16>
    %cst_79 = arith.constant dense<0.000000e+00> : vector<5x128xf32>
    %268 = tpu.matmul %267, %266, %cst_79 {dimension_numbers = #tpu.dot_dimension_numbers<[1], [0], [0], [1], [0, 0, 1, 1], [], []>} : vector<5x64xbf16>, vector<64x128xbf16>, vector<5x128xf32> -> vector<5x128xf32>
    %c0_80 = arith.constant 0 : index
    %c0_81 = arith.constant 0 : index
    %269 = vector.load %arg11[%c0_80, %c0_81] : memref<1x128xf32, #tpu.memory_space<vmem>>, vector<1x128xf32>
    %270 = vector.broadcast %269 : vector<1x128xf32> to vector<5x128xf32>
    %271 = arith.addf %268, %270 : vector<5x128xf32>
    %cst_82 = arith.constant 5.000000e-01 : f32
    %272 = vector.broadcast %cst_82 : f32 to vector<5x128xf32>
    %273 = arith.mulf %272, %271 : vector<5x128xf32>
    %cst_83 = arith.constant 0.707106769 : f32
    %274 = vector.broadcast %cst_83 : f32 to vector<5x128xf32>
    %275 = arith.mulf %271, %274 : vector<5x128xf32>
    %276 = math.erf %275 : vector<5x128xf32>
    %cst_84 = arith.constant 1.000000e+00 : f32
    %277 = vector.broadcast %cst_84 : f32 to vector<5x128xf32>
    %278 = arith.addf %277, %276 : vector<5x128xf32>
    %279 = arith.mulf %273, %278 : vector<5x128xf32>
    %c0_85 = arith.constant 0 : index
    %c0_86 = arith.constant 0 : index
    %280 = vector.load %arg12[%c0_85, %c0_86] : memref<128x64xbf16, #tpu.memory_space<vmem>>, vector<128x64xbf16>
    %281 = arith.truncf %279 : vector<5x128xf32> to vector<5x128xbf16>
    %cst_87 = arith.constant dense<0.000000e+00> : vector<5x64xf32>
    %282 = tpu.matmul %281, %280, %cst_87 {dimension_numbers = #tpu.dot_dimension_numbers<[1], [0], [0], [1], [0, 0, 1, 1], [], []>} : vector<5x128xbf16>, vector<128x64xbf16>, vector<5x64xf32> -> vector<5x64xf32>
    %283 = arith.addf %243, %282 : vector<5x64xf32>
    %c0_88 = arith.constant 0 : index
    %c0_89 = arith.constant 0 : index
    %284 = vector.load %arg13[%c0_88, %c0_89] : memref<1x64xf32, #tpu.memory_space<vmem>>, vector<1x64xf32>
    %285 = vector.broadcast %284 : vector<1x64xf32> to vector<5x64xf32>
    %286 = arith.addf %283, %285 : vector<5x64xf32>
    %c0_90 = arith.constant 0 : index
    %c0_91 = arith.constant 0 : index
    %c0_92 = arith.constant 0 : index
    %287 = vector.load %arg14[%c0_90, %c0_91, %c0_92] : memref<1x5x64xf32, #tpu.memory_space<vmem>>, vector<1x5x64xf32>
    %288 = vector.shape_cast %287 : vector<1x5x64xf32> to vector<5x64xf32>
    %289 = vector.shape_cast %286 : vector<5x64xf32> to vector<1x5x64xf32>
    tpu.vector_store %arg14[%c0_90, %c0_91, %c0_92], %289 {strides = array<i32>} : memref<1x5x64xf32, #tpu.memory_space<vmem>>, vector<1x5x64xf32>,
    return
  }
  func.func @transform_0(%arg0: i32) -> (i32, i32, i32) {
    %c0_i32 = arith.constant 0 : i32
    %c0_i32_0 = arith.constant 0 : i32
    %c0_i32_1 = arith.constant 0 : i32
    return %arg0, %c0_i32, %c0_i32_0 : i32, i32, i32
  }
  func.func @transform_1(%arg0: i32) -> (i32, i32) {
    %c0_i32 = arith.constant 0 : i32
    %c0_i32_0 = arith.constant 0 : i32
    %c0_i32_1 = arith.constant 0 : i32
    return %c0_i32, %c0_i32_0 : i32, i32
  }
  func.func @transform_2(%arg0: i32) -> (i32, i32) {
    %c0_i32 = arith.constant 0 : i32
    %c0_i32_0 = arith.constant 0 : i32
    %c0_i32_1 = arith.constant 0 : i32
    return %c0_i32, %c0_i32_0 : i32, i32
  }
  func.func @transform_3(%arg0: i32) -> (i32, i32) {
    %c0_i32 = arith.constant 0 : i32
    %c0_i32_0 = arith.constant 0 : i32
    %c0_i32_1 = arith.constant 0 : i32
    return %c0_i32, %c0_i32_0 : i32, i32
  }
  func.func @transform_4(%arg0: i32) -> (i32, i32) {
    %c0_i32 = arith.constant 0 : i32
    %c0_i32_0 = arith.constant 0 : i32
    %c0_i32_1 = arith.constant 0 : i32
    return %c0_i32, %c0_i32_0 : i32, i32
  }
  func.func @transform_5(%arg0: i32) -> (i32, i32) {
    %c0_i32 = arith.constant 0 : i32
    %c0_i32_0 = arith.constant 0 : i32
    %c0_i32_1 = arith.constant 0 : i32
    return %c0_i32, %c0_i32_0 : i32, i32
  }
  func.func @transform_6(%arg0: i32) -> (i32, i32) {
    %c0_i32 = arith.constant 0 : i32
    %c0_i32_0 = arith.constant 0 : i32
    %c0_i32_1 = arith.constant 0 : i32
    return %c0_i32, %c0_i32_0 : i32, i32
  }
  func.func @transform_7(%arg0: i32) -> (i32, i32) {
    %c0_i32 = arith.constant 0 : i32
    %c0_i32_0 = arith.constant 0 : i32
    %c0_i32_1 = arith.constant 0 : i32
    return %c0_i32, %c0_i32_0 : i32, i32
  }
  func.func @transform_8(%arg0: i32) -> (i32, i32) {
    %c0_i32 = arith.constant 0 : i32
    %c0_i32_0 = arith.constant 0 : i32
    %c0_i32_1 = arith.constant 0 : i32
    return %c0_i32, %c0_i32_0 : i32, i32
  }
  func.func @transform_9(%arg0: i32) -> (i32, i32) {
    %c0_i32 = arith.constant 0 : i32
    %c0_i32_0 = arith.constant 0 : i32
    %c0_i32_1 = arith.constant 0 : i32
    return %c0_i32, %c0_i32_0 : i32, i32
  }
  func.func @transform_10(%arg0: i32) -> (i32, i32) {
    %c0_i32 = arith.constant 0 : i32
    %c0_i32_0 = arith.constant 0 : i32
    %c0_i32_1 = arith.constant 0 : i32
    return %c0_i32, %c0_i32_0 : i32, i32
  }
  func.func @transform_11(%arg0: i32) -> (i32, i32) {
    %c0_i32 = arith.constant 0 : i32
    %c0_i32_0 = arith.constant 0 : i32
    %c0_i32_1 = arith.constant 0 : i32
    return %c0_i32, %c0_i32_0 : i32, i32
  }
  func.func @transform_12(%arg0: i32) -> (i32, i32) {
    %c0_i32 = arith.constant 0 : i32
    %c0_i32_0 = arith.constant 0 : i32
    %c0_i32_1 = arith.constant 0 : i32
    return %c0_i32, %c0_i32_0 : i32, i32
  }
  func.func @transform_13(%arg0: i32) -> (i32, i32, i32) {
    %c0_i32 = arith.constant 0 : i32
    %c0_i32_0 = arith.constant 0 : i32
    %c0_i32_1 = arith.constant 0 : i32
    return %arg0, %c0_i32, %c0_i32_0 : i32, i32, i32
  }
}

module attributes {stable_mosaic.version = 11 : i64} {
  func.func @_ln_gelu_linear_kernel(%arg0: i32, %arg1: memref<2x64xf32, #tpu.memory_space<vmem>>, %arg2: memref<1x64xf32, #tpu.memory_space<vmem>>, %arg3: memref<1x64xf32, #tpu.memory_space<vmem>>, %arg4: memref<64x32xbf16, #tpu.memory_space<vmem>>, %arg5: memref<1x32xf32, #tpu.memory_space<vmem>>, %arg6: memref<2x32xf32, #tpu.memory_space<vmem>>) attributes {dimension_semantics = [#tpu.dimension_semantics<parallel>], iteration_bounds = array<i64: 1>, scalar_prefetch = 0 : i64, scratch_operands = 0 : i64, tpu.core_type = #tpu.core_type<tc>, window_params = [{transform_indices = @transform_0, window_bounds = array<i64: 2, 64>}, {pipeline_mode = #tpu.pipeline_mode<synchronous>, transform_indices = @transform_1, window_bounds = array<i64: 1, 64>}, {pipeline_mode = #tpu.pipeline_mode<synchronous>, transform_indices = @transform_2, window_bounds = array<i64: 1, 64>}, {pipeline_mode = #tpu.pipeline_mode<synchronous>, transform_indices = @transform_3, window_bounds = array<i64: 64, 32>}, {pipeline_mode = #tpu.pipeline_mode<synchronous>, transform_indices = @transform_4, window_bounds = array<i64: 1, 32>}, {transform_indices = @transform_5, window_bounds = array<i64: 2, 32>}]} {
    %c0 = arith.constant 0 : index
    %c0_0 = arith.constant 0 : index
    %0 = vector.load %arg1[%c0, %c0_0] : memref<2x64xf32, #tpu.memory_space<vmem>>, vector<2x64xf32>
    %c0_1 = arith.constant 0 : index
    %c0_2 = arith.constant 0 : index
    %1 = vector.load %arg2[%c0_1, %c0_2] : memref<1x64xf32, #tpu.memory_space<vmem>>, vector<1x64xf32>
    %c0_3 = arith.constant 0 : index
    %c0_4 = arith.constant 0 : index
    %2 = vector.load %arg3[%c0_3, %c0_4] : memref<1x64xf32, #tpu.memory_space<vmem>>, vector<1x64xf32>
    %cst = arith.constant dense<0.000000e+00> : vector<2xf32>
    %3 = vector.multi_reduction <add>, %0, %cst [1] : vector<2x64xf32> to vector<2xf32>
    %4 = vector.shape_cast %3 : vector<2xf32> to vector<2x1xf32>
    %cst_5 = arith.constant 6.400000e+01 : f32
    %5 = vector.broadcast %cst_5 : f32 to vector<2x1xf32>
    %6 = arith.divf %4, %5 : vector<2x1xf32>
    %7 = vector.broadcast %6 : vector<2x1xf32> to vector<2x64xf32>
    %8 = arith.subf %0, %7 : vector<2x64xf32>
    %9 = arith.mulf %8, %8 : vector<2x64xf32>
    %cst_6 = arith.constant dense<0.000000e+00> : vector<2xf32>
    %10 = vector.multi_reduction <add>, %9, %cst_6 [1] : vector<2x64xf32> to vector<2xf32>
    %11 = vector.shape_cast %10 : vector<2xf32> to vector<2x1xf32>
    %cst_7 = arith.constant 6.400000e+01 : f32
    %12 = vector.broadcast %cst_7 : f32 to vector<2x1xf32>
    %13 = arith.divf %11, %12 : vector<2x1xf32>
    %cst_8 = arith.constant 9.99999974E-6 : f32
    %14 = vector.broadcast %cst_8 : f32 to vector<2x1xf32>
    %15 = arith.addf %13, %14 : vector<2x1xf32>
    %16 = math.rsqrt %15 : vector<2x1xf32>
    %17 = vector.broadcast %16 : vector<2x1xf32> to vector<2x64xf32>
    %18 = arith.mulf %8, %17 : vector<2x64xf32>
    %19 = vector.broadcast %1 : vector<1x64xf32> to vector<2x64xf32>
    %20 = arith.mulf %18, %19 : vector<2x64xf32>
    %21 = vector.broadcast %2 : vector<1x64xf32> to vector<2x64xf32>
    %22 = arith.addf %20, %21 : vector<2x64xf32>
    %cst_9 = arith.constant 5.000000e-01 : f32
    %23 = vector.broadcast %cst_9 : f32 to vector<2x64xf32>
    %24 = arith.mulf %23, %22 : vector<2x64xf32>
    %cst_10 = arith.constant 0.707106769 : f32
    %25 = vector.broadcast %cst_10 : f32 to vector<2x64xf32>
    %26 = arith.mulf %22, %25 : vector<2x64xf32>
    %27 = math.erf %26 : vector<2x64xf32>
    %cst_11 = arith.constant 1.000000e+00 : f32
    %28 = vector.broadcast %cst_11 : f32 to vector<2x64xf32>
    %29 = arith.addf %28, %27 : vector<2x64xf32>
    %30 = arith.mulf %24, %29 : vector<2x64xf32>
    %c0_12 = arith.constant 0 : index
    %c0_13 = arith.constant 0 : index
    %31 = vector.load %arg4[%c0_12, %c0_13] : memref<64x32xbf16, #tpu.memory_space<vmem>>, vector<64x32xbf16>
    %32 = arith.truncf %30 : vector<2x64xf32> to vector<2x64xbf16>
    %cst_14 = arith.constant dense<0.000000e+00> : vector<2x32xf32>
    %33 = tpu.matmul %32, %31, %cst_14 {dimension_numbers = #tpu.dot_dimension_numbers<[1], [0], [0], [1], [0, 0, 1, 1], [], []>} : vector<2x64xbf16>, vector<64x32xbf16>, vector<2x32xf32> -> vector<2x32xf32>
    %c0_15 = arith.constant 0 : index
    %c0_16 = arith.constant 0 : index
    %34 = vector.load %arg5[%c0_15, %c0_16] : memref<1x32xf32, #tpu.memory_space<vmem>>, vector<1x32xf32>
    %35 = vector.broadcast %34 : vector<1x32xf32> to vector<2x32xf32>
    %36 = arith.addf %33, %35 : vector<2x32xf32>
    %c0_17 = arith.constant 0 : index
    %c0_18 = arith.constant 0 : index
    %37 = vector.load %arg6[%c0_17, %c0_18] : memref<2x32xf32, #tpu.memory_space<vmem>>, vector<2x32xf32>
    tpu.vector_store %arg6[%c0_17, %c0_18], %36 {strides = array<i32>} : memref<2x32xf32, #tpu.memory_space<vmem>>, vector<2x32xf32>,
    return
  }
  func.func @transform_0(%arg0: i32) -> (i32, i32) {
    %c0_i32 = arith.constant 0 : i32
    %c0_i32_0 = arith.constant 0 : i32
    return %arg0, %c0_i32 : i32, i32
  }
  func.func @transform_1(%arg0: i32) -> (i32, i32) {
    %c0_i32 = arith.constant 0 : i32
    %c0_i32_0 = arith.constant 0 : i32
    %c0_i32_1 = arith.constant 0 : i32
    return %c0_i32, %c0_i32_0 : i32, i32
  }
  func.func @transform_2(%arg0: i32) -> (i32, i32) {
    %c0_i32 = arith.constant 0 : i32
    %c0_i32_0 = arith.constant 0 : i32
    %c0_i32_1 = arith.constant 0 : i32
    return %c0_i32, %c0_i32_0 : i32, i32
  }
  func.func @transform_3(%arg0: i32) -> (i32, i32) {
    %c0_i32 = arith.constant 0 : i32
    %c0_i32_0 = arith.constant 0 : i32
    %c0_i32_1 = arith.constant 0 : i32
    return %c0_i32, %c0_i32_0 : i32, i32
  }
  func.func @transform_4(%arg0: i32) -> (i32, i32) {
    %c0_i32 = arith.constant 0 : i32
    %c0_i32_0 = arith.constant 0 : i32
    %c0_i32_1 = arith.constant 0 : i32
    return %c0_i32, %c0_i32_0 : i32, i32
  }
  func.func @transform_5(%arg0: i32) -> (i32, i32) {
    %c0_i32 = arith.constant 0 : i32
    %c0_i32_0 = arith.constant 0 : i32
    return %arg0, %c0_i32 : i32, i32
  }
}

module attributes {stable_mosaic.version = 11 : i64} {
  func.func @_cross_block_kernel(%arg0: i32, %arg1: memref<1x17x32xf32, #tpu.memory_space<vmem>>, %arg2: memref<1x32xf32, #tpu.memory_space<vmem>>, %arg3: memref<1x32xf32, #tpu.memory_space<vmem>>, %arg4: memref<32x32xbf16, #tpu.memory_space<vmem>>, %arg5: memref<1x32xf32, #tpu.memory_space<vmem>>, %arg6: memref<32x64xbf16, #tpu.memory_space<vmem>>, %arg7: memref<1x64xf32, #tpu.memory_space<vmem>>, %arg8: memref<32x32xf32, #tpu.memory_space<vmem>>, %arg9: memref<1x32xf32, #tpu.memory_space<vmem>>, %arg10: memref<1x1x32xf32, #tpu.memory_space<vmem>>) attributes {dimension_semantics = [#tpu.dimension_semantics<parallel>], iteration_bounds = array<i64: 2>, scalar_prefetch = 0 : i64, scratch_operands = 0 : i64, tpu.core_type = #tpu.core_type<tc>, window_params = [{transform_indices = @transform_0, window_bounds = array<i64: 1, 17, 32>}, {pipeline_mode = #tpu.pipeline_mode<synchronous>, transform_indices = @transform_1, window_bounds = array<i64: 1, 32>}, {pipeline_mode = #tpu.pipeline_mode<synchronous>, transform_indices = @transform_2, window_bounds = array<i64: 1, 32>}, {pipeline_mode = #tpu.pipeline_mode<synchronous>, transform_indices = @transform_3, window_bounds = array<i64: 32, 32>}, {pipeline_mode = #tpu.pipeline_mode<synchronous>, transform_indices = @transform_4, window_bounds = array<i64: 1, 32>}, {pipeline_mode = #tpu.pipeline_mode<synchronous>, transform_indices = @transform_5, window_bounds = array<i64: 32, 64>}, {pipeline_mode = #tpu.pipeline_mode<synchronous>, transform_indices = @transform_6, window_bounds = array<i64: 1, 64>}, {pipeline_mode = #tpu.pipeline_mode<synchronous>, transform_indices = @transform_7, window_bounds = array<i64: 32, 32>}, {pipeline_mode = #tpu.pipeline_mode<synchronous>, transform_indices = @transform_8, window_bounds = array<i64: 1, 32>}, {transform_indices = @transform_9, window_bounds = array<i64: 1, 1, 32>}]} {
    %c0 = arith.constant 0 : index
    %c0_0 = arith.constant 0 : index
    %c0_1 = arith.constant 0 : index
    %0 = vector.load %arg1[%c0, %c0_0, %c0_1] : memref<1x17x32xf32, #tpu.memory_space<vmem>>, vector<1x17x32xf32>
    %1 = vector.shape_cast %0 : vector<1x17x32xf32> to vector<17x32xf32>
    %c0_2 = arith.constant 0 : index
    %c0_3 = arith.constant 0 : index
    %2 = vector.load %arg2[%c0_2, %c0_3] : memref<1x32xf32, #tpu.memory_space<vmem>>, vector<1x32xf32>
    %c0_4 = arith.constant 0 : index
    %c0_5 = arith.constant 0 : index
    %3 = vector.load %arg3[%c0_4, %c0_5] : memref<1x32xf32, #tpu.memory_space<vmem>>, vector<1x32xf32>
    %cst = arith.constant dense<0.000000e+00> : vector<17xf32>
    %4 = vector.multi_reduction <add>, %1, %cst [1] : vector<17x32xf32> to vector<17xf32>
    %5 = vector.shape_cast %4 : vector<17xf32> to vector<17x1xf32>
    %cst_6 = arith.constant 3.200000e+01 : f32
    %6 = vector.broadcast %cst_6 : f32 to vector<17x1xf32>
    %7 = arith.divf %5, %6 : vector<17x1xf32>
    %8 = vector.broadcast %7 : vector<17x1xf32> to vector<17x32xf32>
    %9 = arith.subf %1, %8 : vector<17x32xf32>
    %10 = arith.mulf %9, %9 : vector<17x32xf32>
    %cst_7 = arith.constant dense<0.000000e+00> : vector<17xf32>
    %11 = vector.multi_reduction <add>, %10, %cst_7 [1] : vector<17x32xf32> to vector<17xf32>
    %12 = vector.shape_cast %11 : vector<17xf32> to vector<17x1xf32>
    %cst_8 = arith.constant 3.200000e+01 : f32
    %13 = vector.broadcast %cst_8 : f32 to vector<17x1xf32>
    %14 = arith.divf %12, %13 : vector<17x1xf32>
    %cst_9 = arith.constant 9.99999974E-6 : f32
    %15 = vector.broadcast %cst_9 : f32 to vector<17x1xf32>
    %16 = arith.addf %14, %15 : vector<17x1xf32>
    %17 = math.rsqrt %16 : vector<17x1xf32>
    %18 = vector.broadcast %17 : vector<17x1xf32> to vector<17x32xf32>
    %19 = arith.mulf %9, %18 : vector<17x32xf32>
    %20 = vector.broadcast %2 : vector<1x32xf32> to vector<17x32xf32>
    %21 = arith.mulf %19, %20 : vector<17x32xf32>
    %22 = vector.broadcast %3 : vector<1x32xf32> to vector<17x32xf32>
    %23 = arith.addf %21, %22 : vector<17x32xf32>
    %24 = vector.extract_strided_slice %23 {offsets = [0, 0], sizes = [1, 32], strides = [1, 1]} : vector<17x32xf32> to vector<1x32xf32>
    %c0_10 = arith.constant 0 : index
    %c0_11 = arith.constant 0 : index
    %25 = vector.load %arg4[%c0_10, %c0_11] : memref<32x32xbf16, #tpu.memory_space<vmem>>, vector<32x32xbf16>
    %26 = arith.truncf %24 : vector<1x32xf32> to vector<1x32xbf16>
    %cst_12 = arith.constant dense<0.000000e+00> : vector<1x32xf32>
    %27 = tpu.matmul %26, %25, %cst_12 {dimension_numbers = #tpu.dot_dimension_numbers<[1], [0], [0], [1], [0, 0, 1, 1], [], []>} : vector<1x32xbf16>, vector<32x32xbf16>, vector<1x32xf32> -> vector<1x32xf32>
    %c0_13 = arith.constant 0 : index
    %c0_14 = arith.constant 0 : index
    %28 = vector.load %arg5[%c0_13, %c0_14] : memref<1x32xf32, #tpu.memory_space<vmem>>, vector<1x32xf32>
    %29 = arith.addf %27, %28 : vector<1x32xf32>
    %cst_15 = arith.constant 0.353553385 : f32
    %30 = vector.broadcast %cst_15 : f32 to vector<1x32xf32>
    %31 = arith.mulf %29, %30 : vector<1x32xf32>
    %c0_16 = arith.constant 0 : index
    %c0_17 = arith.constant 0 : index
    %32 = vector.load %arg6[%c0_16, %c0_17] : memref<32x64xbf16, #tpu.memory_space<vmem>>, vector<32x64xbf16>
    %33 = arith.truncf %23 : vector<17x32xf32> to vector<17x32xbf16>
    %cst_18 = arith.constant dense<0.000000e+00> : vector<17x64xf32>
    %34 = tpu.matmul %33, %32, %cst_18 {dimension_numbers = #tpu.dot_dimension_numbers<[1], [0], [0], [1], [0, 0, 1, 1], [], []>} : vector<17x32xbf16>, vector<32x64xbf16>, vector<17x64xf32> -> vector<17x64xf32>
    %c0_19 = arith.constant 0 : index
    %c0_20 = arith.constant 0 : index
    %35 = vector.load %arg7[%c0_19, %c0_20] : memref<1x64xf32, #tpu.memory_space<vmem>>, vector<1x64xf32>
    %36 = vector.broadcast %35 : vector<1x64xf32> to vector<17x64xf32>
    %37 = arith.addf %34, %36 : vector<17x64xf32>
    %c0_21 = arith.constant 0 : index
    %c0_22 = arith.constant 0 : index
    %38 = vector.load %arg8[%c0_21, %c0_22] : memref<32x32xf32, #tpu.memory_space<vmem>>, vector<32x32xf32>
    %cst_23 = arith.constant 0.000000e+00 : f32
    %39 = vector.broadcast %cst_23 : f32 to vector<1x32xf32>
    %40 = vector.extract_strided_slice %31 {offsets = [0, 0], sizes = [1, 8], strides = [1, 1]} : vector<1x32xf32> to vector<1x8xf32>
    %41 = arith.truncf %40 : vector<1x8xf32> to vector<1x8xbf16>
    %42 = vector.extract_strided_slice %37 {offsets = [0, 0], sizes = [17, 8], strides = [1, 1]} : vector<17x64xf32> to vector<17x8xf32>
    %43 = arith.truncf %42 : vector<17x8xf32> to vector<17x8xbf16>
    %44 = vector.extract_strided_slice %37 {offsets = [0, 32], sizes = [17, 8], strides = [1, 1]} : vector<17x64xf32> to vector<17x8xf32>
    %45 = arith.truncf %44 : vector<17x8xf32> to vector<17x8xbf16>
    %cst_24 = arith.constant dense<0.000000e+00> : vector<1x17xf32>
    %46 = tpu.matmul %41, %43, %cst_24 {dimension_numbers = #tpu.dot_dimension_numbers<[1], [1], [0], [0], [0, 0, 1, 0], [], []>} : vector<1x8xbf16>, vector<17x8xbf16>, vector<1x17xf32> -> vector<1x17xf32>
    %cst_25 = arith.constant dense<0xFF800000> : vector<1xf32>
    %47 = vector.multi_reduction <maximumf>, %46, %cst_25 [1] : vector<1x17xf32> to vector<1xf32>
    %48 = vector.shape_cast %47 : vector<1xf32> to vector<1x1xf32>
    %49 = vector.broadcast %48 : vector<1x1xf32> to vector<1x17xf32>
    %50 = arith.subf %46, %49 : vector<1x17xf32>
    %51 = math.exp %50 : vector<1x17xf32>
    %cst_26 = arith.constant dense<0.000000e+00> : vector<1xf32>
    %52 = vector.multi_reduction <add>, %51, %cst_26 [1] : vector<1x17xf32> to vector<1xf32>
    %53 = vector.shape_cast %52 : vector<1xf32> to vector<1x1xf32>
    %54 = tpu.reciprocal %53 {approx = true} : vector<1x1xf32> -> vector<1x1xf32>
    %55 = vector.broadcast %54 : vector<1x1xf32> to vector<1x17xf32>
    %56 = arith.mulf %51, %55 : vector<1x17xf32>
    %57 = arith.truncf %56 : vector<1x17xf32> to vector<1x17xbf16>
    %cst_27 = arith.constant dense<0.000000e+00> : vector<1x8xf32>
    %58 = tpu.matmul %57, %45, %cst_27 {dimension_numbers = #tpu.dot_dimension_numbers<[1], [0], [0], [1], [0, 0, 1, 1], [], []>} : vector<1x17xbf16>, vector<17x8xbf16>, vector<1x8xf32> -> vector<1x8xf32>
    %59 = arith.truncf %58 : vector<1x8xf32> to vector<1x8xbf16>
    %60 = vector.extract_strided_slice %38 {offsets = [0, 0], sizes = [8, 32], strides = [1, 1]} : vector<32x32xf32> to vector<8x32xf32>
    %61 = arith.truncf %60 : vector<8x32xf32> to vector<8x32xbf16>
    %cst_28 = arith.constant dense<0.000000e+00> : vector<1x32xf32>
    %62 = tpu.matmul %59, %61, %cst_28 {dimension_numbers = #tpu.dot_dimension_numbers<[1], [0], [0], [1], [0, 0, 1, 1], [], []>} : vector<1x8xbf16>, vector<8x32xbf16>, vector<1x32xf32> -> vector<1x32xf32>
    %63 = arith.addf %39, %62 : vector<1x32xf32>
    %64 = vector.extract_strided_slice %31 {offsets = [0, 8], sizes = [1, 8], strides = [1, 1]} : vector<1x32xf32> to vector<1x8xf32>
    %65 = arith.truncf %64 : vector<1x8xf32> to vector<1x8xbf16>
    %66 = vector.extract_strided_slice %37 {offsets = [0, 8], sizes = [17, 8], strides = [1, 1]} : vector<17x64xf32> to vector<17x8xf32>
    %67 = arith.truncf %66 : vector<17x8xf32> to vector<17x8xbf16>
    %68 = vector.extract_strided_slice %37 {offsets = [0, 40], sizes = [17, 8], strides = [1, 1]} : vector<17x64xf32> to vector<17x8xf32>
    %69 = arith.truncf %68 : vector<17x8xf32> to vector<17x8xbf16>
    %cst_29 = arith.constant dense<0.000000e+00> : vector<1x17xf32>
    %70 = tpu.matmul %65, %67, %cst_29 {dimension_numbers = #tpu.dot_dimension_numbers<[1], [1], [0], [0], [0, 0, 1, 0], [], []>} : vector<1x8xbf16>, vector<17x8xbf16>, vector<1x17xf32> -> vector<1x17xf32>
    %cst_30 = arith.constant dense<0xFF800000> : vector<1xf32>
    %71 = vector.multi_reduction <maximumf>, %70, %cst_30 [1] : vector<1x17xf32> to vector<1xf32>
    %72 = vector.shape_cast %71 : vector<1xf32> to vector<1x1xf32>
    %73 = vector.broadcast %72 : vector<1x1xf32> to vector<1x17xf32>
    %74 = arith.subf %70, %73 : vector<1x17xf32>
    %75 = math.exp %74 : vector<1x17xf32>
    %cst_31 = arith.constant dense<0.000000e+00> : vector<1xf32>
    %76 = vector.multi_reduction <add>, %75, %cst_31 [1] : vector<1x17xf32> to vector<1xf32>
    %77 = vector.shape_cast %76 : vector<1xf32> to vector<1x1xf32>
    %78 = tpu.reciprocal %77 {approx = true} : vector<1x1xf32> -> vector<1x1xf32>
    %79 = vector.broadcast %78 : vector<1x1xf32> to vector<1x17xf32>
    %80 = arith.mulf %75, %79 : vector<1x17xf32>
    %81 = arith.truncf %80 : vector<1x17xf32> to vector<1x17xbf16>
    %cst_32 = arith.constant dense<0.000000e+00> : vector<1x8xf32>
    %82 = tpu.matmul %81, %69, %cst_32 {dimension_numbers = #tpu.dot_dimension_numbers<[1], [0], [0], [1], [0, 0, 1, 1], [], []>} : vector<1x17xbf16>, vector<17x8xbf16>, vector<1x8xf32> -> vector<1x8xf32>
    %83 = arith.truncf %82 : vector<1x8xf32> to vector<1x8xbf16>
    %84 = vector.extract_strided_slice %38 {offsets = [8, 0], sizes = [8, 32], strides = [1, 1]} : vector<32x32xf32> to vector<8x32xf32>
    %85 = arith.truncf %84 : vector<8x32xf32> to vector<8x32xbf16>
    %cst_33 = arith.constant dense<0.000000e+00> : vector<1x32xf32>
    %86 = tpu.matmul %83, %85, %cst_33 {dimension_numbers = #tpu.dot_dimension_numbers<[1], [0], [0], [1], [0, 0, 1, 1], [], []>} : vector<1x8xbf16>, vector<8x32xbf16>, vector<1x32xf32> -> vector<1x32xf32>
    %87 = arith.addf %63, %86 : vector<1x32xf32>
    %88 = vector.extract_strided_slice %31 {offsets = [0, 16], sizes = [1, 8], strides = [1, 1]} : vector<1x32xf32> to vector<1x8xf32>
    %89 = arith.truncf %88 : vector<1x8xf32> to vector<1x8xbf16>
    %90 = vector.extract_strided_slice %37 {offsets = [0, 16], sizes = [17, 8], strides = [1, 1]} : vector<17x64xf32> to vector<17x8xf32>
    %91 = arith.truncf %90 : vector<17x8xf32> to vector<17x8xbf16>
    %92 = vector.extract_strided_slice %37 {offsets = [0, 48], sizes = [17, 8], strides = [1, 1]} : vector<17x64xf32> to vector<17x8xf32>
    %93 = arith.truncf %92 : vector<17x8xf32> to vector<17x8xbf16>
    %cst_34 = arith.constant dense<0.000000e+00> : vector<1x17xf32>
    %94 = tpu.matmul %89, %91, %cst_34 {dimension_numbers = #tpu.dot_dimension_numbers<[1], [1], [0], [0], [0, 0, 1, 0], [], []>} : vector<1x8xbf16>, vector<17x8xbf16>, vector<1x17xf32> -> vector<1x17xf32>
    %cst_35 = arith.constant dense<0xFF800000> : vector<1xf32>
    %95 = vector.multi_reduction <maximumf>, %94, %cst_35 [1] : vector<1x17xf32> to vector<1xf32>
    %96 = vector.shape_cast %95 : vector<1xf32> to vector<1x1xf32>
    %97 = vector.broadcast %96 : vector<1x1xf32> to vector<1x17xf32>
    %98 = arith.subf %94, %97 : vector<1x17xf32>
    %99 = math.exp %98 : vector<1x17xf32>
    %cst_36 = arith.constant dense<0.000000e+00> : vector<1xf32>
    %100 = vector.multi_reduction <add>, %99, %cst_36 [1] : vector<1x17xf32> to vector<1xf32>
    %101 = vector.shape_cast %100 : vector<1xf32> to vector<1x1xf32>
    %102 = tpu.reciprocal %101 {approx = true} : vector<1x1xf32> -> vector<1x1xf32>
    %103 = vector.broadcast %102 : vector<1x1xf32> to vector<1x17xf32>
    %104 = arith.mulf %99, %103 : vector<1x17xf32>
    %105 = arith.truncf %104 : vector<1x17xf32> to vector<1x17xbf16>
    %cst_37 = arith.constant dense<0.000000e+00> : vector<1x8xf32>
    %106 = tpu.matmul %105, %93, %cst_37 {dimension_numbers = #tpu.dot_dimension_numbers<[1], [0], [0], [1], [0, 0, 1, 1], [], []>} : vector<1x17xbf16>, vector<17x8xbf16>, vector<1x8xf32> -> vector<1x8xf32>
    %107 = arith.truncf %106 : vector<1x8xf32> to vector<1x8xbf16>
    %108 = vector.extract_strided_slice %38 {offsets = [16, 0], sizes = [8, 32], strides = [1, 1]} : vector<32x32xf32> to vector<8x32xf32>
    %109 = arith.truncf %108 : vector<8x32xf32> to vector<8x32xbf16>
    %cst_38 = arith.constant dense<0.000000e+00> : vector<1x32xf32>
    %110 = tpu.matmul %107, %109, %cst_38 {dimension_numbers = #tpu.dot_dimension_numbers<[1], [0], [0], [1], [0, 0, 1, 1], [], []>} : vector<1x8xbf16>, vector<8x32xbf16>, vector<1x32xf32> -> vector<1x32xf32>
    %111 = arith.addf %87, %110 : vector<1x32xf32>
    %112 = vector.extract_strided_slice %31 {offsets = [0, 24], sizes = [1, 8], strides = [1, 1]} : vector<1x32xf32> to vector<1x8xf32>
    %113 = arith.truncf %112 : vector<1x8xf32> to vector<1x8xbf16>
    %114 = vector.extract_strided_slice %37 {offsets = [0, 24], sizes = [17, 8], strides = [1, 1]} : vector<17x64xf32> to vector<17x8xf32>
    %115 = arith.truncf %114 : vector<17x8xf32> to vector<17x8xbf16>
    %116 = vector.extract_strided_slice %37 {offsets = [0, 56], sizes = [17, 8], strides = [1, 1]} : vector<17x64xf32> to vector<17x8xf32>
    %117 = arith.truncf %116 : vector<17x8xf32> to vector<17x8xbf16>
    %cst_39 = arith.constant dense<0.000000e+00> : vector<1x17xf32>
    %118 = tpu.matmul %113, %115, %cst_39 {dimension_numbers = #tpu.dot_dimension_numbers<[1], [1], [0], [0], [0, 0, 1, 0], [], []>} : vector<1x8xbf16>, vector<17x8xbf16>, vector<1x17xf32> -> vector<1x17xf32>
    %cst_40 = arith.constant dense<0xFF800000> : vector<1xf32>
    %119 = vector.multi_reduction <maximumf>, %118, %cst_40 [1] : vector<1x17xf32> to vector<1xf32>
    %120 = vector.shape_cast %119 : vector<1xf32> to vector<1x1xf32>
    %121 = vector.broadcast %120 : vector<1x1xf32> to vector<1x17xf32>
    %122 = arith.subf %118, %121 : vector<1x17xf32>
    %123 = math.exp %122 : vector<1x17xf32>
    %cst_41 = arith.constant dense<0.000000e+00> : vector<1xf32>
    %124 = vector.multi_reduction <add>, %123, %cst_41 [1] : vector<1x17xf32> to vector<1xf32>
    %125 = vector.shape_cast %124 : vector<1xf32> to vector<1x1xf32>
    %126 = tpu.reciprocal %125 {approx = true} : vector<1x1xf32> -> vector<1x1xf32>
    %127 = vector.broadcast %126 : vector<1x1xf32> to vector<1x17xf32>
    %128 = arith.mulf %123, %127 : vector<1x17xf32>
    %129 = arith.truncf %128 : vector<1x17xf32> to vector<1x17xbf16>
    %cst_42 = arith.constant dense<0.000000e+00> : vector<1x8xf32>
    %130 = tpu.matmul %129, %117, %cst_42 {dimension_numbers = #tpu.dot_dimension_numbers<[1], [0], [0], [1], [0, 0, 1, 1], [], []>} : vector<1x17xbf16>, vector<17x8xbf16>, vector<1x8xf32> -> vector<1x8xf32>
    %131 = arith.truncf %130 : vector<1x8xf32> to vector<1x8xbf16>
    %132 = vector.extract_strided_slice %38 {offsets = [24, 0], sizes = [8, 32], strides = [1, 1]} : vector<32x32xf32> to vector<8x32xf32>
    %133 = arith.truncf %132 : vector<8x32xf32> to vector<8x32xbf16>
    %cst_43 = arith.constant dense<0.000000e+00> : vector<1x32xf32>
    %134 = tpu.matmul %131, %133, %cst_43 {dimension_numbers = #tpu.dot_dimension_numbers<[1], [0], [0], [1], [0, 0, 1, 1], [], []>} : vector<1x8xbf16>, vector<8x32xbf16>, vector<1x32xf32> -> vector<1x32xf32>
    %135 = arith.addf %111, %134 : vector<1x32xf32>
    %136 = vector.extract_strided_slice %1 {offsets = [0, 0], sizes = [1, 32], strides = [1, 1]} : vector<17x32xf32> to vector<1x32xf32>
    %137 = arith.addf %136, %135 : vector<1x32xf32>
    %c0_44 = arith.constant 0 : index
    %c0_45 = arith.constant 0 : index
    %138 = vector.load %arg9[%c0_44, %c0_45] : memref<1x32xf32, #tpu.memory_space<vmem>>, vector<1x32xf32>
    %139 = arith.addf %137, %138 : vector<1x32xf32>
    %c0_46 = arith.constant 0 : index
    %c0_47 = arith.constant 0 : index
    %c0_48 = arith.constant 0 : index
    %140 = vector.load %arg10[%c0_46, %c0_47, %c0_48] : memref<1x1x32xf32, #tpu.memory_space<vmem>>, vector<1x1x32xf32>
    %141 = vector.shape_cast %140 : vector<1x1x32xf32> to vector<1x32xf32>
    %142 = vector.shape_cast %139 : vector<1x32xf32> to vector<1x1x32xf32>
    tpu.vector_store %arg10[%c0_46, %c0_47, %c0_48], %142 {strides = array<i32>} : memref<1x1x32xf32, #tpu.memory_space<vmem>>, vector<1x1x32xf32>,
    return
  }
  func.func @transform_0(%arg0: i32) -> (i32, i32, i32) {
    %c0_i32 = arith.constant 0 : i32
    %c0_i32_0 = arith.constant 0 : i32
    %c0_i32_1 = arith.constant 0 : i32
    return %arg0, %c0_i32, %c0_i32_0 : i32, i32, i32
  }
  func.func @transform_1(%arg0: i32) -> (i32, i32) {
    %c0_i32 = arith.constant 0 : i32
    %c0_i32_0 = arith.constant 0 : i32
    %c0_i32_1 = arith.constant 0 : i32
    return %c0_i32, %c0_i32_0 : i32, i32
  }
  func.func @transform_2(%arg0: i32) -> (i32, i32) {
    %c0_i32 = arith.constant 0 : i32
    %c0_i32_0 = arith.constant 0 : i32
    %c0_i32_1 = arith.constant 0 : i32
    return %c0_i32, %c0_i32_0 : i32, i32
  }
  func.func @transform_3(%arg0: i32) -> (i32, i32) {
    %c0_i32 = arith.constant 0 : i32
    %c0_i32_0 = arith.constant 0 : i32
    %c0_i32_1 = arith.constant 0 : i32
    return %c0_i32, %c0_i32_0 : i32, i32
  }
  func.func @transform_4(%arg0: i32) -> (i32, i32) {
    %c0_i32 = arith.constant 0 : i32
    %c0_i32_0 = arith.constant 0 : i32
    %c0_i32_1 = arith.constant 0 : i32
    return %c0_i32, %c0_i32_0 : i32, i32
  }
  func.func @transform_5(%arg0: i32) -> (i32, i32) {
    %c0_i32 = arith.constant 0 : i32
    %c0_i32_0 = arith.constant 0 : i32
    %c0_i32_1 = arith.constant 0 : i32
    return %c0_i32, %c0_i32_0 : i32, i32
  }
  func.func @transform_6(%arg0: i32) -> (i32, i32) {
    %c0_i32 = arith.constant 0 : i32
    %c0_i32_0 = arith.constant 0 : i32
    %c0_i32_1 = arith.constant 0 : i32
    return %c0_i32, %c0_i32_0 : i32, i32
  }
  func.func @transform_7(%arg0: i32) -> (i32, i32) {
    %c0_i32 = arith.constant 0 : i32
    %c0_i32_0 = arith.constant 0 : i32
    %c0_i32_1 = arith.constant 0 : i32
    return %c0_i32, %c0_i32_0 : i32, i32
  }
  func.func @transform_8(%arg0: i32) -> (i32, i32) {
    %c0_i32 = arith.constant 0 : i32
    %c0_i32_0 = arith.constant 0 : i32
    %c0_i32_1 = arith.constant 0 : i32
    return %c0_i32, %c0_i32_0 : i32, i32
  }
  func.func @transform_9(%arg0: i32) -> (i32, i32, i32) {
    %c0_i32 = arith.constant 0 : i32
    %c0_i32_0 = arith.constant 0 : i32
    %c0_i32_1 = arith.constant 0 : i32
    return %arg0, %c0_i32, %c0_i32_0 : i32, i32, i32
  }
}

module attributes {stable_mosaic.version = 11 : i64} {
  func.func @_ln_gelu_linear_kernel(%arg0: i32, %arg1: memref<2x32xf32, #tpu.memory_space<vmem>>, %arg2: memref<1x32xf32, #tpu.memory_space<vmem>>, %arg3: memref<1x32xf32, #tpu.memory_space<vmem>>, %arg4: memref<32x64xbf16, #tpu.memory_space<vmem>>, %arg5: memref<1x64xf32, #tpu.memory_space<vmem>>, %arg6: memref<2x64xf32, #tpu.memory_space<vmem>>) attributes {dimension_semantics = [#tpu.dimension_semantics<parallel>], iteration_bounds = array<i64: 1>, scalar_prefetch = 0 : i64, scratch_operands = 0 : i64, tpu.core_type = #tpu.core_type<tc>, window_params = [{transform_indices = @transform_0, window_bounds = array<i64: 2, 32>}, {pipeline_mode = #tpu.pipeline_mode<synchronous>, transform_indices = @transform_1, window_bounds = array<i64: 1, 32>}, {pipeline_mode = #tpu.pipeline_mode<synchronous>, transform_indices = @transform_2, window_bounds = array<i64: 1, 32>}, {pipeline_mode = #tpu.pipeline_mode<synchronous>, transform_indices = @transform_3, window_bounds = array<i64: 32, 64>}, {pipeline_mode = #tpu.pipeline_mode<synchronous>, transform_indices = @transform_4, window_bounds = array<i64: 1, 64>}, {transform_indices = @transform_5, window_bounds = array<i64: 2, 64>}]} {
    %c0 = arith.constant 0 : index
    %c0_0 = arith.constant 0 : index
    %0 = vector.load %arg1[%c0, %c0_0] : memref<2x32xf32, #tpu.memory_space<vmem>>, vector<2x32xf32>
    %c0_1 = arith.constant 0 : index
    %c0_2 = arith.constant 0 : index
    %1 = vector.load %arg2[%c0_1, %c0_2] : memref<1x32xf32, #tpu.memory_space<vmem>>, vector<1x32xf32>
    %c0_3 = arith.constant 0 : index
    %c0_4 = arith.constant 0 : index
    %2 = vector.load %arg3[%c0_3, %c0_4] : memref<1x32xf32, #tpu.memory_space<vmem>>, vector<1x32xf32>
    %cst = arith.constant dense<0.000000e+00> : vector<2xf32>
    %3 = vector.multi_reduction <add>, %0, %cst [1] : vector<2x32xf32> to vector<2xf32>
    %4 = vector.shape_cast %3 : vector<2xf32> to vector<2x1xf32>
    %cst_5 = arith.constant 3.200000e+01 : f32
    %5 = vector.broadcast %cst_5 : f32 to vector<2x1xf32>
    %6 = arith.divf %4, %5 : vector<2x1xf32>
    %7 = vector.broadcast %6 : vector<2x1xf32> to vector<2x32xf32>
    %8 = arith.subf %0, %7 : vector<2x32xf32>
    %9 = arith.mulf %8, %8 : vector<2x32xf32>
    %cst_6 = arith.constant dense<0.000000e+00> : vector<2xf32>
    %10 = vector.multi_reduction <add>, %9, %cst_6 [1] : vector<2x32xf32> to vector<2xf32>
    %11 = vector.shape_cast %10 : vector<2xf32> to vector<2x1xf32>
    %cst_7 = arith.constant 3.200000e+01 : f32
    %12 = vector.broadcast %cst_7 : f32 to vector<2x1xf32>
    %13 = arith.divf %11, %12 : vector<2x1xf32>
    %cst_8 = arith.constant 9.99999974E-6 : f32
    %14 = vector.broadcast %cst_8 : f32 to vector<2x1xf32>
    %15 = arith.addf %13, %14 : vector<2x1xf32>
    %16 = math.rsqrt %15 : vector<2x1xf32>
    %17 = vector.broadcast %16 : vector<2x1xf32> to vector<2x32xf32>
    %18 = arith.mulf %8, %17 : vector<2x32xf32>
    %19 = vector.broadcast %1 : vector<1x32xf32> to vector<2x32xf32>
    %20 = arith.mulf %18, %19 : vector<2x32xf32>
    %21 = vector.broadcast %2 : vector<1x32xf32> to vector<2x32xf32>
    %22 = arith.addf %20, %21 : vector<2x32xf32>
    %cst_9 = arith.constant 5.000000e-01 : f32
    %23 = vector.broadcast %cst_9 : f32 to vector<2x32xf32>
    %24 = arith.mulf %23, %22 : vector<2x32xf32>
    %cst_10 = arith.constant 0.707106769 : f32
    %25 = vector.broadcast %cst_10 : f32 to vector<2x32xf32>
    %26 = arith.mulf %22, %25 : vector<2x32xf32>
    %27 = math.erf %26 : vector<2x32xf32>
    %cst_11 = arith.constant 1.000000e+00 : f32
    %28 = vector.broadcast %cst_11 : f32 to vector<2x32xf32>
    %29 = arith.addf %28, %27 : vector<2x32xf32>
    %30 = arith.mulf %24, %29 : vector<2x32xf32>
    %c0_12 = arith.constant 0 : index
    %c0_13 = arith.constant 0 : index
    %31 = vector.load %arg4[%c0_12, %c0_13] : memref<32x64xbf16, #tpu.memory_space<vmem>>, vector<32x64xbf16>
    %32 = arith.truncf %30 : vector<2x32xf32> to vector<2x32xbf16>
    %cst_14 = arith.constant dense<0.000000e+00> : vector<2x64xf32>
    %33 = tpu.matmul %32, %31, %cst_14 {dimension_numbers = #tpu.dot_dimension_numbers<[1], [0], [0], [1], [0, 0, 1, 1], [], []>} : vector<2x32xbf16>, vector<32x64xbf16>, vector<2x64xf32> -> vector<2x64xf32>
    %c0_15 = arith.constant 0 : index
    %c0_16 = arith.constant 0 : index
    %34 = vector.load %arg5[%c0_15, %c0_16] : memref<1x64xf32, #tpu.memory_space<vmem>>, vector<1x64xf32>
    %35 = vector.broadcast %34 : vector<1x64xf32> to vector<2x64xf32>
    %36 = arith.addf %33, %35 : vector<2x64xf32>
    %c0_17 = arith.constant 0 : index
    %c0_18 = arith.constant 0 : index
    %37 = vector.load %arg6[%c0_17, %c0_18] : memref<2x64xf32, #tpu.memory_space<vmem>>, vector<2x64xf32>
    tpu.vector_store %arg6[%c0_17, %c0_18], %36 {strides = array<i32>} : memref<2x64xf32, #tpu.memory_space<vmem>>, vector<2x64xf32>,
    return
  }
  func.func @transform_0(%arg0: i32) -> (i32, i32) {
    %c0_i32 = arith.constant 0 : i32
    %c0_i32_0 = arith.constant 0 : i32
    return %arg0, %c0_i32 : i32, i32
  }
  func.func @transform_1(%arg0: i32) -> (i32, i32) {
    %c0_i32 = arith.constant 0 : i32
    %c0_i32_0 = arith.constant 0 : i32
    %c0_i32_1 = arith.constant 0 : i32
    return %c0_i32, %c0_i32_0 : i32, i32
  }
  func.func @transform_2(%arg0: i32) -> (i32, i32) {
    %c0_i32 = arith.constant 0 : i32
    %c0_i32_0 = arith.constant 0 : i32
    %c0_i32_1 = arith.constant 0 : i32
    return %c0_i32, %c0_i32_0 : i32, i32
  }
  func.func @transform_3(%arg0: i32) -> (i32, i32) {
    %c0_i32 = arith.constant 0 : i32
    %c0_i32_0 = arith.constant 0 : i32
    %c0_i32_1 = arith.constant 0 : i32
    return %c0_i32, %c0_i32_0 : i32, i32
  }
  func.func @transform_4(%arg0: i32) -> (i32, i32) {
    %c0_i32 = arith.constant 0 : i32
    %c0_i32_0 = arith.constant 0 : i32
    %c0_i32_1 = arith.constant 0 : i32
    return %c0_i32, %c0_i32_0 : i32, i32
  }
  func.func @transform_5(%arg0: i32) -> (i32, i32) {
    %c0_i32 = arith.constant 0 : i32
    %c0_i32_0 = arith.constant 0 : i32
    return %arg0, %c0_i32 : i32, i32
  }
}

module attributes {stable_mosaic.version = 11 : i64} {
  func.func @_ln_linear_kernel(%arg0: i32, %arg1: memref<2x64xf32, #tpu.memory_space<vmem>>, %arg2: memref<1x64xf32, #tpu.memory_space<vmem>>, %arg3: memref<1x64xf32, #tpu.memory_space<vmem>>, %arg4: memref<64x128xbf16, #tpu.memory_space<vmem>>, %arg5: memref<1x128xf32, #tpu.memory_space<vmem>>, %arg6: memref<2x128xf32, #tpu.memory_space<vmem>>) attributes {dimension_semantics = [#tpu.dimension_semantics<parallel>], iteration_bounds = array<i64: 1>, scalar_prefetch = 0 : i64, scratch_operands = 0 : i64, tpu.core_type = #tpu.core_type<tc>, window_params = [{transform_indices = @transform_0, window_bounds = array<i64: 2, 64>}, {pipeline_mode = #tpu.pipeline_mode<synchronous>, transform_indices = @transform_1, window_bounds = array<i64: 1, 64>}, {pipeline_mode = #tpu.pipeline_mode<synchronous>, transform_indices = @transform_2, window_bounds = array<i64: 1, 64>}, {pipeline_mode = #tpu.pipeline_mode<synchronous>, transform_indices = @transform_3, window_bounds = array<i64: 64, 128>}, {pipeline_mode = #tpu.pipeline_mode<synchronous>, transform_indices = @transform_4, window_bounds = array<i64: 1, 128>}, {transform_indices = @transform_5, window_bounds = array<i64: 2, 128>}]} {
    %c0 = arith.constant 0 : index
    %c0_0 = arith.constant 0 : index
    %0 = vector.load %arg1[%c0, %c0_0] : memref<2x64xf32, #tpu.memory_space<vmem>>, vector<2x64xf32>
    %c0_1 = arith.constant 0 : index
    %c0_2 = arith.constant 0 : index
    %1 = vector.load %arg2[%c0_1, %c0_2] : memref<1x64xf32, #tpu.memory_space<vmem>>, vector<1x64xf32>
    %c0_3 = arith.constant 0 : index
    %c0_4 = arith.constant 0 : index
    %2 = vector.load %arg3[%c0_3, %c0_4] : memref<1x64xf32, #tpu.memory_space<vmem>>, vector<1x64xf32>
    %cst = arith.constant dense<0.000000e+00> : vector<2xf32>
    %3 = vector.multi_reduction <add>, %0, %cst [1] : vector<2x64xf32> to vector<2xf32>
    %4 = vector.shape_cast %3 : vector<2xf32> to vector<2x1xf32>
    %cst_5 = arith.constant 6.400000e+01 : f32
    %5 = vector.broadcast %cst_5 : f32 to vector<2x1xf32>
    %6 = arith.divf %4, %5 : vector<2x1xf32>
    %7 = vector.broadcast %6 : vector<2x1xf32> to vector<2x64xf32>
    %8 = arith.subf %0, %7 : vector<2x64xf32>
    %9 = arith.mulf %8, %8 : vector<2x64xf32>
    %cst_6 = arith.constant dense<0.000000e+00> : vector<2xf32>
    %10 = vector.multi_reduction <add>, %9, %cst_6 [1] : vector<2x64xf32> to vector<2xf32>
    %11 = vector.shape_cast %10 : vector<2xf32> to vector<2x1xf32>
    %cst_7 = arith.constant 6.400000e+01 : f32
    %12 = vector.broadcast %cst_7 : f32 to vector<2x1xf32>
    %13 = arith.divf %11, %12 : vector<2x1xf32>
    %cst_8 = arith.constant 9.99999974E-6 : f32
    %14 = vector.broadcast %cst_8 : f32 to vector<2x1xf32>
    %15 = arith.addf %13, %14 : vector<2x1xf32>
    %16 = math.rsqrt %15 : vector<2x1xf32>
    %17 = vector.broadcast %16 : vector<2x1xf32> to vector<2x64xf32>
    %18 = arith.mulf %8, %17 : vector<2x64xf32>
    %19 = vector.broadcast %1 : vector<1x64xf32> to vector<2x64xf32>
    %20 = arith.mulf %18, %19 : vector<2x64xf32>
    %21 = vector.broadcast %2 : vector<1x64xf32> to vector<2x64xf32>
    %22 = arith.addf %20, %21 : vector<2x64xf32>
    %c0_9 = arith.constant 0 : index
    %c0_10 = arith.constant 0 : index
    %23 = vector.load %arg4[%c0_9, %c0_10] : memref<64x128xbf16, #tpu.memory_space<vmem>>, vector<64x128xbf16>
    %24 = arith.truncf %22 : vector<2x64xf32> to vector<2x64xbf16>
    %cst_11 = arith.constant dense<0.000000e+00> : vector<2x128xf32>
    %25 = tpu.matmul %24, %23, %cst_11 {dimension_numbers = #tpu.dot_dimension_numbers<[1], [0], [0], [1], [0, 0, 1, 1], [], []>} : vector<2x64xbf16>, vector<64x128xbf16>, vector<2x128xf32> -> vector<2x128xf32>
    %c0_12 = arith.constant 0 : index
    %c0_13 = arith.constant 0 : index
    %26 = vector.load %arg5[%c0_12, %c0_13] : memref<1x128xf32, #tpu.memory_space<vmem>>, vector<1x128xf32>
    %27 = vector.broadcast %26 : vector<1x128xf32> to vector<2x128xf32>
    %28 = arith.addf %25, %27 : vector<2x128xf32>
    %c0_14 = arith.constant 0 : index
    %c0_15 = arith.constant 0 : index
    %29 = vector.load %arg6[%c0_14, %c0_15] : memref<2x128xf32, #tpu.memory_space<vmem>>, vector<2x128xf32>
    tpu.vector_store %arg6[%c0_14, %c0_15], %28 {strides = array<i32>} : memref<2x128xf32, #tpu.memory_space<vmem>>, vector<2x128xf32>,
    return
  }
  func.func @transform_0(%arg0: i32) -> (i32, i32) {
    %c0_i32 = arith.constant 0 : i32
    %c0_i32_0 = arith.constant 0 : i32
    return %arg0, %c0_i32 : i32, i32
  }
  func.func @transform_1(%arg0: i32) -> (i32, i32) {
    %c0_i32 = arith.constant 0 : i32
    %c0_i32_0 = arith.constant 0 : i32
    %c0_i32_1 = arith.constant 0 : i32
    return %c0_i32, %c0_i32_0 : i32, i32
  }
  func.func @transform_2(%arg0: i32) -> (i32, i32) {
    %c0_i32 = arith.constant 0 : i32
    %c0_i32_0 = arith.constant 0 : i32
    %c0_i32_1 = arith.constant 0 : i32
    return %c0_i32, %c0_i32_0 : i32, i32
  }
  func.func @transform_3(%arg0: i32) -> (i32, i32) {
    %c0_i32 = arith.constant 0 : i32
    %c0_i32_0 = arith.constant 0 : i32
    %c0_i32_1 = arith.constant 0 : i32
    return %c0_i32, %c0_i32_0 : i32, i32
  }
  func.func @transform_4(%arg0: i32) -> (i32, i32) {
    %c0_i32 = arith.constant 0 : i32
    %c0_i32_0 = arith.constant 0 : i32
    %c0_i32_1 = arith.constant 0 : i32
    return %c0_i32, %c0_i32_0 : i32, i32
  }
  func.func @transform_5(%arg0: i32) -> (i32, i32) {
    %c0_i32 = arith.constant 0 : i32
    %c0_i32_0 = arith.constant 0 : i32
    return %arg0, %c0_i32 : i32, i32
  }
}

module attributes {stable_mosaic.version = 11 : i64} {
  func.func @_cross_block_kernel(%arg0: i32, %arg1: memref<1x5x64xf32, #tpu.memory_space<vmem>>, %arg2: memref<1x64xf32, #tpu.memory_space<vmem>>, %arg3: memref<1x64xf32, #tpu.memory_space<vmem>>, %arg4: memref<64x64xbf16, #tpu.memory_space<vmem>>, %arg5: memref<1x64xf32, #tpu.memory_space<vmem>>, %arg6: memref<64x128xbf16, #tpu.memory_space<vmem>>, %arg7: memref<1x128xf32, #tpu.memory_space<vmem>>, %arg8: memref<64x64xf32, #tpu.memory_space<vmem>>, %arg9: memref<1x64xf32, #tpu.memory_space<vmem>>, %arg10: memref<1x1x64xf32, #tpu.memory_space<vmem>>) attributes {dimension_semantics = [#tpu.dimension_semantics<parallel>], iteration_bounds = array<i64: 2>, scalar_prefetch = 0 : i64, scratch_operands = 0 : i64, tpu.core_type = #tpu.core_type<tc>, window_params = [{transform_indices = @transform_0, window_bounds = array<i64: 1, 5, 64>}, {pipeline_mode = #tpu.pipeline_mode<synchronous>, transform_indices = @transform_1, window_bounds = array<i64: 1, 64>}, {pipeline_mode = #tpu.pipeline_mode<synchronous>, transform_indices = @transform_2, window_bounds = array<i64: 1, 64>}, {pipeline_mode = #tpu.pipeline_mode<synchronous>, transform_indices = @transform_3, window_bounds = array<i64: 64, 64>}, {pipeline_mode = #tpu.pipeline_mode<synchronous>, transform_indices = @transform_4, window_bounds = array<i64: 1, 64>}, {pipeline_mode = #tpu.pipeline_mode<synchronous>, transform_indices = @transform_5, window_bounds = array<i64: 64, 128>}, {pipeline_mode = #tpu.pipeline_mode<synchronous>, transform_indices = @transform_6, window_bounds = array<i64: 1, 128>}, {pipeline_mode = #tpu.pipeline_mode<synchronous>, transform_indices = @transform_7, window_bounds = array<i64: 64, 64>}, {pipeline_mode = #tpu.pipeline_mode<synchronous>, transform_indices = @transform_8, window_bounds = array<i64: 1, 64>}, {transform_indices = @transform_9, window_bounds = array<i64: 1, 1, 64>}]} {
    %c0 = arith.constant 0 : index
    %c0_0 = arith.constant 0 : index
    %c0_1 = arith.constant 0 : index
    %0 = vector.load %arg1[%c0, %c0_0, %c0_1] : memref<1x5x64xf32, #tpu.memory_space<vmem>>, vector<1x5x64xf32>
    %1 = vector.shape_cast %0 : vector<1x5x64xf32> to vector<5x64xf32>
    %c0_2 = arith.constant 0 : index
    %c0_3 = arith.constant 0 : index
    %2 = vector.load %arg2[%c0_2, %c0_3] : memref<1x64xf32, #tpu.memory_space<vmem>>, vector<1x64xf32>
    %c0_4 = arith.constant 0 : index
    %c0_5 = arith.constant 0 : index
    %3 = vector.load %arg3[%c0_4, %c0_5] : memref<1x64xf32, #tpu.memory_space<vmem>>, vector<1x64xf32>
    %cst = arith.constant dense<0.000000e+00> : vector<5xf32>
    %4 = vector.multi_reduction <add>, %1, %cst [1] : vector<5x64xf32> to vector<5xf32>
    %5 = vector.shape_cast %4 : vector<5xf32> to vector<5x1xf32>
    %cst_6 = arith.constant 6.400000e+01 : f32
    %6 = vector.broadcast %cst_6 : f32 to vector<5x1xf32>
    %7 = arith.divf %5, %6 : vector<5x1xf32>
    %8 = vector.broadcast %7 : vector<5x1xf32> to vector<5x64xf32>
    %9 = arith.subf %1, %8 : vector<5x64xf32>
    %10 = arith.mulf %9, %9 : vector<5x64xf32>
    %cst_7 = arith.constant dense<0.000000e+00> : vector<5xf32>
    %11 = vector.multi_reduction <add>, %10, %cst_7 [1] : vector<5x64xf32> to vector<5xf32>
    %12 = vector.shape_cast %11 : vector<5xf32> to vector<5x1xf32>
    %cst_8 = arith.constant 6.400000e+01 : f32
    %13 = vector.broadcast %cst_8 : f32 to vector<5x1xf32>
    %14 = arith.divf %12, %13 : vector<5x1xf32>
    %cst_9 = arith.constant 9.99999974E-6 : f32
    %15 = vector.broadcast %cst_9 : f32 to vector<5x1xf32>
    %16 = arith.addf %14, %15 : vector<5x1xf32>
    %17 = math.rsqrt %16 : vector<5x1xf32>
    %18 = vector.broadcast %17 : vector<5x1xf32> to vector<5x64xf32>
    %19 = arith.mulf %9, %18 : vector<5x64xf32>
    %20 = vector.broadcast %2 : vector<1x64xf32> to vector<5x64xf32>
    %21 = arith.mulf %19, %20 : vector<5x64xf32>
    %22 = vector.broadcast %3 : vector<1x64xf32> to vector<5x64xf32>
    %23 = arith.addf %21, %22 : vector<5x64xf32>
    %24 = vector.extract_strided_slice %23 {offsets = [0, 0], sizes = [1, 64], strides = [1, 1]} : vector<5x64xf32> to vector<1x64xf32>
    %c0_10 = arith.constant 0 : index
    %c0_11 = arith.constant 0 : index
    %25 = vector.load %arg4[%c0_10, %c0_11] : memref<64x64xbf16, #tpu.memory_space<vmem>>, vector<64x64xbf16>
    %26 = arith.truncf %24 : vector<1x64xf32> to vector<1x64xbf16>
    %cst_12 = arith.constant dense<0.000000e+00> : vector<1x64xf32>
    %27 = tpu.matmul %26, %25, %cst_12 {dimension_numbers = #tpu.dot_dimension_numbers<[1], [0], [0], [1], [0, 0, 1, 1], [], []>} : vector<1x64xbf16>, vector<64x64xbf16>, vector<1x64xf32> -> vector<1x64xf32>
    %c0_13 = arith.constant 0 : index
    %c0_14 = arith.constant 0 : index
    %28 = vector.load %arg5[%c0_13, %c0_14] : memref<1x64xf32, #tpu.memory_space<vmem>>, vector<1x64xf32>
    %29 = arith.addf %27, %28 : vector<1x64xf32>
    %cst_15 = arith.constant 0.353553385 : f32
    %30 = vector.broadcast %cst_15 : f32 to vector<1x64xf32>
    %31 = arith.mulf %29, %30 : vector<1x64xf32>
    %c0_16 = arith.constant 0 : index
    %c0_17 = arith.constant 0 : index
    %32 = vector.load %arg6[%c0_16, %c0_17] : memref<64x128xbf16, #tpu.memory_space<vmem>>, vector<64x128xbf16>
    %33 = arith.truncf %23 : vector<5x64xf32> to vector<5x64xbf16>
    %cst_18 = arith.constant dense<0.000000e+00> : vector<5x128xf32>
    %34 = tpu.matmul %33, %32, %cst_18 {dimension_numbers = #tpu.dot_dimension_numbers<[1], [0], [0], [1], [0, 0, 1, 1], [], []>} : vector<5x64xbf16>, vector<64x128xbf16>, vector<5x128xf32> -> vector<5x128xf32>
    %c0_19 = arith.constant 0 : index
    %c0_20 = arith.constant 0 : index
    %35 = vector.load %arg7[%c0_19, %c0_20] : memref<1x128xf32, #tpu.memory_space<vmem>>, vector<1x128xf32>
    %36 = vector.broadcast %35 : vector<1x128xf32> to vector<5x128xf32>
    %37 = arith.addf %34, %36 : vector<5x128xf32>
    %c0_21 = arith.constant 0 : index
    %c0_22 = arith.constant 0 : index
    %38 = vector.load %arg8[%c0_21, %c0_22] : memref<64x64xf32, #tpu.memory_space<vmem>>, vector<64x64xf32>
    %cst_23 = arith.constant 0.000000e+00 : f32
    %39 = vector.broadcast %cst_23 : f32 to vector<1x64xf32>
    %40 = vector.extract_strided_slice %31 {offsets = [0, 0], sizes = [1, 8], strides = [1, 1]} : vector<1x64xf32> to vector<1x8xf32>
    %41 = arith.truncf %40 : vector<1x8xf32> to vector<1x8xbf16>
    %42 = vector.extract_strided_slice %37 {offsets = [0, 0], sizes = [5, 8], strides = [1, 1]} : vector<5x128xf32> to vector<5x8xf32>
    %43 = arith.truncf %42 : vector<5x8xf32> to vector<5x8xbf16>
    %44 = vector.extract_strided_slice %37 {offsets = [0, 64], sizes = [5, 8], strides = [1, 1]} : vector<5x128xf32> to vector<5x8xf32>
    %45 = arith.truncf %44 : vector<5x8xf32> to vector<5x8xbf16>
    %cst_24 = arith.constant dense<0.000000e+00> : vector<1x5xf32>
    %46 = tpu.matmul %41, %43, %cst_24 {dimension_numbers = #tpu.dot_dimension_numbers<[1], [1], [0], [0], [0, 0, 1, 0], [], []>} : vector<1x8xbf16>, vector<5x8xbf16>, vector<1x5xf32> -> vector<1x5xf32>
    %cst_25 = arith.constant dense<0xFF800000> : vector<1xf32>
    %47 = vector.multi_reduction <maximumf>, %46, %cst_25 [1] : vector<1x5xf32> to vector<1xf32>
    %48 = vector.shape_cast %47 : vector<1xf32> to vector<1x1xf32>
    %49 = vector.broadcast %48 : vector<1x1xf32> to vector<1x5xf32>
    %50 = arith.subf %46, %49 : vector<1x5xf32>
    %51 = math.exp %50 : vector<1x5xf32>
    %cst_26 = arith.constant dense<0.000000e+00> : vector<1xf32>
    %52 = vector.multi_reduction <add>, %51, %cst_26 [1] : vector<1x5xf32> to vector<1xf32>
    %53 = vector.shape_cast %52 : vector<1xf32> to vector<1x1xf32>
    %54 = tpu.reciprocal %53 {approx = true} : vector<1x1xf32> -> vector<1x1xf32>
    %55 = vector.broadcast %54 : vector<1x1xf32> to vector<1x5xf32>
    %56 = arith.mulf %51, %55 : vector<1x5xf32>
    %57 = arith.truncf %56 : vector<1x5xf32> to vector<1x5xbf16>
    %cst_27 = arith.constant dense<0.000000e+00> : vector<1x8xf32>
    %58 = tpu.matmul %57, %45, %cst_27 {dimension_numbers = #tpu.dot_dimension_numbers<[1], [0], [0], [1], [0, 0, 1, 1], [], []>} : vector<1x5xbf16>, vector<5x8xbf16>, vector<1x8xf32> -> vector<1x8xf32>
    %59 = arith.truncf %58 : vector<1x8xf32> to vector<1x8xbf16>
    %60 = vector.extract_strided_slice %38 {offsets = [0, 0], sizes = [8, 64], strides = [1, 1]} : vector<64x64xf32> to vector<8x64xf32>
    %61 = arith.truncf %60 : vector<8x64xf32> to vector<8x64xbf16>
    %cst_28 = arith.constant dense<0.000000e+00> : vector<1x64xf32>
    %62 = tpu.matmul %59, %61, %cst_28 {dimension_numbers = #tpu.dot_dimension_numbers<[1], [0], [0], [1], [0, 0, 1, 1], [], []>} : vector<1x8xbf16>, vector<8x64xbf16>, vector<1x64xf32> -> vector<1x64xf32>
    %63 = arith.addf %39, %62 : vector<1x64xf32>
    %64 = vector.extract_strided_slice %31 {offsets = [0, 8], sizes = [1, 8], strides = [1, 1]} : vector<1x64xf32> to vector<1x8xf32>
    %65 = arith.truncf %64 : vector<1x8xf32> to vector<1x8xbf16>
    %66 = vector.extract_strided_slice %37 {offsets = [0, 8], sizes = [5, 8], strides = [1, 1]} : vector<5x128xf32> to vector<5x8xf32>
    %67 = arith.truncf %66 : vector<5x8xf32> to vector<5x8xbf16>
    %68 = vector.extract_strided_slice %37 {offsets = [0, 72], sizes = [5, 8], strides = [1, 1]} : vector<5x128xf32> to vector<5x8xf32>
    %69 = arith.truncf %68 : vector<5x8xf32> to vector<5x8xbf16>
    %cst_29 = arith.constant dense<0.000000e+00> : vector<1x5xf32>
    %70 = tpu.matmul %65, %67, %cst_29 {dimension_numbers = #tpu.dot_dimension_numbers<[1], [1], [0], [0], [0, 0, 1, 0], [], []>} : vector<1x8xbf16>, vector<5x8xbf16>, vector<1x5xf32> -> vector<1x5xf32>
    %cst_30 = arith.constant dense<0xFF800000> : vector<1xf32>
    %71 = vector.multi_reduction <maximumf>, %70, %cst_30 [1] : vector<1x5xf32> to vector<1xf32>
    %72 = vector.shape_cast %71 : vector<1xf32> to vector<1x1xf32>
    %73 = vector.broadcast %72 : vector<1x1xf32> to vector<1x5xf32>
    %74 = arith.subf %70, %73 : vector<1x5xf32>
    %75 = math.exp %74 : vector<1x5xf32>
    %cst_31 = arith.constant dense<0.000000e+00> : vector<1xf32>
    %76 = vector.multi_reduction <add>, %75, %cst_31 [1] : vector<1x5xf32> to vector<1xf32>
    %77 = vector.shape_cast %76 : vector<1xf32> to vector<1x1xf32>
    %78 = tpu.reciprocal %77 {approx = true} : vector<1x1xf32> -> vector<1x1xf32>
    %79 = vector.broadcast %78 : vector<1x1xf32> to vector<1x5xf32>
    %80 = arith.mulf %75, %79 : vector<1x5xf32>
    %81 = arith.truncf %80 : vector<1x5xf32> to vector<1x5xbf16>
    %cst_32 = arith.constant dense<0.000000e+00> : vector<1x8xf32>
    %82 = tpu.matmul %81, %69, %cst_32 {dimension_numbers = #tpu.dot_dimension_numbers<[1], [0], [0], [1], [0, 0, 1, 1], [], []>} : vector<1x5xbf16>, vector<5x8xbf16>, vector<1x8xf32> -> vector<1x8xf32>
    %83 = arith.truncf %82 : vector<1x8xf32> to vector<1x8xbf16>
    %84 = vector.extract_strided_slice %38 {offsets = [8, 0], sizes = [8, 64], strides = [1, 1]} : vector<64x64xf32> to vector<8x64xf32>
    %85 = arith.truncf %84 : vector<8x64xf32> to vector<8x64xbf16>
    %cst_33 = arith.constant dense<0.000000e+00> : vector<1x64xf32>
    %86 = tpu.matmul %83, %85, %cst_33 {dimension_numbers = #tpu.dot_dimension_numbers<[1], [0], [0], [1], [0, 0, 1, 1], [], []>} : vector<1x8xbf16>, vector<8x64xbf16>, vector<1x64xf32> -> vector<1x64xf32>
    %87 = arith.addf %63, %86 : vector<1x64xf32>
    %88 = vector.extract_strided_slice %31 {offsets = [0, 16], sizes = [1, 8], strides = [1, 1]} : vector<1x64xf32> to vector<1x8xf32>
    %89 = arith.truncf %88 : vector<1x8xf32> to vector<1x8xbf16>
    %90 = vector.extract_strided_slice %37 {offsets = [0, 16], sizes = [5, 8], strides = [1, 1]} : vector<5x128xf32> to vector<5x8xf32>
    %91 = arith.truncf %90 : vector<5x8xf32> to vector<5x8xbf16>
    %92 = vector.extract_strided_slice %37 {offsets = [0, 80], sizes = [5, 8], strides = [1, 1]} : vector<5x128xf32> to vector<5x8xf32>
    %93 = arith.truncf %92 : vector<5x8xf32> to vector<5x8xbf16>
    %cst_34 = arith.constant dense<0.000000e+00> : vector<1x5xf32>
    %94 = tpu.matmul %89, %91, %cst_34 {dimension_numbers = #tpu.dot_dimension_numbers<[1], [1], [0], [0], [0, 0, 1, 0], [], []>} : vector<1x8xbf16>, vector<5x8xbf16>, vector<1x5xf32> -> vector<1x5xf32>
    %cst_35 = arith.constant dense<0xFF800000> : vector<1xf32>
    %95 = vector.multi_reduction <maximumf>, %94, %cst_35 [1] : vector<1x5xf32> to vector<1xf32>
    %96 = vector.shape_cast %95 : vector<1xf32> to vector<1x1xf32>
    %97 = vector.broadcast %96 : vector<1x1xf32> to vector<1x5xf32>
    %98 = arith.subf %94, %97 : vector<1x5xf32>
    %99 = math.exp %98 : vector<1x5xf32>
    %cst_36 = arith.constant dense<0.000000e+00> : vector<1xf32>
    %100 = vector.multi_reduction <add>, %99, %cst_36 [1] : vector<1x5xf32> to vector<1xf32>
    %101 = vector.shape_cast %100 : vector<1xf32> to vector<1x1xf32>
    %102 = tpu.reciprocal %101 {approx = true} : vector<1x1xf32> -> vector<1x1xf32>
    %103 = vector.broadcast %102 : vector<1x1xf32> to vector<1x5xf32>
    %104 = arith.mulf %99, %103 : vector<1x5xf32>
    %105 = arith.truncf %104 : vector<1x5xf32> to vector<1x5xbf16>
    %cst_37 = arith.constant dense<0.000000e+00> : vector<1x8xf32>
    %106 = tpu.matmul %105, %93, %cst_37 {dimension_numbers = #tpu.dot_dimension_numbers<[1], [0], [0], [1], [0, 0, 1, 1], [], []>} : vector<1x5xbf16>, vector<5x8xbf16>, vector<1x8xf32> -> vector<1x8xf32>
    %107 = arith.truncf %106 : vector<1x8xf32> to vector<1x8xbf16>
    %108 = vector.extract_strided_slice %38 {offsets = [16, 0], sizes = [8, 64], strides = [1, 1]} : vector<64x64xf32> to vector<8x64xf32>
    %109 = arith.truncf %108 : vector<8x64xf32> to vector<8x64xbf16>
    %cst_38 = arith.constant dense<0.000000e+00> : vector<1x64xf32>
    %110 = tpu.matmul %107, %109, %cst_38 {dimension_numbers = #tpu.dot_dimension_numbers<[1], [0], [0], [1], [0, 0, 1, 1], [], []>} : vector<1x8xbf16>, vector<8x64xbf16>, vector<1x64xf32> -> vector<1x64xf32>
    %111 = arith.addf %87, %110 : vector<1x64xf32>
    %112 = vector.extract_strided_slice %31 {offsets = [0, 24], sizes = [1, 8], strides = [1, 1]} : vector<1x64xf32> to vector<1x8xf32>
    %113 = arith.truncf %112 : vector<1x8xf32> to vector<1x8xbf16>
    %114 = vector.extract_strided_slice %37 {offsets = [0, 24], sizes = [5, 8], strides = [1, 1]} : vector<5x128xf32> to vector<5x8xf32>
    %115 = arith.truncf %114 : vector<5x8xf32> to vector<5x8xbf16>
    %116 = vector.extract_strided_slice %37 {offsets = [0, 88], sizes = [5, 8], strides = [1, 1]} : vector<5x128xf32> to vector<5x8xf32>
    %117 = arith.truncf %116 : vector<5x8xf32> to vector<5x8xbf16>
    %cst_39 = arith.constant dense<0.000000e+00> : vector<1x5xf32>
    %118 = tpu.matmul %113, %115, %cst_39 {dimension_numbers = #tpu.dot_dimension_numbers<[1], [1], [0], [0], [0, 0, 1, 0], [], []>} : vector<1x8xbf16>, vector<5x8xbf16>, vector<1x5xf32> -> vector<1x5xf32>
    %cst_40 = arith.constant dense<0xFF800000> : vector<1xf32>
    %119 = vector.multi_reduction <maximumf>, %118, %cst_40 [1] : vector<1x5xf32> to vector<1xf32>
    %120 = vector.shape_cast %119 : vector<1xf32> to vector<1x1xf32>
    %121 = vector.broadcast %120 : vector<1x1xf32> to vector<1x5xf32>
    %122 = arith.subf %118, %121 : vector<1x5xf32>
    %123 = math.exp %122 : vector<1x5xf32>
    %cst_41 = arith.constant dense<0.000000e+00> : vector<1xf32>
    %124 = vector.multi_reduction <add>, %123, %cst_41 [1] : vector<1x5xf32> to vector<1xf32>
    %125 = vector.shape_cast %124 : vector<1xf32> to vector<1x1xf32>
    %126 = tpu.reciprocal %125 {approx = true} : vector<1x1xf32> -> vector<1x1xf32>
    %127 = vector.broadcast %126 : vector<1x1xf32> to vector<1x5xf32>
    %128 = arith.mulf %123, %127 : vector<1x5xf32>
    %129 = arith.truncf %128 : vector<1x5xf32> to vector<1x5xbf16>
    %cst_42 = arith.constant dense<0.000000e+00> : vector<1x8xf32>
    %130 = tpu.matmul %129, %117, %cst_42 {dimension_numbers = #tpu.dot_dimension_numbers<[1], [0], [0], [1], [0, 0, 1, 1], [], []>} : vector<1x5xbf16>, vector<5x8xbf16>, vector<1x8xf32> -> vector<1x8xf32>
    %131 = arith.truncf %130 : vector<1x8xf32> to vector<1x8xbf16>
    %132 = vector.extract_strided_slice %38 {offsets = [24, 0], sizes = [8, 64], strides = [1, 1]} : vector<64x64xf32> to vector<8x64xf32>
    %133 = arith.truncf %132 : vector<8x64xf32> to vector<8x64xbf16>
    %cst_43 = arith.constant dense<0.000000e+00> : vector<1x64xf32>
    %134 = tpu.matmul %131, %133, %cst_43 {dimension_numbers = #tpu.dot_dimension_numbers<[1], [0], [0], [1], [0, 0, 1, 1], [], []>} : vector<1x8xbf16>, vector<8x64xbf16>, vector<1x64xf32> -> vector<1x64xf32>
    %135 = arith.addf %111, %134 : vector<1x64xf32>
    %136 = vector.extract_strided_slice %31 {offsets = [0, 32], sizes = [1, 8], strides = [1, 1]} : vector<1x64xf32> to vector<1x8xf32>
    %137 = arith.truncf %136 : vector<1x8xf32> to vector<1x8xbf16>
    %138 = vector.extract_strided_slice %37 {offsets = [0, 32], sizes = [5, 8], strides = [1, 1]} : vector<5x128xf32> to vector<5x8xf32>
    %139 = arith.truncf %138 : vector<5x8xf32> to vector<5x8xbf16>
    %140 = vector.extract_strided_slice %37 {offsets = [0, 96], sizes = [5, 8], strides = [1, 1]} : vector<5x128xf32> to vector<5x8xf32>
    %141 = arith.truncf %140 : vector<5x8xf32> to vector<5x8xbf16>
    %cst_44 = arith.constant dense<0.000000e+00> : vector<1x5xf32>
    %142 = tpu.matmul %137, %139, %cst_44 {dimension_numbers = #tpu.dot_dimension_numbers<[1], [1], [0], [0], [0, 0, 1, 0], [], []>} : vector<1x8xbf16>, vector<5x8xbf16>, vector<1x5xf32> -> vector<1x5xf32>
    %cst_45 = arith.constant dense<0xFF800000> : vector<1xf32>
    %143 = vector.multi_reduction <maximumf>, %142, %cst_45 [1] : vector<1x5xf32> to vector<1xf32>
    %144 = vector.shape_cast %143 : vector<1xf32> to vector<1x1xf32>
    %145 = vector.broadcast %144 : vector<1x1xf32> to vector<1x5xf32>
    %146 = arith.subf %142, %145 : vector<1x5xf32>
    %147 = math.exp %146 : vector<1x5xf32>
    %cst_46 = arith.constant dense<0.000000e+00> : vector<1xf32>
    %148 = vector.multi_reduction <add>, %147, %cst_46 [1] : vector<1x5xf32> to vector<1xf32>
    %149 = vector.shape_cast %148 : vector<1xf32> to vector<1x1xf32>
    %150 = tpu.reciprocal %149 {approx = true} : vector<1x1xf32> -> vector<1x1xf32>
    %151 = vector.broadcast %150 : vector<1x1xf32> to vector<1x5xf32>
    %152 = arith.mulf %147, %151 : vector<1x5xf32>
    %153 = arith.truncf %152 : vector<1x5xf32> to vector<1x5xbf16>
    %cst_47 = arith.constant dense<0.000000e+00> : vector<1x8xf32>
    %154 = tpu.matmul %153, %141, %cst_47 {dimension_numbers = #tpu.dot_dimension_numbers<[1], [0], [0], [1], [0, 0, 1, 1], [], []>} : vector<1x5xbf16>, vector<5x8xbf16>, vector<1x8xf32> -> vector<1x8xf32>
    %155 = arith.truncf %154 : vector<1x8xf32> to vector<1x8xbf16>
    %156 = vector.extract_strided_slice %38 {offsets = [32, 0], sizes = [8, 64], strides = [1, 1]} : vector<64x64xf32> to vector<8x64xf32>
    %157 = arith.truncf %156 : vector<8x64xf32> to vector<8x64xbf16>
    %cst_48 = arith.constant dense<0.000000e+00> : vector<1x64xf32>
    %158 = tpu.matmul %155, %157, %cst_48 {dimension_numbers = #tpu.dot_dimension_numbers<[1], [0], [0], [1], [0, 0, 1, 1], [], []>} : vector<1x8xbf16>, vector<8x64xbf16>, vector<1x64xf32> -> vector<1x64xf32>
    %159 = arith.addf %135, %158 : vector<1x64xf32>
    %160 = vector.extract_strided_slice %31 {offsets = [0, 40], sizes = [1, 8], strides = [1, 1]} : vector<1x64xf32> to vector<1x8xf32>
    %161 = arith.truncf %160 : vector<1x8xf32> to vector<1x8xbf16>
    %162 = vector.extract_strided_slice %37 {offsets = [0, 40], sizes = [5, 8], strides = [1, 1]} : vector<5x128xf32> to vector<5x8xf32>
    %163 = arith.truncf %162 : vector<5x8xf32> to vector<5x8xbf16>
    %164 = vector.extract_strided_slice %37 {offsets = [0, 104], sizes = [5, 8], strides = [1, 1]} : vector<5x128xf32> to vector<5x8xf32>
    %165 = arith.truncf %164 : vector<5x8xf32> to vector<5x8xbf16>
    %cst_49 = arith.constant dense<0.000000e+00> : vector<1x5xf32>
    %166 = tpu.matmul %161, %163, %cst_49 {dimension_numbers = #tpu.dot_dimension_numbers<[1], [1], [0], [0], [0, 0, 1, 0], [], []>} : vector<1x8xbf16>, vector<5x8xbf16>, vector<1x5xf32> -> vector<1x5xf32>
    %cst_50 = arith.constant dense<0xFF800000> : vector<1xf32>
    %167 = vector.multi_reduction <maximumf>, %166, %cst_50 [1] : vector<1x5xf32> to vector<1xf32>
    %168 = vector.shape_cast %167 : vector<1xf32> to vector<1x1xf32>
    %169 = vector.broadcast %168 : vector<1x1xf32> to vector<1x5xf32>
    %170 = arith.subf %166, %169 : vector<1x5xf32>
    %171 = math.exp %170 : vector<1x5xf32>
    %cst_51 = arith.constant dense<0.000000e+00> : vector<1xf32>
    %172 = vector.multi_reduction <add>, %171, %cst_51 [1] : vector<1x5xf32> to vector<1xf32>
    %173 = vector.shape_cast %172 : vector<1xf32> to vector<1x1xf32>
    %174 = tpu.reciprocal %173 {approx = true} : vector<1x1xf32> -> vector<1x1xf32>
    %175 = vector.broadcast %174 : vector<1x1xf32> to vector<1x5xf32>
    %176 = arith.mulf %171, %175 : vector<1x5xf32>
    %177 = arith.truncf %176 : vector<1x5xf32> to vector<1x5xbf16>
    %cst_52 = arith.constant dense<0.000000e+00> : vector<1x8xf32>
    %178 = tpu.matmul %177, %165, %cst_52 {dimension_numbers = #tpu.dot_dimension_numbers<[1], [0], [0], [1], [0, 0, 1, 1], [], []>} : vector<1x5xbf16>, vector<5x8xbf16>, vector<1x8xf32> -> vector<1x8xf32>
    %179 = arith.truncf %178 : vector<1x8xf32> to vector<1x8xbf16>
    %180 = vector.extract_strided_slice %38 {offsets = [40, 0], sizes = [8, 64], strides = [1, 1]} : vector<64x64xf32> to vector<8x64xf32>
    %181 = arith.truncf %180 : vector<8x64xf32> to vector<8x64xbf16>
    %cst_53 = arith.constant dense<0.000000e+00> : vector<1x64xf32>
    %182 = tpu.matmul %179, %181, %cst_53 {dimension_numbers = #tpu.dot_dimension_numbers<[1], [0], [0], [1], [0, 0, 1, 1], [], []>} : vector<1x8xbf16>, vector<8x64xbf16>, vector<1x64xf32> -> vector<1x64xf32>
    %183 = arith.addf %159, %182 : vector<1x64xf32>
    %184 = vector.extract_strided_slice %31 {offsets = [0, 48], sizes = [1, 8], strides = [1, 1]} : vector<1x64xf32> to vector<1x8xf32>
    %185 = arith.truncf %184 : vector<1x8xf32> to vector<1x8xbf16>
    %186 = vector.extract_strided_slice %37 {offsets = [0, 48], sizes = [5, 8], strides = [1, 1]} : vector<5x128xf32> to vector<5x8xf32>
    %187 = arith.truncf %186 : vector<5x8xf32> to vector<5x8xbf16>
    %188 = vector.extract_strided_slice %37 {offsets = [0, 112], sizes = [5, 8], strides = [1, 1]} : vector<5x128xf32> to vector<5x8xf32>
    %189 = arith.truncf %188 : vector<5x8xf32> to vector<5x8xbf16>
    %cst_54 = arith.constant dense<0.000000e+00> : vector<1x5xf32>
    %190 = tpu.matmul %185, %187, %cst_54 {dimension_numbers = #tpu.dot_dimension_numbers<[1], [1], [0], [0], [0, 0, 1, 0], [], []>} : vector<1x8xbf16>, vector<5x8xbf16>, vector<1x5xf32> -> vector<1x5xf32>
    %cst_55 = arith.constant dense<0xFF800000> : vector<1xf32>
    %191 = vector.multi_reduction <maximumf>, %190, %cst_55 [1] : vector<1x5xf32> to vector<1xf32>
    %192 = vector.shape_cast %191 : vector<1xf32> to vector<1x1xf32>
    %193 = vector.broadcast %192 : vector<1x1xf32> to vector<1x5xf32>
    %194 = arith.subf %190, %193 : vector<1x5xf32>
    %195 = math.exp %194 : vector<1x5xf32>
    %cst_56 = arith.constant dense<0.000000e+00> : vector<1xf32>
    %196 = vector.multi_reduction <add>, %195, %cst_56 [1] : vector<1x5xf32> to vector<1xf32>
    %197 = vector.shape_cast %196 : vector<1xf32> to vector<1x1xf32>
    %198 = tpu.reciprocal %197 {approx = true} : vector<1x1xf32> -> vector<1x1xf32>
    %199 = vector.broadcast %198 : vector<1x1xf32> to vector<1x5xf32>
    %200 = arith.mulf %195, %199 : vector<1x5xf32>
    %201 = arith.truncf %200 : vector<1x5xf32> to vector<1x5xbf16>
    %cst_57 = arith.constant dense<0.000000e+00> : vector<1x8xf32>
    %202 = tpu.matmul %201, %189, %cst_57 {dimension_numbers = #tpu.dot_dimension_numbers<[1], [0], [0], [1], [0, 0, 1, 1], [], []>} : vector<1x5xbf16>, vector<5x8xbf16>, vector<1x8xf32> -> vector<1x8xf32>
    %203 = arith.truncf %202 : vector<1x8xf32> to vector<1x8xbf16>
    %204 = vector.extract_strided_slice %38 {offsets = [48, 0], sizes = [8, 64], strides = [1, 1]} : vector<64x64xf32> to vector<8x64xf32>
    %205 = arith.truncf %204 : vector<8x64xf32> to vector<8x64xbf16>
    %cst_58 = arith.constant dense<0.000000e+00> : vector<1x64xf32>
    %206 = tpu.matmul %203, %205, %cst_58 {dimension_numbers = #tpu.dot_dimension_numbers<[1], [0], [0], [1], [0, 0, 1, 1], [], []>} : vector<1x8xbf16>, vector<8x64xbf16>, vector<1x64xf32> -> vector<1x64xf32>
    %207 = arith.addf %183, %206 : vector<1x64xf32>
    %208 = vector.extract_strided_slice %31 {offsets = [0, 56], sizes = [1, 8], strides = [1, 1]} : vector<1x64xf32> to vector<1x8xf32>
    %209 = arith.truncf %208 : vector<1x8xf32> to vector<1x8xbf16>
    %210 = vector.extract_strided_slice %37 {offsets = [0, 56], sizes = [5, 8], strides = [1, 1]} : vector<5x128xf32> to vector<5x8xf32>
    %211 = arith.truncf %210 : vector<5x8xf32> to vector<5x8xbf16>
    %212 = vector.extract_strided_slice %37 {offsets = [0, 120], sizes = [5, 8], strides = [1, 1]} : vector<5x128xf32> to vector<5x8xf32>
    %213 = arith.truncf %212 : vector<5x8xf32> to vector<5x8xbf16>
    %cst_59 = arith.constant dense<0.000000e+00> : vector<1x5xf32>
    %214 = tpu.matmul %209, %211, %cst_59 {dimension_numbers = #tpu.dot_dimension_numbers<[1], [1], [0], [0], [0, 0, 1, 0], [], []>} : vector<1x8xbf16>, vector<5x8xbf16>, vector<1x5xf32> -> vector<1x5xf32>
    %cst_60 = arith.constant dense<0xFF800000> : vector<1xf32>
    %215 = vector.multi_reduction <maximumf>, %214, %cst_60 [1] : vector<1x5xf32> to vector<1xf32>
    %216 = vector.shape_cast %215 : vector<1xf32> to vector<1x1xf32>
    %217 = vector.broadcast %216 : vector<1x1xf32> to vector<1x5xf32>
    %218 = arith.subf %214, %217 : vector<1x5xf32>
    %219 = math.exp %218 : vector<1x5xf32>
    %cst_61 = arith.constant dense<0.000000e+00> : vector<1xf32>
    %220 = vector.multi_reduction <add>, %219, %cst_61 [1] : vector<1x5xf32> to vector<1xf32>
    %221 = vector.shape_cast %220 : vector<1xf32> to vector<1x1xf32>
    %222 = tpu.reciprocal %221 {approx = true} : vector<1x1xf32> -> vector<1x1xf32>
    %223 = vector.broadcast %222 : vector<1x1xf32> to vector<1x5xf32>
    %224 = arith.mulf %219, %223 : vector<1x5xf32>
    %225 = arith.truncf %224 : vector<1x5xf32> to vector<1x5xbf16>
    %cst_62 = arith.constant dense<0.000000e+00> : vector<1x8xf32>
    %226 = tpu.matmul %225, %213, %cst_62 {dimension_numbers = #tpu.dot_dimension_numbers<[1], [0], [0], [1], [0, 0, 1, 1], [], []>} : vector<1x5xbf16>, vector<5x8xbf16>, vector<1x8xf32> -> vector<1x8xf32>
    %227 = arith.truncf %226 : vector<1x8xf32> to vector<1x8xbf16>
    %228 = vector.extract_strided_slice %38 {offsets = [56, 0], sizes = [8, 64], strides = [1, 1]} : vector<64x64xf32> to vector<8x64xf32>
    %229 = arith.truncf %228 : vector<8x64xf32> to vector<8x64xbf16>
    %cst_63 = arith.constant dense<0.000000e+00> : vector<1x64xf32>
    %230 = tpu.matmul %227, %229, %cst_63 {dimension_numbers = #tpu.dot_dimension_numbers<[1], [0], [0], [1], [0, 0, 1, 1], [], []>} : vector<1x8xbf16>, vector<8x64xbf16>, vector<1x64xf32> -> vector<1x64xf32>
    %231 = arith.addf %207, %230 : vector<1x64xf32>
    %232 = vector.extract_strided_slice %1 {offsets = [0, 0], sizes = [1, 64], strides = [1, 1]} : vector<5x64xf32> to vector<1x64xf32>
    %233 = arith.addf %232, %231 : vector<1x64xf32>
    %c0_64 = arith.constant 0 : index
    %c0_65 = arith.constant 0 : index
    %234 = vector.load %arg9[%c0_64, %c0_65] : memref<1x64xf32, #tpu.memory_space<vmem>>, vector<1x64xf32>
    %235 = arith.addf %233, %234 : vector<1x64xf32>
    %c0_66 = arith.constant 0 : index
    %c0_67 = arith.constant 0 : index
    %c0_68 = arith.constant 0 : index
    %236 = vector.load %arg10[%c0_66, %c0_67, %c0_68] : memref<1x1x64xf32, #tpu.memory_space<vmem>>, vector<1x1x64xf32>
    %237 = vector.shape_cast %236 : vector<1x1x64xf32> to vector<1x64xf32>
    %238 = vector.shape_cast %235 : vector<1x64xf32> to vector<1x1x64xf32>
    tpu.vector_store %arg10[%c0_66, %c0_67, %c0_68], %238 {strides = array<i32>} : memref<1x1x64xf32, #tpu.memory_space<vmem>>, vector<1x1x64xf32>,
    return
  }
  func.func @transform_0(%arg0: i32) -> (i32, i32, i32) {
    %c0_i32 = arith.constant 0 : i32
    %c0_i32_0 = arith.constant 0 : i32
    %c0_i32_1 = arith.constant 0 : i32
    return %arg0, %c0_i32, %c0_i32_0 : i32, i32, i32
  }
  func.func @transform_1(%arg0: i32) -> (i32, i32) {
    %c0_i32 = arith.constant 0 : i32
    %c0_i32_0 = arith.constant 0 : i32
    %c0_i32_1 = arith.constant 0 : i32
    return %c0_i32, %c0_i32_0 : i32, i32
  }
  func.func @transform_2(%arg0: i32) -> (i32, i32) {
    %c0_i32 = arith.constant 0 : i32
    %c0_i32_0 = arith.constant 0 : i32
    %c0_i32_1 = arith.constant 0 : i32
    return %c0_i32, %c0_i32_0 : i32, i32
  }
  func.func @transform_3(%arg0: i32) -> (i32, i32) {
    %c0_i32 = arith.constant 0 : i32
    %c0_i32_0 = arith.constant 0 : i32
    %c0_i32_1 = arith.constant 0 : i32
    return %c0_i32, %c0_i32_0 : i32, i32
  }
  func.func @transform_4(%arg0: i32) -> (i32, i32) {
    %c0_i32 = arith.constant 0 : i32
    %c0_i32_0 = arith.constant 0 : i32
    %c0_i32_1 = arith.constant 0 : i32
    return %c0_i32, %c0_i32_0 : i32, i32
  }
  func.func @transform_5(%arg0: i32) -> (i32, i32) {
    %c0_i32 = arith.constant 0 : i32
    %c0_i32_0 = arith.constant 0 : i32
    %c0_i32_1 = arith.constant 0 : i32
    return %c0_i32, %c0_i32_0 : i32, i32
  }
  func.func @transform_6(%arg0: i32) -> (i32, i32) {
    %c0_i32 = arith.constant 0 : i32
    %c0_i32_0 = arith.constant 0 : i32
    %c0_i32_1 = arith.constant 0 : i32
    return %c0_i32, %c0_i32_0 : i32, i32
  }
  func.func @transform_7(%arg0: i32) -> (i32, i32) {
    %c0_i32 = arith.constant 0 : i32
    %c0_i32_0 = arith.constant 0 : i32
    %c0_i32_1 = arith.constant 0 : i32
    return %c0_i32, %c0_i32_0 : i32, i32
  }
  func.func @transform_8(%arg0: i32) -> (i32, i32) {
    %c0_i32 = arith.constant 0 : i32
    %c0_i32_0 = arith.constant 0 : i32
    %c0_i32_1 = arith.constant 0 : i32
    return %c0_i32, %c0_i32_0 : i32, i32
  }
  func.func @transform_9(%arg0: i32) -> (i32, i32, i32) {
    %c0_i32 = arith.constant 0 : i32
    %c0_i32_0 = arith.constant 0 : i32
    %c0_i32_1 = arith.constant 0 : i32
    return %arg0, %c0_i32, %c0_i32_0 : i32, i32, i32
  }
}

module attributes {stable_mosaic.version = 11 : i64} {
  func.func @_ln_linear_kernel(%arg0: i32, %arg1: memref<2x32xf32, #tpu.memory_space<vmem>>, %arg2: memref<1x32xf32, #tpu.memory_space<vmem>>, %arg3: memref<1x32xf32, #tpu.memory_space<vmem>>, %arg4: memref<32x128xbf16, #tpu.memory_space<vmem>>, %arg5: memref<1x128xf32, #tpu.memory_space<vmem>>, %arg6: memref<2x128xf32, #tpu.memory_space<vmem>>) attributes {dimension_semantics = [#tpu.dimension_semantics<parallel>], iteration_bounds = array<i64: 1>, scalar_prefetch = 0 : i64, scratch_operands = 0 : i64, tpu.core_type = #tpu.core_type<tc>, window_params = [{transform_indices = @transform_0, window_bounds = array<i64: 2, 32>}, {pipeline_mode = #tpu.pipeline_mode<synchronous>, transform_indices = @transform_1, window_bounds = array<i64: 1, 32>}, {pipeline_mode = #tpu.pipeline_mode<synchronous>, transform_indices = @transform_2, window_bounds = array<i64: 1, 32>}, {pipeline_mode = #tpu.pipeline_mode<synchronous>, transform_indices = @transform_3, window_bounds = array<i64: 32, 128>}, {pipeline_mode = #tpu.pipeline_mode<synchronous>, transform_indices = @transform_4, window_bounds = array<i64: 1, 128>}, {transform_indices = @transform_5, window_bounds = array<i64: 2, 128>}]} {
    %c0 = arith.constant 0 : index
    %c0_0 = arith.constant 0 : index
    %0 = vector.load %arg1[%c0, %c0_0] : memref<2x32xf32, #tpu.memory_space<vmem>>, vector<2x32xf32>
    %c0_1 = arith.constant 0 : index
    %c0_2 = arith.constant 0 : index
    %1 = vector.load %arg2[%c0_1, %c0_2] : memref<1x32xf32, #tpu.memory_space<vmem>>, vector<1x32xf32>
    %c0_3 = arith.constant 0 : index
    %c0_4 = arith.constant 0 : index
    %2 = vector.load %arg3[%c0_3, %c0_4] : memref<1x32xf32, #tpu.memory_space<vmem>>, vector<1x32xf32>
    %cst = arith.constant dense<0.000000e+00> : vector<2xf32>
    %3 = vector.multi_reduction <add>, %0, %cst [1] : vector<2x32xf32> to vector<2xf32>
    %4 = vector.shape_cast %3 : vector<2xf32> to vector<2x1xf32>
    %cst_5 = arith.constant 3.200000e+01 : f32
    %5 = vector.broadcast %cst_5 : f32 to vector<2x1xf32>
    %6 = arith.divf %4, %5 : vector<2x1xf32>
    %7 = vector.broadcast %6 : vector<2x1xf32> to vector<2x32xf32>
    %8 = arith.subf %0, %7 : vector<2x32xf32>
    %9 = arith.mulf %8, %8 : vector<2x32xf32>
    %cst_6 = arith.constant dense<0.000000e+00> : vector<2xf32>
    %10 = vector.multi_reduction <add>, %9, %cst_6 [1] : vector<2x32xf32> to vector<2xf32>
    %11 = vector.shape_cast %10 : vector<2xf32> to vector<2x1xf32>
    %cst_7 = arith.constant 3.200000e+01 : f32
    %12 = vector.broadcast %cst_7 : f32 to vector<2x1xf32>
    %13 = arith.divf %11, %12 : vector<2x1xf32>
    %cst_8 = arith.constant 9.99999974E-6 : f32
    %14 = vector.broadcast %cst_8 : f32 to vector<2x1xf32>
    %15 = arith.addf %13, %14 : vector<2x1xf32>
    %16 = math.rsqrt %15 : vector<2x1xf32>
    %17 = vector.broadcast %16 : vector<2x1xf32> to vector<2x32xf32>
    %18 = arith.mulf %8, %17 : vector<2x32xf32>
    %19 = vector.broadcast %1 : vector<1x32xf32> to vector<2x32xf32>
    %20 = arith.mulf %18, %19 : vector<2x32xf32>
    %21 = vector.broadcast %2 : vector<1x32xf32> to vector<2x32xf32>
    %22 = arith.addf %20, %21 : vector<2x32xf32>
    %c0_9 = arith.constant 0 : index
    %c0_10 = arith.constant 0 : index
    %23 = vector.load %arg4[%c0_9, %c0_10] : memref<32x128xbf16, #tpu.memory_space<vmem>>, vector<32x128xbf16>
    %24 = arith.truncf %22 : vector<2x32xf32> to vector<2x32xbf16>
    %cst_11 = arith.constant dense<0.000000e+00> : vector<2x128xf32>
    %25 = tpu.matmul %24, %23, %cst_11 {dimension_numbers = #tpu.dot_dimension_numbers<[1], [0], [0], [1], [0, 0, 1, 1], [], []>} : vector<2x32xbf16>, vector<32x128xbf16>, vector<2x128xf32> -> vector<2x128xf32>
    %c0_12 = arith.constant 0 : index
    %c0_13 = arith.constant 0 : index
    %26 = vector.load %arg5[%c0_12, %c0_13] : memref<1x128xf32, #tpu.memory_space<vmem>>, vector<1x128xf32>
    %27 = vector.broadcast %26 : vector<1x128xf32> to vector<2x128xf32>
    %28 = arith.addf %25, %27 : vector<2x128xf32>
    %c0_14 = arith.constant 0 : index
    %c0_15 = arith.constant 0 : index
    %29 = vector.load %arg6[%c0_14, %c0_15] : memref<2x128xf32, #tpu.memory_space<vmem>>, vector<2x128xf32>
    tpu.vector_store %arg6[%c0_14, %c0_15], %28 {strides = array<i32>} : memref<2x128xf32, #tpu.memory_space<vmem>>, vector<2x128xf32>,
    return
  }
  func.func @transform_0(%arg0: i32) -> (i32, i32) {
    %c0_i32 = arith.constant 0 : i32
    %c0_i32_0 = arith.constant 0 : i32
    return %arg0, %c0_i32 : i32, i32
  }
  func.func @transform_1(%arg0: i32) -> (i32, i32) {
    %c0_i32 = arith.constant 0 : i32
    %c0_i32_0 = arith.constant 0 : i32
    %c0_i32_1 = arith.constant 0 : i32
    return %c0_i32, %c0_i32_0 : i32, i32
  }
  func.func @transform_2(%arg0: i32) -> (i32, i32) {
    %c0_i32 = arith.constant 0 : i32
    %c0_i32_0 = arith.constant 0 : i32
    %c0_i32_1 = arith.constant 0 : i32
    return %c0_i32, %c0_i32_0 : i32, i32
  }
  func.func @transform_3(%arg0: i32) -> (i32, i32) {
    %c0_i32 = arith.constant 0 : i32
    %c0_i32_0 = arith.constant 0 : i32
    %c0_i32_1 = arith.constant 0 : i32
    return %c0_i32, %c0_i32_0 : i32, i32
  }
  func.func @transform_4(%arg0: i32) -> (i32, i32) {
    %c0_i32 = arith.constant 0 : i32
    %c0_i32_0 = arith.constant 0 : i32
    %c0_i32_1 = arith.constant 0 : i32
    return %c0_i32, %c0_i32_0 : i32, i32
  }
  func.func @transform_5(%arg0: i32) -> (i32, i32) {
    %c0_i32 = arith.constant 0 : i32
    %c0_i32_0 = arith.constant 0 : i32
    return %arg0, %c0_i32 : i32, i32
  }
}

</mosaic_0001>

<llo_original>
// kernel: _lambda_.13
$region0: #{_lambda_.13}
  #allocation0 [shape = 'u32[]', space=smem, size = 0x4, offset = 0x4, fixed_abs, tag = 'smem constant byte address 0x4 - core index']
  #allocation1 [shape = 'u32[144,128]{1,0:T(1,128)}', space=vmem, size = 0x12000, scoped, tag = 'internal scratch']
  %s0 = inlined_call_operand.vmem [shape: f32[32,48], index: 0, kind: input, shape index: {}]
  %s1 = inlined_call_operand.vmem [shape: bf16[48,32], index: 1, kind: input, shape index: {}]
  %s2 = inlined_call_operand.vmem [shape: f32[1,32], index: 2, kind: input, shape index: {}]
  %s3 = inlined_call_operand.vmem [shape: f32[32,32], index: 3, kind: output, shape index: {}]
  %s4 = sld [smem:[#allocation0]]
  $region22: #{_lambda_.13} parent=0
    _
  %s6 = ssub.s32 1, %s4
  %s7 = scalar_select 0, %s6, %s4
  // Predicated region
  $region2: #{_lambda_.13} parent=0 // pred_check
    _
  $region3: #{_lambda_.13} parent=0 // pred_check_branch
    %9 = sbr.rel (0) target = $region5
  $region4: #{_lambda_.13} parent=0 // pred_region
    _
  $region5: #{_lambda_.13} parent=0 // pred_fallthru
    _
  // Predicated region
  $region6: #{_lambda_.13} parent=0 // pred_check
    _
  $region7: #{_lambda_.13} parent=0 // pred_check_branch
    %11 = sbr.rel (0) target = $region9
  $region8: #{_lambda_.13} parent=0 // pred_region
    _
  $region9: #{_lambda_.13} parent=0 // pred_fallthru
    _
  // Predicated region
  $region10: #{_lambda_.13} parent=0 // pred_check
    _
  $region11: #{_lambda_.13} parent=0 // pred_check_branch
    %13 = sbr.rel (0) target = $region13
  $region12: #{_lambda_.13} parent=0 // pred_region
    _
  $region13: #{_lambda_.13} parent=0 // pred_fallthru
    _
  %v15 = vld [vmem:[%s0] sm:$0xff]
  %v16 = vld [vmem:[%s0 + $0x8] sm:$0xff]
  %v17 = vld [vmem:[%s0 + $0x10] sm:$0xff]
  %v18 = vld [vmem:[%s0 + $0x18] sm:$0xff]
  %v19 = vld [vmem:[%s1] sm:$0xf]
  %v20 = vld [vmem:[%s1 + $0x4] sm:$0xf]
  %v21 = vld [vmem:[%s1 + $0x8] sm:$0xf]
  %v22 = vld [vmem:[%s1 + $0xc] sm:$0xf]
  %v23 = vld [vmem:[%s1 + $0x10] sm:$0xf]
  %v24 = vld [vmem:[%s1 + $0x14] sm:$0xf]
  %v25 = vpack.c.bf16 %v16, %v15
  %v26 = vpack.c.bf16 %v18, %v17
  %v27 = vld [vmem:[%s2] sm:$0x1]
  %v29 = vlaneseq
  %v30 = vshrl.u32 %v29, 7
  %v31 = vsub.s32 0, %v30
  %v32 = vrot.slane %v27, %v31
  %v40 = vunpack.c.l.b16 %v19
  %v41 = vunpack.c.l.b16 %v20
  %v42 = vunpack.c.l.b16 %v21
  %v43 = vunpack.c.l.b16 %v22
  %v44 = vunpack.c.l.b16 %v23
  %v45 = vunpack.c.l.b16 %v24
  %v46 = vpack.c.b16 %v41, %v40
  %v47 = vpack.c.b16 %v43, %v42
  %v48 = vpack.c.b16 %v45, %v44
  %vm52 = vcmask 392192
  %v54 = vsel %vm52, %v25, 0
  %v57 = vsel %vm52, %v26, 0
  %59 = vmatprep.subr.bf16.mxu0 0
  %60 = vmatpush1.bf16.msra.mxu0 %v46
  %61 = vmatprep.subr.bf16.mxu0 0
  %62 = vmatpush1.bf16.msra.mxu0 %v47
  %63 = vmatprep.subr.bf16.mxu0 0
  %64 = vmatpush1.bf16.msra.mxu0 %v48
  %65 = vmatprep.subr.bf16.mxu0 0
  %66 = vmatpush1.bf16.msra.mxu0 0
  %67 = vmatprep.subr.bf16.mxu0 0
  %68 = vmatpush1.bf16.msra.mxu0 0
  %69 = vmatprep.subr.bf16.mxu0 0
  %70 = vmatpush1.bf16.msra.mxu0 0
  %71 = vmatprep.subr.bf16.mxu0 0
  %72 = vmatpush1.bf16.msra.mxu0 0
  %73 = vmatprep.subr.bf16.mxu0 0
  %74 = vmatpush1.bf16.msra.mxu0 0
  %75 = vmatprep.subr.bf16.mxu0 0
  %76 = vmatpush1.bf16.msra.mxu0 0
  %77 = vmatprep.subr.bf16.mxu0 0
  %78 = vmatpush1.bf16.msra.mxu0 0
  %79 = vmatprep.subr.bf16.mxu0 0
  %80 = vmatpush1.bf16.msra.mxu0 0
  %81 = vmatprep.subr.bf16.mxu0 0
  %82 = vmatpush1.bf16.msra.mxu0 0
  %83 = vmatprep.subr.bf16.mxu0 0
  %84 = vmatpush1.bf16.msra.mxu0 0
  %85 = vmatprep.subr.bf16.mxu0 0
  %86 = vmatpush1.bf16.msra.mxu0 0
  %87 = vmatprep.subr.bf16.mxu0 0
  %88 = vmatpush1.bf16.msra.mxu0 0
  %89 = vmatprep.subr.bf16.mxu0 0
  %90 = vmatpush1.bf16.msra.mxu0 0
  %91 = vmatprep.mubr.bf16.mxu0 0
  %92 = vmatmul.mubr.bf16.gmra.mrb[0].mxu0 %v54
  %v93 = vpop.f32.mrb[0].mxu0
  %v94 = vadd.f32 %v32, %v93
  %v95 = vpop.f32.mrb[0].mxu0
  %v96 = vpop.f32.mrb[0].mxu0
  %v97 = vadd.f32 %v32, %v96
  %v98 = vpop.f32.mrb[0].mxu0
  %99 = vmatprep.mubr.bf16.mxu0 0
  %100 = vmatmul.mubr.bf16.gmra.mrb[0].mxu0 %v57
  %v101 = vpop.f32.mrb[0].mxu0
  %v102 = vadd.f32 %v32, %v101
  %v103 = vpop.f32.mrb[0].mxu0
  %v104 = vpop.f32.mrb[0].mxu0
  %v105 = vadd.f32 %v32, %v104
  %v106 = vpop.f32.mrb[0].mxu0
  %107 = vdwg.mxu0
  %vm108 = vcmask 261120
  %109 = vst.msk [vmem:[%s3] sm:$0xff] %vm108, %v94
  %110 = vst.msk [vmem:[%s3 + $0x8] sm:$0xff] %vm108, %v97
  %111 = vst.msk [vmem:[%s3 + $0x10] sm:$0xff] %vm108, %v102
  %112 = vst.msk [vmem:[%s3 + $0x18] sm:$0xff] %vm108, %v105
  // Predicated region
  $region14: #{_lambda_.13} parent=0 // pred_check
    _
  $region15: #{_lambda_.13} parent=0 // pred_check_branch
    %114 = sbr.rel (0) target = $region17
  $region16: #{_lambda_.13} parent=0 // pred_region
    _
  $region17: #{_lambda_.13} parent=0 // pred_fallthru
    _
  // Predicated region
  $region18: #{_lambda_.13} parent=0 // pred_check
    _
  $region19: #{_lambda_.13} parent=0 // pred_check_branch
    %116 = sbr.rel (0) target = $region21
  $region20: #{_lambda_.13} parent=0 // pred_region
    _
  $region21: #{_lambda_.13} parent=0 // pred_fallthru
    _

// kernel: _lambda_.14
$region0: #{_lambda_.14}
  #allocation0 [shape = 'u32[]', space=smem, size = 0x4, offset = 0x4, fixed_abs, tag = 'smem constant byte address 0x4 - core index']
  #allocation1 [shape = 'u32[144,128]{1,0:T(1,128)}', space=vmem, size = 0x12000, scoped, tag = 'internal scratch']
  %s0 = inlined_call_operand.vmem [shape: f32[8,192], index: 0, kind: input, shape index: {}]
  %s1 = inlined_call_operand.vmem [shape: bf16[192,64], index: 1, kind: input, shape index: {}]
  %s2 = inlined_call_operand.vmem [shape: f32[1,64], index: 2, kind: input, shape index: {}]
  %s3 = inlined_call_operand.vmem [shape: f32[8,64], index: 3, kind: output, shape index: {}]
  %s4 = sld [smem:[#allocation0]]
  $region22: #{_lambda_.14} parent=0
    _
  %s6 = ssub.s32 1, %s4
  %s7 = scalar_select 0, %s6, %s4
  // Predicated region
  $region2: #{_lambda_.14} parent=0 // pred_check
    _
  $region3: #{_lambda_.14} parent=0 // pred_check_branch
    %9 = sbr.rel (0) target = $region5
  $region4: #{_lambda_.14} parent=0 // pred_region
    _
  $region5: #{_lambda_.14} parent=0 // pred_fallthru
    _
  // Predicated region
  $region6: #{_lambda_.14} parent=0 // pred_check
    _
  $region7: #{_lambda_.14} parent=0 // pred_check_branch
    %11 = sbr.rel (0) target = $region9
  $region8: #{_lambda_.14} parent=0 // pred_region
    _
  $region9: #{_lambda_.14} parent=0 // pred_fallthru
    _
  // Predicated region
  $region10: #{_lambda_.14} parent=0 // pred_check
    _
  $region11: #{_lambda_.14} parent=0 // pred_check_branch
    %13 = sbr.rel (0) target = $region13
  $region12: #{_lambda_.14} parent=0 // pred_region
    _
  $region13: #{_lambda_.14} parent=0 // pred_fallthru
    _
  %v15 = vld [vmem:[%s0] sm:$0xff]
  %v16 = vld [vmem:[%s0 + $0x8] sm:$0xff]
  %v17 = vld [vmem:[%s1] sm:$0xf]
  %v18 = vld [vmem:[%s1 + $0x4] sm:$0xf]
  %v19 = vld [vmem:[%s1 + $0x8] sm:$0xf]
  %v20 = vld [vmem:[%s1 + $0xc] sm:$0xf]
  %v21 = vld [vmem:[%s1 + $0x10] sm:$0xf]
  %v22 = vld [vmem:[%s1 + $0x14] sm:$0xf]
  %v23 = vld [vmem:[%s1 + $0x18] sm:$0xf]
  %v24 = vld [vmem:[%s1 + $0x1c] sm:$0xf]
  %v25 = vld [vmem:[%s1 + $0x20] sm:$0xf]
  %v26 = vld [vmem:[%s1 + $0x24] sm:$0xf]
  %v27 = vld [vmem:[%s1 + $0x28] sm:$0xf]
  %v28 = vld [vmem:[%s1 + $0x2c] sm:$0xf]
  %v29 = vld [vmem:[%s1 + $0x30] sm:$0xf]
  %v30 = vld [vmem:[%s1 + $0x34] sm:$0xf]
  %v31 = vld [vmem:[%s1 + $0x38] sm:$0xf]
  %v32 = vld [vmem:[%s1 + $0x3c] sm:$0xf]
  %v33 = vld [vmem:[%s1 + $0x40] sm:$0xf]
  %v34 = vld [vmem:[%s1 + $0x44] sm:$0xf]
  %v35 = vld [vmem:[%s1 + $0x48] sm:$0xf]
  %v36 = vld [vmem:[%s1 + $0x4c] sm:$0xf]
  %v37 = vld [vmem:[%s1 + $0x50] sm:$0xf]
  %v38 = vld [vmem:[%s1 + $0x54] sm:$0xf]
  %v39 = vld [vmem:[%s1 + $0x58] sm:$0xf]
  %v40 = vld [vmem:[%s1 + $0x5c] sm:$0xf]
  %v41 = vpack.c.bf16 %v15, %v15
  %v42 = vpack.c.bf16 %v16, %v16
  %v43 = vld [vmem:[%s2] sm:$0x1]
  %v45 = vlaneseq
  %v46 = vshrl.u32 %v45, 7
  %v47 = vsub.s32 0, %v46
  %v48 = vrot.slane %v43, %v47
  %v74 = vunpack.c.l.b16 %v17
  %v75 = vunpack.c.l.b16 %v18
  %v76 = vunpack.c.l.b16 %v19
  %v77 = vunpack.c.l.b16 %v20
  %v78 = vunpack.c.l.b16 %v21
  %v79 = vunpack.c.l.b16 %v22
  %v80 = vunpack.c.l.b16 %v23
  %v81 = vunpack.c.l.b16 %v24
  %v82 = vunpack.c.l.b16 %v25
  %v83 = vunpack.c.l.b16 %v26
  %v84 = vunpack.c.l.b16 %v27
  %v85 = vunpack.c.l.b16 %v28
  %v86 = vunpack.c.l.b16 %v29
  %v87 = vunpack.c.l.b16 %v30
  %v88 = vunpack.c.l.b16 %v31
  %v89 = vunpack.c.l.b16 %v32
  %v90 = vunpack.c.l.b16 %v33
  %v91 = vunpack.c.l.b16 %v34
  %v92 = vunpack.c.l.b16 %v35
  %v93 = vunpack.c.l.b16 %v36
  %v94 = vunpack.c.l.b16 %v37
  %v95 = vunpack.c.l.b16 %v38
  %v96 = vunpack.c.l.b16 %v39
  %v97 = vunpack.c.l.b16 %v40
  %v98 = vpack.c.b16 %v75, %v74
  %v99 = vpack.c.b16 %v77, %v76
  %v100 = vpack.c.b16 %v79, %v78
  %v101 = vpack.c.b16 %v81, %v80
  %v102 = vpack.c.b16 %v83, %v82
  %v103 = vpack.c.b16 %v85, %v84
  %v104 = vpack.c.b16 %v87, %v86
  %v105 = vpack.c.b16 %v89, %v88
  %v106 = vpack.c.b16 %v91, %v90
  %v107 = vpack.c.b16 %v93, %v92
  %v108 = vpack.c.b16 %v95, %v94
  %v109 = vpack.c.b16 %v97, %v96
  %vm122 = vcmask 523264
  %v124 = vsel %vm122, %v42, 0
  %126 = vmatprep.subr.bf16.mxu0 0
  %127 = vmatpush1.bf16.msra.mxu0 %v98
  %128 = vmatprep.subr.bf16.mxu0 0
  %129 = vmatpush1.bf16.msra.mxu0 %v99
  %130 = vmatprep.subr.bf16.mxu0 0
  %131 = vmatpush1.bf16.msra.mxu0 %v100
  %132 = vmatprep.subr.bf16.mxu0 0
  %133 = vmatpush1.bf16.msra.mxu0 %v101
  %134 = vmatprep.subr.bf16.mxu0 0
  %135 = vmatpush1.bf16.msra.mxu0 %v102
  %136 = vmatprep.subr.bf16.mxu0 0
  %137 = vmatpush1.bf16.msra.mxu0 %v103
  %138 = vmatprep.subr.bf16.mxu0 0
  %139 = vmatpush1.bf16.msra.mxu0 %v104
  %140 = vmatprep.subr.bf16.mxu0 0
  %141 = vmatpush1.bf16.msra.mxu0 %v105
  %142 = vmatprep.subr.bf16.mxu0 0
  %143 = vmatpush1.bf16.msra.mxu0 %v106
  %144 = vmatprep.subr.bf16.mxu0 0
  %145 = vmatpush1.bf16.msra.mxu0 %v107
  %146 = vmatprep.subr.bf16.mxu0 0
  %147 = vmatpush1.bf16.msra.mxu0 %v108
  %148 = vmatprep.subr.bf16.mxu0 0
  %149 = vmatpush1.bf16.msra.mxu0 %v109
  %150 = vmatprep.subr.bf16.mxu0 0
  %151 = vmatpush1.bf16.msra.mxu0 0
  %152 = vmatprep.subr.bf16.mxu0 0
  %153 = vmatpush1.bf16.msra.mxu0 0
  %154 = vmatprep.subr.bf16.mxu0 0
  %155 = vmatpush1.bf16.msra.mxu0 0
  %156 = vmatprep.subr.bf16.mxu0 0
  %157 = vmatpush1.bf16.msra.mxu0 0
  %158 = vmatprep.mubr.bf16.mxu0 %v124
  %159 = vmatmul.mubr.bf16.gmra.mrb[0].mxu0 %v41
  %v160 = vpop.f32.mrb[0].mxu0
  %v161 = vadd.f32 %v48, %v160
  %v162 = vpop.f32.mrb[0].mxu0
  %v163 = vpop.f32.mrb[0].mxu0
  %v164 = vpop.f32.mrb[0].mxu0
  %165 = vdwg.mxu0
  %166 = vst.msk [vmem:[%s3] sm:$0xff] %vm122, %v161
  // Predicated region
  $region14: #{_lambda_.14} parent=0 // pred_check
    _
  $region15: #{_lambda_.14} parent=0 // pred_check_branch
    %168 = sbr.rel (0) target = $region17
  $region16: #{_lambda_.14} parent=0 // pred_region
    _
  $region17: #{_lambda_.14} parent=0 // pred_fallthru
    _
  // Predicated region
  $region18: #{_lambda_.14} parent=0 // pred_check
    _
  $region19: #{_lambda_.14} parent=0 // pred_check_branch
    %170 = sbr.rel (0) target = $region21
  $region20: #{_lambda_.14} parent=0 // pred_region
    _
  $region21: #{_lambda_.14} parent=0 // pred_fallthru
    _

// kernel: _lambda_.15
$region0: #{_lambda_.15}
  #allocation0 [shape = 'u32[]', space=smem, size = 0x4, offset = 0x4, fixed_abs, tag = 'smem constant byte address 0x4 - core index']
  #allocation1 [shape = 'u32[144,128]{1,0:T(1,128)}', space=vmem, size = 0x12000, scoped, tag = 'internal scratch']
  %s0 = inlined_call_operand.vmem [shape: f32[2,17,32], index: 0, kind: input, shape index: {}]
  %s1 = inlined_call_operand.vmem [shape: f32[1,32], index: 1, kind: input, shape index: {}]
  %s2 = inlined_call_operand.vmem [shape: f32[1,32], index: 2, kind: input, shape index: {}]
  %s3 = inlined_call_operand.vmem [shape: bf16[32,96], index: 3, kind: input, shape index: {}]
  %s4 = inlined_call_operand.vmem [shape: f32[1,96], index: 4, kind: input, shape index: {}]
  %s5 = inlined_call_operand.vmem [shape: f32[32,32], index: 5, kind: input, shape index: {}]
  %s6 = inlined_call_operand.vmem [shape: f32[1,32], index: 6, kind: input, shape index: {}]
  %s7 = inlined_call_operand.vmem [shape: f32[1,32], index: 7, kind: input, shape index: {}]
  %s8 = inlined_call_operand.vmem [shape: f32[1,32], index: 8, kind: input, shape index: {}]
  %s9 = inlined_call_operand.vmem [shape: bf16[32,64], index: 9, kind: input, shape index: {}]
  %s10 = inlined_call_operand.vmem [shape: f32[1,64], index: 10, kind: input, shape index: {}]
  %s11 = inlined_call_operand.vmem [shape: bf16[64,32], index: 11, kind: input, shape index: {}]
  %s12 = inlined_call_operand.vmem [shape: f32[1,32], index: 12, kind: input, shape index: {}]
  %s13 = inlined_call_operand.vmem [shape: f32[2,17,32], index: 13, kind: output, shape index: {}]
  %s14 = sld [smem:[#allocation0]]
  $region85: #{_lambda_.15} parent=0
    _
  %s16 = ssub.s32 1, %s14
  %s17 = scalar_select 0, %s16, %s14
  loop: start=0, step=1, limit=4
  $region2: #{_lambda_.15} parent=0 // loop_pre_header
    _
  $region3: #{_lambda_.15} parent=0 // loop_header
    %s19 = sphi 0, %s23
    %p20 = scmp.ge.s32.totalorder %s19, 4
    %s29 = sphi 0, %s31
    %s32 = sphi 0, %s29
    %s33 = sphi 0, %s32
    %s49 = sphi 0, %s33
    %s53 = sphi 0, %s53
    %s55 = sphi 0, %s53
    %s56 = sphi 0, %s55
    %s70 = sphi 0, %s56
    %s74 = sphi 0, %s74
    %s76 = sphi 0, %s74
    %s77 = sphi 0, %s76
    %s91 = sphi 0, %s77
    %s95 = sphi 0, %s95
    %s97 = sphi 0, %s95
    %s98 = sphi 0, %s97
    %s112 = sphi 0, %s98
    %s116 = sphi 0, %s116
    %s118 = sphi 0, %s116
    %s119 = sphi 0, %s118
    %s133 = sphi 0, %s119
    %s137 = sphi 0, %s137
    %s139 = sphi 0, %s137
    %s140 = sphi 0, %s139
    %s154 = sphi 0, %s140
    %s158 = sphi 0, %s158
    %s160 = sphi 0, %s158
    %s161 = sphi 0, %s160
    %s175 = sphi 0, %s161
    %s179 = sphi 0, %s179
    %s181 = sphi 0, %s179
    %s182 = sphi 0, %s181
    %s196 = sphi 0, %s182
    %s200 = sphi 0, %s200
    %s202 = sphi 0, %s200
    %s203 = sphi 0, %s202
    %s217 = sphi 0, %s203
    %s221 = sphi 0, %s221
    %s223 = sphi 0, %s221
    %s224 = sphi 0, %s223
    %s238 = sphi 0, %s224
    %s242 = sphi 0, %s242
    %s244 = sphi 0, %s242
    %s245 = sphi 0, %s244
    %s259 = sphi 0, %s245
    %s263 = sphi 0, %s263
    %s265 = sphi 0, %s263
    %s266 = sphi 0, %s265
    %s280 = sphi 0, %s266
    %s284 = sphi 0, %s284
    %s286 = sphi 0, %s284
    %s287 = sphi 0, %s286
    %s301 = sphi 0, %s287
    %s307 = sphi 0, %s309
    %s310 = sphi 0, %s307
    %s311 = sphi 0, %s310
    %s327 = sphi 0, %s311
  $region4: #{_lambda_.15} parent=0 // loop_header_branch
    %22 = sbr.rel (%p20) target = $region8
  $region5: #{_lambda_.15} parent=0 // loop_body
    %s24 = ssub.s32 %s19, 1
    %s25 = ssub.s32 %s19, 2
    %s26 = sadd.s32 %s19, 1
    %s27 = ssub.s32 %s19, %s26
    %p28 = scmp.eq.s32.totalorder %s27, 0
    %s30 = sadd.s32 %s29, 1
    %s31 = scalar_select %p28, %s29, %s30
    %p34 = pneg %p28
    %p35 = scmp.eq.s32.totalorder %s19, 1
    %p36 = por %p34, %p35
    %p37 = scmp.ne.s32.totalorder %s29, %s32
    %p38 = scmp.eq.s32.totalorder %s19, 0
    %p39 = por %p37, %p38
    %p40 = scmp.ne.s32.totalorder %s29, %s32
    %p41 = scmp.eq.s32.totalorder %s24, 1
    %p42 = por %p40, %p41
    %p43 = scmp.ne.s32.totalorder %s32, %s33
    %p44 = scmp.eq.s32.totalorder %s24, 0
    %p45 = por %p43, %p44
    %p46 = scmp.ne.s32.totalorder %s32, %s33
    %p47 = scmp.eq.s32.totalorder %s25, 1
    %p48 = por %p46, %p47
    %p50 = scmp.ne.s32.totalorder %s33, %s49
    %p51 = scmp.eq.s32.totalorder %s25, 0
    %p52 = por %p50, %p51
    %s54 = sadd.s32 %s53, 1
    %p57 = scmp.eq.s32.totalorder %s19, 1
    %p58 = scmp.ne.s32.totalorder %s53, %s55
    %p59 = scmp.eq.s32.totalorder %s19, 0
    %p60 = por %p58, %p59
    %p61 = scmp.ne.s32.totalorder %s53, %s55
    %p62 = scmp.eq.s32.totalorder %s24, 1
    %p63 = por %p61, %p62
    %p64 = scmp.ne.s32.totalorder %s55, %s56
    %p65 = scmp.eq.s32.totalorder %s24, 0
    %p66 = por %p64, %p65
    %p67 = scmp.ne.s32.totalorder %s55, %s56
    %p68 = scmp.eq.s32.totalorder %s25, 1
    %p69 = por %p67, %p68
    %p71 = scmp.ne.s32.totalorder %s56, %s70
    %p72 = scmp.eq.s32.totalorder %s25, 0
    %p73 = por %p71, %p72
    %s75 = sadd.s32 %s74, 1
    %p78 = scmp.eq.s32.totalorder %s19, 1
    %p79 = scmp.ne.s32.totalorder %s74, %s76
    %p80 = scmp.eq.s32.totalorder %s19, 0
    %p81 = por %p79, %p80
    %p82 = scmp.ne.s32.totalorder %s74, %s76
    %p83 = scmp.eq.s32.totalorder %s24, 1
    %p84 = por %p82, %p83
    %p85 = scmp.ne.s32.totalorder %s76, %s77
    %p86 = scmp.eq.s32.totalorder %s24, 0
    %p87 = por %p85, %p86
    %p88 = scmp.ne.s32.totalorder %s76, %s77
    %p89 = scmp.eq.s32.totalorder %s25, 1
    %p90 = por %p88, %p89
    %p92 = scmp.ne.s32.totalorder %s77, %s91
    %p93 = scmp.eq.s32.totalorder %s25, 0
    %p94 = por %p92, %p93
    %s96 = sadd.s32 %s95, 1
    %p99 = scmp.eq.s32.totalorder %s19, 1
    %p100 = scmp.ne.s32.totalorder %s95, %s97
    %p101 = scmp.eq.s32.totalorder %s19, 0
    %p102 = por %p100, %p101
    %p103 = scmp.ne.s32.totalorder %s95, %s97
    %p104 = scmp.eq.s32.totalorder %s24, 1
    %p105 = por %p103, %p104
    %p106 = scmp.ne.s32.totalorder %s97, %s98
    %p107 = scmp.eq.s32.totalorder %s24, 0
    %p108 = por %p106, %p107
    %p109 = scmp.ne.s32.totalorder %s97, %s98
    %p110 = scmp.eq.s32.totalorder %s25, 1
    %p111 = por %p109, %p110
    %p113 = scmp.ne.s32.totalorder %s98, %s112
    %p114 = scmp.eq.s32.totalorder %s25, 0
    %p115 = por %p113, %p114
    %s117 = sadd.s32 %s116, 1
    %p120 = scmp.eq.s32.totalorder %s19, 1
    %p121 = scmp.ne.s32.totalorder %s116, %s118
    %p122 = scmp.eq.s32.totalorder %s19, 0
    %p123 = por %p121, %p122
    %p124 = scmp.ne.s32.totalorder %s116, %s118
    %p125 = scmp.eq.s32.totalorder %s24, 1
    %p126 = por %p124, %p125
    %p127 = scmp.ne.s32.totalorder %s118, %s119
    %p128 = scmp.eq.s32.totalorder %s24, 0
    %p129 = por %p127, %p128
    %p130 = scmp.ne.s32.totalorder %s118, %s119
    %p131 = scmp.eq.s32.totalorder %s25, 1
    %p132 = por %p130, %p131
    %p134 = scmp.ne.s32.totalorder %s119, %s133
    %p135 = scmp.eq.s32.totalorder %s25, 0
    %p136 = por %p134, %p135
    %s138 = sadd.s32 %s137, 1
    %p141 = scmp.eq.s32.totalorder %s19, 1
    %p142 = scmp.ne.s32.totalorder %s137, %s139
    %p143 = scmp.eq.s32.totalorder %s19, 0
    %p144 = por %p142, %p143
    %p145 = scmp.ne.s32.totalorder %s137, %s139
    %p146 = scmp.eq.s32.totalorder %s24, 1
    %p147 = por %p145, %p146
    %p148 = scmp.ne.s32.totalorder %s139, %s140
    %p149 = scmp.eq.s32.totalorder %s24, 0
    %p150 = por %p148, %p149
    %p151 = scmp.ne.s32.totalorder %s139, %s140
    %p152 = scmp.eq.s32.totalorder %s25, 1
    %p153 = por %p151, %p152
    %p155 = scmp.ne.s32.totalorder %s140, %s154
    %p156 = scmp.eq.s32.totalorder %s25, 0
    %p157 = por %p155, %p156
    %s159 = sadd.s32 %s158, 1
    %p162 = scmp.eq.s32.totalorder %s19, 1
    %p163 = scmp.ne.s32.totalorder %s158, %s160
    %p164 = scmp.eq.s32.totalorder %s19, 0
    %p165 = por %p163, %p164
    %p166 = scmp.ne.s32.totalorder %s158, %s160
    %p167 = scmp.eq.s32.totalorder %s24, 1
    %p168 = por %p166, %p167
    %p169 = scmp.ne.s32.totalorder %s160, %s161
    %p170 = scmp.eq.s32.totalorder %s24, 0
    %p171 = por %p169, %p170
    %p172 = scmp.ne.s32.totalorder %s160, %s161
    %p173 = scmp.eq.s32.totalorder %s25, 1
    %p174 = por %p172, %p173
    %p176 = scmp.ne.s32.totalorder %s161, %s175
    %p177 = scmp.eq.s32.totalorder %s25, 0
    %p178 = por %p176, %p177
    %s180 = sadd.s32 %s179, 1
    %p183 = scmp.eq.s32.totalorder %s19, 1
    %p184 = scmp.ne.s32.totalorder %s179, %s181
    %p185 = scmp.eq.s32.totalorder %s19, 0
    %p186 = por %p184, %p185
    %p187 = scmp.ne.s32.totalorder %s179, %s181
    %p188 = scmp.eq.s32.totalorder %s24, 1
    %p189 = por %p187, %p188
    %p190 = scmp.ne.s32.totalorder %s181, %s182
    %p191 = scmp.eq.s32.totalorder %s24, 0
    %p192 = por %p190, %p191
    %p193 = scmp.ne.s32.totalorder %s181, %s182
    %p194 = scmp.eq.s32.totalorder %s25, 1
    %p195 = por %p193, %p194
    %p197 = scmp.ne.s32.totalorder %s182, %s196
    %p198 = scmp.eq.s32.totalorder %s25, 0
    %p199 = por %p197, %p198
    %s201 = sadd.s32 %s200, 1
    %p204 = scmp.eq.s32.totalorder %s19, 1
    %p205 = scmp.ne.s32.totalorder %s200, %s202
    %p206 = scmp.eq.s32.totalorder %s19, 0
    %p207 = por %p205, %p206
    %p208 = scmp.ne.s32.totalorder %s200, %s202
    %p209 = scmp.eq.s32.totalorder %s24, 1
    %p210 = por %p208, %p209
    %p211 = scmp.ne.s32.totalorder %s202, %s203
    %p212 = scmp.eq.s32.totalorder %s24, 0
    %p213 = por %p211, %p212
    %p214 = scmp.ne.s32.totalorder %s202, %s203
    %p215 = scmp.eq.s32.totalorder %s25, 1
    %p216 = por %p214, %p215
    %p218 = scmp.ne.s32.totalorder %s203, %s217
    %p219 = scmp.eq.s32.totalorder %s25, 0
    %p220 = por %p218, %p219
    %s222 = sadd.s32 %s221, 1
    %p225 = scmp.eq.s32.totalorder %s19, 1
    %p226 = scmp.ne.s32.totalorder %s221, %s223
    %p227 = scmp.eq.s32.totalorder %s19, 0
    %p228 = por %p226, %p227
    %p229 = scmp.ne.s32.totalorder %s221, %s223
    %p230 = scmp.eq.s32.totalorder %s24, 1
    %p231 = por %p229, %p230
    %p232 = scmp.ne.s32.totalorder %s223, %s224
    %p233 = scmp.eq.s32.totalorder %s24, 0
    %p234 = por %p232, %p233
    %p235 = scmp.ne.s32.totalorder %s223, %s224
    %p236 = scmp.eq.s32.totalorder %s25, 1
    %p237 = por %p235, %p236
    %p239 = scmp.ne.s32.totalorder %s224, %s238
    %p240 = scmp.eq.s32.totalorder %s25, 0
    %p241 = por %p239, %p240
    %s243 = sadd.s32 %s242, 1
    %p246 = scmp.eq.s32.totalorder %s19, 1
    %p247 = scmp.ne.s32.totalorder %s242, %s244
    %p248 = scmp.eq.s32.totalorder %s19, 0
    %p249 = por %p247, %p248
    %p250 = scmp.ne.s32.totalorder %s242, %s244
    %p251 = scmp.eq.s32.totalorder %s24, 1
    %p252 = por %p250, %p251
    %p253 = scmp.ne.s32.totalorder %s244, %s245
    %p254 = scmp.eq.s32.totalorder %s24, 0
    %p255 = por %p253, %p254
    %p256 = scmp.ne.s32.totalorder %s244, %s245
    %p257 = scmp.eq.s32.totalorder %s25, 1
    %p258 = por %p256, %p257
    %p260 = scmp.ne.s32.totalorder %s245, %s259
    %p261 = scmp.eq.s32.totalorder %s25, 0
    %p262 = por %p260, %p261
    %s264 = sadd.s32 %s263, 1
    %p267 = scmp.eq.s32.totalorder %s19, 1
    %p268 = scmp.ne.s32.totalorder %s263, %s265
    %p269 = scmp.eq.s32.totalorder %s19, 0
    %p270 = por %p268, %p269
    %p271 = scmp.ne.s32.totalorder %s263, %s265
    %p272 = scmp.eq.s32.totalorder %s24, 1
    %p273 = por %p271, %p272
    %p274 = scmp.ne.s32.totalorder %s265, %s266
    %p275 = scmp.eq.s32.totalorder %s24, 0
    %p276 = por %p274, %p275
    %p277 = scmp.ne.s32.totalorder %s265, %s266
    %p278 = scmp.eq.s32.totalorder %s25, 1
    %p279 = por %p277, %p278
    %p281 = scmp.ne.s32.totalorder %s266, %s280
    %p282 = scmp.eq.s32.totalorder %s25, 0
    %p283 = por %p281, %p282
    %s285 = sadd.s32 %s284, 1
    %p288 = scmp.eq.s32.totalorder %s19, 1
    %p289 = scmp.ne.s32.totalorder %s284, %s286
    %p290 = scmp.eq.s32.totalorder %s19, 0
    %p291 = por %p289, %p290
    %p292 = scmp.ne.s32.totalorder %s284, %s286
    %p293 = scmp.eq.s32.totalorder %s24, 1
    %p294 = por %p292, %p293
    %p295 = scmp.ne.s32.totalorder %s286, %s287
    %p296 = scmp.eq.s32.totalorder %s24, 0
    %p297 = por %p295, %p296
    %p298 = scmp.ne.s32.totalorder %s286, %s287
    %p299 = scmp.eq.s32.totalorder %s25, 1
    %p300 = por %p298, %p299
    %p302 = scmp.ne.s32.totalorder %s287, %s301
    %p303 = scmp.eq.s32.totalorder %s25, 0
    %p304 = por %p302, %p303
    %s305 = ssub.s32 %s19, %s26
    %p306 = scmp.eq.s32.totalorder %s305, 0
    %s308 = sadd.s32 %s307, 1
    %s309 = scalar_select %p306, %s307, %s308
    %p312 = pneg %p306
    %p313 = scmp.eq.s32.totalorder %s19, 1
    %p314 = por %p312, %p313
    %p315 = scmp.ne.s32.totalorder %s307, %s310
    %p316 = scmp.eq.s32.totalorder %s19, 0
    %p317 = por %p315, %p316
    %p318 = scmp.ne.s32.totalorder %s307, %s310
    %p319 = scmp.eq.s32.totalorder %s24, 1
    %p320 = por %p318, %p319
    %p321 = scmp.ne.s32.totalorder %s310, %s311
    %p322 = scmp.eq.s32.totalorder %s24, 0
    %p323 = por %p321, %p322
    %p324 = scmp.ne.s32.totalorder %s310, %s311
    %p325 = scmp.eq.s32.totalorder %s25, 1
    %p326 = por %p324, %p325
    %p328 = scmp.ne.s32.totalorder %s311, %s327
    %p329 = scmp.eq.s32.totalorder %s25, 0
    %p330 = por %p328, %p329
    %p331 = scmp.le.s32.totalorder 1, %s19
    %p332 = scmp.lt.s32.totalorder %s19, 3
    %p333 = pnand %p331, %p332
    %p334 = pneg %p333
    // Predicated region
    $region9: #{_lambda_.15} parent=5 // pred_check
      _
    $region10: #{_lambda_.15} parent=5 // pred_check_branch
      %336 = sbr.rel (%p333) target = $region12
    $region11: #{_lambda_.15} parent=5 // pred_region
      %s337 = ssub.s32 %s19, 1
      // Predicated region
      $region13: #{_lambda_.15} parent=11 // pred_check
        %p338 = pneg %p66
      $region14: #{_lambda_.15} parent=11 // pred_check_branch
        %340 = sbr.rel (%p338) target = $region16
      $region15: #{_lambda_.15} parent=11 // pred_region
        _
      $region16: #{_lambda_.15} parent=11 // pred_fallthru
        _
      // Predicated region
      $region17: #{_lambda_.15} parent=11 // pred_check
        %p341 = pneg %p87
      $region18: #{_lambda_.15} parent=11 // pred_check_branch
        %343 = sbr.rel (%p341) target = $region20
      $region19: #{_lambda_.15} parent=11 // pred_region
        _
      $region20: #{_lambda_.15} parent=11 // pred_fallthru
        _
      // Predicated region
      $region21: #{_lambda_.15} parent=11 // pred_check
        %p344 = pneg %p108
      $region22: #{_lambda_.15} parent=11 // pred_check_branch
        %346 = sbr.rel (%p344) target = $region24
      $region23: #{_lambda_.15} parent=11 // pred_region
        _
      $region24: #{_lambda_.15} parent=11 // pred_fallthru
        _
      // Predicated region
      $region25: #{_lambda_.15} parent=11 // pred_check
        %p347 = pneg %p129
      $region26: #{_lambda_.15} parent=11 // pred_check_branch
        %349 = sbr.rel (%p347) target = $region28
      $region27: #{_lambda_.15} parent=11 // pred_region
        _
      $region28: #{_lambda_.15} parent=11 // pred_fallthru
        _
      // Predicated region
      $region29: #{_lambda_.15} parent=11 // pred_check
        %p350 = pneg %p150
      $region30: #{_lambda_.15} parent=11 // pred_check_branch
        %352 = sbr.rel (%p350) target = $region32
      $region31: #{_lambda_.15} parent=11 // pred_region
        _
      $region32: #{_lambda_.15} parent=11 // pred_fallthru
        _
      // Predicated region
      $region33: #{_lambda_.15} parent=11 // pred_check
        %p353 = pneg %p171
      $region34: #{_lambda_.15} parent=11 // pred_check_branch
        %355 = sbr.rel (%p353) target = $region36
      $region35: #{_lambda_.15} parent=11 // pred_region
        _
      $region36: #{_lambda_.15} parent=11 // pred_fallthru
        _
      // Predicated region
      $region37: #{_lambda_.15} parent=11 // pred_check
        %p356 = pneg %p192
      $region38: #{_lambda_.15} parent=11 // pred_check_branch
        %358 = sbr.rel (%p356) target = $region40
      $region39: #{_lambda_.15} parent=11 // pred_region
        _
      $region40: #{_lambda_.15} parent=11 // pred_fallthru
        _
      // Predicated region
      $region41: #{_lambda_.15} parent=11 // pred_check
        %p359 = pneg %p213
      $region42: #{_lambda_.15} parent=11 // pred_check_branch
        %361 = sbr.rel (%p359) target = $region44
      $region43: #{_lambda_.15} parent=11 // pred_region
        _
      $region44: #{_lambda_.15} parent=11 // pred_fallthru
        _
      // Predicated region
      $region45: #{_lambda_.15} parent=11 // pred_check
        %p362 = pneg %p234
      $region46: #{_lambda_.15} parent=11 // pred_check_branch
        %364 = sbr.rel (%p362) target = $region48
      $region47: #{_lambda_.15} parent=11 // pred_region
        _
      $region48: #{_lambda_.15} parent=11 // pred_fallthru
        _
      // Predicated region
      $region49: #{_lambda_.15} parent=11 // pred_check
        %p365 = pneg %p255
      $region50: #{_lambda_.15} parent=11 // pred_check_branch
        %367 = sbr.rel (%p365) target = $region52
      $region51: #{_lambda_.15} parent=11 // pred_region
        _
      $region52: #{_lambda_.15} parent=11 // pred_fallthru
        _
      // Predicated region
      $region53: #{_lambda_.15} parent=11 // pred_check
        %p368 = pneg %p276
      $region54: #{_lambda_.15} parent=11 // pred_check_branch
        %370 = sbr.rel (%p368) target = $region56
      $region55: #{_lambda_.15} parent=11 // pred_region
        _
      $region56: #{_lambda_.15} parent=11 // pred_fallthru
        _
      // Predicated region
      $region57: #{_lambda_.15} parent=11 // pred_check
        %p371 = pneg %p297
      $region58: #{_lambda_.15} parent=11 // pred_check_branch
        %373 = sbr.rel (%p371) target = $region60
      $region59: #{_lambda_.15} parent=11 // pred_region
        _
      $region60: #{_lambda_.15} parent=11 // pred_fallthru
        _
    $region12: #{_lambda_.15} parent=5 // pred_fallthru
      _
    %p374 = scmp.lt.s32.totalorder %s19, 2
    // Predicated region
    $region61: #{_lambda_.15} parent=5 // pred_check
      %p375 = pneg %p374
    $region62: #{_lambda_.15} parent=5 // pred_check_branch
      %377 = sbr.rel (%p375) target = $region64
    $region63: #{_lambda_.15} parent=5 // pred_region
      // Predicated region
      $region65: #{_lambda_.15} parent=63 // pred_check
        %p378 = pneg %p39
      $region66: #{_lambda_.15} parent=63 // pred_check_branch
        %380 = sbr.rel (%p378) target = $region68
      $region67: #{_lambda_.15} parent=63 // pred_region
        %p381 = scmp.lt.s32.totalorder %s19, 1
        %s382 = scalar_select %p381, %s19, 1
        %s383 = smul.addr %s382, 3
        %s384 = smul.addr %s383, 8
        %s385 = scalar_lea.vmem %s0, %s384
      $region68: #{_lambda_.15} parent=63 // pred_fallthru
        _
    $region64: #{_lambda_.15} parent=5 // pred_fallthru
      _
    %p386 = scmp.le.s32.totalorder 1, %s19
    %p387 = scmp.lt.s32.totalorder %s19, 3
    %p388 = pnand %p386, %p387
    %p389 = pneg %p388
    // Predicated region
    $region69: #{_lambda_.15} parent=5 // pred_check
      _
    $region70: #{_lambda_.15} parent=5 // pred_check_branch
      %391 = sbr.rel (%p388) target = $region72
    $region71: #{_lambda_.15} parent=5 // pred_region
      %s392 = ssub.s32 %s19, 1
      %p393 = scmp.lt.s32.totalorder %s24, 1
      %s394 = scalar_select %p393, %s24, 1
      %s395 = smul.addr %s394, 3
      %s396 = smul.addr %s395, 8
      %s397 = scalar_lea.vmem %s0, %s396
      %p398 = pneg %p45
      %p399 = pneg %p42
      %p400 = pneg %p66
      %p401 = pneg %p63
      %p402 = pneg %p87
      %p403 = pneg %p84
      %p404 = pneg %p108
      %p405 = pneg %p105
      %p406 = pneg %p129
      %p407 = pneg %p126
      %p408 = pneg %p150
      %p409 = pneg %p147
      %p410 = pneg %p171
      %p411 = pneg %p168
      %p412 = pneg %p192
      %p413 = pneg %p189
      %p414 = pneg %p213
      %p415 = pneg %p210
      %p416 = pneg %p234
      %p417 = pneg %p231
      %p418 = pneg %p255
      %p419 = pneg %p252
      %p420 = pneg %p276
      %p421 = pneg %p273
      %p422 = pneg %p297
      %p423 = pneg %p294
      %p424 = pneg %p323
      %p425 = pneg %p320
      %p426 = scmp.lt.s32.totalorder %s24, 1
      %s427 = scalar_select %p426, %s24, 1
      %s428 = smul.addr %s427, 3
      %s429 = smul.addr %s428, 8
      %s430 = scalar_lea.vmem %s13, %s429
      %p431 = scmp.lt.s32.totalorder %s24, 1
      %s432 = scalar_select %p431, %s24, 1
      %s433 = smul.addr %s432, 3
      %s434 = smul.addr %s433, 8
      %s435 = scalar_lea.vmem %s0, %s434
      %p436 = scmp.lt.s32.totalorder %s24, 1
      %s437 = scalar_select %p436, %s24, 1
      %s438 = smul.addr %s437, 3
      %s439 = smul.addr %s438, 8
      %s440 = scalar_lea.vmem %s13, %s439
      %v442 = vld [vmem:[%s435] sm:$0xff]
      %v443 = vld [vmem:[%s435 + $0x8] sm:$0xff]
      %v444 = vld [vmem:[%s435 + $0x10] sm:$0x1]
      %v445 = vld [vmem:[%s1] sm:$0x1]
      %v446 = vld [vmem:[%s2] sm:$0x1]
      %vm447 = vcmask 261120
      %v448 = vsel %vm447, %v442, 0.0
      %449 = vadd.xlane.f32.xlu0 %v448
      %v450 = vpop.xlane.xlu0 %449
      %v451 = vsel %vm447, %v443, 0.0
      %452 = vadd.xlane.f32.xlu0 %v451
      %v453 = vpop.xlane.xlu0 %452
      %vm454 = vcmask 253952
      %v455 = vsel %vm454, %v444, 0.0
      %456 = vadd.xlane.f32.xlu0 %v455
      %v457 = vpop.xlane.xlu0 %456
      %v458 = vrcp.pop 32.0
      %v459 = vmul.f32 %v450, %v458
      %v460 = vmul.f32 %v453, %v458
      %v461 = vmul.f32 %v457, %v458
      %v462 = vsub.f32 %v442, %v459
      %v463 = vsub.f32 %v443, %v460
      %v464 = vsub.f32 %v444, %v461
      %v465 = vmul.f32 %v462, %v462
      %v466 = vmul.f32 %v463, %v463
      %v467 = vmul.f32 %v464, %v464
      %v468 = vsel %vm447, %v465, 0.0
      %469 = vadd.xlane.f32.xlu0 %v468
      %v470 = vpop.xlane.xlu0 %469
      %v471 = vsel %vm447, %v466, 0.0
      %472 = vadd.xlane.f32.xlu0 %v471
      %v473 = vpop.xlane.xlu0 %472
      %v474 = vsel %vm454, %v467, 0.0
      %475 = vadd.xlane.f32.xlu0 %v474
      %v476 = vpop.xlane.xlu0 %475
      %v477 = vmul.f32 %v470, %v458
      %v478 = vmul.f32 %v473, %v458
      %v479 = vmul.f32 %v476, %v458
      %v480 = vadd.f32 %v477, 1e-05
      %v481 = vadd.f32 %v478, 1e-05
      %v482 = vadd.f32 %v479, 1e-05
      %v483 = vrsqrt.pop %v480
      %v484 = vrsqrt.pop %v481
      %v485 = vrsqrt.pop %v482
      %v486 = vmul.f32 %v462, %v483
      %v487 = vmul.f32 %v463, %v484
      %v488 = vmul.f32 %v464, %v485
      %v490 = vlaneseq
      %v491 = vshrl.u32 %v490, 7
      %v492 = vsub.s32 0, %v491
      %v493 = vrot.slane %v445, %v492
      %v495 = vmul.f32 %v486, %v493
      %v496 = vmul.f32 %v487, %v493
      %v497 = vmul.f32 %v488, %v493
      %v499 = vlaneseq
      %v500 = vshrl.u32 %v499, 7
      %v501 = vsub.s32 0, %v500
      %v502 = vrot.slane %v446, %v501
      %v504 = vadd.f32 %v495, %v502
      %v505 = vadd.f32 %v496, %v502
      %v506 = vadd.f32 %v497, %v502
      %v507 = vld [vmem:[%s3] sm:$0xf]
      %v508 = vld [vmem:[%s3 + $0x4] sm:$0xf]
      %v509 = vld [vmem:[%s3 + $0x8] sm:$0xf]
      %v510 = vld [vmem:[%s3 + $0xc] sm:$0xf]
      %v511 = vpack.c.bf16 %v505, %v504
      %v512 = vpack.c.bf16 %v506, %v506
      %v513 = vld [vmem:[%s4] sm:$0x1]
      %v515 = vlaneseq
      %v516 = vshrl.u32 %v515, 7
      %v517 = vsub.s32 0, %v516
      %v518 = vrot.slane %v513, %v517
      %v524 = vunpack.c.l.b16 %v507
      %v525 = vunpack.c.l.b16 %v508
      %v526 = vunpack.c.l.b16 %v509
      %v527 = vunpack.c.l.b16 %v510
      %v528 = vpack.c.b16 %v525, %v524
      %v529 = vpack.c.b16 %v527, %v526
      %v533 = vsel %vm447, %v511, 0
      %v536 = vsel %vm447, %v512, 0
      %538 = vmatprep.subr.bf16.mxu0 0
      %539 = vmatpush1.bf16.msra.mxu0 %v528
      %540 = vmatprep.subr.bf16.mxu0 0
      %541 = vmatpush1.bf16.msra.mxu0 %v529
      %542 = vmatprep.subr.bf16.mxu0 0
      %543 = vmatpush1.bf16.msra.mxu0 0
      %544 = vmatprep.subr.bf16.mxu0 0
      %545 = vmatpush1.bf16.msra.mxu0 0
      %546 = vmatprep.subr.bf16.mxu0 0
      %547 = vmatpush1.bf16.msra.mxu0 0
      %548 = vmatprep.subr.bf16.mxu0 0
      %549 = vmatpush1.bf16.msra.mxu0 0
      %550 = vmatprep.subr.bf16.mxu0 0
      %551 = vmatpush1.bf16.msra.mxu0 0
      %552 = vmatprep.subr.bf16.mxu0 0
      %553 = vmatpush1.bf16.msra.mxu0 0
      %554 = vmatprep.subr.bf16.mxu0 0
      %555 = vmatpush1.bf16.msra.mxu0 0
      %556 = vmatprep.subr.bf16.mxu0 0
      %557 = vmatpush1.bf16.msra.mxu0 0
      %558 = vmatprep.subr.bf16.mxu0 0
      %559 = vmatpush1.bf16.msra.mxu0 0
      %560 = vmatprep.subr.bf16.mxu0 0
      %561 = vmatpush1.bf16.msra.mxu0 0
      %562 = vmatprep.subr.bf16.mxu0 0
      %563 = vmatpush1.bf16.msra.mxu0 0
      %564 = vmatprep.subr.bf16.mxu0 0
      %565 = vmatpush1.bf16.msra.mxu0 0
      %566 = vmatprep.subr.bf16.mxu0 0
      %567 = vmatpush1.bf16.msra.mxu0 0
      %568 = vmatprep.subr.bf16.mxu0 0
      %569 = vmatpush1.bf16.msra.mxu0 0
      %570 = vmatprep.mubr.bf16.mxu0 0
      %571 = vmatmul.mubr.bf16.gmra.mrb[0].mxu0 %v533
      %v572 = vpop.f32.mrb[0].mxu0
      %v573 = vadd.f32 %v518, %v572
      %v574 = vpop.f32.mrb[0].mxu0
      %v575 = vpop.f32.mrb[0].mxu0
      %v576 = vadd.f32 %v518, %v575
      %v577 = vpop.f32.mrb[0].mxu0
      %578 = vmatprep.mubr.bf16.mxu0 0
      %579 = vmatmul.mubr.bf16.gmra.mrb[0].mxu0 %v536
      %v580 = vpop.f32.mrb[0].mxu0
      %v581 = vadd.f32 %v518, %v580
      %v582 = vpop.f32.mrb[0].mxu0
      %v583 = vpop.f32.mrb[0].mxu0
      %v584 = vpop.f32.mrb[0].mxu0
      %585 = vdwg.mxu0
      %v586 = vld [vmem:[%s5] sm:$0xff]
      %v587 = vld [vmem:[%s5 + $0x8] sm:$0xff]
      %v588 = vld [vmem:[%s5 + $0x10] sm:$0xff]
      %v589 = vld [vmem:[%s5 + $0x18] sm:$0xff]
      %v590 = vmul.f32 %v573, 0.35355338
      %v591 = vmul.f32 %v576, 0.35355338
      %v592 = vmul.f32 %v581, 0.35355338
      %v593 = vpack.c.bf16 %v591, %v590
      %v594 = vpack.c.bf16 %v592, %v592
      %v595 = vpack.c.bf16 %v576, %v573
      %v596 = vpack.c.bf16 %v581, %v581
      %599 = vrot.lane.b32.xlu0 %v595, 96
      %v600 = vpop.permute.xlu0 %599
      %601 = vrot.lane.b32.xlu0 %v596, 96
      %v602 = vpop.permute.xlu0 %601
      %vm603 = vcmask 64512
      %v605 = vsel %vm603, %v593, 0
      %v608 = vsel %vm603, %v594, 0
      %v611 = vsel %vm603, %v600, 0
      %v614 = vsel %vm603, %v602, 0
      %616 = vmatprep.subr.bf16.mxu0 0
      %617 = vmatpush1.bf16.xpose.msra.mxu0 %v611
      %618 = vmatprep.subr.bf16.mxu0 0
      %619 = vmatpush1.bf16.xpose.msra.mxu0 %v614
      %620 = vmatprep.subr.bf16.mxu0 0
      %621 = vmatpush1.bf16.xpose.msra.mxu0 0
      %622 = vmatprep.subr.bf16.mxu0 0
      %623 = vmatpush1.bf16.xpose.msra.mxu0 0
      %624 = vmatprep.subr.bf16.mxu0 0
      %625 = vmatpush1.bf16.xpose.msra.mxu0 0
      %626 = vmatprep.subr.bf16.mxu0 0
      %627 = vmatpush1.bf16.xpose.msra.mxu0 0
      %628 = vmatprep.subr.bf16.mxu0 0
      %629 = vmatpush1.bf16.xpose.msra.mxu0 0
      %630 = vmatprep.subr.bf16.mxu0 0
      %631 = vmatpush1.bf16.xpose.msra.mxu0 0
      %632 = vmatprep.subr.bf16.mxu0 0
      %633 = vmatpush1.bf16.xpose.msra.mxu0 0
      %634 = vmatprep.subr.bf16.mxu0 0
      %635 = vmatpush1.bf16.xpose.msra.mxu0 0
      %636 = vmatprep.subr.bf16.mxu0 0
      %637 = vmatpush1.bf16.xpose.msra.mxu0 0
      %638 = vmatprep.subr.bf16.mxu0 0
      %639 = vmatpush1.bf16.xpose.msra.mxu0 0
      %640 = vmatprep.subr.bf16.mxu0 0
      %641 = vmatpush1.bf16.xpose.msra.mxu0 0
      %642 = vmatprep.subr.bf16.mxu0 0
      %643 = vmatpush1.bf16.xpose.msra.mxu0 0
      %644 = vmatprep.subr.bf16.mxu0 0
      %645 = vmatpush1.bf16.xpose.msra.mxu0 0
      %646 = vmatprep.subr.bf16.mxu0 0
      %647 = vmatpush1.bf16.xpose.msra.mxu0 0
      %648 = vmatprep.mubr.bf16.mxu0 0
      %649 = vmatmul.mubr.bf16.gmra.mrb[0].mxu0 %v605
      %v650 = vpop.f32.mrb[0].mxu0
      %v651 = vadd.f32 0.0, %v650
      %v652 = vpop.f32.mrb[0].mxu0
      %v653 = vpop.f32.mrb[0].mxu0
      %v654 = vadd.f32 0.0, %v653
      %v655 = vpop.f32.mrb[0].mxu0
      %656 = vmatprep.mubr.bf16.mxu0 0
      %657 = vmatmul.mubr.bf16.gmra.mrb[0].mxu0 %v608
      %v658 = vpop.f32.mrb[0].mxu0
      %v659 = vadd.f32 0.0, %v658
      %v660 = vpop.f32.mrb[0].mxu0
      %v661 = vpop.f32.mrb[0].mxu0
      %v662 = vpop.f32.mrb[0].mxu0
      %663 = vdwg.mxu0
      %vm664 = vcmask 138240
      %v665 = vsel %vm664, %v651, -inf
      %666 = vmax.xlane.f32.xlu0 %v665
      %v667 = vpop.xlane.xlu0 %666
      %v668 = vsel %vm664, %v654, -inf
      %669 = vmax.xlane.f32.xlu0 %v668
      %v670 = vpop.xlane.xlu0 %669
      %vm671 = vcmask 131072
      %v672 = vsel %vm671, %v659, -inf
      %673 = vmax.xlane.f32.xlu0 %v672
      %v674 = vpop.xlane.xlu0 %673
      %v675 = vsub.f32 %v651, %v667
      %v676 = vsub.f32 %v654, %v670
      %v677 = vsub.f32 %v659, %v674
      %v678 = vmul.f32 %v675, 1.442695
      %v679 = vpow.pop %v678
      %v680 = vmul.f32 %v676, 1.442695
      %v681 = vpow.pop %v680
      %v682 = vmul.f32 %v677, 1.442695
      %v683 = vpow.pop %v682
      %v684 = vsel %vm664, %v679, 0.0
      %685 = vadd.xlane.f32.xlu0 %v684
      %v686 = vpop.xlane.xlu0 %685
      %v687 = vsel %vm664, %v681, 0.0
      %688 = vadd.xlane.f32.xlu0 %v687
      %v689 = vpop.xlane.xlu0 %688
      %v690 = vsel %vm671, %v683, 0.0
      %691 = vadd.xlane.f32.xlu0 %v690
      %v692 = vpop.xlane.xlu0 %691
      %v693 = vrcp.pop %v686
      %v694 = vrcp.pop %v689
      %v695 = vrcp.pop %v692
      %v696 = vmul.f32 %v679, %v693
      %v697 = vmul.f32 %v681, %v694
      %v698 = vmul.f32 %v683, %v695
      %v699 = vpack.c.bf16 %v697, %v696
      %v700 = vpack.c.bf16 %v698, %v698
      %701 = vrot.lane.b32.xlu0 %v595, 64
      %v702 = vpop.permute.xlu0 %701
      %703 = vrot.lane.b32.xlu0 %v596, 64
      %v704 = vpop.permute.xlu0 %703
      %v707 = vsel %vm664, %v699, 0
      %v710 = vsel %vm664, %v700, 0
      %vm712 = vcmask 1040384
      %v713 = vsel 0, 4294967295, 65535
      %v714 = vsel %vm712, %v713, 0
      %v716 = vand.u32 %v704, %v714
      %718 = vmatprep.subr.bf16.mxu0 0
      %719 = vmatpush1.bf16.msra.mxu0 %v702
      %720 = vmatprep.subr.bf16.mxu0 0
      %721 = vmatpush1.bf16.msra.mxu0 %v716
      %722 = vmatprep.subr.bf16.mxu0 0
      %723 = vmatpush1.bf16.msra.mxu0 0
      %724 = vmatprep.subr.bf16.mxu0 0
      %725 = vmatpush1.bf16.msra.mxu0 0
      %726 = vmatprep.subr.bf16.mxu0 0
      %727 = vmatpush1.bf16.msra.mxu0 0
      %728 = vmatprep.subr.bf16.mxu0 0
      %729 = vmatpush1.bf16.msra.mxu0 0
      %730 = vmatprep.subr.bf16.mxu0 0
      %731 = vmatpush1.bf16.msra.mxu0 0
      %732 = vmatprep.subr.bf16.mxu0 0
      %733 = vmatpush1.bf16.msra.mxu0 0
      %734 = vmatprep.subr.bf16.mxu0 0
      %735 = vmatpush1.bf16.msra.mxu0 0
      %736 = vmatprep.subr.bf16.mxu0 0
      %737 = vmatpush1.bf16.msra.mxu0 0
      %738 = vmatprep.subr.bf16.mxu0 0
      %739 = vmatpush1.bf16.msra.mxu0 0
      %740 = vmatprep.subr.bf16.mxu0 0
      %741 = vmatpush1.bf16.msra.mxu0 0
      %742 = vmatprep.subr.bf16.mxu0 0
      %743 = vmatpush1.bf16.msra.mxu0 0
      %744 = vmatprep.subr.bf16.mxu0 0
      %745 = vmatpush1.bf16.msra.mxu0 0
      %746 = vmatprep.subr.bf16.mxu0 0
      %747 = vmatpush1.bf16.msra.mxu0 0
      %748 = vmatprep.subr.bf16.mxu0 0
      %749 = vmatpush1.bf16.msra.mxu0 0
      %750 = vmatprep.mubr.bf16.mxu0 0
      %751 = vmatmul.mubr.bf16.gmra.mrb[0].mxu0 %v707
      %v752 = vpop.f32.mrb[0].mxu0
      %v753 = vadd.f32 0.0, %v752
      %v754 = vpop.f32.mrb[0].mxu0
      %v755 = vpop.f32.mrb[0].mxu0
      %v756 = vadd.f32 0.0, %v755
      %v757 = vpop.f32.mrb[0].mxu0
      %758 = vmatprep.mubr.bf16.mxu0 0
      %759 = vmatmul.mubr.bf16.gmra.mrb[0].mxu0 %v710
      %v760 = vpop.f32.mrb[0].mxu0
      %v761 = vadd.f32 0.0, %v760
      %v762 = vpop.f32.mrb[0].mxu0
      %v763 = vpop.f32.mrb[0].mxu0
      %v764 = vpop.f32.mrb[0].mxu0
      %765 = vdwg.mxu0
      %v766 = vpack.c.bf16 %v756, %v753
      %v767 = vpack.c.bf16 %v761, %v761
      %v768 = vpack.c.bf16 %v586, %v586
      %771 = vrot.lane.b32.xlu0 %v593, 120
      %v772 = vpop.permute.xlu0 %771
      %773 = vrot.lane.b32.xlu0 %v594, 120
      %v774 = vpop.permute.xlu0 %773
      %775 = vrot.lane.b32.xlu0 %v595, 88
      %v776 = vpop.permute.xlu0 %775
      %777 = vrot.lane.b32.xlu0 %v596, 88
      %v778 = vpop.permute.xlu0 %777
      %v780 = vsel %vm603, %v772, 0
      %v783 = vsel %vm603, %v774, 0
      %v786 = vsel %vm603, %v776, 0
      %v789 = vsel %vm603, %v778, 0
      %791 = vmatprep.subr.bf16.mxu0 0
      %792 = vmatpush1.bf16.xpose.msra.mxu0 %v786
      %793 = vmatprep.subr.bf16.mxu0 0
      %794 = vmatpush1.bf16.xpose.msra.mxu0 %v789
      %795 = vmatprep.subr.bf16.mxu0 0
      %796 = vmatpush1.bf16.xpose.msra.mxu0 0
      %797 = vmatprep.subr.bf16.mxu0 0
      %798 = vmatpush1.bf16.xpose.msra.mxu0 0
      %799 = vmatprep.subr.bf16.mxu0 0
      %800 = vmatpush1.bf16.xpose.msra.mxu0 0
      %801 = vmatprep.subr.bf16.mxu0 0
      %802 = vmatpush1.bf16.xpose.msra.mxu0 0
      %803 = vmatprep.subr.bf16.mxu0 0
      %804 = vmatpush1.bf16.xpose.msra.mxu0 0
      %805 = vmatprep.subr.bf16.mxu0 0
      %806 = vmatpush1.bf16.xpose.msra.mxu0 0
      %807 = vmatprep.subr.bf16.mxu0 0
      %808 = vmatpush1.bf16.xpose.msra.mxu0 0
      %809 = vmatprep.subr.bf16.mxu0 0
      %810 = vmatpush1.bf16.xpose.msra.mxu0 0
      %811 = vmatprep.subr.bf16.mxu0 0
      %812 = vmatpush1.bf16.xpose.msra.mxu0 0
      %813 = vmatprep.subr.bf16.mxu0 0
      %814 = vmatpush1.bf16.xpose.msra.mxu0 0
      %815 = vmatprep.subr.bf16.mxu0 0
      %816 = vmatpush1.bf16.xpose.msra.mxu0 0
      %817 = vmatprep.subr.bf16.mxu0 0
      %818 = vmatpush1.bf16.xpose.msra.mxu0 0
      %819 = vmatprep.subr.bf16.mxu0 0
      %820 = vmatpush1.bf16.xpose.msra.mxu0 0
      %821 = vmatprep.subr.bf16.mxu0 0
      %822 = vmatpush1.bf16.xpose.msra.mxu0 0
      %823 = vmatprep.mubr.bf16.mxu0 0
      %824 = vmatmul.mubr.bf16.gmra.mrb[0].mxu0 %v780
      %v825 = vpop.f32.mrb[0].mxu0
      %v826 = vadd.f32 0.0, %v825
      %v827 = vpop.f32.mrb[0].mxu0
      %v828 = vpop.f32.mrb[0].mxu0
      %v829 = vadd.f32 0.0, %v828
      %v830 = vpop.f32.mrb[0].mxu0
      %831 = vmatprep.mubr.bf16.mxu0 0
      %832 = vmatmul.mubr.bf16.gmra.mrb[0].mxu0 %v783
      %v833 = vpop.f32.mrb[0].mxu0
      %v834 = vadd.f32 0.0, %v833
      %v835 = vpop.f32.mrb[0].mxu0
      %v836 = vpop.f32.mrb[0].mxu0
      %v837 = vpop.f32.mrb[0].mxu0
      %838 = vdwg.mxu0
      %v839 = vsel %vm664, %v826, -inf
      %840 = vmax.xlane.f32.xlu0 %v839
      %v841 = vpop.xlane.xlu0 %840
      %v842 = vsel %vm664, %v829, -inf
      %843 = vmax.xlane.f32.xlu0 %v842
      %v844 = vpop.xlane.xlu0 %843
      %v845 = vsel %vm671, %v834, -inf
      %846 = vmax.xlane.f32.xlu0 %v845
      %v847 = vpop.xlane.xlu0 %846
      %v848 = vsub.f32 %v826, %v841
      %v849 = vsub.f32 %v829, %v844
      %v850 = vsub.f32 %v834, %v847
      %v851 = vmul.f32 %v848, 1.442695
      %v852 = vpow.pop %v851
      %v853 = vmul.f32 %v849, 1.442695
      %v854 = vpow.pop %v853
      %v855 = vmul.f32 %v850, 1.442695
      %v856 = vpow.pop %v855
      %v857 = vsel %vm664, %v852, 0.0
      %858 = vadd.xlane.f32.xlu0 %v857
      %v859 = vpop.xlane.xlu0 %858
      %v860 = vsel %vm664, %v854, 0.0
      %861 = vadd.xlane.f32.xlu0 %v860
      %v862 = vpop.xlane.xlu0 %861
      %v863 = vsel %vm671, %v856, 0.0
      %864 = vadd.xlane.f32.xlu0 %v863
      %v865 = vpop.xlane.xlu0 %864
      %v866 = vrcp.pop %v859
      %v867 = vrcp.pop %v862
      %v868 = vrcp.pop %v865
      %v869 = vmul.f32 %v852, %v866
      %v870 = vmul.f32 %v854, %v867
      %v871 = vmul.f32 %v856, %v868
      %v872 = vpack.c.bf16 %v870, %v869
      %v873 = vpack.c.bf16 %v871, %v871
      %874 = vrot.lane.b32.xlu0 %v595, 56
      %v875 = vpop.permute.xlu0 %874
      %876 = vrot.lane.b32.xlu0 %v596, 56
      %v877 = vpop.permute.xlu0 %876
      %v880 = vsel %vm664, %v872, 0
      %v883 = vsel %vm664, %v873, 0
      %v886 = vand.u32 %v877, %v714
      %888 = vmatprep.subr.bf16.mxu0 0
      %889 = vmatpush1.bf16.msra.mxu0 %v875
      %890 = vmatprep.subr.bf16.mxu0 0
      %891 = vmatpush1.bf16.msra.mxu0 %v886
      %892 = vmatprep.subr.bf16.mxu0 0
      %893 = vmatpush1.bf16.msra.mxu0 0
      %894 = vmatprep.subr.bf16.mxu0 0
      %895 = vmatpush1.bf16.msra.mxu0 0
      %896 = vmatprep.subr.bf16.mxu0 0
      %897 = vmatpush1.bf16.msra.mxu0 0
      %898 = vmatprep.subr.bf16.mxu0 0
      %899 = vmatpush1.bf16.msra.mxu0 0
      %900 = vmatprep.subr.bf16.mxu0 0
      %901 = vmatpush1.bf16.msra.mxu0 0
      %902 = vmatprep.subr.bf16.mxu0 0
      %903 = vmatpush1.bf16.msra.mxu0 0
      %904 = vmatprep.subr.bf16.mxu0 0
      %905 = vmatpush1.bf16.msra.mxu0 0
      %906 = vmatprep.subr.bf16.mxu0 0
      %907 = vmatpush1.bf16.msra.mxu0 0
      %908 = vmatprep.subr.bf16.mxu0 0
      %909 = vmatpush1.bf16.msra.mxu0 0
      %910 = vmatprep.subr.bf16.mxu0 0
      %911 = vmatpush1.bf16.msra.mxu0 0
      %912 = vmatprep.subr.bf16.mxu0 0
      %913 = vmatpush1.bf16.msra.mxu0 0
      %914 = vmatprep.subr.bf16.mxu0 0
      %915 = vmatpush1.bf16.msra.mxu0 0
      %916 = vmatprep.subr.bf16.mxu0 0
      %917 = vmatpush1.bf16.msra.mxu0 0
      %918 = vmatprep.subr.bf16.mxu0 0
      %919 = vmatpush1.bf16.msra.mxu0 0
      %920 = vmatprep.mubr.bf16.mxu0 0
      %921 = vmatmul.mubr.bf16.gmra.mrb[0].mxu0 %v880
      %v922 = vpop.f32.mrb[0].mxu0
      %v923 = vadd.f32 0.0, %v922
      %v924 = vpop.f32.mrb[0].mxu0
      %v925 = vpop.f32.mrb[0].mxu0
      %v926 = vadd.f32 0.0, %v925
      %v927 = vpop.f32.mrb[0].mxu0
      %928 = vmatprep.mubr.bf16.mxu0 0
      %929 = vmatmul.mubr.bf16.gmra.mrb[0].mxu0 %v883
      %v930 = vpop.f32.mrb[0].mxu0
      %v931 = vadd.f32 0.0, %v930
      %v932 = vpop.f32.mrb[0].mxu0
      %v933 = vpop.f32.mrb[0].mxu0
      %v934 = vpop.f32.mrb[0].mxu0
      %935 = vdwg.mxu0
      %v936 = vpack.c.bf16 %v926, %v923
      %v937 = vpack.c.bf16 %v931, %v931
      %v938 = vpack.c.bf16 %v587, %v587
      %v940 = vsel %vm603, %v936, 0
      %v943 = vsel %vm603, %v937, 0
      %vm945 = vcmask 1043456
      %v947 = vsel %vm945, %v938, 0
      %949 = vmatprep.subr.bf16.mxu0 0
      %950 = vmatpush1.bf16.msra.mxu0 %v947
      %951 = vmatprep.subr.bf16.mxu0 0
      %952 = vmatpush1.bf16.msra.mxu0 0
      %953 = vmatprep.subr.bf16.mxu0 0
      %954 = vmatpush1.bf16.msra.mxu0 0
      %955 = vmatprep.subr.bf16.mxu0 0
      %956 = vmatpush1.bf16.msra.mxu0 0
      %957 = vmatprep.subr.bf16.mxu0 0
      %958 = vmatpush1.bf16.msra.mxu0 0
      %959 = vmatprep.subr.bf16.mxu0 0
      %960 = vmatpush1.bf16.msra.mxu0 0
      %961 = vmatprep.subr.bf16.mxu0 0
      %962 = vmatpush1.bf16.msra.mxu0 0
      %963 = vmatprep.subr.bf16.mxu0 0
      %964 = vmatpush1.bf16.msra.mxu0 0
      %965 = vmatprep.subr.bf16.mxu0 0
      %966 = vmatpush1.bf16.msra.mxu0 0
      %967 = vmatprep.subr.bf16.mxu0 0
      %968 = vmatpush1.bf16.msra.mxu0 0
      %969 = vmatprep.subr.bf16.mxu0 0
      %970 = vmatpush1.bf16.msra.mxu0 0
      %971 = vmatprep.subr.bf16.mxu0 0
      %972 = vmatpush1.bf16.msra.mxu0 0
      %973 = vmatprep.subr.bf16.mxu0 0
      %974 = vmatpush1.bf16.msra.mxu0 0
      %975 = vmatprep.subr.bf16.mxu0 0
      %976 = vmatpush1.bf16.msra.mxu0 0
      %977 = vmatprep.subr.bf16.mxu0 0
      %978 = vmatpush1.bf16.msra.mxu0 0
      %979 = vmatprep.subr.bf16.mxu0 0
      %980 = vmatpush1.bf16.msra.mxu0 0
      %981 = vmatprep.mubr.bf16.mxu0 0
      %982 = vmatmul.mubr.bf16.gmra.mrb[0].mxu0 %v940
      %v983 = vpop.f32.mrb[0].mxu0
      %v984 = vadd.f32 0.0, %v983
      %v985 = vpop.f32.mrb[0].mxu0
      %v986 = vpop.f32.mrb[0].mxu0
      %v987 = vadd.f32 0.0, %v986
      %v988 = vpop.f32.mrb[0].mxu0
      %989 = vmatprep.mubr.bf16.mxu0 0
      %990 = vmatmul.mubr.bf16.gmra.mrb[0].mxu0 %v943
      %v991 = vpop.f32.mrb[0].mxu0
      %v992 = vadd.f32 0.0, %v991
      %v993 = vpop.f32.mrb[0].mxu0
      %v994 = vpop.f32.mrb[0].mxu0
      %v995 = vpop.f32.mrb[0].mxu0
      %996 = vdwg.mxu0
      %v998 = vsel %vm603, %v766, 0
      %v1001 = vsel %vm603, %v767, 0
      %v1004 = vsel %vm945, %v768, 0
      %1006 = vmatprep.subr.bf16.mxu0 0
      %1007 = vmatpush1.bf16.msra.mxu0 %v1004
      %1008 = vmatprep.subr.bf16.mxu0 0
      %1009 = vmatpush1.bf16.msra.mxu0 0
      %1010 = vmatprep.subr.bf16.mxu0 0
      %1011 = vmatpush1.bf16.msra.mxu0 0
      %1012 = vmatprep.subr.bf16.mxu0 0
      %1013 = vmatpush1.bf16.msra.mxu0 0
      %1014 = vmatprep.subr.bf16.mxu0 0
      %1015 = vmatpush1.bf16.msra.mxu0 0
      %1016 = vmatprep.subr.bf16.mxu0 0
      %1017 = vmatpush1.bf16.msra.mxu0 0
      %1018 = vmatprep.subr.bf16.mxu0 0
      %1019 = vmatpush1.bf16.msra.mxu0 0
      %1020 = vmatprep.subr.bf16.mxu0 0
      %1021 = vmatpush1.bf16.msra.mxu0 0
      %1022 = vmatprep.subr.bf16.mxu0 0
      %1023 = vmatpush1.bf16.msra.mxu0 0
      %1024 = vmatprep.subr.bf16.mxu0 0
      %1025 = vmatpush1.bf16.msra.mxu0 0
      %1026 = vmatprep.subr.bf16.mxu0 0
      %1027 = vmatpush1.bf16.msra.mxu0 0
      %1028 = vmatprep.subr.bf16.mxu0 0
      %1029 = vmatpush1.bf16.msra.mxu0 0
      %1030 = vmatprep.subr.bf16.mxu0 0
      %1031 = vmatpush1.bf16.msra.mxu0 0
      %1032 = vmatprep.subr.bf16.mxu0 0
      %1033 = vmatpush1.bf16.msra.mxu0 0
      %1034 = vmatprep.subr.bf16.mxu0 0
      %1035 = vmatpush1.bf16.msra.mxu0 0
      %1036 = vmatprep.subr.bf16.mxu0 0
      %1037 = vmatpush1.bf16.msra.mxu0 0
      %1038 = vmatprep.mubr.bf16.mxu0 0
      %1039 = vmatmul.mubr.bf16.gmra.mrb[0].mxu0 %v998
      %v1040 = vpop.f32.mrb[0].mxu0
      %v1041 = vadd.f32 %v984, %v1040
      %v1042 = vpop.f32.mrb[0].mxu0
      %v1043 = vpop.f32.mrb[0].mxu0
      %v1044 = vadd.f32 %v987, %v1043
      %v1045 = vpop.f32.mrb[0].mxu0
      %1046 = vmatprep.mubr.bf16.mxu0 0
      %1047 = vmatmul.mubr.bf16.gmra.mrb[0].mxu0 %v1001
      %v1048 = vpop.f32.mrb[0].mxu0
      %v1049 = vadd.f32 %v992, %v1048
      %v1050 = vpop.f32.mrb[0].mxu0
      %v1051 = vpop.f32.mrb[0].mxu0
      %v1052 = vpop.f32.mrb[0].mxu0
      %1053 = vdwg.mxu0
      %1054 = vrot.lane.b32.xlu0 %v593, 112
      %v1055 = vpop.permute.xlu0 %1054
      %1056 = vrot.lane.b32.xlu0 %v594, 112
      %v1057 = vpop.permute.xlu0 %1056
      %1058 = vrot.lane.b32.xlu0 %v595, 80
      %v1059 = vpop.permute.xlu0 %1058
      %1060 = vrot.lane.b32.xlu0 %v596, 80
      %v1061 = vpop.permute.xlu0 %1060
      %v1063 = vsel %vm603, %v1055, 0
      %v1066 = vsel %vm603, %v1057, 0
      %v1069 = vsel %vm603, %v1059, 0
      %v1072 = vsel %vm603, %v1061, 0
      %1074 = vmatprep.subr.bf16.mxu0 0
      %1075 = vmatpush1.bf16.xpose.msra.mxu0 %v1069
      %1076 = vmatprep.subr.bf16.mxu0 0
      %1077 = vmatpush1.bf16.xpose.msra.mxu0 %v1072
      %1078 = vmatprep.subr.bf16.mxu0 0
      %1079 = vmatpush1.bf16.xpose.msra.mxu0 0
      %1080 = vmatprep.subr.bf16.mxu0 0
      %1081 = vmatpush1.bf16.xpose.msra.mxu0 0
      %1082 = vmatprep.subr.bf16.mxu0 0
      %1083 = vmatpush1.bf16.xpose.msra.mxu0 0
      %1084 = vmatprep.subr.bf16.mxu0 0
      %1085 = vmatpush1.bf16.xpose.msra.mxu0 0
      %1086 = vmatprep.subr.bf16.mxu0 0
      %1087 = vmatpush1.bf16.xpose.msra.mxu0 0
      %1088 = vmatprep.subr.bf16.mxu0 0
      %1089 = vmatpush1.bf16.xpose.msra.mxu0 0
      %1090 = vmatprep.subr.bf16.mxu0 0
      %1091 = vmatpush1.bf16.xpose.msra.mxu0 0
      %1092 = vmatprep.subr.bf16.mxu0 0
      %1093 = vmatpush1.bf16.xpose.msra.mxu0 0
      %1094 = vmatprep.subr.bf16.mxu0 0
      %1095 = vmatpush1.bf16.xpose.msra.mxu0 0
      %1096 = vmatprep.subr.bf16.mxu0 0
      %1097 = vmatpush1.bf16.xpose.msra.mxu0 0
      %1098 = vmatprep.subr.bf16.mxu0 0
      %1099 = vmatpush1.bf16.xpose.msra.mxu0 0
      %1100 = vmatprep.subr.bf16.mxu0 0
      %1101 = vmatpush1.bf16.xpose.msra.mxu0 0
      %1102 = vmatprep.subr.bf16.mxu0 0
      %1103 = vmatpush1.bf16.xpose.msra.mxu0 0
      %1104 = vmatprep.subr.bf16.mxu0 0
      %1105 = vmatpush1.bf16.xpose.msra.mxu0 0
      %1106 = vmatprep.mubr.bf16.mxu0 0
      %1107 = vmatmul.mubr.bf16.gmra.mrb[0].mxu0 %v1063
      %v1108 = vpop.f32.mrb[0].mxu0
      %v1109 = vadd.f32 0.0, %v1108
      %v1110 = vpop.f32.mrb[0].mxu0
      %v1111 = vpop.f32.mrb[0].mxu0
      %v1112 = vadd.f32 0.0, %v1111
      %v1113 = vpop.f32.mrb[0].mxu0
      %1114 = vmatprep.mubr.bf16.mxu0 0
      %1115 = vmatmul.mubr.bf16.gmra.mrb[0].mxu0 %v1066
      %v1116 = vpop.f32.mrb[0].mxu0
      %v1117 = vadd.f32 0.0, %v1116
      %v1118 = vpop.f32.mrb[0].mxu0
      %v1119 = vpop.f32.mrb[0].mxu0
      %v1120 = vpop.f32.mrb[0].mxu0
      %1121 = vdwg.mxu0
      %v1122 = vsel %vm664, %v1109, -inf
      %1123 = vmax.xlane.f32.xlu0 %v1122
      %v1124 = vpop.xlane.xlu0 %1123
      %v1125 = vsel %vm664, %v1112, -inf
      %1126 = vmax.xlane.f32.xlu0 %v1125
      %v1127 = vpop.xlane.xlu0 %1126
      %v1128 = vsel %vm671, %v1117, -inf
      %1129 = vmax.xlane.f32.xlu0 %v1128
      %v1130 = vpop.xlane.xlu0 %1129
      %v1131 = vsub.f32 %v1109, %v1124
      %v1132 = vsub.f32 %v1112, %v1127
      %v1133 = vsub.f32 %v1117, %v1130
      %v1134 = vmul.f32 %v1131, 1.442695
      %v1135 = vpow.pop %v1134
      %v1136 = vmul.f32 %v1132, 1.442695
      %v1137 = vpow.pop %v1136
      %v1138 = vmul.f32 %v1133, 1.442695
      %v1139 = vpow.pop %v1138
      %v1140 = vsel %vm664, %v1135, 0.0
      %1141 = vadd.xlane.f32.xlu0 %v1140
      %v1142 = vpop.xlane.xlu0 %1141
      %v1143 = vsel %vm664, %v1137, 0.0
      %1144 = vadd.xlane.f32.xlu0 %v1143
      %v1145 = vpop.xlane.xlu0 %1144
      %v1146 = vsel %vm671, %v1139, 0.0
      %1147 = vadd.xlane.f32.xlu0 %v1146
      %v1148 = vpop.xlane.xlu0 %1147
      %v1149 = vrcp.pop %v1142
      %v1150 = vrcp.pop %v1145
      %v1151 = vrcp.pop %v1148
      %v1152 = vmul.f32 %v1135, %v1149
      %v1153 = vmul.f32 %v1137, %v1150
      %v1154 = vmul.f32 %v1139, %v1151
      %v1155 = vpack.c.bf16 %v1153, %v1152
      %v1156 = vpack.c.bf16 %v1154, %v1154
      %1157 = vrot.lane.b32.xlu0 %v595, 48
      %v1158 = vpop.permute.xlu0 %1157
      %1159 = vrot.lane.b32.xlu0 %v596, 48
      %v1160 = vpop.permute.xlu0 %1159
      %v1163 = vsel %vm664, %v1155, 0
      %v1166 = vsel %vm664, %v1156, 0
      %v1169 = vand.u32 %v1160, %v714
      %1171 = vmatprep.subr.bf16.mxu0 0
      %1172 = vmatpush1.bf16.msra.mxu0 %v1158
      %1173 = vmatprep.subr.bf16.mxu0 0
      %1174 = vmatpush1.bf16.msra.mxu0 %v1169
      %1175 = vmatprep.subr.bf16.mxu0 0
      %1176 = vmatpush1.bf16.msra.mxu0 0
      %1177 = vmatprep.subr.bf16.mxu0 0
      %1178 = vmatpush1.bf16.msra.mxu0 0
      %1179 = vmatprep.subr.bf16.mxu0 0
      %1180 = vmatpush1.bf16.msra.mxu0 0
      %1181 = vmatprep.subr.bf16.mxu0 0
      %1182 = vmatpush1.bf16.msra.mxu0 0
      %1183 = vmatprep.subr.bf16.mxu0 0
      %1184 = vmatpush1.bf16.msra.mxu0 0
      %1185 = vmatprep.subr.bf16.mxu0 0
      %1186 = vmatpush1.bf16.msra.mxu0 0
      %1187 = vmatprep.subr.bf16.mxu0 0
      %1188 = vmatpush1.bf16.msra.mxu0 0
      %1189 = vmatprep.subr.bf16.mxu0 0
      %1190 = vmatpush1.bf16.msra.mxu0 0
      %1191 = vmatprep.subr.bf16.mxu0 0
      %1192 = vmatpush1.bf16.msra.mxu0 0
      %1193 = vmatprep.subr.bf16.mxu0 0
      %1194 = vmatpush1.bf16.msra.mxu0 0
      %1195 = vmatprep.subr.bf16.mxu0 0
      %1196 = vmatpush1.bf16.msra.mxu0 0
      %1197 = vmatprep.subr.bf16.mxu0 0
      %1198 = vmatpush1.bf16.msra.mxu0 0
      %1199 = vmatprep.subr.bf16.mxu0 0
      %1200 = vmatpush1.bf16.msra.mxu0 0
      %1201 = vmatprep.subr.bf16.mxu0 0
      %1202 = vmatpush1.bf16.msra.mxu0 0
      %1203 = vmatprep.mubr.bf16.mxu0 0
      %1204 = vmatmul.mubr.bf16.gmra.mrb[0].mxu0 %v1163
      %v1205 = vpop.f32.mrb[0].mxu0
      %v1206 = vadd.f32 0.0, %v1205
      %v1207 = vpop.f32.mrb[0].mxu0
      %v1208 = vpop.f32.mrb[0].mxu0
      %v1209 = vadd.f32 0.0, %v1208
      %v1210 = vpop.f32.mrb[0].mxu0
      %1211 = vmatprep.mubr.bf16.mxu0 0
      %1212 = vmatmul.mubr.bf16.gmra.mrb[0].mxu0 %v1166
      %v1213 = vpop.f32.mrb[0].mxu0
      %v1214 = vadd.f32 0.0, %v1213
      %v1215 = vpop.f32.mrb[0].mxu0
      %v1216 = vpop.f32.mrb[0].mxu0
      %v1217 = vpop.f32.mrb[0].mxu0
      %1218 = vdwg.mxu0
      %v1219 = vpack.c.bf16 %v1209, %v1206
      %v1220 = vpack.c.bf16 %v1214, %v1214
      %v1221 = vpack.c.bf16 %v588, %v588
      %v1223 = vsel %vm603, %v1219, 0
      %v1226 = vsel %vm603, %v1220, 0
      %v1229 = vsel %vm945, %v1221, 0
      %1231 = vmatprep.subr.bf16.mxu0 0
      %1232 = vmatpush1.bf16.msra.mxu0 %v1229
      %1233 = vmatprep.subr.bf16.mxu0 0
      %1234 = vmatpush1.bf16.msra.mxu0 0
      %1235 = vmatprep.subr.bf16.mxu0 0
      %1236 = vmatpush1.bf16.msra.mxu0 0
      %1237 = vmatprep.subr.bf16.mxu0 0
      %1238 = vmatpush1.bf16.msra.mxu0 0
      %1239 = vmatprep.subr.bf16.mxu0 0
      %1240 = vmatpush1.bf16.msra.mxu0 0
      %1241 = vmatprep.subr.bf16.mxu0 0
      %1242 = vmatpush1.bf16.msra.mxu0 0
      %1243 = vmatprep.subr.bf16.mxu0 0
      %1244 = vmatpush1.bf16.msra.mxu0 0
      %1245 = vmatprep.subr.bf16.mxu0 0
      %1246 = vmatpush1.bf16.msra.mxu0 0
      %1247 = vmatprep.subr.bf16.mxu0 0
      %1248 = vmatpush1.bf16.msra.mxu0 0
      %1249 = vmatprep.subr.bf16.mxu0 0
      %1250 = vmatpush1.bf16.msra.mxu0 0
      %1251 = vmatprep.subr.bf16.mxu0 0
      %1252 = vmatpush1.bf16.msra.mxu0 0
      %1253 = vmatprep.subr.bf16.mxu0 0
      %1254 = vmatpush1.bf16.msra.mxu0 0
      %1255 = vmatprep.subr.bf16.mxu0 0
      %1256 = vmatpush1.bf16.msra.mxu0 0
      %1257 = vmatprep.subr.bf16.mxu0 0
      %1258 = vmatpush1.bf16.msra.mxu0 0
      %1259 = vmatprep.subr.bf16.mxu0 0
      %1260 = vmatpush1.bf16.msra.mxu0 0
      %1261 = vmatprep.subr.bf16.mxu0 0
      %1262 = vmatpush1.bf16.msra.mxu0 0
      %1263 = vmatprep.mubr.bf16.mxu0 0
      %1264 = vmatmul.mubr.bf16.gmra.mrb[0].mxu0 %v1223
      %v1265 = vpop.f32.mrb[0].mxu0
      %v1266 = vadd.f32 0.0, %v1265
      %v1267 = vpop.f32.mrb[0].mxu0
      %v1268 = vpop.f32.mrb[0].mxu0
      %v1269 = vadd.f32 0.0, %v1268
      %v1270 = vpop.f32.mrb[0].mxu0
      %1271 = vmatprep.mubr.bf16.mxu0 0
      %1272 = vmatmul.mubr.bf16.gmra.mrb[0].mxu0 %v1226
      %v1273 = vpop.f32.mrb[0].mxu0
      %v1274 = vadd.f32 0.0, %v1273
      %v1275 = vpop.f32.mrb[0].mxu0
      %v1276 = vpop.f32.mrb[0].mxu0
      %v1277 = vpop.f32.mrb[0].mxu0
      %1278 = vdwg.mxu0
      %v1279 = vadd.f32 %v1041, %v1266
      %v1280 = vadd.f32 %v1044, %v1269
      %v1281 = vadd.f32 %v1049, %v1274
      %1282 = vrot.lane.b32.xlu0 %v593, 104
      %v1283 = vpop.permute.xlu0 %1282
      %1284 = vrot.lane.b32.xlu0 %v594, 104
      %v1285 = vpop.permute.xlu0 %1284
      %1286 = vrot.lane.b32.xlu0 %v595, 72
      %v1287 = vpop.permute.xlu0 %1286
      %1288 = vrot.lane.b32.xlu0 %v596, 72
      %v1289 = vpop.permute.xlu0 %1288
      %v1291 = vsel %vm603, %v1283, 0
      %v1294 = vsel %vm603, %v1285, 0
      %v1297 = vsel %vm603, %v1287, 0
      %v1300 = vsel %vm603, %v1289, 0
      %1302 = vmatprep.subr.bf16.mxu0 0
      %1303 = vmatpush1.bf16.xpose.msra.mxu0 %v1297
      %1304 = vmatprep.subr.bf16.mxu0 0
      %1305 = vmatpush1.bf16.xpose.msra.mxu0 %v1300
      %1306 = vmatprep.subr.bf16.mxu0 0
      %1307 = vmatpush1.bf16.xpose.msra.mxu0 0
      %1308 = vmatprep.subr.bf16.mxu0 0
      %1309 = vmatpush1.bf16.xpose.msra.mxu0 0
      %1310 = vmatprep.subr.bf16.mxu0 0
      %1311 = vmatpush1.bf16.xpose.msra.mxu0 0
      %1312 = vmatprep.subr.bf16.mxu0 0
      %1313 = vmatpush1.bf16.xpose.msra.mxu0 0
      %1314 = vmatprep.subr.bf16.mxu0 0
      %1315 = vmatpush1.bf16.xpose.msra.mxu0 0
      %1316 = vmatprep.subr.bf16.mxu0 0
      %1317 = vmatpush1.bf16.xpose.msra.mxu0 0
      %1318 = vmatprep.subr.bf16.mxu0 0
      %1319 = vmatpush1.bf16.xpose.msra.mxu0 0
      %1320 = vmatprep.subr.bf16.mxu0 0
      %1321 = vmatpush1.bf16.xpose.msra.mxu0 0
      %1322 = vmatprep.subr.bf16.mxu0 0
      %1323 = vmatpush1.bf16.xpose.msra.mxu0 0
      %1324 = vmatprep.subr.bf16.mxu0 0
      %1325 = vmatpush1.bf16.xpose.msra.mxu0 0
      %1326 = vmatprep.subr.bf16.mxu0 0
      %1327 = vmatpush1.bf16.xpose.msra.mxu0 0
      %1328 = vmatprep.subr.bf16.mxu0 0
      %1329 = vmatpush1.bf16.xpose.msra.mxu0 0
      %1330 = vmatprep.subr.bf16.mxu0 0
      %1331 = vmatpush1.bf16.xpose.msra.mxu0 0
      %1332 = vmatprep.subr.bf16.mxu0 0
      %1333 = vmatpush1.bf16.xpose.msra.mxu0 0
      %1334 = vmatprep.mubr.bf16.mxu0 0
      %1335 = vmatmul.mubr.bf16.gmra.mrb[0].mxu0 %v1291
      %v1336 = vpop.f32.mrb[0].mxu0
      %v1337 = vadd.f32 0.0, %v1336
      %v1338 = vpop.f32.mrb[0].mxu0
      %v1339 = vpop.f32.mrb[0].mxu0
      %v1340 = vadd.f32 0.0, %v1339
      %v1341 = vpop.f32.mrb[0].mxu0
      %1342 = vmatprep.mubr.bf16.mxu0 0
      %1343 = vmatmul.mubr.bf16.gmra.mrb[0].mxu0 %v1294
      %v1344 = vpop.f32.mrb[0].mxu0
      %v1345 = vadd.f32 0.0, %v1344
      %v1346 = vpop.f32.mrb[0].mxu0
      %v1347 = vpop.f32.mrb[0].mxu0
      %v1348 = vpop.f32.mrb[0].mxu0
      %1349 = vdwg.mxu0
      %v1350 = vsel %vm664, %v1337, -inf
      %1351 = vmax.xlane.f32.xlu0 %v1350
      %v1352 = vpop.xlane.xlu0 %1351
      %v1353 = vsel %vm664, %v1340, -inf
      %1354 = vmax.xlane.f32.xlu0 %v1353
      %v1355 = vpop.xlane.xlu0 %1354
      %v1356 = vsel %vm671, %v1345, -inf
      %1357 = vmax.xlane.f32.xlu0 %v1356
      %v1358 = vpop.xlane.xlu0 %1357
      %v1359 = vsub.f32 %v1337, %v1352
      %v1360 = vsub.f32 %v1340, %v1355
      %v1361 = vsub.f32 %v1345, %v1358
      %v1362 = vmul.f32 %v1359, 1.442695
      %v1363 = vpow.pop %v1362
      %v1364 = vmul.f32 %v1360, 1.442695
      %v1365 = vpow.pop %v1364
      %v1366 = vmul.f32 %v1361, 1.442695
      %v1367 = vpow.pop %v1366
      %v1368 = vsel %vm664, %v1363, 0.0
      %1369 = vadd.xlane.f32.xlu0 %v1368
      %v1370 = vpop.xlane.xlu0 %1369
      %v1371 = vsel %vm664, %v1365, 0.0
      %1372 = vadd.xlane.f32.xlu0 %v1371
      %v1373 = vpop.xlane.xlu0 %1372
      %v1374 = vsel %vm671, %v1367, 0.0
      %1375 = vadd.xlane.f32.xlu0 %v1374
      %v1376 = vpop.xlane.xlu0 %1375
      %v1377 = vrcp.pop %v1370
      %v1378 = vrcp.pop %v1373
      %v1379 = vrcp.pop %v1376
      %v1380 = vmul.f32 %v1363, %v1377
      %v1381 = vmul.f32 %v1365, %v1378
      %v1382 = vmul.f32 %v1367, %v1379
      %v1383 = vpack.c.bf16 %v1381, %v1380
      %v1384 = vpack.c.bf16 %v1382, %v1382
      %1385 = vrot.lane.b32.xlu0 %v595, 40
      %v1386 = vpop.permute.xlu0 %1385
      %1387 = vrot.lane.b32.xlu0 %v596, 40
      %v1388 = vpop.permute.xlu0 %1387
      %v1391 = vsel %vm664, %v1383, 0
      %v1394 = vsel %vm664, %v1384, 0
      %v1397 = vand.u32 %v1388, %v714
      %1399 = vmatprep.subr.bf16.mxu0 0
      %1400 = vmatpush1.bf16.msra.mxu0 %v1386
      %1401 = vmatprep.subr.bf16.mxu0 0
      %1402 = vmatpush1.bf16.msra.mxu0 %v1397
      %1403 = vmatprep.subr.bf16.mxu0 0
      %1404 = vmatpush1.bf16.msra.mxu0 0
      %1405 = vmatprep.subr.bf16.mxu0 0
      %1406 = vmatpush1.bf16.msra.mxu0 0
      %1407 = vmatprep.subr.bf16.mxu0 0
      %1408 = vmatpush1.bf16.msra.mxu0 0
      %1409 = vmatprep.subr.bf16.mxu0 0
      %1410 = vmatpush1.bf16.msra.mxu0 0
      %1411 = vmatprep.subr.bf16.mxu0 0
      %1412 = vmatpush1.bf16.msra.mxu0 0
      %1413 = vmatprep.subr.bf16.mxu0 0
      %1414 = vmatpush1.bf16.msra.mxu0 0
      %1415 = vmatprep.subr.bf16.mxu0 0
      %1416 = vmatpush1.bf16.msra.mxu0 0
      %1417 = vmatprep.subr.bf16.mxu0 0
      %1418 = vmatpush1.bf16.msra.mxu0 0
      %1419 = vmatprep.subr.bf16.mxu0 0
      %1420 = vmatpush1.bf16.msra.mxu0 0
      %1421 = vmatprep.subr.bf16.mxu0 0
      %1422 = vmatpush1.bf16.msra.mxu0 0
      %1423 = vmatprep.subr.bf16.mxu0 0
      %1424 = vmatpush1.bf16.msra.mxu0 0
      %1425 = vmatprep.subr.bf16.mxu0 0
      %1426 = vmatpush1.bf16.msra.mxu0 0
      %1427 = vmatprep.subr.bf16.mxu0 0
      %1428 = vmatpush1.bf16.msra.mxu0 0
      %1429 = vmatprep.subr.bf16.mxu0 0
      %1430 = vmatpush1.bf16.msra.mxu0 0
      %1431 = vmatprep.mubr.bf16.mxu0 0
      %1432 = vmatmul.mubr.bf16.gmra.mrb[0].mxu0 %v1391
      %v1433 = vpop.f32.mrb[0].mxu0
      %v1434 = vadd.f32 0.0, %v1433
      %v1435 = vpop.f32.mrb[0].mxu0
      %v1436 = vpop.f32.mrb[0].mxu0
      %v1437 = vadd.f32 0.0, %v1436
      %v1438 = vpop.f32.mrb[0].mxu0
      %1439 = vmatprep.mubr.bf16.mxu0 0
      %1440 = vmatmul.mubr.bf16.gmra.mrb[0].mxu0 %v1394
      %v1441 = vpop.f32.mrb[0].mxu0
      %v1442 = vadd.f32 0.0, %v1441
      %v1443 = vpop.f32.mrb[0].mxu0
      %v1444 = vpop.f32.mrb[0].mxu0
      %v1445 = vpop.f32.mrb[0].mxu0
      %1446 = vdwg.mxu0
      %v1447 = vpack.c.bf16 %v1437, %v1434
      %v1448 = vpack.c.bf16 %v1442, %v1442
      %v1449 = vpack.c.bf16 %v589, %v589
      %v1451 = vsel %vm603, %v1447, 0
      %v1454 = vsel %vm603, %v1448, 0
      %v1457 = vsel %vm945, %v1449, 0
      %1459 = vmatprep.subr.bf16.mxu0 0
      %1460 = vmatpush1.bf16.msra.mxu0 %v1457
      %1461 = vmatprep.subr.bf16.mxu0 0
      %1462 = vmatpush1.bf16.msra.mxu0 0
      %1463 = vmatprep.subr.bf16.mxu0 0
      %1464 = vmatpush1.bf16.msra.mxu0 0
      %1465 = vmatprep.subr.bf16.mxu0 0
      %1466 = vmatpush1.bf16.msra.mxu0 0
      %1467 = vmatprep.subr.bf16.mxu0 0
      %1468 = vmatpush1.bf16.msra.mxu0 0
      %1469 = vmatprep.subr.bf16.mxu0 0
      %1470 = vmatpush1.bf16.msra.mxu0 0
      %1471 = vmatprep.subr.bf16.mxu0 0
      %1472 = vmatpush1.bf16.msra.mxu0 0
      %1473 = vmatprep.subr.bf16.mxu0 0
      %1474 = vmatpush1.bf16.msra.mxu0 0
      %1475 = vmatprep.subr.bf16.mxu0 0
      %1476 = vmatpush1.bf16.msra.mxu0 0
      %1477 = vmatprep.subr.bf16.mxu0 0
      %1478 = vmatpush1.bf16.msra.mxu0 0
      %1479 = vmatprep.subr.bf16.mxu0 0
      %1480 = vmatpush1.bf16.msra.mxu0 0
      %1481 = vmatprep.subr.bf16.mxu0 0
      %1482 = vmatpush1.bf16.msra.mxu0 0
      %1483 = vmatprep.subr.bf16.mxu0 0
      %1484 = vmatpush1.bf16.msra.mxu0 0
      %1485 = vmatprep.subr.bf16.mxu0 0
      %1486 = vmatpush1.bf16.msra.mxu0 0
      %1487 = vmatprep.subr.bf16.mxu0 0
      %1488 = vmatpush1.bf16.msra.mxu0 0
      %1489 = vmatprep.subr.bf16.mxu0 0
      %1490 = vmatpush1.bf16.msra.mxu0 0
      %1491 = vmatprep.mubr.bf16.mxu0 0
      %1492 = vmatmul.mubr.bf16.gmra.mrb[0].mxu0 %v1451
      %v1493 = vpop.f32.mrb[0].mxu0
      %v1494 = vadd.f32 0.0, %v1493
      %v1495 = vpop.f32.mrb[0].mxu0
      %v1496 = vpop.f32.mrb[0].mxu0
      %v1497 = vadd.f32 0.0, %v1496
      %v1498 = vpop.f32.mrb[0].mxu0
      %1499 = vmatprep.mubr.bf16.mxu0 0
      %1500 = vmatmul.mubr.bf16.gmra.mrb[0].mxu0 %v1454
      %v1501 = vpop.f32.mrb[0].mxu0
      %v1502 = vadd.f32 0.0, %v1501
      %v1503 = vpop.f32.mrb[0].mxu0
      %v1504 = vpop.f32.mrb[0].mxu0
      %v1505 = vpop.f32.mrb[0].mxu0
      %1506 = vdwg.mxu0
      %v1507 = vadd.f32 %v1279, %v1494
      %v1508 = vadd.f32 %v1280, %v1497
      %v1509 = vadd.f32 %v1281, %v1502
      %v1510 = vadd.f32 %v442, %v1507
      %v1511 = vadd.f32 %v443, %v1508
      %v1512 = vadd.f32 %v444, %v1509
      %v1513 = vld [vmem:[%s6] sm:$0x1]
      %v1515 = vlaneseq
      %v1516 = vshrl.u32 %v1515, 7
      %v1517 = vsub.s32 0, %v1516
      %v1518 = vrot.slane %v1513, %v1517
      %v1520 = vadd.f32 %v1510, %v1518
      %v1521 = vadd.f32 %v1511, %v1518
      %v1522 = vadd.f32 %v1512, %v1518
      %v1523 = vld [vmem:[%s7] sm:$0x1]
      %v1524 = vld [vmem:[%s8] sm:$0x1]
      %v1525 = vsel %vm447, %v1520, 0.0
      %1526 = vadd.xlane.f32.xlu0 %v1525
      %v1527 = vpop.xlane.xlu0 %1526
      %v1528 = vsel %vm447, %v1521, 0.0
      %1529 = vadd.xlane.f32.xlu0 %v1528
      %v1530 = vpop.xlane.xlu0 %1529
      %v1531 = vsel %vm454, %v1522, 0.0
      %1532 = vadd.xlane.f32.xlu0 %v1531
      %v1533 = vpop.xlane.xlu0 %1532
      %v1534 = vmul.f32 %v1527, %v458
      %v1535 = vmul.f32 %v1530, %v458
      %v1536 = vmul.f32 %v1533, %v458
      %v1537 = vsub.f32 %v1520, %v1534
      %v1538 = vsub.f32 %v1521, %v1535
      %v1539 = vsub.f32 %v1522, %v1536
      %v1540 = vmul.f32 %v1537, %v1537
      %v1541 = vmul.f32 %v1538, %v1538
      %v1542 = vmul.f32 %v1539, %v1539
      %v1543 = vsel %vm447, %v1540, 0.0
      %1544 = vadd.xlane.f32.xlu0 %v1543
      %v1545 = vpop.xlane.xlu0 %1544
      %v1546 = vsel %vm447, %v1541, 0.0
      %1547 = vadd.xlane.f32.xlu0 %v1546
      %v1548 = vpop.xlane.xlu0 %1547
      %v1549 = vsel %vm454, %v1542, 0.0
      %1550 = vadd.xlane.f32.xlu0 %v1549
      %v1551 = vpop.xlane.xlu0 %1550
      %v1552 = vmul.f32 %v1545, %v458
      %v1553 = vmul.f32 %v1548, %v458
      %v1554 = vmul.f32 %v1551, %v458
      %v1555 = vadd.f32 %v1552, 1e-05
      %v1556 = vadd.f32 %v1553, 1e-05
      %v1557 = vadd.f32 %v1554, 1e-05
      %v1558 = vrsqrt.pop %v1555
      %v1559 = vrsqrt.pop %v1556
      %v1560 = vrsqrt.pop %v1557
      %v1561 = vmul.f32 %v1537, %v1558
      %v1562 = vmul.f32 %v1538, %v1559
      %v1563 = vmul.f32 %v1539, %v1560
      %v1565 = vlaneseq
      %v1566 = vshrl.u32 %v1565, 7
      %v1567 = vsub.s32 0, %v1566
      %v1568 = vrot.slane %v1523, %v1567
      %v1570 = vmul.f32 %v1561, %v1568
      %v1571 = vmul.f32 %v1562, %v1568
      %v1572 = vmul.f32 %v1563, %v1568
      %v1574 = vlaneseq
      %v1575 = vshrl.u32 %v1574, 7
      %v1576 = vsub.s32 0, %v1575
      %v1577 = vrot.slane %v1524, %v1576
      %v1579 = vadd.f32 %v1570, %v1577
      %v1580 = vadd.f32 %v1571, %v1577
      %v1581 = vadd.f32 %v1572, %v1577
      %v1582 = vld [vmem:[%s9] sm:$0xf]
      %v1583 = vld [vmem:[%s9 + $0x4] sm:$0xf]
      %v1584 = vld [vmem:[%s9 + $0x8] sm:$0xf]
      %v1585 = vld [vmem:[%s9 + $0xc] sm:$0xf]
      %v1586 = vpack.c.bf16 %v1580, %v1579
      %v1587 = vpack.c.bf16 %v1581, %v1581
      %v1588 = vld [vmem:[%s10] sm:$0x1]
      %v1590 = vlaneseq
      %v1591 = vshrl.u32 %v1590, 7
      %v1592 = vsub.s32 0, %v1591
      %v1593 = vrot.slane %v1588, %v1592
      %v1599 = vunpack.c.l.b16 %v1582
      %v1600 = vunpack.c.l.b16 %v1583
      %v1601 = vunpack.c.l.b16 %v1584
      %v1602 = vunpack.c.l.b16 %v1585
      %v1603 = vpack.c.b16 %v1600, %v1599
      %v1604 = vpack.c.b16 %v1602, %v1601
      %v1608 = vsel %vm447, %v1586, 0
      %v1611 = vsel %vm447, %v1587, 0
      %1613 = vmatprep.subr.bf16.mxu0 0
      %1614 = vmatpush1.bf16.msra.mxu0 %v1603
      %1615 = vmatprep.subr.bf16.mxu0 0
      %1616 = vmatpush1.bf16.msra.mxu0 %v1604
      %1617 = vmatprep.subr.bf16.mxu0 0
      %1618 = vmatpush1.bf16.msra.mxu0 0
      %1619 = vmatprep.subr.bf16.mxu0 0
      %1620 = vmatpush1.bf16.msra.mxu0 0
      %1621 = vmatprep.subr.bf16.mxu0 0
      %1622 = vmatpush1.bf16.msra.mxu0 0
      %1623 = vmatprep.subr.bf16.mxu0 0
      %1624 = vmatpush1.bf16.msra.mxu0 0
      %1625 = vmatprep.subr.bf16.mxu0 0
      %1626 = vmatpush1.bf16.msra.mxu0 0
      %1627 = vmatprep.subr.bf16.mxu0 0
      %1628 = vmatpush1.bf16.msra.mxu0 0
      %1629 = vmatprep.subr.bf16.mxu0 0
      %1630 = vmatpush1.bf16.msra.mxu0 0
      %1631 = vmatprep.subr.bf16.mxu0 0
      %1632 = vmatpush1.bf16.msra.mxu0 0
      %1633 = vmatprep.subr.bf16.mxu0 0
      %1634 = vmatpush1.bf16.msra.mxu0 0
      %1635 = vmatprep.subr.bf16.mxu0 0
      %1636 = vmatpush1.bf16.msra.mxu0 0
      %1637 = vmatprep.subr.bf16.mxu0 0
      %1638 = vmatpush1.bf16.msra.mxu0 0
      %1639 = vmatprep.subr.bf16.mxu0 0
      %1640 = vmatpush1.bf16.msra.mxu0 0
      %1641 = vmatprep.subr.bf16.mxu0 0
      %1642 = vmatpush1.bf16.msra.mxu0 0
      %1643 = vmatprep.subr.bf16.mxu0 0
      %1644 = vmatpush1.bf16.msra.mxu0 0
      %1645 = vmatprep.mubr.bf16.mxu0 0
      %1646 = vmatmul.mubr.bf16.gmra.mrb[0].mxu0 %v1608
      %v1647 = vpop.f32.mrb[0].mxu0
      %v1648 = vadd.f32 %v1593, %v1647
      %v1649 = vpop.f32.mrb[0].mxu0
      %v1650 = vpop.f32.mrb[0].mxu0
      %v1651 = vadd.f32 %v1593, %v1650
      %v1652 = vpop.f32.mrb[0].mxu0
      %1653 = vmatprep.mubr.bf16.mxu0 0
      %1654 = vmatmul.mubr.bf16.gmra.mrb[0].mxu0 %v1611
      %v1655 = vpop.f32.mrb[0].mxu0
      %v1656 = vadd.f32 %v1593, %v1655
      %v1657 = vpop.f32.mrb[0].mxu0
      %v1658 = vpop.f32.mrb[0].mxu0
      %v1659 = vpop.f32.mrb[0].mxu0
      %1660 = vdwg.mxu0
      %v1661 = vmul.f32 %v1648, 0.5
      %v1662 = vmul.f32 %v1651, 0.5
      %v1663 = vmul.f32 %v1656, 0.5
      %v1664 = vmul.f32 %v1648, 0.70710677
      %v1665 = vmul.f32 %v1651, 0.70710677
      %v1666 = vmul.f32 %v1656, 0.70710677
      %v1667 = verf.f32.pop %v1664
      %v1668 = verf.f32.pop %v1665
      %v1669 = verf.f32.pop %v1666
      %v1670 = vadd.f32 %v1667, 1.0
      %v1671 = vadd.f32 %v1668, 1.0
      %v1672 = vadd.f32 %v1669, 1.0
      %v1673 = vmul.f32 %v1661, %v1670
      %v1674 = vmul.f32 %v1662, %v1671
      %v1675 = vmul.f32 %v1663, %v1672
      %v1676 = vld [vmem:[%s11] sm:$0xf]
      %v1677 = vld [vmem:[%s11 + $0x4] sm:$0xf]
      %v1678 = vld [vmem:[%s11 + $0x8] sm:$0xf]
      %v1679 = vld [vmem:[%s11 + $0xc] sm:$0xf]
      %v1680 = vld [vmem:[%s11 + $0x10] sm:$0xf]
      %v1681 = vld [vmem:[%s11 + $0x14] sm:$0xf]
      %v1682 = vld [vmem:[%s11 + $0x18] sm:$0xf]
      %v1683 = vld [vmem:[%s11 + $0x1c] sm:$0xf]
      %v1684 = vpack.c.bf16 %v1674, %v1673
      %v1685 = vpack.c.bf16 %v1675, %v1675
      %v1694 = vunpack.c.l.b16 %v1676
      %v1695 = vunpack.c.l.b16 %v1677
      %v1696 = vunpack.c.l.b16 %v1678
      %v1697 = vunpack.c.l.b16 %v1679
      %v1698 = vunpack.c.l.b16 %v1680
      %v1699 = vunpack.c.l.b16 %v1681
      %v1700 = vunpack.c.l.b16 %v1682
      %v1701 = vunpack.c.l.b16 %v1683
      %v1702 = vpack.c.b16 %v1695, %v1694
      %v1703 = vpack.c.b16 %v1697, %v1696
      %v1704 = vpack.c.b16 %v1699, %v1698
      %v1705 = vpack.c.b16 %v1701, %v1700
      %vm1710 = vcmask 523264
      %v1712 = vsel %vm1710, %v1684, 0
      %v1715 = vsel %vm1710, %v1685, 0
      %1717 = vmatprep.subr.bf16.mxu0 0
      %1718 = vmatpush1.bf16.msra.mxu0 %v1702
      %1719 = vmatprep.subr.bf16.mxu0 0
      %1720 = vmatpush1.bf16.msra.mxu0 %v1703
      %1721 = vmatprep.subr.bf16.mxu0 0
      %1722 = vmatpush1.bf16.msra.mxu0 %v1704
      %1723 = vmatprep.subr.bf16.mxu0 0
      %1724 = vmatpush1.bf16.msra.mxu0 %v1705
      %1725 = vmatprep.subr.bf16.mxu0 0
      %1726 = vmatpush1.bf16.msra.mxu0 0
      %1727 = vmatprep.subr.bf16.mxu0 0
      %1728 = vmatpush1.bf16.msra.mxu0 0
      %1729 = vmatprep.subr.bf16.mxu0 0
      %1730 = vmatpush1.bf16.msra.mxu0 0
      %1731 = vmatprep.subr.bf16.mxu0 0
      %1732 = vmatpush1.bf16.msra.mxu0 0
      %1733 = vmatprep.subr.bf16.mxu0 0
      %1734 = vmatpush1.bf16.msra.mxu0 0
      %1735 = vmatprep.subr.bf16.mxu0 0
      %1736 = vmatpush1.bf16.msra.mxu0 0
      %1737 = vmatprep.subr.bf16.mxu0 0
      %1738 = vmatpush1.bf16.msra.mxu0 0
      %1739 = vmatprep.subr.bf16.mxu0 0
      %1740 = vmatpush1.bf16.msra.mxu0 0
      %1741 = vmatprep.subr.bf16.mxu0 0
      %1742 = vmatpush1.bf16.msra.mxu0 0
      %1743 = vmatprep.subr.bf16.mxu0 0
      %1744 = vmatpush1.bf16.msra.mxu0 0
      %1745 = vmatprep.subr.bf16.mxu0 0
      %1746 = vmatpush1.bf16.msra.mxu0 0
      %1747 = vmatprep.subr.bf16.mxu0 0
      %1748 = vmatpush1.bf16.msra.mxu0 0
      %1749 = vmatprep.mubr.bf16.mxu0 0
      %1750 = vmatmul.mubr.bf16.gmra.mrb[0].mxu0 %v1712
      %v1751 = vpop.f32.mrb[0].mxu0
      %v1752 = vadd.f32 0.0, %v1751
      %v1753 = vpop.f32.mrb[0].mxu0
      %v1754 = vpop.f32.mrb[0].mxu0
      %v1755 = vadd.f32 0.0, %v1754
      %v1756 = vpop.f32.mrb[0].mxu0
      %1757 = vmatprep.mubr.bf16.mxu0 0
      %1758 = vmatmul.mubr.bf16.gmra.mrb[0].mxu0 %v1715
      %v1759 = vpop.f32.mrb[0].mxu0
      %v1760 = vadd.f32 0.0, %v1759
      %v1761 = vpop.f32.mrb[0].mxu0
      %v1762 = vpop.f32.mrb[0].mxu0
      %v1763 = vpop.f32.mrb[0].mxu0
      %1764 = vdwg.mxu0
      %v1765 = vadd.f32 %v1520, %v1752
      %v1766 = vadd.f32 %v1521, %v1755
      %v1767 = vadd.f32 %v1522, %v1760
      %v1768 = vld [vmem:[%s12] sm:$0x1]
      %v1770 = vlaneseq
      %v1771 = vshrl.u32 %v1770, 7
      %v1772 = vsub.s32 0, %v1771
      %v1773 = vrot.slane %v1768, %v1772
      %v1775 = vadd.f32 %v1765, %v1773
      %v1776 = vadd.f32 %v1766, %v1773
      %v1777 = vadd.f32 %v1767, %v1773
      %1778 = vst.msk [vmem:[%s440] sm:$0xff] %vm447, %v1775
      %1779 = vst.msk [vmem:[%s440 + $0x8] sm:$0xff] %vm447, %v1776
      %1780 = vst.msk [vmem:[%s440 + $0x10] sm:$0x1] %vm454, %v1777
      %p1781 = scmp.lt.s32.totalorder %s24, 1
      %s1782 = scalar_select %p1781, %s24, 1
      %s1783 = smul.addr %s1782, 3
      %s1784 = smul.addr %s1783, 8
      %s1785 = scalar_lea.vmem %s13, %s1784
      // Predicated region
      $region73: #{_lambda_.15} parent=71 // pred_check
        %p1786 = pneg %p320
      $region74: #{_lambda_.15} parent=71 // pred_check_branch
        %1788 = sbr.rel (%p1786) target = $region76
      $region75: #{_lambda_.15} parent=71 // pred_region
        _
      $region76: #{_lambda_.15} parent=71 // pred_fallthru
        _
    $region72: #{_lambda_.15} parent=5 // pred_fallthru
      _
    %p1789 = scmp.le.s32.totalorder 2, %s19
    // Predicated region
    $region77: #{_lambda_.15} parent=5 // pred_check
      %p1790 = pneg %p1789
    $region78: #{_lambda_.15} parent=5 // pred_check_branch
      %1792 = sbr.rel (%p1790) target = $region80
    $region79: #{_lambda_.15} parent=5 // pred_region
      %s1793 = ssub.s32 %s19, 2
      // Predicated region
      $region81: #{_lambda_.15} parent=79 // pred_check
        %p1794 = pneg %p326
      $region82: #{_lambda_.15} parent=79 // pred_check_branch
        %1796 = sbr.rel (%p1794) target = $region84
      $region83: #{_lambda_.15} parent=79 // pred_region
        %p1797 = scmp.lt.s32.totalorder %s25, 1
        %s1798 = scalar_select %p1797, %s25, 1
        %s1799 = smul.addr %s1798, 3
        %s1800 = smul.addr %s1799, 8
        %s1801 = scalar_lea.vmem %s13, %s1800
      $region84: #{_lambda_.15} parent=79 // pred_fallthru
        _
    $region80: #{_lambda_.15} parent=5 // pred_fallthru
      _
  $region6: #{_lambda_.15} parent=0 // loop_footer
    %s23 = sadd.s32 1, %s19
  $region7: #{_lambda_.15} parent=0 // loop_footer_branch
    %18 = sbr.rel target = $region3
  $region8: #{_lambda_.15} parent=0 // loop_exit
    _

// kernel: _lambda_.19
$region0: #{_lambda_.19}
  #allocation0 [shape = 'u32[]', space=smem, size = 0x4, offset = 0x4, fixed_abs, tag = 'smem constant byte address 0x4 - core index']
  #allocation1 [shape = 'u32[144,128]{1,0:T(1,128)}', space=vmem, size = 0x12000, scoped, tag = 'internal scratch']
  %s0 = inlined_call_operand.vmem [shape: f32[2,64], index: 0, kind: input, shape index: {}]
  %s1 = inlined_call_operand.vmem [shape: f32[1,64], index: 1, kind: input, shape index: {}]
  %s2 = inlined_call_operand.vmem [shape: f32[1,64], index: 2, kind: input, shape index: {}]
  %s3 = inlined_call_operand.vmem [shape: bf16[64,32], index: 3, kind: input, shape index: {}]
  %s4 = inlined_call_operand.vmem [shape: f32[1,32], index: 4, kind: input, shape index: {}]
  %s5 = inlined_call_operand.vmem [shape: f32[2,32], index: 5, kind: output, shape index: {}]
  %s6 = sld [smem:[#allocation0]]
  $region30: #{_lambda_.19} parent=0
    _
  %s8 = ssub.s32 1, %s6
  %s9 = scalar_select 0, %s8, %s6
  // Predicated region
  $region2: #{_lambda_.19} parent=0 // pred_check
    _
  $region3: #{_lambda_.19} parent=0 // pred_check_branch
    %11 = sbr.rel (0) target = $region5
  $region4: #{_lambda_.19} parent=0 // pred_region
    _
  $region5: #{_lambda_.19} parent=0 // pred_fallthru
    _
  // Predicated region
  $region6: #{_lambda_.19} parent=0 // pred_check
    _
  $region7: #{_lambda_.19} parent=0 // pred_check_branch
    %13 = sbr.rel (0) target = $region9
  $region8: #{_lambda_.19} parent=0 // pred_region
    _
  $region9: #{_lambda_.19} parent=0 // pred_fallthru
    _
  // Predicated region
  $region10: #{_lambda_.19} parent=0 // pred_check
    _
  $region11: #{_lambda_.19} parent=0 // pred_check_branch
    %15 = sbr.rel (0) target = $region13
  $region12: #{_lambda_.19} parent=0 // pred_region
    _
  $region13: #{_lambda_.19} parent=0 // pred_fallthru
    _
  // Predicated region
  $region14: #{_lambda_.19} parent=0 // pred_check
    _
  $region15: #{_lambda_.19} parent=0 // pred_check_branch
    %17 = sbr.rel (0) target = $region17
  $region16: #{_lambda_.19} parent=0 // pred_region
    _
  $region17: #{_lambda_.19} parent=0 // pred_fallthru
    _
  // Predicated region
  $region18: #{_lambda_.19} parent=0 // pred_check
    _
  $region19: #{_lambda_.19} parent=0 // pred_check_branch
    %19 = sbr.rel (0) target = $region21
  $region20: #{_lambda_.19} parent=0 // pred_region
    _
  $region21: #{_lambda_.19} parent=0 // pred_fallthru
    _
  %v21 = vld [vmem:[%s0] sm:$0x3]
  %v22 = vld [vmem:[%s1] sm:$0x1]
  %v23 = vld [vmem:[%s2] sm:$0x1]
  %vm24 = vcmask 517120
  %v25 = vsel %vm24, %v21, 0.0
  %26 = vadd.xlane.f32.xlu0 %v25
  %v27 = vpop.xlane.xlu0 %26
  %v28 = vrcp.pop 64.0
  %v29 = vmul.f32 %v27, %v28
  %v30 = vsub.f32 %v21, %v29
  %v31 = vmul.f32 %v30, %v30
  %v32 = vsel %vm24, %v31, 0.0
  %33 = vadd.xlane.f32.xlu0 %v32
  %v34 = vpop.xlane.xlu0 %33
  %v35 = vmul.f32 %v34, %v28
  %v36 = vadd.f32 %v35, 1e-05
  %v37 = vrsqrt.pop %v36
  %v38 = vmul.f32 %v30, %v37
  %v40 = vlaneseq
  %v41 = vshrl.u32 %v40, 7
  %v42 = vsub.s32 0, %v41
  %v43 = vrot.slane %v22, %v42
  %v45 = vmul.f32 %v38, %v43
  %v47 = vlaneseq
  %v48 = vshrl.u32 %v47, 7
  %v49 = vsub.s32 0, %v48
  %v50 = vrot.slane %v23, %v49
  %v52 = vadd.f32 %v45, %v50
  %v53 = vmul.f32 %v52, 0.5
  %v54 = vmul.f32 %v52, 0.70710677
  %v55 = verf.f32.pop %v54
  %v56 = vadd.f32 %v55, 1.0
  %v57 = vmul.f32 %v53, %v56
  %v58 = vld [vmem:[%s3] sm:$0xf]
  %v59 = vld [vmem:[%s3 + $0x4] sm:$0xf]
  %v60 = vld [vmem:[%s3 + $0x8] sm:$0xf]
  %v61 = vld [vmem:[%s3 + $0xc] sm:$0xf]
  %v62 = vld [vmem:[%s3 + $0x10] sm:$0xf]
  %v63 = vld [vmem:[%s3 + $0x14] sm:$0xf]
  %v64 = vld [vmem:[%s3 + $0x18] sm:$0xf]
  %v65 = vld [vmem:[%s3 + $0x1c] sm:$0xf]
  %v66 = vpack.c.bf16 %v57, %v57
  %v67 = vld [vmem:[%s4] sm:$0x1]
  %v69 = vlaneseq
  %v70 = vshrl.u32 %v69, 7
  %v71 = vsub.s32 0, %v70
  %v72 = vrot.slane %v67, %v71
  %v82 = vunpack.c.l.b16 %v58
  %v83 = vunpack.c.l.b16 %v59
  %v84 = vunpack.c.l.b16 %v60
  %v85 = vunpack.c.l.b16 %v61
  %v86 = vunpack.c.l.b16 %v62
  %v87 = vunpack.c.l.b16 %v63
  %v88 = vunpack.c.l.b16 %v64
  %v89 = vunpack.c.l.b16 %v65
  %v90 = vpack.c.b16 %v83, %v82
  %v91 = vpack.c.b16 %v85, %v84
  %v92 = vpack.c.b16 %v87, %v86
  %v93 = vpack.c.b16 %v89, %v88
  %vm98 = vcmask 523264
  %v100 = vsel %vm98, %v66, 0
  %102 = vmatprep.subr.bf16.mxu0 0
  %103 = vmatpush1.bf16.msra.mxu0 %v90
  %104 = vmatprep.subr.bf16.mxu0 0
  %105 = vmatpush1.bf16.msra.mxu0 %v91
  %106 = vmatprep.subr.bf16.mxu0 0
  %107 = vmatpush1.bf16.msra.mxu0 %v92
  %108 = vmatprep.subr.bf16.mxu0 0
  %109 = vmatpush1.bf16.msra.mxu0 %v93
  %110 = vmatprep.subr.bf16.mxu0 0
  %111 = vmatpush1.bf16.msra.mxu0 0
  %112 = vmatprep.subr.bf16.mxu0 0
  %113 = vmatpush1.bf16.msra.mxu0 0
  %114 = vmatprep.subr.bf16.mxu0 0
  %115 = vmatpush1.bf16.msra.mxu0 0
  %116 = vmatprep.subr.bf16.mxu0 0
  %117 = vmatpush1.bf16.msra.mxu0 0
  %118 = vmatprep.subr.bf16.mxu0 0
  %119 = vmatpush1.bf16.msra.mxu0 0
  %120 = vmatprep.subr.bf16.mxu0 0
  %121 = vmatpush1.bf16.msra.mxu0 0
  %122 = vmatprep.subr.bf16.mxu0 0
  %123 = vmatpush1.bf16.msra.mxu0 0
  %124 = vmatprep.subr.bf16.mxu0 0
  %125 = vmatpush1.bf16.msra.mxu0 0
  %126 = vmatprep.subr.bf16.mxu0 0
  %127 = vmatpush1.bf16.msra.mxu0 0
  %128 = vmatprep.subr.bf16.mxu0 0
  %129 = vmatpush1.bf16.msra.mxu0 0
  %130 = vmatprep.subr.bf16.mxu0 0
  %131 = vmatpush1.bf16.msra.mxu0 0
  %132 = vmatprep.subr.bf16.mxu0 0
  %133 = vmatpush1.bf16.msra.mxu0 0
  %134 = vmatprep.mubr.bf16.mxu0 0
  %135 = vmatmul.mubr.bf16.gmra.mrb[0].mxu0 %v100
  %v136 = vpop.f32.mrb[0].mxu0
  %v137 = vadd.f32 %v72, %v136
  %v138 = vpop.f32.mrb[0].mxu0
  %v139 = vpop.f32.mrb[0].mxu0
  %v140 = vpop.f32.mrb[0].mxu0
  %141 = vdwg.mxu0
  %vm142 = vcmask 254976
  %143 = vst.msk [vmem:[%s5] sm:$0x3] %vm142, %v137
  // Predicated region
  $region22: #{_lambda_.19} parent=0 // pred_check
    _
  $region23: #{_lambda_.19} parent=0 // pred_check_branch
    %145 = sbr.rel (0) target = $region25
  $region24: #{_lambda_.19} parent=0 // pred_region
    _
  $region25: #{_lambda_.19} parent=0 // pred_fallthru
    _
  // Predicated region
  $region26: #{_lambda_.19} parent=0 // pred_check
    _
  $region27: #{_lambda_.19} parent=0 // pred_check_branch
    %147 = sbr.rel (0) target = $region29
  $region28: #{_lambda_.19} parent=0 // pred_region
    _
  $region29: #{_lambda_.19} parent=0 // pred_fallthru
    _

// kernel: _lambda_.16
$region0: #{_lambda_.16}
  #allocation0 [shape = 'u32[]', space=smem, size = 0x4, offset = 0x4, fixed_abs, tag = 'smem constant byte address 0x4 - core index']
  #allocation1 [shape = 'u32[144,128]{1,0:T(1,128)}', space=vmem, size = 0x12000, scoped, tag = 'internal scratch']
  %s0 = inlined_call_operand.vmem [shape: f32[2,5,64], index: 0, kind: input, shape index: {}]
  %s1 = inlined_call_operand.vmem [shape: f32[1,64], index: 1, kind: input, shape index: {}]
  %s2 = inlined_call_operand.vmem [shape: f32[1,64], index: 2, kind: input, shape index: {}]
  %s3 = inlined_call_operand.vmem [shape: bf16[64,192], index: 3, kind: input, shape index: {}]
  %s4 = inlined_call_operand.vmem [shape: f32[1,192], index: 4, kind: input, shape index: {}]
  %s5 = inlined_call_operand.vmem [shape: f32[64,64], index: 5, kind: input, shape index: {}]
  %s6 = inlined_call_operand.vmem [shape: f32[1,64], index: 6, kind: input, shape index: {}]
  %s7 = inlined_call_operand.vmem [shape: f32[1,64], index: 7, kind: input, shape index: {}]
  %s8 = inlined_call_operand.vmem [shape: f32[1,64], index: 8, kind: input, shape index: {}]
  %s9 = inlined_call_operand.vmem [shape: bf16[64,128], index: 9, kind: input, shape index: {}]
  %s10 = inlined_call_operand.vmem [shape: f32[1,128], index: 10, kind: input, shape index: {}]
  %s11 = inlined_call_operand.vmem [shape: bf16[128,64], index: 11, kind: input, shape index: {}]
  %s12 = inlined_call_operand.vmem [shape: f32[1,64], index: 12, kind: input, shape index: {}]
  %s13 = inlined_call_operand.vmem [shape: f32[2,5,64], index: 13, kind: output, shape index: {}]
  %s14 = sld [smem:[#allocation0]]
  $region85: #{_lambda_.16} parent=0
    _
  %s16 = ssub.s32 1, %s14
  %s17 = scalar_select 0, %s16, %s14
  loop: start=0, step=1, limit=4
  $region2: #{_lambda_.16} parent=0 // loop_pre_header
    _
  $region3: #{_lambda_.16} parent=0 // loop_header
    %s19 = sphi 0, %s23
    %p20 = scmp.ge.s32.totalorder %s19, 4
    %s29 = sphi 0, %s31
    %s32 = sphi 0, %s29
    %s33 = sphi 0, %s32
    %s49 = sphi 0, %s33
    %s53 = sphi 0, %s53
    %s55 = sphi 0, %s53
    %s56 = sphi 0, %s55
    %s70 = sphi 0, %s56
    %s74 = sphi 0, %s74
    %s76 = sphi 0, %s74
    %s77 = sphi 0, %s76
    %s91 = sphi 0, %s77
    %s95 = sphi 0, %s95
    %s97 = sphi 0, %s95
    %s98 = sphi 0, %s97
    %s112 = sphi 0, %s98
    %s116 = sphi 0, %s116
    %s118 = sphi 0, %s116
    %s119 = sphi 0, %s118
    %s133 = sphi 0, %s119
    %s137 = sphi 0, %s137
    %s139 = sphi 0, %s137
    %s140 = sphi 0, %s139
    %s154 = sphi 0, %s140
    %s158 = sphi 0, %s158
    %s160 = sphi 0, %s158
    %s161 = sphi 0, %s160
    %s175 = sphi 0, %s161
    %s179 = sphi 0, %s179
    %s181 = sphi 0, %s179
    %s182 = sphi 0, %s181
    %s196 = sphi 0, %s182
    %s200 = sphi 0, %s200
    %s202 = sphi 0, %s200
    %s203 = sphi 0, %s202
    %s217 = sphi 0, %s203
    %s221 = sphi 0, %s221
    %s223 = sphi 0, %s221
    %s224 = sphi 0, %s223
    %s238 = sphi 0, %s224
    %s242 = sphi 0, %s242
    %s244 = sphi 0, %s242
    %s245 = sphi 0, %s244
    %s259 = sphi 0, %s245
    %s263 = sphi 0, %s263
    %s265 = sphi 0, %s263
    %s266 = sphi 0, %s265
    %s280 = sphi 0, %s266
    %s284 = sphi 0, %s284
    %s286 = sphi 0, %s284
    %s287 = sphi 0, %s286
    %s301 = sphi 0, %s287
    %s307 = sphi 0, %s309
    %s310 = sphi 0, %s307
    %s311 = sphi 0, %s310
    %s327 = sphi 0, %s311
  $region4: #{_lambda_.16} parent=0 // loop_header_branch
    %22 = sbr.rel (%p20) target = $region8
  $region5: #{_lambda_.16} parent=0 // loop_body
    %s24 = ssub.s32 %s19, 1
    %s25 = ssub.s32 %s19, 2
    %s26 = sadd.s32 %s19, 1
    %s27 = ssub.s32 %s19, %s26
    %p28 = scmp.eq.s32.totalorder %s27, 0
    %s30 = sadd.s32 %s29, 1
    %s31 = scalar_select %p28, %s29, %s30
    %p34 = pneg %p28
    %p35 = scmp.eq.s32.totalorder %s19, 1
    %p36 = por %p34, %p35
    %p37 = scmp.ne.s32.totalorder %s29, %s32
    %p38 = scmp.eq.s32.totalorder %s19, 0
    %p39 = por %p37, %p38
    %p40 = scmp.ne.s32.totalorder %s29, %s32
    %p41 = scmp.eq.s32.totalorder %s24, 1
    %p42 = por %p40, %p41
    %p43 = scmp.ne.s32.totalorder %s32, %s33
    %p44 = scmp.eq.s32.totalorder %s24, 0
    %p45 = por %p43, %p44
    %p46 = scmp.ne.s32.totalorder %s32, %s33
    %p47 = scmp.eq.s32.totalorder %s25, 1
    %p48 = por %p46, %p47
    %p50 = scmp.ne.s32.totalorder %s33, %s49
    %p51 = scmp.eq.s32.totalorder %s25, 0
    %p52 = por %p50, %p51
    %s54 = sadd.s32 %s53, 1
    %p57 = scmp.eq.s32.totalorder %s19, 1
    %p58 = scmp.ne.s32.totalorder %s53, %s55
    %p59 = scmp.eq.s32.totalorder %s19, 0
    %p60 = por %p58, %p59
    %p61 = scmp.ne.s32.totalorder %s53, %s55
    %p62 = scmp.eq.s32.totalorder %s24, 1
    %p63 = por %p61, %p62
    %p64 = scmp.ne.s32.totalorder %s55, %s56
    %p65 = scmp.eq.s32.totalorder %s24, 0
    %p66 = por %p64, %p65
    %p67 = scmp.ne.s32.totalorder %s55, %s56
    %p68 = scmp.eq.s32.totalorder %s25, 1
    %p69 = por %p67, %p68
    %p71 = scmp.ne.s32.totalorder %s56, %s70
    %p72 = scmp.eq.s32.totalorder %s25, 0
    %p73 = por %p71, %p72
    %s75 = sadd.s32 %s74, 1
    %p78 = scmp.eq.s32.totalorder %s19, 1
    %p79 = scmp.ne.s32.totalorder %s74, %s76
    %p80 = scmp.eq.s32.totalorder %s19, 0
    %p81 = por %p79, %p80
    %p82 = scmp.ne.s32.totalorder %s74, %s76
    %p83 = scmp.eq.s32.totalorder %s24, 1
    %p84 = por %p82, %p83
    %p85 = scmp.ne.s32.totalorder %s76, %s77
    %p86 = scmp.eq.s32.totalorder %s24, 0
    %p87 = por %p85, %p86
    %p88 = scmp.ne.s32.totalorder %s76, %s77
    %p89 = scmp.eq.s32.totalorder %s25, 1
    %p90 = por %p88, %p89
    %p92 = scmp.ne.s32.totalorder %s77, %s91
    %p93 = scmp.eq.s32.totalorder %s25, 0
    %p94 = por %p92, %p93
    %s96 = sadd.s32 %s95, 1
    %p99 = scmp.eq.s32.totalorder %s19, 1
    %p100 = scmp.ne.s32.totalorder %s95, %s97
    %p101 = scmp.eq.s32.totalorder %s19, 0
    %p102 = por %p100, %p101
    %p103 = scmp.ne.s32.totalorder %s95, %s97
    %p104 = scmp.eq.s32.totalorder %s24, 1
    %p105 = por %p103, %p104
    %p106 = scmp.ne.s32.totalorder %s97, %s98
    %p107 = scmp.eq.s32.totalorder %s24, 0
    %p108 = por %p106, %p107
    %p109 = scmp.ne.s32.totalorder %s97, %s98
    %p110 = scmp.eq.s32.totalorder %s25, 1
    %p111 = por %p109, %p110
    %p113 = scmp.ne.s32.totalorder %s98, %s112
    %p114 = scmp.eq.s32.totalorder %s25, 0
    %p115 = por %p113, %p114
    %s117 = sadd.s32 %s116, 1
    %p120 = scmp.eq.s32.totalorder %s19, 1
    %p121 = scmp.ne.s32.totalorder %s116, %s118
    %p122 = scmp.eq.s32.totalorder %s19, 0
    %p123 = por %p121, %p122
    %p124 = scmp.ne.s32.totalorder %s116, %s118
    %p125 = scmp.eq.s32.totalorder %s24, 1
    %p126 = por %p124, %p125
    %p127 = scmp.ne.s32.totalorder %s118, %s119
    %p128 = scmp.eq.s32.totalorder %s24, 0
    %p129 = por %p127, %p128
    %p130 = scmp.ne.s32.totalorder %s118, %s119
    %p131 = scmp.eq.s32.totalorder %s25, 1
    %p132 = por %p130, %p131
    %p134 = scmp.ne.s32.totalorder %s119, %s133
    %p135 = scmp.eq.s32.totalorder %s25, 0
    %p136 = por %p134, %p135
    %s138 = sadd.s32 %s137, 1
    %p141 = scmp.eq.s32.totalorder %s19, 1
    %p142 = scmp.ne.s32.totalorder %s137, %s139
    %p143 = scmp.eq.s32.totalorder %s19, 0
    %p144 = por %p142, %p143
    %p145 = scmp.ne.s32.totalorder %s137, %s139
    %p146 = scmp.eq.s32.totalorder %s24, 1
    %p147 = por %p145, %p146
    %p148 = scmp.ne.s32.totalorder %s139, %s140
    %p149 = scmp.eq.s32.totalorder %s24, 0
    %p150 = por %p148, %p149
    %p151 = scmp.ne.s32.totalorder %s139, %s140
    %p152 = scmp.eq.s32.totalorder %s25, 1
    %p153 = por %p151, %p152
    %p155 = scmp.ne.s32.totalorder %s140, %s154
    %p156 = scmp.eq.s32.totalorder %s25, 0
    %p157 = por %p155, %p156
    %s159 = sadd.s32 %s158, 1
    %p162 = scmp.eq.s32.totalorder %s19, 1
    %p163 = scmp.ne.s32.totalorder %s158, %s160
    %p164 = scmp.eq.s32.totalorder %s19, 0
    %p165 = por %p163, %p164
    %p166 = scmp.ne.s32.totalorder %s158, %s160
    %p167 = scmp.eq.s32.totalorder %s24, 1
    %p168 = por %p166, %p167
    %p169 = scmp.ne.s32.totalorder %s160, %s161
    %p170 = scmp.eq.s32.totalorder %s24, 0
    %p171 = por %p169, %p170
    %p172 = scmp.ne.s32.totalorder %s160, %s161
    %p173 = scmp.eq.s32.totalorder %s25, 1
    %p174 = por %p172, %p173
    %p176 = scmp.ne.s32.totalorder %s161, %s175
    %p177 = scmp.eq.s32.totalorder %s25, 0
    %p178 = por %p176, %p177
    %s180 = sadd.s32 %s179, 1
    %p183 = scmp.eq.s32.totalorder %s19, 1
    %p184 = scmp.ne.s32.totalorder %s179, %s181
    %p185 = scmp.eq.s32.totalorder %s19, 0
    %p186 = por %p184, %p185
    %p187 = scmp.ne.s32.totalorder %s179, %s181
    %p188 = scmp.eq.s32.totalorder %s24, 1
    %p189 = por %p187, %p188
    %p190 = scmp.ne.s32.totalorder %s181, %s182
    %p191 = scmp.eq.s32.totalorder %s24, 0
    %p192 = por %p190, %p191
    %p193 = scmp.ne.s32.totalorder %s181, %s182
    %p194 = scmp.eq.s32.totalorder %s25, 1
    %p195 = por %p193, %p194
    %p197 = scmp.ne.s32.totalorder %s182, %s196
    %p198 = scmp.eq.s32.totalorder %s25, 0
    %p199 = por %p197, %p198
    %s201 = sadd.s32 %s200, 1
    %p204 = scmp.eq.s32.totalorder %s19, 1
    %p205 = scmp.ne.s32.totalorder %s200, %s202
    %p206 = scmp.eq.s32.totalorder %s19, 0
    %p207 = por %p205, %p206
    %p208 = scmp.ne.s32.totalorder %s200, %s202
    %p209 = scmp.eq.s32.totalorder %s24, 1
    %p210 = por %p208, %p209
    %p211 = scmp.ne.s32.totalorder %s202, %s203
    %p212 = scmp.eq.s32.totalorder %s24, 0
    %p213 = por %p211, %p212
    %p214 = scmp.ne.s32.totalorder %s202, %s203
    %p215 = scmp.eq.s32.totalorder %s25, 1
    %p216 = por %p214, %p215
    %p218 = scmp.ne.s32.totalorder %s203, %s217
    %p219 = scmp.eq.s32.totalorder %s25, 0
    %p220 = por %p218, %p219
    %s222 = sadd.s32 %s221, 1
    %p225 = scmp.eq.s32.totalorder %s19, 1
    %p226 = scmp.ne.s32.totalorder %s221, %s223
    %p227 = scmp.eq.s32.totalorder %s19, 0
    %p228 = por %p226, %p227
    %p229 = scmp.ne.s32.totalorder %s221, %s223
    %p230 = scmp.eq.s32.totalorder %s24, 1
    %p231 = por %p229, %p230
    %p232 = scmp.ne.s32.totalorder %s223, %s224
    %p233 = scmp.eq.s32.totalorder %s24, 0
    %p234 = por %p232, %p233
    %p235 = scmp.ne.s32.totalorder %s223, %s224
    %p236 = scmp.eq.s32.totalorder %s25, 1
    %p237 = por %p235, %p236
    %p239 = scmp.ne.s32.totalorder %s224, %s238
    %p240 = scmp.eq.s32.totalorder %s25, 0
    %p241 = por %p239, %p240
    %s243 = sadd.s32 %s242, 1
    %p246 = scmp.eq.s32.totalorder %s19, 1
    %p247 = scmp.ne.s32.totalorder %s242, %s244
    %p248 = scmp.eq.s32.totalorder %s19, 0
    %p249 = por %p247, %p248
    %p250 = scmp.ne.s32.totalorder %s242, %s244
    %p251 = scmp.eq.s32.totalorder %s24, 1
    %p252 = por %p250, %p251
    %p253 = scmp.ne.s32.totalorder %s244, %s245
    %p254 = scmp.eq.s32.totalorder %s24, 0
    %p255 = por %p253, %p254
    %p256 = scmp.ne.s32.totalorder %s244, %s245
    %p257 = scmp.eq.s32.totalorder %s25, 1
    %p258 = por %p256, %p257
    %p260 = scmp.ne.s32.totalorder %s245, %s259
    %p261 = scmp.eq.s32.totalorder %s25, 0
    %p262 = por %p260, %p261
    %s264 = sadd.s32 %s263, 1
    %p267 = scmp.eq.s32.totalorder %s19, 1
    %p268 = scmp.ne.s32.totalorder %s263, %s265
    %p269 = scmp.eq.s32.totalorder %s19, 0
    %p270 = por %p268, %p269
    %p271 = scmp.ne.s32.totalorder %s263, %s265
    %p272 = scmp.eq.s32.totalorder %s24, 1
    %p273 = por %p271, %p272
    %p274 = scmp.ne.s32.totalorder %s265, %s266
    %p275 = scmp.eq.s32.totalorder %s24, 0
    %p276 = por %p274, %p275
    %p277 = scmp.ne.s32.totalorder %s265, %s266
    %p278 = scmp.eq.s32.totalorder %s25, 1
    %p279 = por %p277, %p278
    %p281 = scmp.ne.s32.totalorder %s266, %s280
    %p282 = scmp.eq.s32.totalorder %s25, 0
    %p283 = por %p281, %p282
    %s285 = sadd.s32 %s284, 1
    %p288 = scmp.eq.s32.totalorder %s19, 1
    %p289 = scmp.ne.s32.totalorder %s284, %s286
    %p290 = scmp.eq.s32.totalorder %s19, 0
    %p291 = por %p289, %p290
    %p292 = scmp.ne.s32.totalorder %s284, %s286
    %p293 = scmp.eq.s32.totalorder %s24, 1
    %p294 = por %p292, %p293
    %p295 = scmp.ne.s32.totalorder %s286, %s287
    %p296 = scmp.eq.s32.totalorder %s24, 0
    %p297 = por %p295, %p296
    %p298 = scmp.ne.s32.totalorder %s286, %s287
    %p299 = scmp.eq.s32.totalorder %s25, 1
    %p300 = por %p298, %p299
    %p302 = scmp.ne.s32.totalorder %s287, %s301
    %p303 = scmp.eq.s32.totalorder %s25, 0
    %p304 = por %p302, %p303
    %s305 = ssub.s32 %s19, %s26
    %p306 = scmp.eq.s32.totalorder %s305, 0
    %s308 = sadd.s32 %s307, 1
    %s309 = scalar_select %p306, %s307, %s308
    %p312 = pneg %p306
    %p313 = scmp.eq.s32.totalorder %s19, 1
    %p314 = por %p312, %p313
    %p315 = scmp.ne.s32.totalorder %s307, %s310
    %p316 = scmp.eq.s32.totalorder %s19, 0
    %p317 = por %p315, %p316
    %p318 = scmp.ne.s32.totalorder %s307, %s310
    %p319 = scmp.eq.s32.totalorder %s24, 1
    %p320 = por %p318, %p319
    %p321 = scmp.ne.s32.totalorder %s310, %s311
    %p322 = scmp.eq.s32.totalorder %s24, 0
    %p323 = por %p321, %p322
    %p324 = scmp.ne.s32.totalorder %s310, %s311
    %p325 = scmp.eq.s32.totalorder %s25, 1
    %p326 = por %p324, %p325
    %p328 = scmp.ne.s32.totalorder %s311, %s327
    %p329 = scmp.eq.s32.totalorder %s25, 0
    %p330 = por %p328, %p329
    %p331 = scmp.le.s32.totalorder 1, %s19
    %p332 = scmp.lt.s32.totalorder %s19, 3
    %p333 = pnand %p331, %p332
    %p334 = pneg %p333
    // Predicated region
    $region9: #{_lambda_.16} parent=5 // pred_check
      _
    $region10: #{_lambda_.16} parent=5 // pred_check_branch
      %336 = sbr.rel (%p333) target = $region12
    $region11: #{_lambda_.16} parent=5 // pred_region
      %s337 = ssub.s32 %s19, 1
      // Predicated region
      $region13: #{_lambda_.16} parent=11 // pred_check
        %p338 = pneg %p66
      $region14: #{_lambda_.16} parent=11 // pred_check_branch
        %340 = sbr.rel (%p338) target = $region16
      $region15: #{_lambda_.16} parent=11 // pred_region
        _
      $region16: #{_lambda_.16} parent=11 // pred_fallthru
        _
      // Predicated region
      $region17: #{_lambda_.16} parent=11 // pred_check
        %p341 = pneg %p87
      $region18: #{_lambda_.16} parent=11 // pred_check_branch
        %343 = sbr.rel (%p341) target = $region20
      $region19: #{_lambda_.16} parent=11 // pred_region
        _
      $region20: #{_lambda_.16} parent=11 // pred_fallthru
        _
      // Predicated region
      $region21: #{_lambda_.16} parent=11 // pred_check
        %p344 = pneg %p108
      $region22: #{_lambda_.16} parent=11 // pred_check_branch
        %346 = sbr.rel (%p344) target = $region24
      $region23: #{_lambda_.16} parent=11 // pred_region
        _
      $region24: #{_lambda_.16} parent=11 // pred_fallthru
        _
      // Predicated region
      $region25: #{_lambda_.16} parent=11 // pred_check
        %p347 = pneg %p129
      $region26: #{_lambda_.16} parent=11 // pred_check_branch
        %349 = sbr.rel (%p347) target = $region28
      $region27: #{_lambda_.16} parent=11 // pred_region
        _
      $region28: #{_lambda_.16} parent=11 // pred_fallthru
        _
      // Predicated region
      $region29: #{_lambda_.16} parent=11 // pred_check
        %p350 = pneg %p150
      $region30: #{_lambda_.16} parent=11 // pred_check_branch
        %352 = sbr.rel (%p350) target = $region32
      $region31: #{_lambda_.16} parent=11 // pred_region
        _
      $region32: #{_lambda_.16} parent=11 // pred_fallthru
        _
      // Predicated region
      $region33: #{_lambda_.16} parent=11 // pred_check
        %p353 = pneg %p171
      $region34: #{_lambda_.16} parent=11 // pred_check_branch
        %355 = sbr.rel (%p353) target = $region36
      $region35: #{_lambda_.16} parent=11 // pred_region
        _
      $region36: #{_lambda_.16} parent=11 // pred_fallthru
        _
      // Predicated region
      $region37: #{_lambda_.16} parent=11 // pred_check
        %p356 = pneg %p192
      $region38: #{_lambda_.16} parent=11 // pred_check_branch
        %358 = sbr.rel (%p356) target = $region40
      $region39: #{_lambda_.16} parent=11 // pred_region
        _
      $region40: #{_lambda_.16} parent=11 // pred_fallthru
        _
      // Predicated region
      $region41: #{_lambda_.16} parent=11 // pred_check
        %p359 = pneg %p213
      $region42: #{_lambda_.16} parent=11 // pred_check_branch
        %361 = sbr.rel (%p359) target = $region44
      $region43: #{_lambda_.16} parent=11 // pred_region
        _
      $region44: #{_lambda_.16} parent=11 // pred_fallthru
        _
      // Predicated region
      $region45: #{_lambda_.16} parent=11 // pred_check
        %p362 = pneg %p234
      $region46: #{_lambda_.16} parent=11 // pred_check_branch
        %364 = sbr.rel (%p362) target = $region48
      $region47: #{_lambda_.16} parent=11 // pred_region
        _
      $region48: #{_lambda_.16} parent=11 // pred_fallthru
        _
      // Predicated region
      $region49: #{_lambda_.16} parent=11 // pred_check
        %p365 = pneg %p255
      $region50: #{_lambda_.16} parent=11 // pred_check_branch
        %367 = sbr.rel (%p365) target = $region52
      $region51: #{_lambda_.16} parent=11 // pred_region
        _
      $region52: #{_lambda_.16} parent=11 // pred_fallthru
        _
      // Predicated region
      $region53: #{_lambda_.16} parent=11 // pred_check
        %p368 = pneg %p276
      $region54: #{_lambda_.16} parent=11 // pred_check_branch
        %370 = sbr.rel (%p368) target = $region56
      $region55: #{_lambda_.16} parent=11 // pred_region
        _
      $region56: #{_lambda_.16} parent=11 // pred_fallthru
        _
      // Predicated region
      $region57: #{_lambda_.16} parent=11 // pred_check
        %p371 = pneg %p297
      $region58: #{_lambda_.16} parent=11 // pred_check_branch
        %373 = sbr.rel (%p371) target = $region60
      $region59: #{_lambda_.16} parent=11 // pred_region
        _
      $region60: #{_lambda_.16} parent=11 // pred_fallthru
        _
    $region12: #{_lambda_.16} parent=5 // pred_fallthru
      _
    %p374 = scmp.lt.s32.totalorder %s19, 2
    // Predicated region
    $region61: #{_lambda_.16} parent=5 // pred_check
      %p375 = pneg %p374
    $region62: #{_lambda_.16} parent=5 // pred_check_branch
      %377 = sbr.rel (%p375) target = $region64
    $region63: #{_lambda_.16} parent=5 // pred_region
      // Predicated region
      $region65: #{_lambda_.16} parent=63 // pred_check
        %p378 = pneg %p39
      $region66: #{_lambda_.16} parent=63 // pred_check_branch
        %380 = sbr.rel (%p378) target = $region68
      $region67: #{_lambda_.16} parent=63 // pred_region
        %p381 = scmp.lt.s32.totalorder %s19, 1
        %s382 = scalar_select %p381, %s19, 1
        %s383 = smul.addr %s382, 8
        %s384 = scalar_lea.vmem %s0, %s383
      $region68: #{_lambda_.16} parent=63 // pred_fallthru
        _
    $region64: #{_lambda_.16} parent=5 // pred_fallthru
      _
    %p385 = scmp.le.s32.totalorder 1, %s19
    %p386 = scmp.lt.s32.totalorder %s19, 3
    %p387 = pnand %p385, %p386
    %p388 = pneg %p387
    // Predicated region
    $region69: #{_lambda_.16} parent=5 // pred_check
      _
    $region70: #{_lambda_.16} parent=5 // pred_check_branch
      %390 = sbr.rel (%p387) target = $region72
    $region71: #{_lambda_.16} parent=5 // pred_region
      %s391 = ssub.s32 %s19, 1
      %p392 = scmp.lt.s32.totalorder %s24, 1
      %s393 = scalar_select %p392, %s24, 1
      %s394 = smul.addr %s393, 8
      %s395 = scalar_lea.vmem %s0, %s394
      %p396 = pneg %p45
      %p397 = pneg %p42
      %p398 = pneg %p66
      %p399 = pneg %p63
      %p400 = pneg %p87
      %p401 = pneg %p84
      %p402 = pneg %p108
      %p403 = pneg %p105
      %p404 = pneg %p129
      %p405 = pneg %p126
      %p406 = pneg %p150
      %p407 = pneg %p147
      %p408 = pneg %p171
      %p409 = pneg %p168
      %p410 = pneg %p192
      %p411 = pneg %p189
      %p412 = pneg %p213
      %p413 = pneg %p210
      %p414 = pneg %p234
      %p415 = pneg %p231
      %p416 = pneg %p255
      %p417 = pneg %p252
      %p418 = pneg %p276
      %p419 = pneg %p273
      %p420 = pneg %p297
      %p421 = pneg %p294
      %p422 = pneg %p323
      %p423 = pneg %p320
      %p424 = scmp.lt.s32.totalorder %s24, 1
      %s425 = scalar_select %p424, %s24, 1
      %s426 = smul.addr %s425, 8
      %s427 = scalar_lea.vmem %s13, %s426
      %p428 = scmp.lt.s32.totalorder %s24, 1
      %s429 = scalar_select %p428, %s24, 1
      %s430 = smul.addr %s429, 8
      %s431 = scalar_lea.vmem %s0, %s430
      %p432 = scmp.lt.s32.totalorder %s24, 1
      %s433 = scalar_select %p432, %s24, 1
      %s434 = smul.addr %s433, 8
      %s435 = scalar_lea.vmem %s13, %s434
      %v437 = vld [vmem:[%s431] sm:$0x1f]
      %v438 = vld [vmem:[%s1] sm:$0x1]
      %v439 = vld [vmem:[%s2] sm:$0x1]
      %vm440 = vcmask 520192
      %v441 = vsel %vm440, %v437, 0.0
      %442 = vadd.xlane.f32.xlu0 %v441
      %v443 = vpop.xlane.xlu0 %442
      %v444 = vrcp.pop 64.0
      %v445 = vmul.f32 %v443, %v444
      %v446 = vsub.f32 %v437, %v445
      %v447 = vmul.f32 %v446, %v446
      %v448 = vsel %vm440, %v447, 0.0
      %449 = vadd.xlane.f32.xlu0 %v448
      %v450 = vpop.xlane.xlu0 %449
      %v451 = vmul.f32 %v450, %v444
      %v452 = vadd.f32 %v451, 1e-05
      %v453 = vrsqrt.pop %v452
      %v454 = vmul.f32 %v446, %v453
      %v456 = vlaneseq
      %v457 = vshrl.u32 %v456, 7
      %v458 = vsub.s32 0, %v457
      %v459 = vrot.slane %v438, %v458
      %v461 = vmul.f32 %v454, %v459
      %v463 = vlaneseq
      %v464 = vshrl.u32 %v463, 7
      %v465 = vsub.s32 0, %v464
      %v466 = vrot.slane %v439, %v465
      %v468 = vadd.f32 %v461, %v466
      %v469 = vld [vmem:[%s3] sm:$0xff]
      %v470 = vld [vmem:[%s3 + $0x8] sm:$0xff]
      %v471 = vld [vmem:[%s3 + $0x10] sm:$0xff]
      %v472 = vld [vmem:[%s3 + $0x18] sm:$0xff]
      %v473 = vld [vmem:[%s3 + $0x20] sm:$0xff]
      %v474 = vld [vmem:[%s3 + $0x28] sm:$0xff]
      %v475 = vld [vmem:[%s3 + $0x30] sm:$0xff]
      %v476 = vld [vmem:[%s3 + $0x38] sm:$0xff]
      %v477 = vpack.c.bf16 %v468, %v468
      %v478 = vld [vmem:[%s4] sm:$0x3]
      %v480 = vlaneseq
      %v481 = vshrl.u32 %v480, 7
      %v482 = vsub.s32 0, %v481
      %v483 = vrot.slane %v478, %v482
      %v484 = vlaneseq
      %v485 = vshrl.u32 %v484, 7
      %v486 = vsub.s32 1, %v485
      %v487 = vrot.slane %v478, %v486
      %v498 = vunpack.c.l.b16 %v469
      %v499 = vunpack.c.h.b16 %v469
      %v500 = vunpack.c.l.b16 %v470
      %v501 = vunpack.c.h.b16 %v470
      %v502 = vunpack.c.l.b16 %v471
      %v503 = vunpack.c.h.b16 %v471
      %v504 = vunpack.c.l.b16 %v472
      %v505 = vunpack.c.h.b16 %v472
      %v506 = vunpack.c.l.b16 %v473
      %v507 = vunpack.c.h.b16 %v473
      %v508 = vunpack.c.l.b16 %v474
      %v509 = vunpack.c.h.b16 %v474
      %v510 = vunpack.c.l.b16 %v475
      %v511 = vunpack.c.h.b16 %v475
      %v512 = vunpack.c.l.b16 %v476
      %v513 = vunpack.c.h.b16 %v476
      %v514 = vpack.c.b16 %v500, %v498
      %v515 = vpack.c.b16 %v501, %v499
      %v516 = vpack.c.b16 %v504, %v502
      %v517 = vpack.c.b16 %v505, %v503
      %v518 = vpack.c.b16 %v508, %v506
      %v519 = vpack.c.b16 %v509, %v507
      %v520 = vpack.c.b16 %v512, %v510
      %v521 = vpack.c.b16 %v513, %v511
      %vm530 = vcmask 523264
      %v532 = vsel %vm530, %v477, 0
      %534 = vmatprep.subr.bf16.mxu0 %v515
      %535 = vmatpush1.bf16.msra.mxu0 %v514
      %536 = vmatprep.subr.bf16.mxu0 %v517
      %537 = vmatpush1.bf16.msra.mxu0 %v516
      %538 = vmatprep.subr.bf16.mxu0 %v519
      %539 = vmatpush1.bf16.msra.mxu0 %v518
      %540 = vmatprep.subr.bf16.mxu0 %v521
      %541 = vmatpush1.bf16.msra.mxu0 %v520
      %542 = vmatprep.subr.bf16.mxu0 0
      %543 = vmatpush1.bf16.msra.mxu0 0
      %544 = vmatprep.subr.bf16.mxu0 0
      %545 = vmatpush1.bf16.msra.mxu0 0
      %546 = vmatprep.subr.bf16.mxu0 0
      %547 = vmatpush1.bf16.msra.mxu0 0
      %548 = vmatprep.subr.bf16.mxu0 0
      %549 = vmatpush1.bf16.msra.mxu0 0
      %550 = vmatprep.subr.bf16.mxu0 0
      %551 = vmatpush1.bf16.msra.mxu0 0
      %552 = vmatprep.subr.bf16.mxu0 0
      %553 = vmatpush1.bf16.msra.mxu0 0
      %554 = vmatprep.subr.bf16.mxu0 0
      %555 = vmatpush1.bf16.msra.mxu0 0
      %556 = vmatprep.subr.bf16.mxu0 0
      %557 = vmatpush1.bf16.msra.mxu0 0
      %558 = vmatprep.subr.bf16.mxu0 0
      %559 = vmatpush1.bf16.msra.mxu0 0
      %560 = vmatprep.subr.bf16.mxu0 0
      %561 = vmatpush1.bf16.msra.mxu0 0
      %562 = vmatprep.subr.bf16.mxu0 0
      %563 = vmatpush1.bf16.msra.mxu0 0
      %564 = vmatprep.subr.bf16.mxu0 0
      %565 = vmatpush1.bf16.msra.mxu0 0
      %566 = vmatprep.mubr.bf16.mxu0 0
      %567 = vmatmul.mubr.bf16.gmra.mrb[0].mxu0 %v532
      %v568 = vpop.f32.mrb[0].mxu0
      %v569 = vadd.f32 %v483, %v568
      %v570 = vpop.f32.mrb[0].mxu0
      %v571 = vadd.f32 %v487, %v570
      %v572 = vpop.f32.mrb[0].mxu0
      %v573 = vpop.f32.mrb[0].mxu0
      %574 = vdwg.mxu0
      %v575 = vld [vmem:[%s5] sm:$0xff]
      %v576 = vld [vmem:[%s5 + $0x8] sm:$0xff]
      %v577 = vld [vmem:[%s5 + $0x10] sm:$0xff]
      %v578 = vld [vmem:[%s5 + $0x18] sm:$0xff]
      %v579 = vld [vmem:[%s5 + $0x20] sm:$0xff]
      %v580 = vld [vmem:[%s5 + $0x28] sm:$0xff]
      %v581 = vld [vmem:[%s5 + $0x30] sm:$0xff]
      %v582 = vld [vmem:[%s5 + $0x38] sm:$0xff]
      %v583 = vmul.f32 %v569, 0.35355338
      %v584 = vpack.c.bf16 %v583, %v583
      %v585 = vpack.c.bf16 %v569, %v569
      %v586 = vpack.c.bf16 %v571, %v571
      %588 = vrot.lane.b32.xlu0 %v585, 64
      %v589 = vpop.permute.xlu0 %588
      %vm590 = vcmask 64512
      %v592 = vsel %vm590, %v584, 0
      %v595 = vsel %vm590, %v589, 0
      %597 = vmatprep.subr.bf16.mxu0 0
      %598 = vmatpush1.bf16.xpose.msra.mxu0 %v595
      %599 = vmatprep.subr.bf16.mxu0 0
      %600 = vmatpush1.bf16.xpose.msra.mxu0 0
      %601 = vmatprep.subr.bf16.mxu0 0
      %602 = vmatpush1.bf16.xpose.msra.mxu0 0
      %603 = vmatprep.subr.bf16.mxu0 0
      %604 = vmatpush1.bf16.xpose.msra.mxu0 0
      %605 = vmatprep.subr.bf16.mxu0 0
      %606 = vmatpush1.bf16.xpose.msra.mxu0 0
      %607 = vmatprep.subr.bf16.mxu0 0
      %608 = vmatpush1.bf16.xpose.msra.mxu0 0
      %609 = vmatprep.subr.bf16.mxu0 0
      %610 = vmatpush1.bf16.xpose.msra.mxu0 0
      %611 = vmatprep.subr.bf16.mxu0 0
      %612 = vmatpush1.bf16.xpose.msra.mxu0 0
      %613 = vmatprep.subr.bf16.mxu0 0
      %614 = vmatpush1.bf16.xpose.msra.mxu0 0
      %615 = vmatprep.subr.bf16.mxu0 0
      %616 = vmatpush1.bf16.xpose.msra.mxu0 0
      %617 = vmatprep.subr.bf16.mxu0 0
      %618 = vmatpush1.bf16.xpose.msra.mxu0 0
      %619 = vmatprep.subr.bf16.mxu0 0
      %620 = vmatpush1.bf16.xpose.msra.mxu0 0
      %621 = vmatprep.subr.bf16.mxu0 0
      %622 = vmatpush1.bf16.xpose.msra.mxu0 0
      %623 = vmatprep.subr.bf16.mxu0 0
      %624 = vmatpush1.bf16.xpose.msra.mxu0 0
      %625 = vmatprep.subr.bf16.mxu0 0
      %626 = vmatpush1.bf16.xpose.msra.mxu0 0
      %627 = vmatprep.subr.bf16.mxu0 0
      %628 = vmatpush1.bf16.xpose.msra.mxu0 0
      %629 = vmatprep.mubr.bf16.mxu0 0
      %630 = vmatmul.mubr.bf16.gmra.mrb[0].mxu0 %v592
      %v631 = vpop.f32.mrb[0].mxu0
      %v632 = vadd.f32 0.0, %v631
      %v633 = vpop.f32.mrb[0].mxu0
      %v634 = vpop.f32.mrb[0].mxu0
      %v635 = vpop.f32.mrb[0].mxu0
      %636 = vdwg.mxu0
      %vm637 = vcmask 36864
      %v638 = vsel %vm637, %v632, -inf
      %639 = vmax.xlane.f32.xlu0 %v638
      %v640 = vpop.xlane.xlu0 %639
      %v641 = vsub.f32 %v632, %v640
      %v642 = vmul.f32 %v641, 1.442695
      %v643 = vpow.pop %v642
      %v644 = vsel %vm637, %v643, 0.0
      %645 = vadd.xlane.f32.xlu0 %v644
      %v646 = vpop.xlane.xlu0 %645
      %v647 = vrcp.pop %v646
      %v648 = vmul.f32 %v643, %v647
      %v649 = vpack.c.bf16 %v648, %v648
      %vm650 = vcmask 39936
      %v652 = vsel %vm650, %v649, 0
      %vm654 = vcmask 1041408
      %vm655 = vcmask 1042432
      %v656 = vsel %vm654, 4294967295, 65535
      %v657 = vsel %vm655, %v656, 0
      %v659 = vand.u32 %v586, %v657
      %661 = vmatprep.subr.bf16.mxu0 0
      %662 = vmatpush1.bf16.msra.mxu0 %v659
      %663 = vmatprep.subr.bf16.mxu0 0
      %664 = vmatpush1.bf16.msra.mxu0 0
      %665 = vmatprep.subr.bf16.mxu0 0
      %666 = vmatpush1.bf16.msra.mxu0 0
      %667 = vmatprep.subr.bf16.mxu0 0
      %668 = vmatpush1.bf16.msra.mxu0 0
      %669 = vmatprep.subr.bf16.mxu0 0
      %670 = vmatpush1.bf16.msra.mxu0 0
      %671 = vmatprep.subr.bf16.mxu0 0
      %672 = vmatpush1.bf16.msra.mxu0 0
      %673 = vmatprep.subr.bf16.mxu0 0
      %674 = vmatpush1.bf16.msra.mxu0 0
      %675 = vmatprep.subr.bf16.mxu0 0
      %676 = vmatpush1.bf16.msra.mxu0 0
      %677 = vmatprep.subr.bf16.mxu0 0
      %678 = vmatpush1.bf16.msra.mxu0 0
      %679 = vmatprep.subr.bf16.mxu0 0
      %680 = vmatpush1.bf16.msra.mxu0 0
      %681 = vmatprep.subr.bf16.mxu0 0
      %682 = vmatpush1.bf16.msra.mxu0 0
      %683 = vmatprep.subr.bf16.mxu0 0
      %684 = vmatpush1.bf16.msra.mxu0 0
      %685 = vmatprep.subr.bf16.mxu0 0
      %686 = vmatpush1.bf16.msra.mxu0 0
      %687 = vmatprep.subr.bf16.mxu0 0
      %688 = vmatpush1.bf16.msra.mxu0 0
      %689 = vmatprep.subr.bf16.mxu0 0
      %690 = vmatpush1.bf16.msra.mxu0 0
      %691 = vmatprep.subr.bf16.mxu0 0
      %692 = vmatpush1.bf16.msra.mxu0 0
      %693 = vmatprep.mubr.bf16.mxu0 0
      %694 = vmatmul.mubr.bf16.gmra.mrb[0].mxu0 %v652
      %v695 = vpop.f32.mrb[0].mxu0
      %v696 = vadd.f32 0.0, %v695
      %v697 = vpop.f32.mrb[0].mxu0
      %v698 = vpop.f32.mrb[0].mxu0
      %v699 = vpop.f32.mrb[0].mxu0
      %700 = vdwg.mxu0
      %v701 = vpack.c.bf16 %v696, %v696
      %v702 = vpack.c.bf16 %v575, %v575
      %704 = vrot.lane.b32.xlu0 %v584, 120
      %v705 = vpop.permute.xlu0 %704
      %706 = vrot.lane.b32.xlu0 %v585, 56
      %v707 = vpop.permute.xlu0 %706
      %v709 = vsel %vm590, %v705, 0
      %v712 = vsel %vm590, %v707, 0
      %714 = vmatprep.subr.bf16.mxu0 0
      %715 = vmatpush1.bf16.xpose.msra.mxu0 %v712
      %716 = vmatprep.subr.bf16.mxu0 0
      %717 = vmatpush1.bf16.xpose.msra.mxu0 0
      %718 = vmatprep.subr.bf16.mxu0 0
      %719 = vmatpush1.bf16.xpose.msra.mxu0 0
      %720 = vmatprep.subr.bf16.mxu0 0
      %721 = vmatpush1.bf16.xpose.msra.mxu0 0
      %722 = vmatprep.subr.bf16.mxu0 0
      %723 = vmatpush1.bf16.xpose.msra.mxu0 0
      %724 = vmatprep.subr.bf16.mxu0 0
      %725 = vmatpush1.bf16.xpose.msra.mxu0 0
      %726 = vmatprep.subr.bf16.mxu0 0
      %727 = vmatpush1.bf16.xpose.msra.mxu0 0
      %728 = vmatprep.subr.bf16.mxu0 0
      %729 = vmatpush1.bf16.xpose.msra.mxu0 0
      %730 = vmatprep.subr.bf16.mxu0 0
      %731 = vmatpush1.bf16.xpose.msra.mxu0 0
      %732 = vmatprep.subr.bf16.mxu0 0
      %733 = vmatpush1.bf16.xpose.msra.mxu0 0
      %734 = vmatprep.subr.bf16.mxu0 0
      %735 = vmatpush1.bf16.xpose.msra.mxu0 0
      %736 = vmatprep.subr.bf16.mxu0 0
      %737 = vmatpush1.bf16.xpose.msra.mxu0 0
      %738 = vmatprep.subr.bf16.mxu0 0
      %739 = vmatpush1.bf16.xpose.msra.mxu0 0
      %740 = vmatprep.subr.bf16.mxu0 0
      %741 = vmatpush1.bf16.xpose.msra.mxu0 0
      %742 = vmatprep.subr.bf16.mxu0 0
      %743 = vmatpush1.bf16.xpose.msra.mxu0 0
      %744 = vmatprep.subr.bf16.mxu0 0
      %745 = vmatpush1.bf16.xpose.msra.mxu0 0
      %746 = vmatprep.mubr.bf16.mxu0 0
      %747 = vmatmul.mubr.bf16.gmra.mrb[0].mxu0 %v709
      %v748 = vpop.f32.mrb[0].mxu0
      %v749 = vadd.f32 0.0, %v748
      %v750 = vpop.f32.mrb[0].mxu0
      %v751 = vpop.f32.mrb[0].mxu0
      %v752 = vpop.f32.mrb[0].mxu0
      %753 = vdwg.mxu0
      %v754 = vsel %vm637, %v749, -inf
      %755 = vmax.xlane.f32.xlu0 %v754
      %v756 = vpop.xlane.xlu0 %755
      %v757 = vsub.f32 %v749, %v756
      %v758 = vmul.f32 %v757, 1.442695
      %v759 = vpow.pop %v758
      %v760 = vsel %vm637, %v759, 0.0
      %761 = vadd.xlane.f32.xlu0 %v760
      %v762 = vpop.xlane.xlu0 %761
      %v763 = vrcp.pop %v762
      %v764 = vmul.f32 %v759, %v763
      %v765 = vpack.c.bf16 %v764, %v764
      %767 = vrot.lane.b32.xlu0 %v586, 120
      %v768 = vpop.permute.xlu0 %767
      %v770 = vsel %vm650, %v765, 0
      %v773 = vand.u32 %v768, %v657
      %775 = vmatprep.subr.bf16.mxu0 0
      %776 = vmatpush1.bf16.msra.mxu0 %v773
      %777 = vmatprep.subr.bf16.mxu0 0
      %778 = vmatpush1.bf16.msra.mxu0 0
      %779 = vmatprep.subr.bf16.mxu0 0
      %780 = vmatpush1.bf16.msra.mxu0 0
      %781 = vmatprep.subr.bf16.mxu0 0
      %782 = vmatpush1.bf16.msra.mxu0 0
      %783 = vmatprep.subr.bf16.mxu0 0
      %784 = vmatpush1.bf16.msra.mxu0 0
      %785 = vmatprep.subr.bf16.mxu0 0
      %786 = vmatpush1.bf16.msra.mxu0 0
      %787 = vmatprep.subr.bf16.mxu0 0
      %788 = vmatpush1.bf16.msra.mxu0 0
      %789 = vmatprep.subr.bf16.mxu0 0
      %790 = vmatpush1.bf16.msra.mxu0 0
      %791 = vmatprep.subr.bf16.mxu0 0
      %792 = vmatpush1.bf16.msra.mxu0 0
      %793 = vmatprep.subr.bf16.mxu0 0
      %794 = vmatpush1.bf16.msra.mxu0 0
      %795 = vmatprep.subr.bf16.mxu0 0
      %796 = vmatpush1.bf16.msra.mxu0 0
      %797 = vmatprep.subr.bf16.mxu0 0
      %798 = vmatpush1.bf16.msra.mxu0 0
      %799 = vmatprep.subr.bf16.mxu0 0
      %800 = vmatpush1.bf16.msra.mxu0 0
      %801 = vmatprep.subr.bf16.mxu0 0
      %802 = vmatpush1.bf16.msra.mxu0 0
      %803 = vmatprep.subr.bf16.mxu0 0
      %804 = vmatpush1.bf16.msra.mxu0 0
      %805 = vmatprep.subr.bf16.mxu0 0
      %806 = vmatpush1.bf16.msra.mxu0 0
      %807 = vmatprep.mubr.bf16.mxu0 0
      %808 = vmatmul.mubr.bf16.gmra.mrb[0].mxu0 %v770
      %v809 = vpop.f32.mrb[0].mxu0
      %v810 = vadd.f32 0.0, %v809
      %v811 = vpop.f32.mrb[0].mxu0
      %v812 = vpop.f32.mrb[0].mxu0
      %v813 = vpop.f32.mrb[0].mxu0
      %814 = vdwg.mxu0
      %v815 = vpack.c.bf16 %v810, %v810
      %v816 = vpack.c.bf16 %v576, %v576
      %v818 = vsel %vm590, %v815, 0
      %vm820 = vcmask 1043456
      %v822 = vsel %vm820, %v816, 0
      %824 = vmatprep.subr.bf16.mxu0 0
      %825 = vmatpush1.bf16.msra.mxu0 %v822
      %826 = vmatprep.subr.bf16.mxu0 0
      %827 = vmatpush1.bf16.msra.mxu0 0
      %828 = vmatprep.subr.bf16.mxu0 0
      %829 = vmatpush1.bf16.msra.mxu0 0
      %830 = vmatprep.subr.bf16.mxu0 0
      %831 = vmatpush1.bf16.msra.mxu0 0
      %832 = vmatprep.subr.bf16.mxu0 0
      %833 = vmatpush1.bf16.msra.mxu0 0
      %834 = vmatprep.subr.bf16.mxu0 0
      %835 = vmatpush1.bf16.msra.mxu0 0
      %836 = vmatprep.subr.bf16.mxu0 0
      %837 = vmatpush1.bf16.msra.mxu0 0
      %838 = vmatprep.subr.bf16.mxu0 0
      %839 = vmatpush1.bf16.msra.mxu0 0
      %840 = vmatprep.subr.bf16.mxu0 0
      %841 = vmatpush1.bf16.msra.mxu0 0
      %842 = vmatprep.subr.bf16.mxu0 0
      %843 = vmatpush1.bf16.msra.mxu0 0
      %844 = vmatprep.subr.bf16.mxu0 0
      %845 = vmatpush1.bf16.msra.mxu0 0
      %846 = vmatprep.subr.bf16.mxu0 0
      %847 = vmatpush1.bf16.msra.mxu0 0
      %848 = vmatprep.subr.bf16.mxu0 0
      %849 = vmatpush1.bf16.msra.mxu0 0
      %850 = vmatprep.subr.bf16.mxu0 0
      %851 = vmatpush1.bf16.msra.mxu0 0
      %852 = vmatprep.subr.bf16.mxu0 0
      %853 = vmatpush1.bf16.msra.mxu0 0
      %854 = vmatprep.subr.bf16.mxu0 0
      %855 = vmatpush1.bf16.msra.mxu0 0
      %856 = vmatprep.mubr.bf16.mxu0 0
      %857 = vmatmul.mubr.bf16.gmra.mrb[0].mxu0 %v818
      %v858 = vpop.f32.mrb[0].mxu0
      %v859 = vadd.f32 0.0, %v858
      %v860 = vpop.f32.mrb[0].mxu0
      %v861 = vpop.f32.mrb[0].mxu0
      %v862 = vpop.f32.mrb[0].mxu0
      %863 = vdwg.mxu0
      %v865 = vsel %vm590, %v701, 0
      %v868 = vsel %vm820, %v702, 0
      %870 = vmatprep.subr.bf16.mxu0 0
      %871 = vmatpush1.bf16.msra.mxu0 %v868
      %872 = vmatprep.subr.bf16.mxu0 0
      %873 = vmatpush1.bf16.msra.mxu0 0
      %874 = vmatprep.subr.bf16.mxu0 0
      %875 = vmatpush1.bf16.msra.mxu0 0
      %876 = vmatprep.subr.bf16.mxu0 0
      %877 = vmatpush1.bf16.msra.mxu0 0
      %878 = vmatprep.subr.bf16.mxu0 0
      %879 = vmatpush1.bf16.msra.mxu0 0
      %880 = vmatprep.subr.bf16.mxu0 0
      %881 = vmatpush1.bf16.msra.mxu0 0
      %882 = vmatprep.subr.bf16.mxu0 0
      %883 = vmatpush1.bf16.msra.mxu0 0
      %884 = vmatprep.subr.bf16.mxu0 0
      %885 = vmatpush1.bf16.msra.mxu0 0
      %886 = vmatprep.subr.bf16.mxu0 0
      %887 = vmatpush1.bf16.msra.mxu0 0
      %888 = vmatprep.subr.bf16.mxu0 0
      %889 = vmatpush1.bf16.msra.mxu0 0
      %890 = vmatprep.subr.bf16.mxu0 0
      %891 = vmatpush1.bf16.msra.mxu0 0
      %892 = vmatprep.subr.bf16.mxu0 0
      %893 = vmatpush1.bf16.msra.mxu0 0
      %894 = vmatprep.subr.bf16.mxu0 0
      %895 = vmatpush1.bf16.msra.mxu0 0
      %896 = vmatprep.subr.bf16.mxu0 0
      %897 = vmatpush1.bf16.msra.mxu0 0
      %898 = vmatprep.subr.bf16.mxu0 0
      %899 = vmatpush1.bf16.msra.mxu0 0
      %900 = vmatprep.subr.bf16.mxu0 0
      %901 = vmatpush1.bf16.msra.mxu0 0
      %902 = vmatprep.mubr.bf16.mxu0 0
      %903 = vmatmul.mubr.bf16.gmra.mrb[0].mxu0 %v865
      %v904 = vpop.f32.mrb[0].mxu0
      %v905 = vadd.f32 %v859, %v904
      %v906 = vpop.f32.mrb[0].mxu0
      %v907 = vpop.f32.mrb[0].mxu0
      %v908 = vpop.f32.mrb[0].mxu0
      %909 = vdwg.mxu0
      %910 = vrot.lane.b32.xlu0 %v584, 112
      %v911 = vpop.permute.xlu0 %910
      %912 = vrot.lane.b32.xlu0 %v585, 48
      %v913 = vpop.permute.xlu0 %912
      %v915 = vsel %vm590, %v911, 0
      %v918 = vsel %vm590, %v913, 0
      %920 = vmatprep.subr.bf16.mxu0 0
      %921 = vmatpush1.bf16.xpose.msra.mxu0 %v918
      %922 = vmatprep.subr.bf16.mxu0 0
      %923 = vmatpush1.bf16.xpose.msra.mxu0 0
      %924 = vmatprep.subr.bf16.mxu0 0
      %925 = vmatpush1.bf16.xpose.msra.mxu0 0
      %926 = vmatprep.subr.bf16.mxu0 0
      %927 = vmatpush1.bf16.xpose.msra.mxu0 0
      %928 = vmatprep.subr.bf16.mxu0 0
      %929 = vmatpush1.bf16.xpose.msra.mxu0 0
      %930 = vmatprep.subr.bf16.mxu0 0
      %931 = vmatpush1.bf16.xpose.msra.mxu0 0
      %932 = vmatprep.subr.bf16.mxu0 0
      %933 = vmatpush1.bf16.xpose.msra.mxu0 0
      %934 = vmatprep.subr.bf16.mxu0 0
      %935 = vmatpush1.bf16.xpose.msra.mxu0 0
      %936 = vmatprep.subr.bf16.mxu0 0
      %937 = vmatpush1.bf16.xpose.msra.mxu0 0
      %938 = vmatprep.subr.bf16.mxu0 0
      %939 = vmatpush1.bf16.xpose.msra.mxu0 0
      %940 = vmatprep.subr.bf16.mxu0 0
      %941 = vmatpush1.bf16.xpose.msra.mxu0 0
      %942 = vmatprep.subr.bf16.mxu0 0
      %943 = vmatpush1.bf16.xpose.msra.mxu0 0
      %944 = vmatprep.subr.bf16.mxu0 0
      %945 = vmatpush1.bf16.xpose.msra.mxu0 0
      %946 = vmatprep.subr.bf16.mxu0 0
      %947 = vmatpush1.bf16.xpose.msra.mxu0 0
      %948 = vmatprep.subr.bf16.mxu0 0
      %949 = vmatpush1.bf16.xpose.msra.mxu0 0
      %950 = vmatprep.subr.bf16.mxu0 0
      %951 = vmatpush1.bf16.xpose.msra.mxu0 0
      %952 = vmatprep.mubr.bf16.mxu0 0
      %953 = vmatmul.mubr.bf16.gmra.mrb[0].mxu0 %v915
      %v954 = vpop.f32.mrb[0].mxu0
      %v955 = vadd.f32 0.0, %v954
      %v956 = vpop.f32.mrb[0].mxu0
      %v957 = vpop.f32.mrb[0].mxu0
      %v958 = vpop.f32.mrb[0].mxu0
      %959 = vdwg.mxu0
      %v960 = vsel %vm637, %v955, -inf
      %961 = vmax.xlane.f32.xlu0 %v960
      %v962 = vpop.xlane.xlu0 %961
      %v963 = vsub.f32 %v955, %v962
      %v964 = vmul.f32 %v963, 1.442695
      %v965 = vpow.pop %v964
      %v966 = vsel %vm637, %v965, 0.0
      %967 = vadd.xlane.f32.xlu0 %v966
      %v968 = vpop.xlane.xlu0 %967
      %v969 = vrcp.pop %v968
      %v970 = vmul.f32 %v965, %v969
      %v971 = vpack.c.bf16 %v970, %v970
      %972 = vrot.lane.b32.xlu0 %v586, 112
      %v973 = vpop.permute.xlu0 %972
      %v975 = vsel %vm650, %v971, 0
      %v978 = vand.u32 %v973, %v657
      %980 = vmatprep.subr.bf16.mxu0 0
      %981 = vmatpush1.bf16.msra.mxu0 %v978
      %982 = vmatprep.subr.bf16.mxu0 0
      %983 = vmatpush1.bf16.msra.mxu0 0
      %984 = vmatprep.subr.bf16.mxu0 0
      %985 = vmatpush1.bf16.msra.mxu0 0
      %986 = vmatprep.subr.bf16.mxu0 0
      %987 = vmatpush1.bf16.msra.mxu0 0
      %988 = vmatprep.subr.bf16.mxu0 0
      %989 = vmatpush1.bf16.msra.mxu0 0
      %990 = vmatprep.subr.bf16.mxu0 0
      %991 = vmatpush1.bf16.msra.mxu0 0
      %992 = vmatprep.subr.bf16.mxu0 0
      %993 = vmatpush1.bf16.msra.mxu0 0
      %994 = vmatprep.subr.bf16.mxu0 0
      %995 = vmatpush1.bf16.msra.mxu0 0
      %996 = vmatprep.subr.bf16.mxu0 0
      %997 = vmatpush1.bf16.msra.mxu0 0
      %998 = vmatprep.subr.bf16.mxu0 0
      %999 = vmatpush1.bf16.msra.mxu0 0
      %1000 = vmatprep.subr.bf16.mxu0 0
      %1001 = vmatpush1.bf16.msra.mxu0 0
      %1002 = vmatprep.subr.bf16.mxu0 0
      %1003 = vmatpush1.bf16.msra.mxu0 0
      %1004 = vmatprep.subr.bf16.mxu0 0
      %1005 = vmatpush1.bf16.msra.mxu0 0
      %1006 = vmatprep.subr.bf16.mxu0 0
      %1007 = vmatpush1.bf16.msra.mxu0 0
      %1008 = vmatprep.subr.bf16.mxu0 0
      %1009 = vmatpush1.bf16.msra.mxu0 0
      %1010 = vmatprep.subr.bf16.mxu0 0
      %1011 = vmatpush1.bf16.msra.mxu0 0
      %1012 = vmatprep.mubr.bf16.mxu0 0
      %1013 = vmatmul.mubr.bf16.gmra.mrb[0].mxu0 %v975
      %v1014 = vpop.f32.mrb[0].mxu0
      %v1015 = vadd.f32 0.0, %v1014
      %v1016 = vpop.f32.mrb[0].mxu0
      %v1017 = vpop.f32.mrb[0].mxu0
      %v1018 = vpop.f32.mrb[0].mxu0
      %1019 = vdwg.mxu0
      %v1020 = vpack.c.bf16 %v1015, %v1015
      %v1021 = vpack.c.bf16 %v577, %v577
      %v1023 = vsel %vm590, %v1020, 0
      %v1026 = vsel %vm820, %v1021, 0
      %1028 = vmatprep.subr.bf16.mxu0 0
      %1029 = vmatpush1.bf16.msra.mxu0 %v1026
      %1030 = vmatprep.subr.bf16.mxu0 0
      %1031 = vmatpush1.bf16.msra.mxu0 0
      %1032 = vmatprep.subr.bf16.mxu0 0
      %1033 = vmatpush1.bf16.msra.mxu0 0
      %1034 = vmatprep.subr.bf16.mxu0 0
      %1035 = vmatpush1.bf16.msra.mxu0 0
      %1036 = vmatprep.subr.bf16.mxu0 0
      %1037 = vmatpush1.bf16.msra.mxu0 0
      %1038 = vmatprep.subr.bf16.mxu0 0
      %1039 = vmatpush1.bf16.msra.mxu0 0
      %1040 = vmatprep.subr.bf16.mxu0 0
      %1041 = vmatpush1.bf16.msra.mxu0 0
      %1042 = vmatprep.subr.bf16.mxu0 0
      %1043 = vmatpush1.bf16.msra.mxu0 0
      %1044 = vmatprep.subr.bf16.mxu0 0
      %1045 = vmatpush1.bf16.msra.mxu0 0
      %1046 = vmatprep.subr.bf16.mxu0 0
      %1047 = vmatpush1.bf16.msra.mxu0 0
      %1048 = vmatprep.subr.bf16.mxu0 0
      %1049 = vmatpush1.bf16.msra.mxu0 0
      %1050 = vmatprep.subr.bf16.mxu0 0
      %1051 = vmatpush1.bf16.msra.mxu0 0
      %1052 = vmatprep.subr.bf16.mxu0 0
      %1053 = vmatpush1.bf16.msra.mxu0 0
      %1054 = vmatprep.subr.bf16.mxu0 0
      %1055 = vmatpush1.bf16.msra.mxu0 0
      %1056 = vmatprep.subr.bf16.mxu0 0
      %1057 = vmatpush1.bf16.msra.mxu0 0
      %1058 = vmatprep.subr.bf16.mxu0 0
      %1059 = vmatpush1.bf16.msra.mxu0 0
      %1060 = vmatprep.mubr.bf16.mxu0 0
      %1061 = vmatmul.mubr.bf16.gmra.mrb[0].mxu0 %v1023
      %v1062 = vpop.f32.mrb[0].mxu0
      %v1063 = vadd.f32 0.0, %v1062
      %v1064 = vpop.f32.mrb[0].mxu0
      %v1065 = vpop.f32.mrb[0].mxu0
      %v1066 = vpop.f32.mrb[0].mxu0
      %1067 = vdwg.mxu0
      %v1068 = vadd.f32 %v905, %v1063
      %1069 = vrot.lane.b32.xlu0 %v584, 104
      %v1070 = vpop.permute.xlu0 %1069
      %1071 = vrot.lane.b32.xlu0 %v585, 40
      %v1072 = vpop.permute.xlu0 %1071
      %v1074 = vsel %vm590, %v1070, 0
      %v1077 = vsel %vm590, %v1072, 0
      %1079 = vmatprep.subr.bf16.mxu0 0
      %1080 = vmatpush1.bf16.xpose.msra.mxu0 %v1077
      %1081 = vmatprep.subr.bf16.mxu0 0
      %1082 = vmatpush1.bf16.xpose.msra.mxu0 0
      %1083 = vmatprep.subr.bf16.mxu0 0
      %1084 = vmatpush1.bf16.xpose.msra.mxu0 0
      %1085 = vmatprep.subr.bf16.mxu0 0
      %1086 = vmatpush1.bf16.xpose.msra.mxu0 0
      %1087 = vmatprep.subr.bf16.mxu0 0
      %1088 = vmatpush1.bf16.xpose.msra.mxu0 0
      %1089 = vmatprep.subr.bf16.mxu0 0
      %1090 = vmatpush1.bf16.xpose.msra.mxu0 0
      %1091 = vmatprep.subr.bf16.mxu0 0
      %1092 = vmatpush1.bf16.xpose.msra.mxu0 0
      %1093 = vmatprep.subr.bf16.mxu0 0
      %1094 = vmatpush1.bf16.xpose.msra.mxu0 0
      %1095 = vmatprep.subr.bf16.mxu0 0
      %1096 = vmatpush1.bf16.xpose.msra.mxu0 0
      %1097 = vmatprep.subr.bf16.mxu0 0
      %1098 = vmatpush1.bf16.xpose.msra.mxu0 0
      %1099 = vmatprep.subr.bf16.mxu0 0
      %1100 = vmatpush1.bf16.xpose.msra.mxu0 0
      %1101 = vmatprep.subr.bf16.mxu0 0
      %1102 = vmatpush1.bf16.xpose.msra.mxu0 0
      %1103 = vmatprep.subr.bf16.mxu0 0
      %1104 = vmatpush1.bf16.xpose.msra.mxu0 0
      %1105 = vmatprep.subr.bf16.mxu0 0
      %1106 = vmatpush1.bf16.xpose.msra.mxu0 0
      %1107 = vmatprep.subr.bf16.mxu0 0
      %1108 = vmatpush1.bf16.xpose.msra.mxu0 0
      %1109 = vmatprep.subr.bf16.mxu0 0
      %1110 = vmatpush1.bf16.xpose.msra.mxu0 0
      %1111 = vmatprep.mubr.bf16.mxu0 0
      %1112 = vmatmul.mubr.bf16.gmra.mrb[0].mxu0 %v1074
      %v1113 = vpop.f32.mrb[0].mxu0
      %v1114 = vadd.f32 0.0, %v1113
      %v1115 = vpop.f32.mrb[0].mxu0
      %v1116 = vpop.f32.mrb[0].mxu0
      %v1117 = vpop.f32.mrb[0].mxu0
      %1118 = vdwg.mxu0
      %v1119 = vsel %vm637, %v1114, -inf
      %1120 = vmax.xlane.f32.xlu0 %v1119
      %v1121 = vpop.xlane.xlu0 %1120
      %v1122 = vsub.f32 %v1114, %v1121
      %v1123 = vmul.f32 %v1122, 1.442695
      %v1124 = vpow.pop %v1123
      %v1125 = vsel %vm637, %v1124, 0.0
      %1126 = vadd.xlane.f32.xlu0 %v1125
      %v1127 = vpop.xlane.xlu0 %1126
      %v1128 = vrcp.pop %v1127
      %v1129 = vmul.f32 %v1124, %v1128
      %v1130 = vpack.c.bf16 %v1129, %v1129
      %1131 = vrot.lane.b32.xlu0 %v586, 104
      %v1132 = vpop.permute.xlu0 %1131
      %v1134 = vsel %vm650, %v1130, 0
      %v1137 = vand.u32 %v1132, %v657
      %1139 = vmatprep.subr.bf16.mxu0 0
      %1140 = vmatpush1.bf16.msra.mxu0 %v1137
      %1141 = vmatprep.subr.bf16.mxu0 0
      %1142 = vmatpush1.bf16.msra.mxu0 0
      %1143 = vmatprep.subr.bf16.mxu0 0
      %1144 = vmatpush1.bf16.msra.mxu0 0
      %1145 = vmatprep.subr.bf16.mxu0 0
      %1146 = vmatpush1.bf16.msra.mxu0 0
      %1147 = vmatprep.subr.bf16.mxu0 0
      %1148 = vmatpush1.bf16.msra.mxu0 0
      %1149 = vmatprep.subr.bf16.mxu0 0
      %1150 = vmatpush1.bf16.msra.mxu0 0
      %1151 = vmatprep.subr.bf16.mxu0 0
      %1152 = vmatpush1.bf16.msra.mxu0 0
      %1153 = vmatprep.subr.bf16.mxu0 0
      %1154 = vmatpush1.bf16.msra.mxu0 0
      %1155 = vmatprep.subr.bf16.mxu0 0
      %1156 = vmatpush1.bf16.msra.mxu0 0
      %1157 = vmatprep.subr.bf16.mxu0 0
      %1158 = vmatpush1.bf16.msra.mxu0 0
      %1159 = vmatprep.subr.bf16.mxu0 0
      %1160 = vmatpush1.bf16.msra.mxu0 0
      %1161 = vmatprep.subr.bf16.mxu0 0
      %1162 = vmatpush1.bf16.msra.mxu0 0
      %1163 = vmatprep.subr.bf16.mxu0 0
      %1164 = vmatpush1.bf16.msra.mxu0 0
      %1165 = vmatprep.subr.bf16.mxu0 0
      %1166 = vmatpush1.bf16.msra.mxu0 0
      %1167 = vmatprep.subr.bf16.mxu0 0
      %1168 = vmatpush1.bf16.msra.mxu0 0
      %1169 = vmatprep.subr.bf16.mxu0 0
      %1170 = vmatpush1.bf16.msra.mxu0 0
      %1171 = vmatprep.mubr.bf16.mxu0 0
      %1172 = vmatmul.mubr.bf16.gmra.mrb[0].mxu0 %v1134
      %v1173 = vpop.f32.mrb[0].mxu0
      %v1174 = vadd.f32 0.0, %v1173
      %v1175 = vpop.f32.mrb[0].mxu0
      %v1176 = vpop.f32.mrb[0].mxu0
      %v1177 = vpop.f32.mrb[0].mxu0
      %1178 = vdwg.mxu0
      %v1179 = vpack.c.bf16 %v1174, %v1174
      %v1180 = vpack.c.bf16 %v578, %v578
      %v1182 = vsel %vm590, %v1179, 0
      %v1185 = vsel %vm820, %v1180, 0
      %1187 = vmatprep.subr.bf16.mxu0 0
      %1188 = vmatpush1.bf16.msra.mxu0 %v1185
      %1189 = vmatprep.subr.bf16.mxu0 0
      %1190 = vmatpush1.bf16.msra.mxu0 0
      %1191 = vmatprep.subr.bf16.mxu0 0
      %1192 = vmatpush1.bf16.msra.mxu0 0
      %1193 = vmatprep.subr.bf16.mxu0 0
      %1194 = vmatpush1.bf16.msra.mxu0 0
      %1195 = vmatprep.subr.bf16.mxu0 0
      %1196 = vmatpush1.bf16.msra.mxu0 0
      %1197 = vmatprep.subr.bf16.mxu0 0
      %1198 = vmatpush1.bf16.msra.mxu0 0
      %1199 = vmatprep.subr.bf16.mxu0 0
      %1200 = vmatpush1.bf16.msra.mxu0 0
      %1201 = vmatprep.subr.bf16.mxu0 0
      %1202 = vmatpush1.bf16.msra.mxu0 0
      %1203 = vmatprep.subr.bf16.mxu0 0
      %1204 = vmatpush1.bf16.msra.mxu0 0
      %1205 = vmatprep.subr.bf16.mxu0 0
      %1206 = vmatpush1.bf16.msra.mxu0 0
      %1207 = vmatprep.subr.bf16.mxu0 0
      %1208 = vmatpush1.bf16.msra.mxu0 0
      %1209 = vmatprep.subr.bf16.mxu0 0
      %1210 = vmatpush1.bf16.msra.mxu0 0
      %1211 = vmatprep.subr.bf16.mxu0 0
      %1212 = vmatpush1.bf16.msra.mxu0 0
      %1213 = vmatprep.subr.bf16.mxu0 0
      %1214 = vmatpush1.bf16.msra.mxu0 0
      %1215 = vmatprep.subr.bf16.mxu0 0
      %1216 = vmatpush1.bf16.msra.mxu0 0
      %1217 = vmatprep.subr.bf16.mxu0 0
      %1218 = vmatpush1.bf16.msra.mxu0 0
      %1219 = vmatprep.mubr.bf16.mxu0 0
      %1220 = vmatmul.mubr.bf16.gmra.mrb[0].mxu0 %v1182
      %v1221 = vpop.f32.mrb[0].mxu0
      %v1222 = vadd.f32 0.0, %v1221
      %v1223 = vpop.f32.mrb[0].mxu0
      %v1224 = vpop.f32.mrb[0].mxu0
      %v1225 = vpop.f32.mrb[0].mxu0
      %1226 = vdwg.mxu0
      %v1227 = vadd.f32 %v1068, %v1222
      %1228 = vrot.lane.b32.xlu0 %v584, 96
      %v1229 = vpop.permute.xlu0 %1228
      %1230 = vrot.lane.b32.xlu0 %v585, 32
      %v1231 = vpop.permute.xlu0 %1230
      %v1233 = vsel %vm590, %v1229, 0
      %v1236 = vsel %vm590, %v1231, 0
      %1238 = vmatprep.subr.bf16.mxu0 0
      %1239 = vmatpush1.bf16.xpose.msra.mxu0 %v1236
      %1240 = vmatprep.subr.bf16.mxu0 0
      %1241 = vmatpush1.bf16.xpose.msra.mxu0 0
      %1242 = vmatprep.subr.bf16.mxu0 0
      %1243 = vmatpush1.bf16.xpose.msra.mxu0 0
      %1244 = vmatprep.subr.bf16.mxu0 0
      %1245 = vmatpush1.bf16.xpose.msra.mxu0 0
      %1246 = vmatprep.subr.bf16.mxu0 0
      %1247 = vmatpush1.bf16.xpose.msra.mxu0 0
      %1248 = vmatprep.subr.bf16.mxu0 0
      %1249 = vmatpush1.bf16.xpose.msra.mxu0 0
      %1250 = vmatprep.subr.bf16.mxu0 0
      %1251 = vmatpush1.bf16.xpose.msra.mxu0 0
      %1252 = vmatprep.subr.bf16.mxu0 0
      %1253 = vmatpush1.bf16.xpose.msra.mxu0 0
      %1254 = vmatprep.subr.bf16.mxu0 0
      %1255 = vmatpush1.bf16.xpose.msra.mxu0 0
      %1256 = vmatprep.subr.bf16.mxu0 0
      %1257 = vmatpush1.bf16.xpose.msra.mxu0 0
      %1258 = vmatprep.subr.bf16.mxu0 0
      %1259 = vmatpush1.bf16.xpose.msra.mxu0 0
      %1260 = vmatprep.subr.bf16.mxu0 0
      %1261 = vmatpush1.bf16.xpose.msra.mxu0 0
      %1262 = vmatprep.subr.bf16.mxu0 0
      %1263 = vmatpush1.bf16.xpose.msra.mxu0 0
      %1264 = vmatprep.subr.bf16.mxu0 0
      %1265 = vmatpush1.bf16.xpose.msra.mxu0 0
      %1266 = vmatprep.subr.bf16.mxu0 0
      %1267 = vmatpush1.bf16.xpose.msra.mxu0 0
      %1268 = vmatprep.subr.bf16.mxu0 0
      %1269 = vmatpush1.bf16.xpose.msra.mxu0 0
      %1270 = vmatprep.mubr.bf16.mxu0 0
      %1271 = vmatmul.mubr.bf16.gmra.mrb[0].mxu0 %v1233
      %v1272 = vpop.f32.mrb[0].mxu0
      %v1273 = vadd.f32 0.0, %v1272
      %v1274 = vpop.f32.mrb[0].mxu0
      %v1275 = vpop.f32.mrb[0].mxu0
      %v1276 = vpop.f32.mrb[0].mxu0
      %1277 = vdwg.mxu0
      %v1278 = vsel %vm637, %v1273, -inf
      %1279 = vmax.xlane.f32.xlu0 %v1278
      %v1280 = vpop.xlane.xlu0 %1279
      %v1281 = vsub.f32 %v1273, %v1280
      %v1282 = vmul.f32 %v1281, 1.442695
      %v1283 = vpow.pop %v1282
      %v1284 = vsel %vm637, %v1283, 0.0
      %1285 = vadd.xlane.f32.xlu0 %v1284
      %v1286 = vpop.xlane.xlu0 %1285
      %v1287 = vrcp.pop %v1286
      %v1288 = vmul.f32 %v1283, %v1287
      %v1289 = vpack.c.bf16 %v1288, %v1288
      %1290 = vrot.lane.b32.xlu0 %v586, 96
      %v1291 = vpop.permute.xlu0 %1290
      %v1293 = vsel %vm650, %v1289, 0
      %v1296 = vand.u32 %v1291, %v657
      %1298 = vmatprep.subr.bf16.mxu0 0
      %1299 = vmatpush1.bf16.msra.mxu0 %v1296
      %1300 = vmatprep.subr.bf16.mxu0 0
      %1301 = vmatpush1.bf16.msra.mxu0 0
      %1302 = vmatprep.subr.bf16.mxu0 0
      %1303 = vmatpush1.bf16.msra.mxu0 0
      %1304 = vmatprep.subr.bf16.mxu0 0
      %1305 = vmatpush1.bf16.msra.mxu0 0
      %1306 = vmatprep.subr.bf16.mxu0 0
      %1307 = vmatpush1.bf16.msra.mxu0 0
      %1308 = vmatprep.subr.bf16.mxu0 0
      %1309 = vmatpush1.bf16.msra.mxu0 0
      %1310 = vmatprep.subr.bf16.mxu0 0
      %1311 = vmatpush1.bf16.msra.mxu0 0
      %1312 = vmatprep.subr.bf16.mxu0 0
      %1313 = vmatpush1.bf16.msra.mxu0 0
      %1314 = vmatprep.subr.bf16.mxu0 0
      %1315 = vmatpush1.bf16.msra.mxu0 0
      %1316 = vmatprep.subr.bf16.mxu0 0
      %1317 = vmatpush1.bf16.msra.mxu0 0
      %1318 = vmatprep.subr.bf16.mxu0 0
      %1319 = vmatpush1.bf16.msra.mxu0 0
      %1320 = vmatprep.subr.bf16.mxu0 0
      %1321 = vmatpush1.bf16.msra.mxu0 0
      %1322 = vmatprep.subr.bf16.mxu0 0
      %1323 = vmatpush1.bf16.msra.mxu0 0
      %1324 = vmatprep.subr.bf16.mxu0 0
      %1325 = vmatpush1.bf16.msra.mxu0 0
      %1326 = vmatprep.subr.bf16.mxu0 0
      %1327 = vmatpush1.bf16.msra.mxu0 0
      %1328 = vmatprep.subr.bf16.mxu0 0
      %1329 = vmatpush1.bf16.msra.mxu0 0
      %1330 = vmatprep.mubr.bf16.mxu0 0
      %1331 = vmatmul.mubr.bf16.gmra.mrb[0].mxu0 %v1293
      %v1332 = vpop.f32.mrb[0].mxu0
      %v1333 = vadd.f32 0.0, %v1332
      %v1334 = vpop.f32.mrb[0].mxu0
      %v1335 = vpop.f32.mrb[0].mxu0
      %v1336 = vpop.f32.mrb[0].mxu0
      %1337 = vdwg.mxu0
      %v1338 = vpack.c.bf16 %v1333, %v1333
      %v1339 = vpack.c.bf16 %v579, %v579
      %v1341 = vsel %vm590, %v1338, 0
      %v1344 = vsel %vm820, %v1339, 0
      %1346 = vmatprep.subr.bf16.mxu0 0
      %1347 = vmatpush1.bf16.msra.mxu0 %v1344
      %1348 = vmatprep.subr.bf16.mxu0 0
      %1349 = vmatpush1.bf16.msra.mxu0 0
      %1350 = vmatprep.subr.bf16.mxu0 0
      %1351 = vmatpush1.bf16.msra.mxu0 0
      %1352 = vmatprep.subr.bf16.mxu0 0
      %1353 = vmatpush1.bf16.msra.mxu0 0
      %1354 = vmatprep.subr.bf16.mxu0 0
      %1355 = vmatpush1.bf16.msra.mxu0 0
      %1356 = vmatprep.subr.bf16.mxu0 0
      %1357 = vmatpush1.bf16.msra.mxu0 0
      %1358 = vmatprep.subr.bf16.mxu0 0
      %1359 = vmatpush1.bf16.msra.mxu0 0
      %1360 = vmatprep.subr.bf16.mxu0 0
      %1361 = vmatpush1.bf16.msra.mxu0 0
      %1362 = vmatprep.subr.bf16.mxu0 0
      %1363 = vmatpush1.bf16.msra.mxu0 0
      %1364 = vmatprep.subr.bf16.mxu0 0
      %1365 = vmatpush1.bf16.msra.mxu0 0
      %1366 = vmatprep.subr.bf16.mxu0 0
      %1367 = vmatpush1.bf16.msra.mxu0 0
      %1368 = vmatprep.subr.bf16.mxu0 0
      %1369 = vmatpush1.bf16.msra.mxu0 0
      %1370 = vmatprep.subr.bf16.mxu0 0
      %1371 = vmatpush1.bf16.msra.mxu0 0
      %1372 = vmatprep.subr.bf16.mxu0 0
      %1373 = vmatpush1.bf16.msra.mxu0 0
      %1374 = vmatprep.subr.bf16.mxu0 0
      %1375 = vmatpush1.bf16.msra.mxu0 0
      %1376 = vmatprep.subr.bf16.mxu0 0
      %1377 = vmatpush1.bf16.msra.mxu0 0
      %1378 = vmatprep.mubr.bf16.mxu0 0
      %1379 = vmatmul.mubr.bf16.gmra.mrb[0].mxu0 %v1341
      %v1380 = vpop.f32.mrb[0].mxu0
      %v1381 = vadd.f32 0.0, %v1380
      %v1382 = vpop.f32.mrb[0].mxu0
      %v1383 = vpop.f32.mrb[0].mxu0
      %v1384 = vpop.f32.mrb[0].mxu0
      %1385 = vdwg.mxu0
      %v1386 = vadd.f32 %v1227, %v1381
      %1387 = vrot.lane.b32.xlu0 %v584, 88
      %v1388 = vpop.permute.xlu0 %1387
      %1389 = vrot.lane.b32.xlu0 %v585, 24
      %v1390 = vpop.permute.xlu0 %1389
      %v1392 = vsel %vm590, %v1388, 0
      %v1395 = vsel %vm590, %v1390, 0
      %1397 = vmatprep.subr.bf16.mxu0 0
      %1398 = vmatpush1.bf16.xpose.msra.mxu0 %v1395
      %1399 = vmatprep.subr.bf16.mxu0 0
      %1400 = vmatpush1.bf16.xpose.msra.mxu0 0
      %1401 = vmatprep.subr.bf16.mxu0 0
      %1402 = vmatpush1.bf16.xpose.msra.mxu0 0
      %1403 = vmatprep.subr.bf16.mxu0 0
      %1404 = vmatpush1.bf16.xpose.msra.mxu0 0
      %1405 = vmatprep.subr.bf16.mxu0 0
      %1406 = vmatpush1.bf16.xpose.msra.mxu0 0
      %1407 = vmatprep.subr.bf16.mxu0 0
      %1408 = vmatpush1.bf16.xpose.msra.mxu0 0
      %1409 = vmatprep.subr.bf16.mxu0 0
      %1410 = vmatpush1.bf16.xpose.msra.mxu0 0
      %1411 = vmatprep.subr.bf16.mxu0 0
      %1412 = vmatpush1.bf16.xpose.msra.mxu0 0
      %1413 = vmatprep.subr.bf16.mxu0 0
      %1414 = vmatpush1.bf16.xpose.msra.mxu0 0
      %1415 = vmatprep.subr.bf16.mxu0 0
      %1416 = vmatpush1.bf16.xpose.msra.mxu0 0
      %1417 = vmatprep.subr.bf16.mxu0 0
      %1418 = vmatpush1.bf16.xpose.msra.mxu0 0
      %1419 = vmatprep.subr.bf16.mxu0 0
      %1420 = vmatpush1.bf16.xpose.msra.mxu0 0
      %1421 = vmatprep.subr.bf16.mxu0 0
      %1422 = vmatpush1.bf16.xpose.msra.mxu0 0
      %1423 = vmatprep.subr.bf16.mxu0 0
      %1424 = vmatpush1.bf16.xpose.msra.mxu0 0
      %1425 = vmatprep.subr.bf16.mxu0 0
      %1426 = vmatpush1.bf16.xpose.msra.mxu0 0
      %1427 = vmatprep.subr.bf16.mxu0 0
      %1428 = vmatpush1.bf16.xpose.msra.mxu0 0
      %1429 = vmatprep.mubr.bf16.mxu0 0
      %1430 = vmatmul.mubr.bf16.gmra.mrb[0].mxu0 %v1392
      %v1431 = vpop.f32.mrb[0].mxu0
      %v1432 = vadd.f32 0.0, %v1431
      %v1433 = vpop.f32.mrb[0].mxu0
      %v1434 = vpop.f32.mrb[0].mxu0
      %v1435 = vpop.f32.mrb[0].mxu0
      %1436 = vdwg.mxu0
      %v1437 = vsel %vm637, %v1432, -inf
      %1438 = vmax.xlane.f32.xlu0 %v1437
      %v1439 = vpop.xlane.xlu0 %1438
      %v1440 = vsub.f32 %v1432, %v1439
      %v1441 = vmul.f32 %v1440, 1.442695
      %v1442 = vpow.pop %v1441
      %v1443 = vsel %vm637, %v1442, 0.0
      %1444 = vadd.xlane.f32.xlu0 %v1443
      %v1445 = vpop.xlane.xlu0 %1444
      %v1446 = vrcp.pop %v1445
      %v1447 = vmul.f32 %v1442, %v1446
      %v1448 = vpack.c.bf16 %v1447, %v1447
      %1449 = vrot.lane.b32.xlu0 %v586, 88
      %v1450 = vpop.permute.xlu0 %1449
      %v1452 = vsel %vm650, %v1448, 0
      %v1455 = vand.u32 %v1450, %v657
      %1457 = vmatprep.subr.bf16.mxu0 0
      %1458 = vmatpush1.bf16.msra.mxu0 %v1455
      %1459 = vmatprep.subr.bf16.mxu0 0
      %1460 = vmatpush1.bf16.msra.mxu0 0
      %1461 = vmatprep.subr.bf16.mxu0 0
      %1462 = vmatpush1.bf16.msra.mxu0 0
      %1463 = vmatprep.subr.bf16.mxu0 0
      %1464 = vmatpush1.bf16.msra.mxu0 0
      %1465 = vmatprep.subr.bf16.mxu0 0
      %1466 = vmatpush1.bf16.msra.mxu0 0
      %1467 = vmatprep.subr.bf16.mxu0 0
      %1468 = vmatpush1.bf16.msra.mxu0 0
      %1469 = vmatprep.subr.bf16.mxu0 0
      %1470 = vmatpush1.bf16.msra.mxu0 0
      %1471 = vmatprep.subr.bf16.mxu0 0
      %1472 = vmatpush1.bf16.msra.mxu0 0
      %1473 = vmatprep.subr.bf16.mxu0 0
      %1474 = vmatpush1.bf16.msra.mxu0 0
      %1475 = vmatprep.subr.bf16.mxu0 0
      %1476 = vmatpush1.bf16.msra.mxu0 0
      %1477 = vmatprep.subr.bf16.mxu0 0
      %1478 = vmatpush1.bf16.msra.mxu0 0
      %1479 = vmatprep.subr.bf16.mxu0 0
      %1480 = vmatpush1.bf16.msra.mxu0 0
      %1481 = vmatprep.subr.bf16.mxu0 0
      %1482 = vmatpush1.bf16.msra.mxu0 0
      %1483 = vmatprep.subr.bf16.mxu0 0
      %1484 = vmatpush1.bf16.msra.mxu0 0
      %1485 = vmatprep.subr.bf16.mxu0 0
      %1486 = vmatpush1.bf16.msra.mxu0 0
      %1487 = vmatprep.subr.bf16.mxu0 0
      %1488 = vmatpush1.bf16.msra.mxu0 0
      %1489 = vmatprep.mubr.bf16.mxu0 0
      %1490 = vmatmul.mubr.bf16.gmra.mrb[0].mxu0 %v1452
      %v1491 = vpop.f32.mrb[0].mxu0
      %v1492 = vadd.f32 0.0, %v1491
      %v1493 = vpop.f32.mrb[0].mxu0
      %v1494 = vpop.f32.mrb[0].mxu0
      %v1495 = vpop.f32.mrb[0].mxu0
      %1496 = vdwg.mxu0
      %v1497 = vpack.c.bf16 %v1492, %v1492
      %v1498 = vpack.c.bf16 %v580, %v580
      %v1500 = vsel %vm590, %v1497, 0
      %v1503 = vsel %vm820, %v1498, 0
      %1505 = vmatprep.subr.bf16.mxu0 0
      %1506 = vmatpush1.bf16.msra.mxu0 %v1503
      %1507 = vmatprep.subr.bf16.mxu0 0
      %1508 = vmatpush1.bf16.msra.mxu0 0
      %1509 = vmatprep.subr.bf16.mxu0 0
      %1510 = vmatpush1.bf16.msra.mxu0 0
      %1511 = vmatprep.subr.bf16.mxu0 0
      %1512 = vmatpush1.bf16.msra.mxu0 0
      %1513 = vmatprep.subr.bf16.mxu0 0
      %1514 = vmatpush1.bf16.msra.mxu0 0
      %1515 = vmatprep.subr.bf16.mxu0 0
      %1516 = vmatpush1.bf16.msra.mxu0 0
      %1517 = vmatprep.subr.bf16.mxu0 0
      %1518 = vmatpush1.bf16.msra.mxu0 0
      %1519 = vmatprep.subr.bf16.mxu0 0
      %1520 = vmatpush1.bf16.msra.mxu0 0
      %1521 = vmatprep.subr.bf16.mxu0 0
      %1522 = vmatpush1.bf16.msra.mxu0 0
      %1523 = vmatprep.subr.bf16.mxu0 0
      %1524 = vmatpush1.bf16.msra.mxu0 0
      %1525 = vmatprep.subr.bf16.mxu0 0
      %1526 = vmatpush1.bf16.msra.mxu0 0
      %1527 = vmatprep.subr.bf16.mxu0 0
      %1528 = vmatpush1.bf16.msra.mxu0 0
      %1529 = vmatprep.subr.bf16.mxu0 0
      %1530 = vmatpush1.bf16.msra.mxu0 0
      %1531 = vmatprep.subr.bf16.mxu0 0
      %1532 = vmatpush1.bf16.msra.mxu0 0
      %1533 = vmatprep.subr.bf16.mxu0 0
      %1534 = vmatpush1.bf16.msra.mxu0 0
      %1535 = vmatprep.subr.bf16.mxu0 0
      %1536 = vmatpush1.bf16.msra.mxu0 0
      %1537 = vmatprep.mubr.bf16.mxu0 0
      %1538 = vmatmul.mubr.bf16.gmra.mrb[0].mxu0 %v1500
      %v1539 = vpop.f32.mrb[0].mxu0
      %v1540 = vadd.f32 0.0, %v1539
      %v1541 = vpop.f32.mrb[0].mxu0
      %v1542 = vpop.f32.mrb[0].mxu0
      %v1543 = vpop.f32.mrb[0].mxu0
      %1544 = vdwg.mxu0
      %v1545 = vadd.f32 %v1386, %v1540
      %1546 = vrot.lane.b32.xlu0 %v584, 80
      %v1547 = vpop.permute.xlu0 %1546
      %1548 = vrot.lane.b32.xlu0 %v585, 16
      %v1549 = vpop.permute.xlu0 %1548
      %v1551 = vsel %vm590, %v1547, 0
      %v1554 = vsel %vm590, %v1549, 0
      %1556 = vmatprep.subr.bf16.mxu0 0
      %1557 = vmatpush1.bf16.xpose.msra.mxu0 %v1554
      %1558 = vmatprep.subr.bf16.mxu0 0
      %1559 = vmatpush1.bf16.xpose.msra.mxu0 0
      %1560 = vmatprep.subr.bf16.mxu0 0
      %1561 = vmatpush1.bf16.xpose.msra.mxu0 0
      %1562 = vmatprep.subr.bf16.mxu0 0
      %1563 = vmatpush1.bf16.xpose.msra.mxu0 0
      %1564 = vmatprep.subr.bf16.mxu0 0
      %1565 = vmatpush1.bf16.xpose.msra.mxu0 0
      %1566 = vmatprep.subr.bf16.mxu0 0
      %1567 = vmatpush1.bf16.xpose.msra.mxu0 0
      %1568 = vmatprep.subr.bf16.mxu0 0
      %1569 = vmatpush1.bf16.xpose.msra.mxu0 0
      %1570 = vmatprep.subr.bf16.mxu0 0
      %1571 = vmatpush1.bf16.xpose.msra.mxu0 0
      %1572 = vmatprep.subr.bf16.mxu0 0
      %1573 = vmatpush1.bf16.xpose.msra.mxu0 0
      %1574 = vmatprep.subr.bf16.mxu0 0
      %1575 = vmatpush1.bf16.xpose.msra.mxu0 0
      %1576 = vmatprep.subr.bf16.mxu0 0
      %1577 = vmatpush1.bf16.xpose.msra.mxu0 0
      %1578 = vmatprep.subr.bf16.mxu0 0
      %1579 = vmatpush1.bf16.xpose.msra.mxu0 0
      %1580 = vmatprep.subr.bf16.mxu0 0
      %1581 = vmatpush1.bf16.xpose.msra.mxu0 0
      %1582 = vmatprep.subr.bf16.mxu0 0
      %1583 = vmatpush1.bf16.xpose.msra.mxu0 0
      %1584 = vmatprep.subr.bf16.mxu0 0
      %1585 = vmatpush1.bf16.xpose.msra.mxu0 0
      %1586 = vmatprep.subr.bf16.mxu0 0
      %1587 = vmatpush1.bf16.xpose.msra.mxu0 0
      %1588 = vmatprep.mubr.bf16.mxu0 0
      %1589 = vmatmul.mubr.bf16.gmra.mrb[0].mxu0 %v1551
      %v1590 = vpop.f32.mrb[0].mxu0
      %v1591 = vadd.f32 0.0, %v1590
      %v1592 = vpop.f32.mrb[0].mxu0
      %v1593 = vpop.f32.mrb[0].mxu0
      %v1594 = vpop.f32.mrb[0].mxu0
      %1595 = vdwg.mxu0
      %v1596 = vsel %vm637, %v1591, -inf
      %1597 = vmax.xlane.f32.xlu0 %v1596
      %v1598 = vpop.xlane.xlu0 %1597
      %v1599 = vsub.f32 %v1591, %v1598
      %v1600 = vmul.f32 %v1599, 1.442695
      %v1601 = vpow.pop %v1600
      %v1602 = vsel %vm637, %v1601, 0.0
      %1603 = vadd.xlane.f32.xlu0 %v1602
      %v1604 = vpop.xlane.xlu0 %1603
      %v1605 = vrcp.pop %v1604
      %v1606 = vmul.f32 %v1601, %v1605
      %v1607 = vpack.c.bf16 %v1606, %v1606
      %1608 = vrot.lane.b32.xlu0 %v586, 80
      %v1609 = vpop.permute.xlu0 %1608
      %v1611 = vsel %vm650, %v1607, 0
      %v1614 = vand.u32 %v1609, %v657
      %1616 = vmatprep.subr.bf16.mxu0 0
      %1617 = vmatpush1.bf16.msra.mxu0 %v1614
      %1618 = vmatprep.subr.bf16.mxu0 0
      %1619 = vmatpush1.bf16.msra.mxu0 0
      %1620 = vmatprep.subr.bf16.mxu0 0
      %1621 = vmatpush1.bf16.msra.mxu0 0
      %1622 = vmatprep.subr.bf16.mxu0 0
      %1623 = vmatpush1.bf16.msra.mxu0 0
      %1624 = vmatprep.subr.bf16.mxu0 0
      %1625 = vmatpush1.bf16.msra.mxu0 0
      %1626 = vmatprep.subr.bf16.mxu0 0
      %1627 = vmatpush1.bf16.msra.mxu0 0
      %1628 = vmatprep.subr.bf16.mxu0 0
      %1629 = vmatpush1.bf16.msra.mxu0 0
      %1630 = vmatprep.subr.bf16.mxu0 0
      %1631 = vmatpush1.bf16.msra.mxu0 0
      %1632 = vmatprep.subr.bf16.mxu0 0
      %1633 = vmatpush1.bf16.msra.mxu0 0
      %1634 = vmatprep.subr.bf16.mxu0 0
      %1635 = vmatpush1.bf16.msra.mxu0 0
      %1636 = vmatprep.subr.bf16.mxu0 0
      %1637 = vmatpush1.bf16.msra.mxu0 0
      %1638 = vmatprep.subr.bf16.mxu0 0
      %1639 = vmatpush1.bf16.msra.mxu0 0
      %1640 = vmatprep.subr.bf16.mxu0 0
      %1641 = vmatpush1.bf16.msra.mxu0 0
      %1642 = vmatprep.subr.bf16.mxu0 0
      %1643 = vmatpush1.bf16.msra.mxu0 0
      %1644 = vmatprep.subr.bf16.mxu0 0
      %1645 = vmatpush1.bf16.msra.mxu0 0
      %1646 = vmatprep.subr.bf16.mxu0 0
      %1647 = vmatpush1.bf16.msra.mxu0 0
      %1648 = vmatprep.mubr.bf16.mxu0 0
      %1649 = vmatmul.mubr.bf16.gmra.mrb[0].mxu0 %v1611
      %v1650 = vpop.f32.mrb[0].mxu0
      %v1651 = vadd.f32 0.0, %v1650
      %v1652 = vpop.f32.mrb[0].mxu0
      %v1653 = vpop.f32.mrb[0].mxu0
      %v1654 = vpop.f32.mrb[0].mxu0
      %1655 = vdwg.mxu0
      %v1656 = vpack.c.bf16 %v1651, %v1651
      %v1657 = vpack.c.bf16 %v581, %v581
      %v1659 = vsel %vm590, %v1656, 0
      %v1662 = vsel %vm820, %v1657, 0
      %1664 = vmatprep.subr.bf16.mxu0 0
      %1665 = vmatpush1.bf16.msra.mxu0 %v1662
      %1666 = vmatprep.subr.bf16.mxu0 0
      %1667 = vmatpush1.bf16.msra.mxu0 0
      %1668 = vmatprep.subr.bf16.mxu0 0
      %1669 = vmatpush1.bf16.msra.mxu0 0
      %1670 = vmatprep.subr.bf16.mxu0 0
      %1671 = vmatpush1.bf16.msra.mxu0 0
      %1672 = vmatprep.subr.bf16.mxu0 0
      %1673 = vmatpush1.bf16.msra.mxu0 0
      %1674 = vmatprep.subr.bf16.mxu0 0
      %1675 = vmatpush1.bf16.msra.mxu0 0
      %1676 = vmatprep.subr.bf16.mxu0 0
      %1677 = vmatpush1.bf16.msra.mxu0 0
      %1678 = vmatprep.subr.bf16.mxu0 0
      %1679 = vmatpush1.bf16.msra.mxu0 0
      %1680 = vmatprep.subr.bf16.mxu0 0
      %1681 = vmatpush1.bf16.msra.mxu0 0
      %1682 = vmatprep.subr.bf16.mxu0 0
      %1683 = vmatpush1.bf16.msra.mxu0 0
      %1684 = vmatprep.subr.bf16.mxu0 0
      %1685 = vmatpush1.bf16.msra.mxu0 0
      %1686 = vmatprep.subr.bf16.mxu0 0
      %1687 = vmatpush1.bf16.msra.mxu0 0
      %1688 = vmatprep.subr.bf16.mxu0 0
      %1689 = vmatpush1.bf16.msra.mxu0 0
      %1690 = vmatprep.subr.bf16.mxu0 0
      %1691 = vmatpush1.bf16.msra.mxu0 0
      %1692 = vmatprep.subr.bf16.mxu0 0
      %1693 = vmatpush1.bf16.msra.mxu0 0
      %1694 = vmatprep.subr.bf16.mxu0 0
      %1695 = vmatpush1.bf16.msra.mxu0 0
      %1696 = vmatprep.mubr.bf16.mxu0 0
      %1697 = vmatmul.mubr.bf16.gmra.mrb[0].mxu0 %v1659
      %v1698 = vpop.f32.mrb[0].mxu0
      %v1699 = vadd.f32 0.0, %v1698
      %v1700 = vpop.f32.mrb[0].mxu0
      %v1701 = vpop.f32.mrb[0].mxu0
      %v1702 = vpop.f32.mrb[0].mxu0
      %1703 = vdwg.mxu0
      %v1704 = vadd.f32 %v1545, %v1699
      %1705 = vrot.lane.b32.xlu0 %v584, 72
      %v1706 = vpop.permute.xlu0 %1705
      %1707 = vrot.lane.b32.xlu0 %v585, 8
      %v1708 = vpop.permute.xlu0 %1707
      %v1710 = vsel %vm590, %v1706, 0
      %v1713 = vsel %vm590, %v1708, 0
      %1715 = vmatprep.subr.bf16.mxu0 0
      %1716 = vmatpush1.bf16.xpose.msra.mxu0 %v1713
      %1717 = vmatprep.subr.bf16.mxu0 0
      %1718 = vmatpush1.bf16.xpose.msra.mxu0 0
      %1719 = vmatprep.subr.bf16.mxu0 0
      %1720 = vmatpush1.bf16.xpose.msra.mxu0 0
      %1721 = vmatprep.subr.bf16.mxu0 0
      %1722 = vmatpush1.bf16.xpose.msra.mxu0 0
      %1723 = vmatprep.subr.bf16.mxu0 0
      %1724 = vmatpush1.bf16.xpose.msra.mxu0 0
      %1725 = vmatprep.subr.bf16.mxu0 0
      %1726 = vmatpush1.bf16.xpose.msra.mxu0 0
      %1727 = vmatprep.subr.bf16.mxu0 0
      %1728 = vmatpush1.bf16.xpose.msra.mxu0 0
      %1729 = vmatprep.subr.bf16.mxu0 0
      %1730 = vmatpush1.bf16.xpose.msra.mxu0 0
      %1731 = vmatprep.subr.bf16.mxu0 0
      %1732 = vmatpush1.bf16.xpose.msra.mxu0 0
      %1733 = vmatprep.subr.bf16.mxu0 0
      %1734 = vmatpush1.bf16.xpose.msra.mxu0 0
      %1735 = vmatprep.subr.bf16.mxu0 0
      %1736 = vmatpush1.bf16.xpose.msra.mxu0 0
      %1737 = vmatprep.subr.bf16.mxu0 0
      %1738 = vmatpush1.bf16.xpose.msra.mxu0 0
      %1739 = vmatprep.subr.bf16.mxu0 0
      %1740 = vmatpush1.bf16.xpose.msra.mxu0 0
      %1741 = vmatprep.subr.bf16.mxu0 0
      %1742 = vmatpush1.bf16.xpose.msra.mxu0 0
      %1743 = vmatprep.subr.bf16.mxu0 0
      %1744 = vmatpush1.bf16.xpose.msra.mxu0 0
      %1745 = vmatprep.subr.bf16.mxu0 0
      %1746 = vmatpush1.bf16.xpose.msra.mxu0 0
      %1747 = vmatprep.mubr.bf16.mxu0 0
      %1748 = vmatmul.mubr.bf16.gmra.mrb[0].mxu0 %v1710
      %v1749 = vpop.f32.mrb[0].mxu0
      %v1750 = vadd.f32 0.0, %v1749
      %v1751 = vpop.f32.mrb[0].mxu0
      %v1752 = vpop.f32.mrb[0].mxu0
      %v1753 = vpop.f32.mrb[0].mxu0
      %1754 = vdwg.mxu0
      %v1755 = vsel %vm637, %v1750, -inf
      %1756 = vmax.xlane.f32.xlu0 %v1755
      %v1757 = vpop.xlane.xlu0 %1756
      %v1758 = vsub.f32 %v1750, %v1757
      %v1759 = vmul.f32 %v1758, 1.442695
      %v1760 = vpow.pop %v1759
      %v1761 = vsel %vm637, %v1760, 0.0
      %1762 = vadd.xlane.f32.xlu0 %v1761
      %v1763 = vpop.xlane.xlu0 %1762
      %v1764 = vrcp.pop %v1763
      %v1765 = vmul.f32 %v1760, %v1764
      %v1766 = vpack.c.bf16 %v1765, %v1765
      %1767 = vrot.lane.b32.xlu0 %v586, 72
      %v1768 = vpop.permute.xlu0 %1767
      %v1770 = vsel %vm650, %v1766, 0
      %v1773 = vand.u32 %v1768, %v657
      %1775 = vmatprep.subr.bf16.mxu0 0
      %1776 = vmatpush1.bf16.msra.mxu0 %v1773
      %1777 = vmatprep.subr.bf16.mxu0 0
      %1778 = vmatpush1.bf16.msra.mxu0 0
      %1779 = vmatprep.subr.bf16.mxu0 0
      %1780 = vmatpush1.bf16.msra.mxu0 0
      %1781 = vmatprep.subr.bf16.mxu0 0
      %1782 = vmatpush1.bf16.msra.mxu0 0
      %1783 = vmatprep.subr.bf16.mxu0 0
      %1784 = vmatpush1.bf16.msra.mxu0 0
      %1785 = vmatprep.subr.bf16.mxu0 0
      %1786 = vmatpush1.bf16.msra.mxu0 0
      %1787 = vmatprep.subr.bf16.mxu0 0
      %1788 = vmatpush1.bf16.msra.mxu0 0
      %1789 = vmatprep.subr.bf16.mxu0 0
      %1790 = vmatpush1.bf16.msra.mxu0 0
      %1791 = vmatprep.subr.bf16.mxu0 0
      %1792 = vmatpush1.bf16.msra.mxu0 0
      %1793 = vmatprep.subr.bf16.mxu0 0
      %1794 = vmatpush1.bf16.msra.mxu0 0
      %1795 = vmatprep.subr.bf16.mxu0 0
      %1796 = vmatpush1.bf16.msra.mxu0 0
      %1797 = vmatprep.subr.bf16.mxu0 0
      %1798 = vmatpush1.bf16.msra.mxu0 0
      %1799 = vmatprep.subr.bf16.mxu0 0
      %1800 = vmatpush1.bf16.msra.mxu0 0
      %1801 = vmatprep.subr.bf16.mxu0 0
      %1802 = vmatpush1.bf16.msra.mxu0 0
      %1803 = vmatprep.subr.bf16.mxu0 0
      %1804 = vmatpush1.bf16.msra.mxu0 0
      %1805 = vmatprep.subr.bf16.mxu0 0
      %1806 = vmatpush1.bf16.msra.mxu0 0
      %1807 = vmatprep.mubr.bf16.mxu0 0
      %1808 = vmatmul.mubr.bf16.gmra.mrb[0].mxu0 %v1770
      %v1809 = vpop.f32.mrb[0].mxu0
      %v1810 = vadd.f32 0.0, %v1809
      %v1811 = vpop.f32.mrb[0].mxu0
      %v1812 = vpop.f32.mrb[0].mxu0
      %v1813 = vpop.f32.mrb[0].mxu0
      %1814 = vdwg.mxu0
      %v1815 = vpack.c.bf16 %v1810, %v1810
      %v1816 = vpack.c.bf16 %v582, %v582
      %v1818 = vsel %vm590, %v1815, 0
      %v1821 = vsel %vm820, %v1816, 0
      %1823 = vmatprep.subr.bf16.mxu0 0
      %1824 = vmatpush1.bf16.msra.mxu0 %v1821
      %1825 = vmatprep.subr.bf16.mxu0 0
      %1826 = vmatpush1.bf16.msra.mxu0 0
      %1827 = vmatprep.subr.bf16.mxu0 0
      %1828 = vmatpush1.bf16.msra.mxu0 0
      %1829 = vmatprep.subr.bf16.mxu0 0
      %1830 = vmatpush1.bf16.msra.mxu0 0
      %1831 = vmatprep.subr.bf16.mxu0 0
      %1832 = vmatpush1.bf16.msra.mxu0 0
      %1833 = vmatprep.subr.bf16.mxu0 0
      %1834 = vmatpush1.bf16.msra.mxu0 0
      %1835 = vmatprep.subr.bf16.mxu0 0
      %1836 = vmatpush1.bf16.msra.mxu0 0
      %1837 = vmatprep.subr.bf16.mxu0 0
      %1838 = vmatpush1.bf16.msra.mxu0 0
      %1839 = vmatprep.subr.bf16.mxu0 0
      %1840 = vmatpush1.bf16.msra.mxu0 0
      %1841 = vmatprep.subr.bf16.mxu0 0
      %1842 = vmatpush1.bf16.msra.mxu0 0
      %1843 = vmatprep.subr.bf16.mxu0 0
      %1844 = vmatpush1.bf16.msra.mxu0 0
      %1845 = vmatprep.subr.bf16.mxu0 0
      %1846 = vmatpush1.bf16.msra.mxu0 0
      %1847 = vmatprep.subr.bf16.mxu0 0
      %1848 = vmatpush1.bf16.msra.mxu0 0
      %1849 = vmatprep.subr.bf16.mxu0 0
      %1850 = vmatpush1.bf16.msra.mxu0 0
      %1851 = vmatprep.subr.bf16.mxu0 0
      %1852 = vmatpush1.bf16.msra.mxu0 0
      %1853 = vmatprep.subr.bf16.mxu0 0
      %1854 = vmatpush1.bf16.msra.mxu0 0
      %1855 = vmatprep.mubr.bf16.mxu0 0
      %1856 = vmatmul.mubr.bf16.gmra.mrb[0].mxu0 %v1818
      %v1857 = vpop.f32.mrb[0].mxu0
      %v1858 = vadd.f32 0.0, %v1857
      %v1859 = vpop.f32.mrb[0].mxu0
      %v1860 = vpop.f32.mrb[0].mxu0
      %v1861 = vpop.f32.mrb[0].mxu0
      %1862 = vdwg.mxu0
      %v1863 = vadd.f32 %v1704, %v1858
      %v1864 = vadd.f32 %v437, %v1863
      %v1865 = vld [vmem:[%s6] sm:$0x1]
      %v1867 = vlaneseq
      %v1868 = vshrl.u32 %v1867, 7
      %v1869 = vsub.s32 0, %v1868
      %v1870 = vrot.slane %v1865, %v1869
      %v1872 = vadd.f32 %v1864, %v1870
      %v1873 = vld [vmem:[%s7] sm:$0x1]
      %v1874 = vld [vmem:[%s8] sm:$0x1]
      %v1875 = vsel %vm440, %v1872, 0.0
      %1876 = vadd.xlane.f32.xlu0 %v1875
      %v1877 = vpop.xlane.xlu0 %1876
      %v1878 = vmul.f32 %v1877, %v444
      %v1879 = vsub.f32 %v1872, %v1878
      %v1880 = vmul.f32 %v1879, %v1879
      %v1881 = vsel %vm440, %v1880, 0.0
      %1882 = vadd.xlane.f32.xlu0 %v1881
      %v1883 = vpop.xlane.xlu0 %1882
      %v1884 = vmul.f32 %v1883, %v444
      %v1885 = vadd.f32 %v1884, 1e-05
      %v1886 = vrsqrt.pop %v1885
      %v1887 = vmul.f32 %v1879, %v1886
      %v1889 = vlaneseq
      %v1890 = vshrl.u32 %v1889, 7
      %v1891 = vsub.s32 0, %v1890
      %v1892 = vrot.slane %v1873, %v1891
      %v1894 = vmul.f32 %v1887, %v1892
      %v1896 = vlaneseq
      %v1897 = vshrl.u32 %v1896, 7
      %v1898 = vsub.s32 0, %v1897
      %v1899 = vrot.slane %v1874, %v1898
      %v1901 = vadd.f32 %v1894, %v1899
      %v1902 = vld [vmem:[%s9] sm:$0xf]
      %v1903 = vld [vmem:[%s9 + $0x4] sm:$0xf]
      %v1904 = vld [vmem:[%s9 + $0x8] sm:$0xf]
      %v1905 = vld [vmem:[%s9 + $0xc] sm:$0xf]
      %v1906 = vld [vmem:[%s9 + $0x10] sm:$0xf]
      %v1907 = vld [vmem:[%s9 + $0x14] sm:$0xf]
      %v1908 = vld [vmem:[%s9 + $0x18] sm:$0xf]
      %v1909 = vld [vmem:[%s9 + $0x1c] sm:$0xf]
      %v1910 = vpack.c.bf16 %v1901, %v1901
      %v1911 = vld [vmem:[%s10] sm:$0x1]
      %v1913 = vlaneseq
      %v1914 = vshrl.u32 %v1913, 7
      %v1915 = vsub.s32 0, %v1914
      %v1916 = vrot.slane %v1911, %v1915
      %v1926 = vunpack.c.l.b16 %v1902
      %v1927 = vunpack.c.l.b16 %v1903
      %v1928 = vunpack.c.l.b16 %v1904
      %v1929 = vunpack.c.l.b16 %v1905
      %v1930 = vunpack.c.l.b16 %v1906
      %v1931 = vunpack.c.l.b16 %v1907
      %v1932 = vunpack.c.l.b16 %v1908
      %v1933 = vunpack.c.l.b16 %v1909
      %v1934 = vpack.c.b16 %v1927, %v1926
      %v1935 = vpack.c.b16 %v1929, %v1928
      %v1936 = vpack.c.b16 %v1931, %v1930
      %v1937 = vpack.c.b16 %v1933, %v1932
      %v1943 = vsel %vm530, %v1910, 0
      %1945 = vmatprep.subr.bf16.mxu0 0
      %1946 = vmatpush1.bf16.msra.mxu0 %v1934
      %1947 = vmatprep.subr.bf16.mxu0 0
      %1948 = vmatpush1.bf16.msra.mxu0 %v1935
      %1949 = vmatprep.subr.bf16.mxu0 0
      %1950 = vmatpush1.bf16.msra.mxu0 %v1936
      %1951 = vmatprep.subr.bf16.mxu0 0
      %1952 = vmatpush1.bf16.msra.mxu0 %v1937
      %1953 = vmatprep.subr.bf16.mxu0 0
      %1954 = vmatpush1.bf16.msra.mxu0 0
      %1955 = vmatprep.subr.bf16.mxu0 0
      %1956 = vmatpush1.bf16.msra.mxu0 0
      %1957 = vmatprep.subr.bf16.mxu0 0
      %1958 = vmatpush1.bf16.msra.mxu0 0
      %1959 = vmatprep.subr.bf16.mxu0 0
      %1960 = vmatpush1.bf16.msra.mxu0 0
      %1961 = vmatprep.subr.bf16.mxu0 0
      %1962 = vmatpush1.bf16.msra.mxu0 0
      %1963 = vmatprep.subr.bf16.mxu0 0
      %1964 = vmatpush1.bf16.msra.mxu0 0
      %1965 = vmatprep.subr.bf16.mxu0 0
      %1966 = vmatpush1.bf16.msra.mxu0 0
      %1967 = vmatprep.subr.bf16.mxu0 0
      %1968 = vmatpush1.bf16.msra.mxu0 0
      %1969 = vmatprep.subr.bf16.mxu0 0
      %1970 = vmatpush1.bf16.msra.mxu0 0
      %1971 = vmatprep.subr.bf16.mxu0 0
      %1972 = vmatpush1.bf16.msra.mxu0 0
      %1973 = vmatprep.subr.bf16.mxu0 0
      %1974 = vmatpush1.bf16.msra.mxu0 0
      %1975 = vmatprep.subr.bf16.mxu0 0
      %1976 = vmatpush1.bf16.msra.mxu0 0
      %1977 = vmatprep.mubr.bf16.mxu0 0
      %1978 = vmatmul.mubr.bf16.gmra.mrb[0].mxu0 %v1943
      %v1979 = vpop.f32.mrb[0].mxu0
      %v1980 = vadd.f32 %v1916, %v1979
      %v1981 = vpop.f32.mrb[0].mxu0
      %v1982 = vpop.f32.mrb[0].mxu0
      %v1983 = vpop.f32.mrb[0].mxu0
      %1984 = vdwg.mxu0
      %v1985 = vmul.f32 %v1980, 0.5
      %v1986 = vmul.f32 %v1980, 0.70710677
      %v1987 = verf.f32.pop %v1986
      %v1988 = vadd.f32 %v1987, 1.0
      %v1989 = vmul.f32 %v1985, %v1988
      %v1990 = vld [vmem:[%s11] sm:$0xf]
      %v1991 = vld [vmem:[%s11 + $0x4] sm:$0xf]
      %v1992 = vld [vmem:[%s11 + $0x8] sm:$0xf]
      %v1993 = vld [vmem:[%s11 + $0xc] sm:$0xf]
      %v1994 = vld [vmem:[%s11 + $0x10] sm:$0xf]
      %v1995 = vld [vmem:[%s11 + $0x14] sm:$0xf]
      %v1996 = vld [vmem:[%s11 + $0x18] sm:$0xf]
      %v1997 = vld [vmem:[%s11 + $0x1c] sm:$0xf]
      %v1998 = vld [vmem:[%s11 + $0x20] sm:$0xf]
      %v1999 = vld [vmem:[%s11 + $0x24] sm:$0xf]
      %v2000 = vld [vmem:[%s11 + $0x28] sm:$0xf]
      %v2001 = vld [vmem:[%s11 + $0x2c] sm:$0xf]
      %v2002 = vld [vmem:[%s11 + $0x30] sm:$0xf]
      %v2003 = vld [vmem:[%s11 + $0x34] sm:$0xf]
      %v2004 = vld [vmem:[%s11 + $0x38] sm:$0xf]
      %v2005 = vld [vmem:[%s11 + $0x3c] sm:$0xf]
      %v2006 = vpack.c.bf16 %v1989, %v1989
      %v2023 = vunpack.c.l.b16 %v1990
      %v2024 = vunpack.c.l.b16 %v1991
      %v2025 = vunpack.c.l.b16 %v1992
      %v2026 = vunpack.c.l.b16 %v1993
      %v2027 = vunpack.c.l.b16 %v1994
      %v2028 = vunpack.c.l.b16 %v1995
      %v2029 = vunpack.c.l.b16 %v1996
      %v2030 = vunpack.c.l.b16 %v1997
      %v2031 = vunpack.c.l.b16 %v1998
      %v2032 = vunpack.c.l.b16 %v1999
      %v2033 = vunpack.c.l.b16 %v2000
      %v2034 = vunpack.c.l.b16 %v2001
      %v2035 = vunpack.c.l.b16 %v2002
      %v2036 = vunpack.c.l.b16 %v2003
      %v2037 = vunpack.c.l.b16 %v2004
      %v2038 = vunpack.c.l.b16 %v2005
      %v2039 = vpack.c.b16 %v2024, %v2023
      %v2040 = vpack.c.b16 %v2026, %v2025
      %v2041 = vpack.c.b16 %v2028, %v2027
      %v2042 = vpack.c.b16 %v2030, %v2029
      %v2043 = vpack.c.b16 %v2032, %v2031
      %v2044 = vpack.c.b16 %v2034, %v2033
      %v2045 = vpack.c.b16 %v2036, %v2035
      %v2046 = vpack.c.b16 %v2038, %v2037
      %2055 = vmatprep.subr.bf16.mxu0 0
      %2056 = vmatpush1.bf16.msra.mxu0 %v2039
      %2057 = vmatprep.subr.bf16.mxu0 0
      %2058 = vmatpush1.bf16.msra.mxu0 %v2040
      %2059 = vmatprep.subr.bf16.mxu0 0
      %2060 = vmatpush1.bf16.msra.mxu0 %v2041
      %2061 = vmatprep.subr.bf16.mxu0 0
      %2062 = vmatpush1.bf16.msra.mxu0 %v2042
      %2063 = vmatprep.subr.bf16.mxu0 0
      %2064 = vmatpush1.bf16.msra.mxu0 %v2043
      %2065 = vmatprep.subr.bf16.mxu0 0
      %2066 = vmatpush1.bf16.msra.mxu0 %v2044
      %2067 = vmatprep.subr.bf16.mxu0 0
      %2068 = vmatpush1.bf16.msra.mxu0 %v2045
      %2069 = vmatprep.subr.bf16.mxu0 0
      %2070 = vmatpush1.bf16.msra.mxu0 %v2046
      %2071 = vmatprep.subr.bf16.mxu0 0
      %2072 = vmatpush1.bf16.msra.mxu0 0
      %2073 = vmatprep.subr.bf16.mxu0 0
      %2074 = vmatpush1.bf16.msra.mxu0 0
      %2075 = vmatprep.subr.bf16.mxu0 0
      %2076 = vmatpush1.bf16.msra.mxu0 0
      %2077 = vmatprep.subr.bf16.mxu0 0
      %2078 = vmatpush1.bf16.msra.mxu0 0
      %2079 = vmatprep.subr.bf16.mxu0 0
      %2080 = vmatpush1.bf16.msra.mxu0 0
      %2081 = vmatprep.subr.bf16.mxu0 0
      %2082 = vmatpush1.bf16.msra.mxu0 0
      %2083 = vmatprep.subr.bf16.mxu0 0
      %2084 = vmatpush1.bf16.msra.mxu0 0
      %2085 = vmatprep.subr.bf16.mxu0 0
      %2086 = vmatpush1.bf16.msra.mxu0 0
      %2087 = vmatprep.mubr.bf16.mxu0 0
      %2088 = vmatmul.mubr.bf16.gmra.mrb[0].mxu0 %v2006
      %v2089 = vpop.f32.mrb[0].mxu0
      %v2090 = vadd.f32 0.0, %v2089
      %v2091 = vpop.f32.mrb[0].mxu0
      %v2092 = vpop.f32.mrb[0].mxu0
      %v2093 = vpop.f32.mrb[0].mxu0
      %2094 = vdwg.mxu0
      %v2095 = vadd.f32 %v1872, %v2090
      %v2096 = vld [vmem:[%s12] sm:$0x1]
      %v2098 = vlaneseq
      %v2099 = vshrl.u32 %v2098, 7
      %v2100 = vsub.s32 0, %v2099
      %v2101 = vrot.slane %v2096, %v2100
      %v2103 = vadd.f32 %v2095, %v2101
      %2104 = vst.msk [vmem:[%s435] sm:$0x1f] %vm440, %v2103
      %p2105 = scmp.lt.s32.totalorder %s24, 1
      %s2106 = scalar_select %p2105, %s24, 1
      %s2107 = smul.addr %s2106, 8
      %s2108 = scalar_lea.vmem %s13, %s2107
      // Predicated region
      $region73: #{_lambda_.16} parent=71 // pred_check
        %p2109 = pneg %p320
      $region74: #{_lambda_.16} parent=71 // pred_check_branch
        %2111 = sbr.rel (%p2109) target = $region76
      $region75: #{_lambda_.16} parent=71 // pred_region
        _
      $region76: #{_lambda_.16} parent=71 // pred_fallthru
        _
    $region72: #{_lambda_.16} parent=5 // pred_fallthru
      _
    %p2112 = scmp.le.s32.totalorder 2, %s19
    // Predicated region
    $region77: #{_lambda_.16} parent=5 // pred_check
      %p2113 = pneg %p2112
    $region78: #{_lambda_.16} parent=5 // pred_check_branch
      %2115 = sbr.rel (%p2113) target = $region80
    $region79: #{_lambda_.16} parent=5 // pred_region
      %s2116 = ssub.s32 %s19, 2
      // Predicated region
      $region81: #{_lambda_.16} parent=79 // pred_check
        %p2117 = pneg %p326
      $region82: #{_lambda_.16} parent=79 // pred_check_branch
        %2119 = sbr.rel (%p2117) target = $region84
      $region83: #{_lambda_.16} parent=79 // pred_region
        %p2120 = scmp.lt.s32.totalorder %s25, 1
        %s2121 = scalar_select %p2120, %s25, 1
        %s2122 = smul.addr %s2121, 8
        %s2123 = scalar_lea.vmem %s13, %s2122
      $region84: #{_lambda_.16} parent=79 // pred_fallthru
        _
    $region80: #{_lambda_.16} parent=5 // pred_fallthru
      _
  $region6: #{_lambda_.16} parent=0 // loop_footer
    %s23 = sadd.s32 1, %s19
  $region7: #{_lambda_.16} parent=0 // loop_footer_branch
    %18 = sbr.rel target = $region3
  $region8: #{_lambda_.16} parent=0 // loop_exit
    _

// kernel: _lambda_.23
$region0: #{_lambda_.23}
  #allocation0 [shape = 'u32[]', space=smem, size = 0x4, offset = 0x4, fixed_abs, tag = 'smem constant byte address 0x4 - core index']
  #allocation1 [shape = 'u32[144,128]{1,0:T(1,128)}', space=vmem, size = 0x12000, scoped, tag = 'internal scratch']
  %s0 = inlined_call_operand.vmem [shape: f32[2,32], index: 0, kind: input, shape index: {}]
  %s1 = inlined_call_operand.vmem [shape: f32[1,32], index: 1, kind: input, shape index: {}]
  %s2 = inlined_call_operand.vmem [shape: f32[1,32], index: 2, kind: input, shape index: {}]
  %s3 = inlined_call_operand.vmem [shape: bf16[32,64], index: 3, kind: input, shape index: {}]
  %s4 = inlined_call_operand.vmem [shape: f32[1,64], index: 4, kind: input, shape index: {}]
  %s5 = inlined_call_operand.vmem [shape: f32[2,64], index: 5, kind: output, shape index: {}]
  %s6 = sld [smem:[#allocation0]]
  $region30: #{_lambda_.23} parent=0
    _
  %s8 = ssub.s32 1, %s6
  %s9 = scalar_select 0, %s8, %s6
  // Predicated region
  $region2: #{_lambda_.23} parent=0 // pred_check
    _
  $region3: #{_lambda_.23} parent=0 // pred_check_branch
    %11 = sbr.rel (0) target = $region5
  $region4: #{_lambda_.23} parent=0 // pred_region
    _
  $region5: #{_lambda_.23} parent=0 // pred_fallthru
    _
  // Predicated region
  $region6: #{_lambda_.23} parent=0 // pred_check
    _
  $region7: #{_lambda_.23} parent=0 // pred_check_branch
    %13 = sbr.rel (0) target = $region9
  $region8: #{_lambda_.23} parent=0 // pred_region
    _
  $region9: #{_lambda_.23} parent=0 // pred_fallthru
    _
  // Predicated region
  $region10: #{_lambda_.23} parent=0 // pred_check
    _
  $region11: #{_lambda_.23} parent=0 // pred_check_branch
    %15 = sbr.rel (0) target = $region13
  $region12: #{_lambda_.23} parent=0 // pred_region
    _
  $region13: #{_lambda_.23} parent=0 // pred_fallthru
    _
  // Predicated region
  $region14: #{_lambda_.23} parent=0 // pred_check
    _
  $region15: #{_lambda_.23} parent=0 // pred_check_branch
    %17 = sbr.rel (0) target = $region17
  $region16: #{_lambda_.23} parent=0 // pred_region
    _
  $region17: #{_lambda_.23} parent=0 // pred_fallthru
    _
  // Predicated region
  $region18: #{_lambda_.23} parent=0 // pred_check
    _
  $region19: #{_lambda_.23} parent=0 // pred_check_branch
    %19 = sbr.rel (0) target = $region21
  $region20: #{_lambda_.23} parent=0 // pred_region
    _
  $region21: #{_lambda_.23} parent=0 // pred_fallthru
    _
  %v21 = vld [vmem:[%s0] sm:$0x3]
  %v22 = vld [vmem:[%s1] sm:$0x1]
  %v23 = vld [vmem:[%s2] sm:$0x1]
  %vm24 = vcmask 254976
  %v25 = vsel %vm24, %v21, 0.0
  %26 = vadd.xlane.f32.xlu0 %v25
  %v27 = vpop.xlane.xlu0 %26
  %v28 = vrcp.pop 32.0
  %v29 = vmul.f32 %v27, %v28
  %v30 = vsub.f32 %v21, %v29
  %v31 = vmul.f32 %v30, %v30
  %v32 = vsel %vm24, %v31, 0.0
  %33 = vadd.xlane.f32.xlu0 %v32
  %v34 = vpop.xlane.xlu0 %33
  %v35 = vmul.f32 %v34, %v28
  %v36 = vadd.f32 %v35, 1e-05
  %v37 = vrsqrt.pop %v36
  %v38 = vmul.f32 %v30, %v37
  %v40 = vlaneseq
  %v41 = vshrl.u32 %v40, 7
  %v42 = vsub.s32 0, %v41
  %v43 = vrot.slane %v22, %v42
  %v45 = vmul.f32 %v38, %v43
  %v47 = vlaneseq
  %v48 = vshrl.u32 %v47, 7
  %v49 = vsub.s32 0, %v48
  %v50 = vrot.slane %v23, %v49
  %v52 = vadd.f32 %v45, %v50
  %v53 = vmul.f32 %v52, 0.5
  %v54 = vmul.f32 %v52, 0.70710677
  %v55 = verf.f32.pop %v54
  %v56 = vadd.f32 %v55, 1.0
  %v57 = vmul.f32 %v53, %v56
  %v58 = vld [vmem:[%s3] sm:$0xf]
  %v59 = vld [vmem:[%s3 + $0x4] sm:$0xf]
  %v60 = vld [vmem:[%s3 + $0x8] sm:$0xf]
  %v61 = vld [vmem:[%s3 + $0xc] sm:$0xf]
  %v62 = vpack.c.bf16 %v57, %v57
  %v63 = vld [vmem:[%s4] sm:$0x1]
  %v65 = vlaneseq
  %v66 = vshrl.u32 %v65, 7
  %v67 = vsub.s32 0, %v66
  %v68 = vrot.slane %v63, %v67
  %v74 = vunpack.c.l.b16 %v58
  %v75 = vunpack.c.l.b16 %v59
  %v76 = vunpack.c.l.b16 %v60
  %v77 = vunpack.c.l.b16 %v61
  %v78 = vpack.c.b16 %v75, %v74
  %v79 = vpack.c.b16 %v77, %v76
  %vm82 = vcmask 261120
  %v84 = vsel %vm82, %v62, 0
  %86 = vmatprep.subr.bf16.mxu0 0
  %87 = vmatpush1.bf16.msra.mxu0 %v78
  %88 = vmatprep.subr.bf16.mxu0 0
  %89 = vmatpush1.bf16.msra.mxu0 %v79
  %90 = vmatprep.subr.bf16.mxu0 0
  %91 = vmatpush1.bf16.msra.mxu0 0
  %92 = vmatprep.subr.bf16.mxu0 0
  %93 = vmatpush1.bf16.msra.mxu0 0
  %94 = vmatprep.subr.bf16.mxu0 0
  %95 = vmatpush1.bf16.msra.mxu0 0
  %96 = vmatprep.subr.bf16.mxu0 0
  %97 = vmatpush1.bf16.msra.mxu0 0
  %98 = vmatprep.subr.bf16.mxu0 0
  %99 = vmatpush1.bf16.msra.mxu0 0
  %100 = vmatprep.subr.bf16.mxu0 0
  %101 = vmatpush1.bf16.msra.mxu0 0
  %102 = vmatprep.subr.bf16.mxu0 0
  %103 = vmatpush1.bf16.msra.mxu0 0
  %104 = vmatprep.subr.bf16.mxu0 0
  %105 = vmatpush1.bf16.msra.mxu0 0
  %106 = vmatprep.subr.bf16.mxu0 0
  %107 = vmatpush1.bf16.msra.mxu0 0
  %108 = vmatprep.subr.bf16.mxu0 0
  %109 = vmatpush1.bf16.msra.mxu0 0
  %110 = vmatprep.subr.bf16.mxu0 0
  %111 = vmatpush1.bf16.msra.mxu0 0
  %112 = vmatprep.subr.bf16.mxu0 0
  %113 = vmatpush1.bf16.msra.mxu0 0
  %114 = vmatprep.subr.bf16.mxu0 0
  %115 = vmatpush1.bf16.msra.mxu0 0
  %116 = vmatprep.subr.bf16.mxu0 0
  %117 = vmatpush1.bf16.msra.mxu0 0
  %118 = vmatprep.mubr.bf16.mxu0 0
  %119 = vmatmul.mubr.bf16.gmra.mrb[0].mxu0 %v84
  %v120 = vpop.f32.mrb[0].mxu0
  %v121 = vadd.f32 %v68, %v120
  %v122 = vpop.f32.mrb[0].mxu0
  %v123 = vpop.f32.mrb[0].mxu0
  %v124 = vpop.f32.mrb[0].mxu0
  %125 = vdwg.mxu0
  %vm126 = vcmask 517120
  %127 = vst.msk [vmem:[%s5] sm:$0x3] %vm126, %v121
  // Predicated region
  $region22: #{_lambda_.23} parent=0 // pred_check
    _
  $region23: #{_lambda_.23} parent=0 // pred_check_branch
    %129 = sbr.rel (0) target = $region25
  $region24: #{_lambda_.23} parent=0 // pred_region
    _
  $region25: #{_lambda_.23} parent=0 // pred_fallthru
    _
  // Predicated region
  $region26: #{_lambda_.23} parent=0 // pred_check
    _
  $region27: #{_lambda_.23} parent=0 // pred_check_branch
    %131 = sbr.rel (0) target = $region29
  $region28: #{_lambda_.23} parent=0 // pred_region
    _
  $region29: #{_lambda_.23} parent=0 // pred_fallthru
    _

// kernel: _lambda_.22
$region0: #{_lambda_.22}
  #allocation0 [shape = 'u32[]', space=smem, size = 0x4, offset = 0x4, fixed_abs, tag = 'smem constant byte address 0x4 - core index']
  #allocation1 [shape = 'u32[144,128]{1,0:T(1,128)}', space=vmem, size = 0x12000, scoped, tag = 'internal scratch']
  %s0 = inlined_call_operand.vmem [shape: f32[2,17,32], index: 0, kind: input, shape index: {}]
  %s1 = inlined_call_operand.vmem [shape: f32[1,32], index: 1, kind: input, shape index: {}]
  %s2 = inlined_call_operand.vmem [shape: f32[1,32], index: 2, kind: input, shape index: {}]
  %s3 = inlined_call_operand.vmem [shape: bf16[32,32], index: 3, kind: input, shape index: {}]
  %s4 = inlined_call_operand.vmem [shape: f32[1,32], index: 4, kind: input, shape index: {}]
  %s5 = inlined_call_operand.vmem [shape: bf16[32,64], index: 5, kind: input, shape index: {}]
  %s6 = inlined_call_operand.vmem [shape: f32[1,64], index: 6, kind: input, shape index: {}]
  %s7 = inlined_call_operand.vmem [shape: f32[32,32], index: 7, kind: input, shape index: {}]
  %s8 = inlined_call_operand.vmem [shape: f32[1,32], index: 8, kind: input, shape index: {}]
  %s9 = inlined_call_operand.vmem [shape: f32[2,1,32], index: 9, kind: output, shape index: {}]
  %s10 = sld [smem:[#allocation0]]
  $region69: #{_lambda_.22} parent=0
    _
  %s12 = ssub.s32 1, %s10
  %s13 = scalar_select 0, %s12, %s10
  loop: start=0, step=1, limit=4
  $region2: #{_lambda_.22} parent=0 // loop_pre_header
    _
  $region3: #{_lambda_.22} parent=0 // loop_header
    %s15 = sphi 0, %s19
    %p16 = scmp.ge.s32.totalorder %s15, 4
    %s25 = sphi 0, %s27
    %s28 = sphi 0, %s25
    %s29 = sphi 0, %s28
    %s45 = sphi 0, %s29
    %s49 = sphi 0, %s49
    %s51 = sphi 0, %s49
    %s52 = sphi 0, %s51
    %s66 = sphi 0, %s52
    %s70 = sphi 0, %s70
    %s72 = sphi 0, %s70
    %s73 = sphi 0, %s72
    %s87 = sphi 0, %s73
    %s91 = sphi 0, %s91
    %s93 = sphi 0, %s91
    %s94 = sphi 0, %s93
    %s108 = sphi 0, %s94
    %s112 = sphi 0, %s112
    %s114 = sphi 0, %s112
    %s115 = sphi 0, %s114
    %s129 = sphi 0, %s115
    %s133 = sphi 0, %s133
    %s135 = sphi 0, %s133
    %s136 = sphi 0, %s135
    %s150 = sphi 0, %s136
    %s154 = sphi 0, %s154
    %s156 = sphi 0, %s154
    %s157 = sphi 0, %s156
    %s171 = sphi 0, %s157
    %s175 = sphi 0, %s175
    %s177 = sphi 0, %s175
    %s178 = sphi 0, %s177
    %s192 = sphi 0, %s178
    %s196 = sphi 0, %s196
    %s198 = sphi 0, %s196
    %s199 = sphi 0, %s198
    %s213 = sphi 0, %s199
    %s219 = sphi 0, %s221
    %s222 = sphi 0, %s219
    %s223 = sphi 0, %s222
    %s239 = sphi 0, %s223
  $region4: #{_lambda_.22} parent=0 // loop_header_branch
    %18 = sbr.rel (%p16) target = $region8
  $region5: #{_lambda_.22} parent=0 // loop_body
    %s20 = ssub.s32 %s15, 1
    %s21 = ssub.s32 %s15, 2
    %s22 = sadd.s32 %s15, 1
    %s23 = ssub.s32 %s15, %s22
    %p24 = scmp.eq.s32.totalorder %s23, 0
    %s26 = sadd.s32 %s25, 1
    %s27 = scalar_select %p24, %s25, %s26
    %p30 = pneg %p24
    %p31 = scmp.eq.s32.totalorder %s15, 1
    %p32 = por %p30, %p31
    %p33 = scmp.ne.s32.totalorder %s25, %s28
    %p34 = scmp.eq.s32.totalorder %s15, 0
    %p35 = por %p33, %p34
    %p36 = scmp.ne.s32.totalorder %s25, %s28
    %p37 = scmp.eq.s32.totalorder %s20, 1
    %p38 = por %p36, %p37
    %p39 = scmp.ne.s32.totalorder %s28, %s29
    %p40 = scmp.eq.s32.totalorder %s20, 0
    %p41 = por %p39, %p40
    %p42 = scmp.ne.s32.totalorder %s28, %s29
    %p43 = scmp.eq.s32.totalorder %s21, 1
    %p44 = por %p42, %p43
    %p46 = scmp.ne.s32.totalorder %s29, %s45
    %p47 = scmp.eq.s32.totalorder %s21, 0
    %p48 = por %p46, %p47
    %s50 = sadd.s32 %s49, 1
    %p53 = scmp.eq.s32.totalorder %s15, 1
    %p54 = scmp.ne.s32.totalorder %s49, %s51
    %p55 = scmp.eq.s32.totalorder %s15, 0
    %p56 = por %p54, %p55
    %p57 = scmp.ne.s32.totalorder %s49, %s51
    %p58 = scmp.eq.s32.totalorder %s20, 1
    %p59 = por %p57, %p58
    %p60 = scmp.ne.s32.totalorder %s51, %s52
    %p61 = scmp.eq.s32.totalorder %s20, 0
    %p62 = por %p60, %p61
    %p63 = scmp.ne.s32.totalorder %s51, %s52
    %p64 = scmp.eq.s32.totalorder %s21, 1
    %p65 = por %p63, %p64
    %p67 = scmp.ne.s32.totalorder %s52, %s66
    %p68 = scmp.eq.s32.totalorder %s21, 0
    %p69 = por %p67, %p68
    %s71 = sadd.s32 %s70, 1
    %p74 = scmp.eq.s32.totalorder %s15, 1
    %p75 = scmp.ne.s32.totalorder %s70, %s72
    %p76 = scmp.eq.s32.totalorder %s15, 0
    %p77 = por %p75, %p76
    %p78 = scmp.ne.s32.totalorder %s70, %s72
    %p79 = scmp.eq.s32.totalorder %s20, 1
    %p80 = por %p78, %p79
    %p81 = scmp.ne.s32.totalorder %s72, %s73
    %p82 = scmp.eq.s32.totalorder %s20, 0
    %p83 = por %p81, %p82
    %p84 = scmp.ne.s32.totalorder %s72, %s73
    %p85 = scmp.eq.s32.totalorder %s21, 1
    %p86 = por %p84, %p85
    %p88 = scmp.ne.s32.totalorder %s73, %s87
    %p89 = scmp.eq.s32.totalorder %s21, 0
    %p90 = por %p88, %p89
    %s92 = sadd.s32 %s91, 1
    %p95 = scmp.eq.s32.totalorder %s15, 1
    %p96 = scmp.ne.s32.totalorder %s91, %s93
    %p97 = scmp.eq.s32.totalorder %s15, 0
    %p98 = por %p96, %p97
    %p99 = scmp.ne.s32.totalorder %s91, %s93
    %p100 = scmp.eq.s32.totalorder %s20, 1
    %p101 = por %p99, %p100
    %p102 = scmp.ne.s32.totalorder %s93, %s94
    %p103 = scmp.eq.s32.totalorder %s20, 0
    %p104 = por %p102, %p103
    %p105 = scmp.ne.s32.totalorder %s93, %s94
    %p106 = scmp.eq.s32.totalorder %s21, 1
    %p107 = por %p105, %p106
    %p109 = scmp.ne.s32.totalorder %s94, %s108
    %p110 = scmp.eq.s32.totalorder %s21, 0
    %p111 = por %p109, %p110
    %s113 = sadd.s32 %s112, 1
    %p116 = scmp.eq.s32.totalorder %s15, 1
    %p117 = scmp.ne.s32.totalorder %s112, %s114
    %p118 = scmp.eq.s32.totalorder %s15, 0
    %p119 = por %p117, %p118
    %p120 = scmp.ne.s32.totalorder %s112, %s114
    %p121 = scmp.eq.s32.totalorder %s20, 1
    %p122 = por %p120, %p121
    %p123 = scmp.ne.s32.totalorder %s114, %s115
    %p124 = scmp.eq.s32.totalorder %s20, 0
    %p125 = por %p123, %p124
    %p126 = scmp.ne.s32.totalorder %s114, %s115
    %p127 = scmp.eq.s32.totalorder %s21, 1
    %p128 = por %p126, %p127
    %p130 = scmp.ne.s32.totalorder %s115, %s129
    %p131 = scmp.eq.s32.totalorder %s21, 0
    %p132 = por %p130, %p131
    %s134 = sadd.s32 %s133, 1
    %p137 = scmp.eq.s32.totalorder %s15, 1
    %p138 = scmp.ne.s32.totalorder %s133, %s135
    %p139 = scmp.eq.s32.totalorder %s15, 0
    %p140 = por %p138, %p139
    %p141 = scmp.ne.s32.totalorder %s133, %s135
    %p142 = scmp.eq.s32.totalorder %s20, 1
    %p143 = por %p141, %p142
    %p144 = scmp.ne.s32.totalorder %s135, %s136
    %p145 = scmp.eq.s32.totalorder %s20, 0
    %p146 = por %p144, %p145
    %p147 = scmp.ne.s32.totalorder %s135, %s136
    %p148 = scmp.eq.s32.totalorder %s21, 1
    %p149 = por %p147, %p148
    %p151 = scmp.ne.s32.totalorder %s136, %s150
    %p152 = scmp.eq.s32.totalorder %s21, 0
    %p153 = por %p151, %p152
    %s155 = sadd.s32 %s154, 1
    %p158 = scmp.eq.s32.totalorder %s15, 1
    %p159 = scmp.ne.s32.totalorder %s154, %s156
    %p160 = scmp.eq.s32.totalorder %s15, 0
    %p161 = por %p159, %p160
    %p162 = scmp.ne.s32.totalorder %s154, %s156
    %p163 = scmp.eq.s32.totalorder %s20, 1
    %p164 = por %p162, %p163
    %p165 = scmp.ne.s32.totalorder %s156, %s157
    %p166 = scmp.eq.s32.totalorder %s20, 0
    %p167 = por %p165, %p166
    %p168 = scmp.ne.s32.totalorder %s156, %s157
    %p169 = scmp.eq.s32.totalorder %s21, 1
    %p170 = por %p168, %p169
    %p172 = scmp.ne.s32.totalorder %s157, %s171
    %p173 = scmp.eq.s32.totalorder %s21, 0
    %p174 = por %p172, %p173
    %s176 = sadd.s32 %s175, 1
    %p179 = scmp.eq.s32.totalorder %s15, 1
    %p180 = scmp.ne.s32.totalorder %s175, %s177
    %p181 = scmp.eq.s32.totalorder %s15, 0
    %p182 = por %p180, %p181
    %p183 = scmp.ne.s32.totalorder %s175, %s177
    %p184 = scmp.eq.s32.totalorder %s20, 1
    %p185 = por %p183, %p184
    %p186 = scmp.ne.s32.totalorder %s177, %s178
    %p187 = scmp.eq.s32.totalorder %s20, 0
    %p188 = por %p186, %p187
    %p189 = scmp.ne.s32.totalorder %s177, %s178
    %p190 = scmp.eq.s32.totalorder %s21, 1
    %p191 = por %p189, %p190
    %p193 = scmp.ne.s32.totalorder %s178, %s192
    %p194 = scmp.eq.s32.totalorder %s21, 0
    %p195 = por %p193, %p194
    %s197 = sadd.s32 %s196, 1
    %p200 = scmp.eq.s32.totalorder %s15, 1
    %p201 = scmp.ne.s32.totalorder %s196, %s198
    %p202 = scmp.eq.s32.totalorder %s15, 0
    %p203 = por %p201, %p202
    %p204 = scmp.ne.s32.totalorder %s196, %s198
    %p205 = scmp.eq.s32.totalorder %s20, 1
    %p206 = por %p204, %p205
    %p207 = scmp.ne.s32.totalorder %s198, %s199
    %p208 = scmp.eq.s32.totalorder %s20, 0
    %p209 = por %p207, %p208
    %p210 = scmp.ne.s32.totalorder %s198, %s199
    %p211 = scmp.eq.s32.totalorder %s21, 1
    %p212 = por %p210, %p211
    %p214 = scmp.ne.s32.totalorder %s199, %s213
    %p215 = scmp.eq.s32.totalorder %s21, 0
    %p216 = por %p214, %p215
    %s217 = ssub.s32 %s15, %s22
    %p218 = scmp.eq.s32.totalorder %s217, 0
    %s220 = sadd.s32 %s219, 1
    %s221 = scalar_select %p218, %s219, %s220
    %p224 = pneg %p218
    %p225 = scmp.eq.s32.totalorder %s15, 1
    %p226 = por %p224, %p225
    %p227 = scmp.ne.s32.totalorder %s219, %s222
    %p228 = scmp.eq.s32.totalorder %s15, 0
    %p229 = por %p227, %p228
    %p230 = scmp.ne.s32.totalorder %s219, %s222
    %p231 = scmp.eq.s32.totalorder %s20, 1
    %p232 = por %p230, %p231
    %p233 = scmp.ne.s32.totalorder %s222, %s223
    %p234 = scmp.eq.s32.totalorder %s20, 0
    %p235 = por %p233, %p234
    %p236 = scmp.ne.s32.totalorder %s222, %s223
    %p237 = scmp.eq.s32.totalorder %s21, 1
    %p238 = por %p236, %p237
    %p240 = scmp.ne.s32.totalorder %s223, %s239
    %p241 = scmp.eq.s32.totalorder %s21, 0
    %p242 = por %p240, %p241
    %p243 = scmp.le.s32.totalorder 1, %s15
    %p244 = scmp.lt.s32.totalorder %s15, 3
    %p245 = pnand %p243, %p244
    %p246 = pneg %p245
    // Predicated region
    $region9: #{_lambda_.22} parent=5 // pred_check
      _
    $region10: #{_lambda_.22} parent=5 // pred_check_branch
      %248 = sbr.rel (%p245) target = $region12
    $region11: #{_lambda_.22} parent=5 // pred_region
      %s249 = ssub.s32 %s15, 1
      // Predicated region
      $region13: #{_lambda_.22} parent=11 // pred_check
        %p250 = pneg %p62
      $region14: #{_lambda_.22} parent=11 // pred_check_branch
        %252 = sbr.rel (%p250) target = $region16
      $region15: #{_lambda_.22} parent=11 // pred_region
        _
      $region16: #{_lambda_.22} parent=11 // pred_fallthru
        _
      // Predicated region
      $region17: #{_lambda_.22} parent=11 // pred_check
        %p253 = pneg %p83
      $region18: #{_lambda_.22} parent=11 // pred_check_branch
        %255 = sbr.rel (%p253) target = $region20
      $region19: #{_lambda_.22} parent=11 // pred_region
        _
      $region20: #{_lambda_.22} parent=11 // pred_fallthru
        _
      // Predicated region
      $region21: #{_lambda_.22} parent=11 // pred_check
        %p256 = pneg %p104
      $region22: #{_lambda_.22} parent=11 // pred_check_branch
        %258 = sbr.rel (%p256) target = $region24
      $region23: #{_lambda_.22} parent=11 // pred_region
        _
      $region24: #{_lambda_.22} parent=11 // pred_fallthru
        _
      // Predicated region
      $region25: #{_lambda_.22} parent=11 // pred_check
        %p259 = pneg %p125
      $region26: #{_lambda_.22} parent=11 // pred_check_branch
        %261 = sbr.rel (%p259) target = $region28
      $region27: #{_lambda_.22} parent=11 // pred_region
        _
      $region28: #{_lambda_.22} parent=11 // pred_fallthru
        _
      // Predicated region
      $region29: #{_lambda_.22} parent=11 // pred_check
        %p262 = pneg %p146
      $region30: #{_lambda_.22} parent=11 // pred_check_branch
        %264 = sbr.rel (%p262) target = $region32
      $region31: #{_lambda_.22} parent=11 // pred_region
        _
      $region32: #{_lambda_.22} parent=11 // pred_fallthru
        _
      // Predicated region
      $region33: #{_lambda_.22} parent=11 // pred_check
        %p265 = pneg %p167
      $region34: #{_lambda_.22} parent=11 // pred_check_branch
        %267 = sbr.rel (%p265) target = $region36
      $region35: #{_lambda_.22} parent=11 // pred_region
        _
      $region36: #{_lambda_.22} parent=11 // pred_fallthru
        _
      // Predicated region
      $region37: #{_lambda_.22} parent=11 // pred_check
        %p268 = pneg %p188
      $region38: #{_lambda_.22} parent=11 // pred_check_branch
        %270 = sbr.rel (%p268) target = $region40
      $region39: #{_lambda_.22} parent=11 // pred_region
        _
      $region40: #{_lambda_.22} parent=11 // pred_fallthru
        _
      // Predicated region
      $region41: #{_lambda_.22} parent=11 // pred_check
        %p271 = pneg %p209
      $region42: #{_lambda_.22} parent=11 // pred_check_branch
        %273 = sbr.rel (%p271) target = $region44
      $region43: #{_lambda_.22} parent=11 // pred_region
        _
      $region44: #{_lambda_.22} parent=11 // pred_fallthru
        _
    $region12: #{_lambda_.22} parent=5 // pred_fallthru
      _
    %p274 = scmp.lt.s32.totalorder %s15, 2
    // Predicated region
    $region45: #{_lambda_.22} parent=5 // pred_check
      %p275 = pneg %p274
    $region46: #{_lambda_.22} parent=5 // pred_check_branch
      %277 = sbr.rel (%p275) target = $region48
    $region47: #{_lambda_.22} parent=5 // pred_region
      // Predicated region
      $region49: #{_lambda_.22} parent=47 // pred_check
        %p278 = pneg %p35
      $region50: #{_lambda_.22} parent=47 // pred_check_branch
        %280 = sbr.rel (%p278) target = $region52
      $region51: #{_lambda_.22} parent=47 // pred_region
        %p281 = scmp.lt.s32.totalorder %s15, 1
        %s282 = scalar_select %p281, %s15, 1
        %s283 = smul.addr %s282, 3
        %s284 = smul.addr %s283, 8
        %s285 = scalar_lea.vmem %s0, %s284
      $region52: #{_lambda_.22} parent=47 // pred_fallthru
        _
    $region48: #{_lambda_.22} parent=5 // pred_fallthru
      _
    %p286 = scmp.le.s32.totalorder 1, %s15
    %p287 = scmp.lt.s32.totalorder %s15, 3
    %p288 = pnand %p286, %p287
    %p289 = pneg %p288
    // Predicated region
    $region53: #{_lambda_.22} parent=5 // pred_check
      _
    $region54: #{_lambda_.22} parent=5 // pred_check_branch
      %291 = sbr.rel (%p288) target = $region56
    $region55: #{_lambda_.22} parent=5 // pred_region
      %s292 = ssub.s32 %s15, 1
      %p293 = scmp.lt.s32.totalorder %s20, 1
      %s294 = scalar_select %p293, %s20, 1
      %s295 = smul.addr %s294, 3
      %s296 = smul.addr %s295, 8
      %s297 = scalar_lea.vmem %s0, %s296
      %p298 = pneg %p41
      %p299 = pneg %p38
      %p300 = pneg %p62
      %p301 = pneg %p59
      %p302 = pneg %p83
      %p303 = pneg %p80
      %p304 = pneg %p104
      %p305 = pneg %p101
      %p306 = pneg %p125
      %p307 = pneg %p122
      %p308 = pneg %p146
      %p309 = pneg %p143
      %p310 = pneg %p167
      %p311 = pneg %p164
      %p312 = pneg %p188
      %p313 = pneg %p185
      %p314 = pneg %p209
      %p315 = pneg %p206
      %p316 = pneg %p235
      %p317 = pneg %p232
      %p318 = scmp.lt.s32.totalorder %s20, 1
      %s319 = scalar_select %p318, %s20, 1
      %s320 = scalar_lea.vmem %s9, %s319
      %p321 = scmp.lt.s32.totalorder %s20, 1
      %s322 = scalar_select %p321, %s20, 1
      %s323 = smul.addr %s322, 3
      %s324 = smul.addr %s323, 8
      %s325 = scalar_lea.vmem %s0, %s324
      %p326 = scmp.lt.s32.totalorder %s20, 1
      %s327 = scalar_select %p326, %s20, 1
      %s328 = scalar_lea.vmem %s9, %s327
      %v330 = vld [vmem:[%s325] sm:$0xff]
      %v331 = vld [vmem:[%s325 + $0x8] sm:$0xff]
      %v332 = vld [vmem:[%s325 + $0x10] sm:$0x1]
      %v333 = vld [vmem:[%s1] sm:$0x1]
      %v334 = vld [vmem:[%s2] sm:$0x1]
      %vm335 = vcmask 261120
      %v336 = vsel %vm335, %v330, 0.0
      %337 = vadd.xlane.f32.xlu0 %v336
      %v338 = vpop.xlane.xlu0 %337
      %v339 = vsel %vm335, %v331, 0.0
      %340 = vadd.xlane.f32.xlu0 %v339
      %v341 = vpop.xlane.xlu0 %340
      %vm342 = vcmask 253952
      %v343 = vsel %vm342, %v332, 0.0
      %344 = vadd.xlane.f32.xlu0 %v343
      %v345 = vpop.xlane.xlu0 %344
      %v346 = vrcp.pop 32.0
      %v347 = vmul.f32 %v338, %v346
      %v348 = vmul.f32 %v341, %v346
      %v349 = vmul.f32 %v345, %v346
      %v350 = vsub.f32 %v330, %v347
      %v351 = vsub.f32 %v331, %v348
      %v352 = vsub.f32 %v332, %v349
      %v353 = vmul.f32 %v350, %v350
      %v354 = vmul.f32 %v351, %v351
      %v355 = vmul.f32 %v352, %v352
      %v356 = vsel %vm335, %v353, 0.0
      %357 = vadd.xlane.f32.xlu0 %v356
      %v358 = vpop.xlane.xlu0 %357
      %v359 = vsel %vm335, %v354, 0.0
      %360 = vadd.xlane.f32.xlu0 %v359
      %v361 = vpop.xlane.xlu0 %360
      %v362 = vsel %vm342, %v355, 0.0
      %363 = vadd.xlane.f32.xlu0 %v362
      %v364 = vpop.xlane.xlu0 %363
      %v365 = vmul.f32 %v358, %v346
      %v366 = vmul.f32 %v361, %v346
      %v367 = vmul.f32 %v364, %v346
      %v368 = vadd.f32 %v365, 1e-05
      %v369 = vadd.f32 %v366, 1e-05
      %v370 = vadd.f32 %v367, 1e-05
      %v371 = vrsqrt.pop %v368
      %v372 = vrsqrt.pop %v369
      %v373 = vrsqrt.pop %v370
      %v374 = vmul.f32 %v350, %v371
      %v375 = vmul.f32 %v351, %v372
      %v376 = vmul.f32 %v352, %v373
      %v378 = vlaneseq
      %v379 = vshrl.u32 %v378, 7
      %v380 = vsub.s32 0, %v379
      %v381 = vrot.slane %v333, %v380
      %v383 = vmul.f32 %v374, %v381
      %v384 = vmul.f32 %v375, %v381
      %v385 = vmul.f32 %v376, %v381
      %v387 = vlaneseq
      %v388 = vshrl.u32 %v387, 7
      %v389 = vsub.s32 0, %v388
      %v390 = vrot.slane %v334, %v389
      %v392 = vadd.f32 %v383, %v390
      %v393 = vadd.f32 %v384, %v390
      %v394 = vadd.f32 %v385, %v390
      %v395 = vld [vmem:[%s3] sm:$0xf]
      %v396 = vld [vmem:[%s3 + $0x4] sm:$0xf]
      %v397 = vld [vmem:[%s3 + $0x8] sm:$0xf]
      %v398 = vld [vmem:[%s3 + $0xc] sm:$0xf]
      %v399 = vpack.c.bf16 %v392, %v392
      %v400 = vld [vmem:[%s4] sm:$0x1]
      %v405 = vunpack.c.l.b16 %v395
      %v406 = vunpack.c.l.b16 %v396
      %v407 = vunpack.c.l.b16 %v397
      %v408 = vunpack.c.l.b16 %v398
      %v409 = vpack.c.b16 %v406, %v405
      %v410 = vpack.c.b16 %v408, %v407
      %v414 = vsel %vm335, %v399, 0
      %416 = vmatprep.subr.bf16.mxu0 0
      %417 = vmatpush1.bf16.msra.mxu0 %v409
      %418 = vmatprep.subr.bf16.mxu0 0
      %419 = vmatpush1.bf16.msra.mxu0 %v410
      %420 = vmatprep.subr.bf16.mxu0 0
      %421 = vmatpush1.bf16.msra.mxu0 0
      %422 = vmatprep.subr.bf16.mxu0 0
      %423 = vmatpush1.bf16.msra.mxu0 0
      %424 = vmatprep.subr.bf16.mxu0 0
      %425 = vmatpush1.bf16.msra.mxu0 0
      %426 = vmatprep.subr.bf16.mxu0 0
      %427 = vmatpush1.bf16.msra.mxu0 0
      %428 = vmatprep.subr.bf16.mxu0 0
      %429 = vmatpush1.bf16.msra.mxu0 0
      %430 = vmatprep.subr.bf16.mxu0 0
      %431 = vmatpush1.bf16.msra.mxu0 0
      %432 = vmatprep.subr.bf16.mxu0 0
      %433 = vmatpush1.bf16.msra.mxu0 0
      %434 = vmatprep.subr.bf16.mxu0 0
      %435 = vmatpush1.bf16.msra.mxu0 0
      %436 = vmatprep.subr.bf16.mxu0 0
      %437 = vmatpush1.bf16.msra.mxu0 0
      %438 = vmatprep.subr.bf16.mxu0 0
      %439 = vmatpush1.bf16.msra.mxu0 0
      %440 = vmatprep.subr.bf16.mxu0 0
      %441 = vmatpush1.bf16.msra.mxu0 0
      %442 = vmatprep.subr.bf16.mxu0 0
      %443 = vmatpush1.bf16.msra.mxu0 0
      %444 = vmatprep.subr.bf16.mxu0 0
      %445 = vmatpush1.bf16.msra.mxu0 0
      %446 = vmatprep.subr.bf16.mxu0 0
      %447 = vmatpush1.bf16.msra.mxu0 0
      %448 = vmatprep.mubr.bf16.mxu0 0
      %449 = vmatmul.mubr.bf16.gmra.mrb[0].mxu0 %v414
      %v450 = vpop.f32.mrb[0].mxu0
      %v451 = vadd.f32 %v400, %v450
      %v452 = vpop.f32.mrb[0].mxu0
      %v453 = vpop.f32.mrb[0].mxu0
      %v454 = vpop.f32.mrb[0].mxu0
      %455 = vdwg.mxu0
      %v456 = vmul.f32 %v451, 0.35355338
      %v457 = vld [vmem:[%s5] sm:$0xf]
      %v458 = vld [vmem:[%s5 + $0x4] sm:$0xf]
      %v459 = vld [vmem:[%s5 + $0x8] sm:$0xf]
      %v460 = vld [vmem:[%s5 + $0xc] sm:$0xf]
      %v461 = vpack.c.bf16 %v393, %v392
      %v462 = vpack.c.bf16 %v394, %v394
      %v463 = vld [vmem:[%s6] sm:$0x1]
      %v465 = vlaneseq
      %v466 = vshrl.u32 %v465, 7
      %v467 = vsub.s32 0, %v466
      %v468 = vrot.slane %v463, %v467
      %v474 = vunpack.c.l.b16 %v457
      %v475 = vunpack.c.l.b16 %v458
      %v476 = vunpack.c.l.b16 %v459
      %v477 = vunpack.c.l.b16 %v460
      %v478 = vpack.c.b16 %v475, %v474
      %v479 = vpack.c.b16 %v477, %v476
      %v483 = vsel %vm335, %v461, 0
      %v486 = vsel %vm335, %v462, 0
      %488 = vmatprep.subr.bf16.mxu0 0
      %489 = vmatpush1.bf16.msra.mxu0 %v478
      %490 = vmatprep.subr.bf16.mxu0 0
      %491 = vmatpush1.bf16.msra.mxu0 %v479
      %492 = vmatprep.subr.bf16.mxu0 0
      %493 = vmatpush1.bf16.msra.mxu0 0
      %494 = vmatprep.subr.bf16.mxu0 0
      %495 = vmatpush1.bf16.msra.mxu0 0
      %496 = vmatprep.subr.bf16.mxu0 0
      %497 = vmatpush1.bf16.msra.mxu0 0
      %498 = vmatprep.subr.bf16.mxu0 0
      %499 = vmatpush1.bf16.msra.mxu0 0
      %500 = vmatprep.subr.bf16.mxu0 0
      %501 = vmatpush1.bf16.msra.mxu0 0
      %502 = vmatprep.subr.bf16.mxu0 0
      %503 = vmatpush1.bf16.msra.mxu0 0
      %504 = vmatprep.subr.bf16.mxu0 0
      %505 = vmatpush1.bf16.msra.mxu0 0
      %506 = vmatprep.subr.bf16.mxu0 0
      %507 = vmatpush1.bf16.msra.mxu0 0
      %508 = vmatprep.subr.bf16.mxu0 0
      %509 = vmatpush1.bf16.msra.mxu0 0
      %510 = vmatprep.subr.bf16.mxu0 0
      %511 = vmatpush1.bf16.msra.mxu0 0
      %512 = vmatprep.subr.bf16.mxu0 0
      %513 = vmatpush1.bf16.msra.mxu0 0
      %514 = vmatprep.subr.bf16.mxu0 0
      %515 = vmatpush1.bf16.msra.mxu0 0
      %516 = vmatprep.subr.bf16.mxu0 0
      %517 = vmatpush1.bf16.msra.mxu0 0
      %518 = vmatprep.subr.bf16.mxu0 0
      %519 = vmatpush1.bf16.msra.mxu0 0
      %520 = vmatprep.mubr.bf16.mxu0 0
      %521 = vmatmul.mubr.bf16.gmra.mrb[0].mxu0 %v483
      %v522 = vpop.f32.mrb[0].mxu0
      %v523 = vadd.f32 %v468, %v522
      %v524 = vpop.f32.mrb[0].mxu0
      %v525 = vpop.f32.mrb[0].mxu0
      %v526 = vadd.f32 %v468, %v525
      %v527 = vpop.f32.mrb[0].mxu0
      %528 = vmatprep.mubr.bf16.mxu0 0
      %529 = vmatmul.mubr.bf16.gmra.mrb[0].mxu0 %v486
      %v530 = vpop.f32.mrb[0].mxu0
      %v531 = vadd.f32 %v468, %v530
      %v532 = vpop.f32.mrb[0].mxu0
      %v533 = vpop.f32.mrb[0].mxu0
      %v534 = vpop.f32.mrb[0].mxu0
      %535 = vdwg.mxu0
      %v536 = vld [vmem:[%s7] sm:$0xff]
      %v537 = vld [vmem:[%s7 + $0x8] sm:$0xff]
      %v538 = vld [vmem:[%s7 + $0x10] sm:$0xff]
      %v539 = vld [vmem:[%s7 + $0x18] sm:$0xff]
      %v540 = vpack.c.bf16 %v456, %v456
      %v541 = vpack.c.bf16 %v526, %v523
      %v542 = vpack.c.bf16 %v531, %v531
      %vm543 = vcmask 64512
      %v545 = vsel %vm543, %v540, 0
      %v548 = vsel %vm543, %v541, 0
      %v551 = vsel %vm543, %v542, 0
      %553 = vmatprep.subr.bf16.mxu0 0
      %554 = vmatpush1.bf16.xpose.msra.mxu0 %v548
      %555 = vmatprep.subr.bf16.mxu0 0
      %556 = vmatpush1.bf16.xpose.msra.mxu0 %v551
      %557 = vmatprep.subr.bf16.mxu0 0
      %558 = vmatpush1.bf16.xpose.msra.mxu0 0
      %559 = vmatprep.subr.bf16.mxu0 0
      %560 = vmatpush1.bf16.xpose.msra.mxu0 0
      %561 = vmatprep.subr.bf16.mxu0 0
      %562 = vmatpush1.bf16.xpose.msra.mxu0 0
      %563 = vmatprep.subr.bf16.mxu0 0
      %564 = vmatpush1.bf16.xpose.msra.mxu0 0
      %565 = vmatprep.subr.bf16.mxu0 0
      %566 = vmatpush1.bf16.xpose.msra.mxu0 0
      %567 = vmatprep.subr.bf16.mxu0 0
      %568 = vmatpush1.bf16.xpose.msra.mxu0 0
      %569 = vmatprep.subr.bf16.mxu0 0
      %570 = vmatpush1.bf16.xpose.msra.mxu0 0
      %571 = vmatprep.subr.bf16.mxu0 0
      %572 = vmatpush1.bf16.xpose.msra.mxu0 0
      %573 = vmatprep.subr.bf16.mxu0 0
      %574 = vmatpush1.bf16.xpose.msra.mxu0 0
      %575 = vmatprep.subr.bf16.mxu0 0
      %576 = vmatpush1.bf16.xpose.msra.mxu0 0
      %577 = vmatprep.subr.bf16.mxu0 0
      %578 = vmatpush1.bf16.xpose.msra.mxu0 0
      %579 = vmatprep.subr.bf16.mxu0 0
      %580 = vmatpush1.bf16.xpose.msra.mxu0 0
      %581 = vmatprep.subr.bf16.mxu0 0
      %582 = vmatpush1.bf16.xpose.msra.mxu0 0
      %583 = vmatprep.subr.bf16.mxu0 0
      %584 = vmatpush1.bf16.xpose.msra.mxu0 0
      %585 = vmatprep.mubr.bf16.mxu0 0
      %586 = vmatmul.mubr.bf16.gmra.mrb[0].mxu0 %v545
      %v587 = vpop.f32.mrb[0].mxu0
      %v588 = vadd.f32 0.0, %v587
      %v589 = vpop.f32.mrb[0].mxu0
      %v590 = vpop.f32.mrb[0].mxu0
      %v591 = vpop.f32.mrb[0].mxu0
      %592 = vdwg.mxu0
      %vm593 = vcmask 131072
      %v594 = vsel %vm593, %v588, -inf
      %595 = vmax.xlane.f32.xlu0 %v594
      %v596 = vpop.xlane.xlu0 %595
      %v597 = vsub.f32 %v588, %v596
      %v598 = vmul.f32 %v597, 1.442695
      %v599 = vpow.pop %v598
      %v600 = vsel %vm593, %v599, 0.0
      %601 = vadd.xlane.f32.xlu0 %v600
      %v602 = vpop.xlane.xlu0 %601
      %v603 = vrcp.pop %v602
      %v604 = vmul.f32 %v599, %v603
      %v605 = vpack.c.bf16 %v604, %v604
      %608 = vrot.lane.b32.xlu0 %v541, 96
      %v609 = vpop.permute.xlu0 %608
      %610 = vrot.lane.b32.xlu0 %v542, 96
      %v611 = vpop.permute.xlu0 %610
      %vm613 = vcmask 138240
      %v615 = vsel %vm613, %v605, 0
      %vm617 = vcmask 1040384
      %v618 = vsel 0, 4294967295, 65535
      %v619 = vsel %vm617, %v618, 0
      %v621 = vand.u32 %v611, %v619
      %623 = vmatprep.subr.bf16.mxu0 0
      %624 = vmatpush1.bf16.msra.mxu0 %v609
      %625 = vmatprep.subr.bf16.mxu0 0
      %626 = vmatpush1.bf16.msra.mxu0 %v621
      %627 = vmatprep.subr.bf16.mxu0 0
      %628 = vmatpush1.bf16.msra.mxu0 0
      %629 = vmatprep.subr.bf16.mxu0 0
      %630 = vmatpush1.bf16.msra.mxu0 0
      %631 = vmatprep.subr.bf16.mxu0 0
      %632 = vmatpush1.bf16.msra.mxu0 0
      %633 = vmatprep.subr.bf16.mxu0 0
      %634 = vmatpush1.bf16.msra.mxu0 0
      %635 = vmatprep.subr.bf16.mxu0 0
      %636 = vmatpush1.bf16.msra.mxu0 0
      %637 = vmatprep.subr.bf16.mxu0 0
      %638 = vmatpush1.bf16.msra.mxu0 0
      %639 = vmatprep.subr.bf16.mxu0 0
      %640 = vmatpush1.bf16.msra.mxu0 0
      %641 = vmatprep.subr.bf16.mxu0 0
      %642 = vmatpush1.bf16.msra.mxu0 0
      %643 = vmatprep.subr.bf16.mxu0 0
      %644 = vmatpush1.bf16.msra.mxu0 0
      %645 = vmatprep.subr.bf16.mxu0 0
      %646 = vmatpush1.bf16.msra.mxu0 0
      %647 = vmatprep.subr.bf16.mxu0 0
      %648 = vmatpush1.bf16.msra.mxu0 0
      %649 = vmatprep.subr.bf16.mxu0 0
      %650 = vmatpush1.bf16.msra.mxu0 0
      %651 = vmatprep.subr.bf16.mxu0 0
      %652 = vmatpush1.bf16.msra.mxu0 0
      %653 = vmatprep.subr.bf16.mxu0 0
      %654 = vmatpush1.bf16.msra.mxu0 0
      %655 = vmatprep.mubr.bf16.mxu0 0
      %656 = vmatmul.mubr.bf16.gmra.mrb[0].mxu0 %v615
      %v657 = vpop.f32.mrb[0].mxu0
      %v658 = vadd.f32 0.0, %v657
      %v659 = vpop.f32.mrb[0].mxu0
      %v660 = vpop.f32.mrb[0].mxu0
      %v661 = vpop.f32.mrb[0].mxu0
      %662 = vdwg.mxu0
      %v663 = vpack.c.bf16 %v658, %v658
      %v664 = vpack.c.bf16 %v536, %v536
      %666 = vrot.lane.b32.xlu0 %v540, 120
      %v667 = vpop.permute.xlu0 %666
      %668 = vrot.lane.b32.xlu0 %v541, 120
      %v669 = vpop.permute.xlu0 %668
      %670 = vrot.lane.b32.xlu0 %v542, 120
      %v671 = vpop.permute.xlu0 %670
      %v673 = vsel %vm543, %v667, 0
      %v676 = vsel %vm543, %v669, 0
      %v679 = vsel %vm543, %v671, 0
      %681 = vmatprep.subr.bf16.mxu0 0
      %682 = vmatpush1.bf16.xpose.msra.mxu0 %v676
      %683 = vmatprep.subr.bf16.mxu0 0
      %684 = vmatpush1.bf16.xpose.msra.mxu0 %v679
      %685 = vmatprep.subr.bf16.mxu0 0
      %686 = vmatpush1.bf16.xpose.msra.mxu0 0
      %687 = vmatprep.subr.bf16.mxu0 0
      %688 = vmatpush1.bf16.xpose.msra.mxu0 0
      %689 = vmatprep.subr.bf16.mxu0 0
      %690 = vmatpush1.bf16.xpose.msra.mxu0 0
      %691 = vmatprep.subr.bf16.mxu0 0
      %692 = vmatpush1.bf16.xpose.msra.mxu0 0
      %693 = vmatprep.subr.bf16.mxu0 0
      %694 = vmatpush1.bf16.xpose.msra.mxu0 0
      %695 = vmatprep.subr.bf16.mxu0 0
      %696 = vmatpush1.bf16.xpose.msra.mxu0 0
      %697 = vmatprep.subr.bf16.mxu0 0
      %698 = vmatpush1.bf16.xpose.msra.mxu0 0
      %699 = vmatprep.subr.bf16.mxu0 0
      %700 = vmatpush1.bf16.xpose.msra.mxu0 0
      %701 = vmatprep.subr.bf16.mxu0 0
      %702 = vmatpush1.bf16.xpose.msra.mxu0 0
      %703 = vmatprep.subr.bf16.mxu0 0
      %704 = vmatpush1.bf16.xpose.msra.mxu0 0
      %705 = vmatprep.subr.bf16.mxu0 0
      %706 = vmatpush1.bf16.xpose.msra.mxu0 0
      %707 = vmatprep.subr.bf16.mxu0 0
      %708 = vmatpush1.bf16.xpose.msra.mxu0 0
      %709 = vmatprep.subr.bf16.mxu0 0
      %710 = vmatpush1.bf16.xpose.msra.mxu0 0
      %711 = vmatprep.subr.bf16.mxu0 0
      %712 = vmatpush1.bf16.xpose.msra.mxu0 0
      %713 = vmatprep.mubr.bf16.mxu0 0
      %714 = vmatmul.mubr.bf16.gmra.mrb[0].mxu0 %v673
      %v715 = vpop.f32.mrb[0].mxu0
      %v716 = vadd.f32 0.0, %v715
      %v717 = vpop.f32.mrb[0].mxu0
      %v718 = vpop.f32.mrb[0].mxu0
      %v719 = vpop.f32.mrb[0].mxu0
      %720 = vdwg.mxu0
      %v721 = vsel %vm593, %v716, -inf
      %722 = vmax.xlane.f32.xlu0 %v721
      %v723 = vpop.xlane.xlu0 %722
      %v724 = vsub.f32 %v716, %v723
      %v725 = vmul.f32 %v724, 1.442695
      %v726 = vpow.pop %v725
      %v727 = vsel %vm593, %v726, 0.0
      %728 = vadd.xlane.f32.xlu0 %v727
      %v729 = vpop.xlane.xlu0 %728
      %v730 = vrcp.pop %v729
      %v731 = vmul.f32 %v726, %v730
      %v732 = vpack.c.bf16 %v731, %v731
      %733 = vrot.lane.b32.xlu0 %v541, 88
      %v734 = vpop.permute.xlu0 %733
      %735 = vrot.lane.b32.xlu0 %v542, 88
      %v736 = vpop.permute.xlu0 %735
      %v739 = vsel %vm613, %v732, 0
      %v742 = vand.u32 %v736, %v619
      %744 = vmatprep.subr.bf16.mxu0 0
      %745 = vmatpush1.bf16.msra.mxu0 %v734
      %746 = vmatprep.subr.bf16.mxu0 0
      %747 = vmatpush1.bf16.msra.mxu0 %v742
      %748 = vmatprep.subr.bf16.mxu0 0
      %749 = vmatpush1.bf16.msra.mxu0 0
      %750 = vmatprep.subr.bf16.mxu0 0
      %751 = vmatpush1.bf16.msra.mxu0 0
      %752 = vmatprep.subr.bf16.mxu0 0
      %753 = vmatpush1.bf16.msra.mxu0 0
      %754 = vmatprep.subr.bf16.mxu0 0
      %755 = vmatpush1.bf16.msra.mxu0 0
      %756 = vmatprep.subr.bf16.mxu0 0
      %757 = vmatpush1.bf16.msra.mxu0 0
      %758 = vmatprep.subr.bf16.mxu0 0
      %759 = vmatpush1.bf16.msra.mxu0 0
      %760 = vmatprep.subr.bf16.mxu0 0
      %761 = vmatpush1.bf16.msra.mxu0 0
      %762 = vmatprep.subr.bf16.mxu0 0
      %763 = vmatpush1.bf16.msra.mxu0 0
      %764 = vmatprep.subr.bf16.mxu0 0
      %765 = vmatpush1.bf16.msra.mxu0 0
      %766 = vmatprep.subr.bf16.mxu0 0
      %767 = vmatpush1.bf16.msra.mxu0 0
      %768 = vmatprep.subr.bf16.mxu0 0
      %769 = vmatpush1.bf16.msra.mxu0 0
      %770 = vmatprep.subr.bf16.mxu0 0
      %771 = vmatpush1.bf16.msra.mxu0 0
      %772 = vmatprep.subr.bf16.mxu0 0
      %773 = vmatpush1.bf16.msra.mxu0 0
      %774 = vmatprep.subr.bf16.mxu0 0
      %775 = vmatpush1.bf16.msra.mxu0 0
      %776 = vmatprep.mubr.bf16.mxu0 0
      %777 = vmatmul.mubr.bf16.gmra.mrb[0].mxu0 %v739
      %v778 = vpop.f32.mrb[0].mxu0
      %v779 = vadd.f32 0.0, %v778
      %v780 = vpop.f32.mrb[0].mxu0
      %v781 = vpop.f32.mrb[0].mxu0
      %v782 = vpop.f32.mrb[0].mxu0
      %783 = vdwg.mxu0
      %v784 = vpack.c.bf16 %v779, %v779
      %v785 = vpack.c.bf16 %v537, %v537
      %v787 = vsel %vm543, %v784, 0
      %vm789 = vcmask 1043456
      %v791 = vsel %vm789, %v785, 0
      %793 = vmatprep.subr.bf16.mxu0 0
      %794 = vmatpush1.bf16.msra.mxu0 %v791
      %795 = vmatprep.subr.bf16.mxu0 0
      %796 = vmatpush1.bf16.msra.mxu0 0
      %797 = vmatprep.subr.bf16.mxu0 0
      %798 = vmatpush1.bf16.msra.mxu0 0
      %799 = vmatprep.subr.bf16.mxu0 0
      %800 = vmatpush1.bf16.msra.mxu0 0
      %801 = vmatprep.subr.bf16.mxu0 0
      %802 = vmatpush1.bf16.msra.mxu0 0
      %803 = vmatprep.subr.bf16.mxu0 0
      %804 = vmatpush1.bf16.msra.mxu0 0
      %805 = vmatprep.subr.bf16.mxu0 0
      %806 = vmatpush1.bf16.msra.mxu0 0
      %807 = vmatprep.subr.bf16.mxu0 0
      %808 = vmatpush1.bf16.msra.mxu0 0
      %809 = vmatprep.subr.bf16.mxu0 0
      %810 = vmatpush1.bf16.msra.mxu0 0
      %811 = vmatprep.subr.bf16.mxu0 0
      %812 = vmatpush1.bf16.msra.mxu0 0
      %813 = vmatprep.subr.bf16.mxu0 0
      %814 = vmatpush1.bf16.msra.mxu0 0
      %815 = vmatprep.subr.bf16.mxu0 0
      %816 = vmatpush1.bf16.msra.mxu0 0
      %817 = vmatprep.subr.bf16.mxu0 0
      %818 = vmatpush1.bf16.msra.mxu0 0
      %819 = vmatprep.subr.bf16.mxu0 0
      %820 = vmatpush1.bf16.msra.mxu0 0
      %821 = vmatprep.subr.bf16.mxu0 0
      %822 = vmatpush1.bf16.msra.mxu0 0
      %823 = vmatprep.subr.bf16.mxu0 0
      %824 = vmatpush1.bf16.msra.mxu0 0
      %825 = vmatprep.mubr.bf16.mxu0 0
      %826 = vmatmul.mubr.bf16.gmra.mrb[0].mxu0 %v787
      %v827 = vpop.f32.mrb[0].mxu0
      %v828 = vadd.f32 0.0, %v827
      %v829 = vpop.f32.mrb[0].mxu0
      %v830 = vpop.f32.mrb[0].mxu0
      %v831 = vpop.f32.mrb[0].mxu0
      %832 = vdwg.mxu0
      %v834 = vsel %vm543, %v663, 0
      %v837 = vsel %vm789, %v664, 0
      %839 = vmatprep.subr.bf16.mxu0 0
      %840 = vmatpush1.bf16.msra.mxu0 %v837
      %841 = vmatprep.subr.bf16.mxu0 0
      %842 = vmatpush1.bf16.msra.mxu0 0
      %843 = vmatprep.subr.bf16.mxu0 0
      %844 = vmatpush1.bf16.msra.mxu0 0
      %845 = vmatprep.subr.bf16.mxu0 0
      %846 = vmatpush1.bf16.msra.mxu0 0
      %847 = vmatprep.subr.bf16.mxu0 0
      %848 = vmatpush1.bf16.msra.mxu0 0
      %849 = vmatprep.subr.bf16.mxu0 0
      %850 = vmatpush1.bf16.msra.mxu0 0
      %851 = vmatprep.subr.bf16.mxu0 0
      %852 = vmatpush1.bf16.msra.mxu0 0
      %853 = vmatprep.subr.bf16.mxu0 0
      %854 = vmatpush1.bf16.msra.mxu0 0
      %855 = vmatprep.subr.bf16.mxu0 0
      %856 = vmatpush1.bf16.msra.mxu0 0
      %857 = vmatprep.subr.bf16.mxu0 0
      %858 = vmatpush1.bf16.msra.mxu0 0
      %859 = vmatprep.subr.bf16.mxu0 0
      %860 = vmatpush1.bf16.msra.mxu0 0
      %861 = vmatprep.subr.bf16.mxu0 0
      %862 = vmatpush1.bf16.msra.mxu0 0
      %863 = vmatprep.subr.bf16.mxu0 0
      %864 = vmatpush1.bf16.msra.mxu0 0
      %865 = vmatprep.subr.bf16.mxu0 0
      %866 = vmatpush1.bf16.msra.mxu0 0
      %867 = vmatprep.subr.bf16.mxu0 0
      %868 = vmatpush1.bf16.msra.mxu0 0
      %869 = vmatprep.subr.bf16.mxu0 0
      %870 = vmatpush1.bf16.msra.mxu0 0
      %871 = vmatprep.mubr.bf16.mxu0 0
      %872 = vmatmul.mubr.bf16.gmra.mrb[0].mxu0 %v834
      %v873 = vpop.f32.mrb[0].mxu0
      %v874 = vadd.f32 %v828, %v873
      %v875 = vpop.f32.mrb[0].mxu0
      %v876 = vpop.f32.mrb[0].mxu0
      %v877 = vpop.f32.mrb[0].mxu0
      %878 = vdwg.mxu0
      %879 = vrot.lane.b32.xlu0 %v540, 112
      %v880 = vpop.permute.xlu0 %879
      %881 = vrot.lane.b32.xlu0 %v541, 112
      %v882 = vpop.permute.xlu0 %881
      %883 = vrot.lane.b32.xlu0 %v542, 112
      %v884 = vpop.permute.xlu0 %883
      %v886 = vsel %vm543, %v880, 0
      %v889 = vsel %vm543, %v882, 0
      %v892 = vsel %vm543, %v884, 0
      %894 = vmatprep.subr.bf16.mxu0 0
      %895 = vmatpush1.bf16.xpose.msra.mxu0 %v889
      %896 = vmatprep.subr.bf16.mxu0 0
      %897 = vmatpush1.bf16.xpose.msra.mxu0 %v892
      %898 = vmatprep.subr.bf16.mxu0 0
      %899 = vmatpush1.bf16.xpose.msra.mxu0 0
      %900 = vmatprep.subr.bf16.mxu0 0
      %901 = vmatpush1.bf16.xpose.msra.mxu0 0
      %902 = vmatprep.subr.bf16.mxu0 0
      %903 = vmatpush1.bf16.xpose.msra.mxu0 0
      %904 = vmatprep.subr.bf16.mxu0 0
      %905 = vmatpush1.bf16.xpose.msra.mxu0 0
      %906 = vmatprep.subr.bf16.mxu0 0
      %907 = vmatpush1.bf16.xpose.msra.mxu0 0
      %908 = vmatprep.subr.bf16.mxu0 0
      %909 = vmatpush1.bf16.xpose.msra.mxu0 0
      %910 = vmatprep.subr.bf16.mxu0 0
      %911 = vmatpush1.bf16.xpose.msra.mxu0 0
      %912 = vmatprep.subr.bf16.mxu0 0
      %913 = vmatpush1.bf16.xpose.msra.mxu0 0
      %914 = vmatprep.subr.bf16.mxu0 0
      %915 = vmatpush1.bf16.xpose.msra.mxu0 0
      %916 = vmatprep.subr.bf16.mxu0 0
      %917 = vmatpush1.bf16.xpose.msra.mxu0 0
      %918 = vmatprep.subr.bf16.mxu0 0
      %919 = vmatpush1.bf16.xpose.msra.mxu0 0
      %920 = vmatprep.subr.bf16.mxu0 0
      %921 = vmatpush1.bf16.xpose.msra.mxu0 0
      %922 = vmatprep.subr.bf16.mxu0 0
      %923 = vmatpush1.bf16.xpose.msra.mxu0 0
      %924 = vmatprep.subr.bf16.mxu0 0
      %925 = vmatpush1.bf16.xpose.msra.mxu0 0
      %926 = vmatprep.mubr.bf16.mxu0 0
      %927 = vmatmul.mubr.bf16.gmra.mrb[0].mxu0 %v886
      %v928 = vpop.f32.mrb[0].mxu0
      %v929 = vadd.f32 0.0, %v928
      %v930 = vpop.f32.mrb[0].mxu0
      %v931 = vpop.f32.mrb[0].mxu0
      %v932 = vpop.f32.mrb[0].mxu0
      %933 = vdwg.mxu0
      %v934 = vsel %vm593, %v929, -inf
      %935 = vmax.xlane.f32.xlu0 %v934
      %v936 = vpop.xlane.xlu0 %935
      %v937 = vsub.f32 %v929, %v936
      %v938 = vmul.f32 %v937, 1.442695
      %v939 = vpow.pop %v938
      %v940 = vsel %vm593, %v939, 0.0
      %941 = vadd.xlane.f32.xlu0 %v940
      %v942 = vpop.xlane.xlu0 %941
      %v943 = vrcp.pop %v942
      %v944 = vmul.f32 %v939, %v943
      %v945 = vpack.c.bf16 %v944, %v944
      %946 = vrot.lane.b32.xlu0 %v541, 80
      %v947 = vpop.permute.xlu0 %946
      %948 = vrot.lane.b32.xlu0 %v542, 80
      %v949 = vpop.permute.xlu0 %948
      %v952 = vsel %vm613, %v945, 0
      %v955 = vand.u32 %v949, %v619
      %957 = vmatprep.subr.bf16.mxu0 0
      %958 = vmatpush1.bf16.msra.mxu0 %v947
      %959 = vmatprep.subr.bf16.mxu0 0
      %960 = vmatpush1.bf16.msra.mxu0 %v955
      %961 = vmatprep.subr.bf16.mxu0 0
      %962 = vmatpush1.bf16.msra.mxu0 0
      %963 = vmatprep.subr.bf16.mxu0 0
      %964 = vmatpush1.bf16.msra.mxu0 0
      %965 = vmatprep.subr.bf16.mxu0 0
      %966 = vmatpush1.bf16.msra.mxu0 0
      %967 = vmatprep.subr.bf16.mxu0 0
      %968 = vmatpush1.bf16.msra.mxu0 0
      %969 = vmatprep.subr.bf16.mxu0 0
      %970 = vmatpush1.bf16.msra.mxu0 0
      %971 = vmatprep.subr.bf16.mxu0 0
      %972 = vmatpush1.bf16.msra.mxu0 0
      %973 = vmatprep.subr.bf16.mxu0 0
      %974 = vmatpush1.bf16.msra.mxu0 0
      %975 = vmatprep.subr.bf16.mxu0 0
      %976 = vmatpush1.bf16.msra.mxu0 0
      %977 = vmatprep.subr.bf16.mxu0 0
      %978 = vmatpush1.bf16.msra.mxu0 0
      %979 = vmatprep.subr.bf16.mxu0 0
      %980 = vmatpush1.bf16.msra.mxu0 0
      %981 = vmatprep.subr.bf16.mxu0 0
      %982 = vmatpush1.bf16.msra.mxu0 0
      %983 = vmatprep.subr.bf16.mxu0 0
      %984 = vmatpush1.bf16.msra.mxu0 0
      %985 = vmatprep.subr.bf16.mxu0 0
      %986 = vmatpush1.bf16.msra.mxu0 0
      %987 = vmatprep.subr.bf16.mxu0 0
      %988 = vmatpush1.bf16.msra.mxu0 0
      %989 = vmatprep.mubr.bf16.mxu0 0
      %990 = vmatmul.mubr.bf16.gmra.mrb[0].mxu0 %v952
      %v991 = vpop.f32.mrb[0].mxu0
      %v992 = vadd.f32 0.0, %v991
      %v993 = vpop.f32.mrb[0].mxu0
      %v994 = vpop.f32.mrb[0].mxu0
      %v995 = vpop.f32.mrb[0].mxu0
      %996 = vdwg.mxu0
      %v997 = vpack.c.bf16 %v992, %v992
      %v998 = vpack.c.bf16 %v538, %v538
      %v1000 = vsel %vm543, %v997, 0
      %v1003 = vsel %vm789, %v998, 0
      %1005 = vmatprep.subr.bf16.mxu0 0
      %1006 = vmatpush1.bf16.msra.mxu0 %v1003
      %1007 = vmatprep.subr.bf16.mxu0 0
      %1008 = vmatpush1.bf16.msra.mxu0 0
      %1009 = vmatprep.subr.bf16.mxu0 0
      %1010 = vmatpush1.bf16.msra.mxu0 0
      %1011 = vmatprep.subr.bf16.mxu0 0
      %1012 = vmatpush1.bf16.msra.mxu0 0
      %1013 = vmatprep.subr.bf16.mxu0 0
      %1014 = vmatpush1.bf16.msra.mxu0 0
      %1015 = vmatprep.subr.bf16.mxu0 0
      %1016 = vmatpush1.bf16.msra.mxu0 0
      %1017 = vmatprep.subr.bf16.mxu0 0
      %1018 = vmatpush1.bf16.msra.mxu0 0
      %1019 = vmatprep.subr.bf16.mxu0 0
      %1020 = vmatpush1.bf16.msra.mxu0 0
      %1021 = vmatprep.subr.bf16.mxu0 0
      %1022 = vmatpush1.bf16.msra.mxu0 0
      %1023 = vmatprep.subr.bf16.mxu0 0
      %1024 = vmatpush1.bf16.msra.mxu0 0
      %1025 = vmatprep.subr.bf16.mxu0 0
      %1026 = vmatpush1.bf16.msra.mxu0 0
      %1027 = vmatprep.subr.bf16.mxu0 0
      %1028 = vmatpush1.bf16.msra.mxu0 0
      %1029 = vmatprep.subr.bf16.mxu0 0
      %1030 = vmatpush1.bf16.msra.mxu0 0
      %1031 = vmatprep.subr.bf16.mxu0 0
      %1032 = vmatpush1.bf16.msra.mxu0 0
      %1033 = vmatprep.subr.bf16.mxu0 0
      %1034 = vmatpush1.bf16.msra.mxu0 0
      %1035 = vmatprep.subr.bf16.mxu0 0
      %1036 = vmatpush1.bf16.msra.mxu0 0
      %1037 = vmatprep.mubr.bf16.mxu0 0
      %1038 = vmatmul.mubr.bf16.gmra.mrb[0].mxu0 %v1000
      %v1039 = vpop.f32.mrb[0].mxu0
      %v1040 = vadd.f32 0.0, %v1039
      %v1041 = vpop.f32.mrb[0].mxu0
      %v1042 = vpop.f32.mrb[0].mxu0
      %v1043 = vpop.f32.mrb[0].mxu0
      %1044 = vdwg.mxu0
      %v1045 = vadd.f32 %v874, %v1040
      %1046 = vrot.lane.b32.xlu0 %v540, 104
      %v1047 = vpop.permute.xlu0 %1046
      %1048 = vrot.lane.b32.xlu0 %v541, 104
      %v1049 = vpop.permute.xlu0 %1048
      %1050 = vrot.lane.b32.xlu0 %v542, 104
      %v1051 = vpop.permute.xlu0 %1050
      %v1053 = vsel %vm543, %v1047, 0
      %v1056 = vsel %vm543, %v1049, 0
      %v1059 = vsel %vm543, %v1051, 0
      %1061 = vmatprep.subr.bf16.mxu0 0
      %1062 = vmatpush1.bf16.xpose.msra.mxu0 %v1056
      %1063 = vmatprep.subr.bf16.mxu0 0
      %1064 = vmatpush1.bf16.xpose.msra.mxu0 %v1059
      %1065 = vmatprep.subr.bf16.mxu0 0
      %1066 = vmatpush1.bf16.xpose.msra.mxu0 0
      %1067 = vmatprep.subr.bf16.mxu0 0
      %1068 = vmatpush1.bf16.xpose.msra.mxu0 0
      %1069 = vmatprep.subr.bf16.mxu0 0
      %1070 = vmatpush1.bf16.xpose.msra.mxu0 0
      %1071 = vmatprep.subr.bf16.mxu0 0
      %1072 = vmatpush1.bf16.xpose.msra.mxu0 0
      %1073 = vmatprep.subr.bf16.mxu0 0
      %1074 = vmatpush1.bf16.xpose.msra.mxu0 0
      %1075 = vmatprep.subr.bf16.mxu0 0
      %1076 = vmatpush1.bf16.xpose.msra.mxu0 0
      %1077 = vmatprep.subr.bf16.mxu0 0
      %1078 = vmatpush1.bf16.xpose.msra.mxu0 0
      %1079 = vmatprep.subr.bf16.mxu0 0
      %1080 = vmatpush1.bf16.xpose.msra.mxu0 0
      %1081 = vmatprep.subr.bf16.mxu0 0
      %1082 = vmatpush1.bf16.xpose.msra.mxu0 0
      %1083 = vmatprep.subr.bf16.mxu0 0
      %1084 = vmatpush1.bf16.xpose.msra.mxu0 0
      %1085 = vmatprep.subr.bf16.mxu0 0
      %1086 = vmatpush1.bf16.xpose.msra.mxu0 0
      %1087 = vmatprep.subr.bf16.mxu0 0
      %1088 = vmatpush1.bf16.xpose.msra.mxu0 0
      %1089 = vmatprep.subr.bf16.mxu0 0
      %1090 = vmatpush1.bf16.xpose.msra.mxu0 0
      %1091 = vmatprep.subr.bf16.mxu0 0
      %1092 = vmatpush1.bf16.xpose.msra.mxu0 0
      %1093 = vmatprep.mubr.bf16.mxu0 0
      %1094 = vmatmul.mubr.bf16.gmra.mrb[0].mxu0 %v1053
      %v1095 = vpop.f32.mrb[0].mxu0
      %v1096 = vadd.f32 0.0, %v1095
      %v1097 = vpop.f32.mrb[0].mxu0
      %v1098 = vpop.f32.mrb[0].mxu0
      %v1099 = vpop.f32.mrb[0].mxu0
      %1100 = vdwg.mxu0
      %v1101 = vsel %vm593, %v1096, -inf
      %1102 = vmax.xlane.f32.xlu0 %v1101
      %v1103 = vpop.xlane.xlu0 %1102
      %v1104 = vsub.f32 %v1096, %v1103
      %v1105 = vmul.f32 %v1104, 1.442695
      %v1106 = vpow.pop %v1105
      %v1107 = vsel %vm593, %v1106, 0.0
      %1108 = vadd.xlane.f32.xlu0 %v1107
      %v1109 = vpop.xlane.xlu0 %1108
      %v1110 = vrcp.pop %v1109
      %v1111 = vmul.f32 %v1106, %v1110
      %v1112 = vpack.c.bf16 %v1111, %v1111
      %1113 = vrot.lane.b32.xlu0 %v541, 72
      %v1114 = vpop.permute.xlu0 %1113
      %1115 = vrot.lane.b32.xlu0 %v542, 72
      %v1116 = vpop.permute.xlu0 %1115
      %v1119 = vsel %vm613, %v1112, 0
      %v1122 = vand.u32 %v1116, %v619
      %1124 = vmatprep.subr.bf16.mxu0 0
      %1125 = vmatpush1.bf16.msra.mxu0 %v1114
      %1126 = vmatprep.subr.bf16.mxu0 0
      %1127 = vmatpush1.bf16.msra.mxu0 %v1122
      %1128 = vmatprep.subr.bf16.mxu0 0
      %1129 = vmatpush1.bf16.msra.mxu0 0
      %1130 = vmatprep.subr.bf16.mxu0 0
      %1131 = vmatpush1.bf16.msra.mxu0 0
      %1132 = vmatprep.subr.bf16.mxu0 0
      %1133 = vmatpush1.bf16.msra.mxu0 0
      %1134 = vmatprep.subr.bf16.mxu0 0
      %1135 = vmatpush1.bf16.msra.mxu0 0
      %1136 = vmatprep.subr.bf16.mxu0 0
      %1137 = vmatpush1.bf16.msra.mxu0 0
      %1138 = vmatprep.subr.bf16.mxu0 0
      %1139 = vmatpush1.bf16.msra.mxu0 0
      %1140 = vmatprep.subr.bf16.mxu0 0
      %1141 = vmatpush1.bf16.msra.mxu0 0
      %1142 = vmatprep.subr.bf16.mxu0 0
      %1143 = vmatpush1.bf16.msra.mxu0 0
      %1144 = vmatprep.subr.bf16.mxu0 0
      %1145 = vmatpush1.bf16.msra.mxu0 0
      %1146 = vmatprep.subr.bf16.mxu0 0
      %1147 = vmatpush1.bf16.msra.mxu0 0
      %1148 = vmatprep.subr.bf16.mxu0 0
      %1149 = vmatpush1.bf16.msra.mxu0 0
      %1150 = vmatprep.subr.bf16.mxu0 0
      %1151 = vmatpush1.bf16.msra.mxu0 0
      %1152 = vmatprep.subr.bf16.mxu0 0
      %1153 = vmatpush1.bf16.msra.mxu0 0
      %1154 = vmatprep.subr.bf16.mxu0 0
      %1155 = vmatpush1.bf16.msra.mxu0 0
      %1156 = vmatprep.mubr.bf16.mxu0 0
      %1157 = vmatmul.mubr.bf16.gmra.mrb[0].mxu0 %v1119
      %v1158 = vpop.f32.mrb[0].mxu0
      %v1159 = vadd.f32 0.0, %v1158
      %v1160 = vpop.f32.mrb[0].mxu0
      %v1161 = vpop.f32.mrb[0].mxu0
      %v1162 = vpop.f32.mrb[0].mxu0
      %1163 = vdwg.mxu0
      %v1164 = vpack.c.bf16 %v1159, %v1159
      %v1165 = vpack.c.bf16 %v539, %v539
      %v1167 = vsel %vm543, %v1164, 0
      %v1170 = vsel %vm789, %v1165, 0
      %1172 = vmatprep.subr.bf16.mxu0 0
      %1173 = vmatpush1.bf16.msra.mxu0 %v1170
      %1174 = vmatprep.subr.bf16.mxu0 0
      %1175 = vmatpush1.bf16.msra.mxu0 0
      %1176 = vmatprep.subr.bf16.mxu0 0
      %1177 = vmatpush1.bf16.msra.mxu0 0
      %1178 = vmatprep.subr.bf16.mxu0 0
      %1179 = vmatpush1.bf16.msra.mxu0 0
      %1180 = vmatprep.subr.bf16.mxu0 0
      %1181 = vmatpush1.bf16.msra.mxu0 0
      %1182 = vmatprep.subr.bf16.mxu0 0
      %1183 = vmatpush1.bf16.msra.mxu0 0
      %1184 = vmatprep.subr.bf16.mxu0 0
      %1185 = vmatpush1.bf16.msra.mxu0 0
      %1186 = vmatprep.subr.bf16.mxu0 0
      %1187 = vmatpush1.bf16.msra.mxu0 0
      %1188 = vmatprep.subr.bf16.mxu0 0
      %1189 = vmatpush1.bf16.msra.mxu0 0
      %1190 = vmatprep.subr.bf16.mxu0 0
      %1191 = vmatpush1.bf16.msra.mxu0 0
      %1192 = vmatprep.subr.bf16.mxu0 0
      %1193 = vmatpush1.bf16.msra.mxu0 0
      %1194 = vmatprep.subr.bf16.mxu0 0
      %1195 = vmatpush1.bf16.msra.mxu0 0
      %1196 = vmatprep.subr.bf16.mxu0 0
      %1197 = vmatpush1.bf16.msra.mxu0 0
      %1198 = vmatprep.subr.bf16.mxu0 0
      %1199 = vmatpush1.bf16.msra.mxu0 0
      %1200 = vmatprep.subr.bf16.mxu0 0
      %1201 = vmatpush1.bf16.msra.mxu0 0
      %1202 = vmatprep.subr.bf16.mxu0 0
      %1203 = vmatpush1.bf16.msra.mxu0 0
      %1204 = vmatprep.mubr.bf16.mxu0 0
      %1205 = vmatmul.mubr.bf16.gmra.mrb[0].mxu0 %v1167
      %v1206 = vpop.f32.mrb[0].mxu0
      %v1207 = vadd.f32 0.0, %v1206
      %v1208 = vpop.f32.mrb[0].mxu0
      %v1209 = vpop.f32.mrb[0].mxu0
      %v1210 = vpop.f32.mrb[0].mxu0
      %1211 = vdwg.mxu0
      %v1212 = vadd.f32 %v1045, %v1207
      %v1213 = vadd.f32 %v330, %v1212
      %v1214 = vld [vmem:[%s8] sm:$0x1]
      %v1215 = vadd.f32 %v1213, %v1214
      %1216 = vst.msk [vmem:[%s328] sm:$0x1] %vm342, %v1215
      %p1217 = scmp.lt.s32.totalorder %s20, 1
      %s1218 = scalar_select %p1217, %s20, 1
      %s1219 = scalar_lea.vmem %s9, %s1218
      // Predicated region
      $region57: #{_lambda_.22} parent=55 // pred_check
        %p1220 = pneg %p232
      $region58: #{_lambda_.22} parent=55 // pred_check_branch
        %1222 = sbr.rel (%p1220) target = $region60
      $region59: #{_lambda_.22} parent=55 // pred_region
        _
      $region60: #{_lambda_.22} parent=55 // pred_fallthru
        _
    $region56: #{_lambda_.22} parent=5 // pred_fallthru
      _
    %p1223 = scmp.le.s32.totalorder 2, %s15
    // Predicated region
    $region61: #{_lambda_.22} parent=5 // pred_check
      %p1224 = pneg %p1223
    $region62: #{_lambda_.22} parent=5 // pred_check_branch
      %1226 = sbr.rel (%p1224) target = $region64
    $region63: #{_lambda_.22} parent=5 // pred_region
      %s1227 = ssub.s32 %s15, 2
      // Predicated region
      $region65: #{_lambda_.22} parent=63 // pred_check
        %p1228 = pneg %p238
      $region66: #{_lambda_.22} parent=63 // pred_check_branch
        %1230 = sbr.rel (%p1228) target = $region68
      $region67: #{_lambda_.22} parent=63 // pred_region
        %p1231 = scmp.lt.s32.totalorder %s21, 1
        %s1232 = scalar_select %p1231, %s21, 1
        %s1233 = scalar_lea.vmem %s9, %s1232
      $region68: #{_lambda_.22} parent=63 // pred_fallthru
        _
    $region64: #{_lambda_.22} parent=5 // pred_fallthru
      _
  $region6: #{_lambda_.22} parent=0 // loop_footer
    %s19 = sadd.s32 1, %s15
  $region7: #{_lambda_.22} parent=0 // loop_footer_branch
    %14 = sbr.rel target = $region3
  $region8: #{_lambda_.22} parent=0 // loop_exit
    _

// kernel: _lambda_.25
$region0: #{_lambda_.25}
  #allocation0 [shape = 'u32[]', space=smem, size = 0x4, offset = 0x4, fixed_abs, tag = 'smem constant byte address 0x4 - core index']
  #allocation1 [shape = 'u32[144,128]{1,0:T(1,128)}', space=vmem, size = 0x12000, scoped, tag = 'internal scratch']
  %s0 = inlined_call_operand.vmem [shape: f32[2,64], index: 0, kind: input, shape index: {}]
  %s1 = inlined_call_operand.vmem [shape: f32[1,64], index: 1, kind: input, shape index: {}]
  %s2 = inlined_call_operand.vmem [shape: f32[1,64], index: 2, kind: input, shape index: {}]
  %s3 = inlined_call_operand.vmem [shape: bf16[64,128], index: 3, kind: input, shape index: {}]
  %s4 = inlined_call_operand.vmem [shape: f32[1,128], index: 4, kind: input, shape index: {}]
  %s5 = inlined_call_operand.vmem [shape: f32[2,128], index: 5, kind: output, shape index: {}]
  %s6 = sld [smem:[#allocation0]]
  $region30: #{_lambda_.25} parent=0
    _
  %s8 = ssub.s32 1, %s6
  %s9 = scalar_select 0, %s8, %s6
  // Predicated region
  $region2: #{_lambda_.25} parent=0 // pred_check
    _
  $region3: #{_lambda_.25} parent=0 // pred_check_branch
    %11 = sbr.rel (0) target = $region5
  $region4: #{_lambda_.25} parent=0 // pred_region
    _
  $region5: #{_lambda_.25} parent=0 // pred_fallthru
    _
  // Predicated region
  $region6: #{_lambda_.25} parent=0 // pred_check
    _
  $region7: #{_lambda_.25} parent=0 // pred_check_branch
    %13 = sbr.rel (0) target = $region9
  $region8: #{_lambda_.25} parent=0 // pred_region
    _
  $region9: #{_lambda_.25} parent=0 // pred_fallthru
    _
  // Predicated region
  $region10: #{_lambda_.25} parent=0 // pred_check
    _
  $region11: #{_lambda_.25} parent=0 // pred_check_branch
    %15 = sbr.rel (0) target = $region13
  $region12: #{_lambda_.25} parent=0 // pred_region
    _
  $region13: #{_lambda_.25} parent=0 // pred_fallthru
    _
  // Predicated region
  $region14: #{_lambda_.25} parent=0 // pred_check
    _
  $region15: #{_lambda_.25} parent=0 // pred_check_branch
    %17 = sbr.rel (0) target = $region17
  $region16: #{_lambda_.25} parent=0 // pred_region
    _
  $region17: #{_lambda_.25} parent=0 // pred_fallthru
    _
  // Predicated region
  $region18: #{_lambda_.25} parent=0 // pred_check
    _
  $region19: #{_lambda_.25} parent=0 // pred_check_branch
    %19 = sbr.rel (0) target = $region21
  $region20: #{_lambda_.25} parent=0 // pred_region
    _
  $region21: #{_lambda_.25} parent=0 // pred_fallthru
    _
  %v21 = vld [vmem:[%s0] sm:$0x3]
  %v22 = vld [vmem:[%s1] sm:$0x1]
  %v23 = vld [vmem:[%s2] sm:$0x1]
  %vm24 = vcmask 517120
  %v25 = vsel %vm24, %v21, 0.0
  %26 = vadd.xlane.f32.xlu0 %v25
  %v27 = vpop.xlane.xlu0 %26
  %v28 = vrcp.pop 64.0
  %v29 = vmul.f32 %v27, %v28
  %v30 = vsub.f32 %v21, %v29
  %v31 = vmul.f32 %v30, %v30
  %v32 = vsel %vm24, %v31, 0.0
  %33 = vadd.xlane.f32.xlu0 %v32
  %v34 = vpop.xlane.xlu0 %33
  %v35 = vmul.f32 %v34, %v28
  %v36 = vadd.f32 %v35, 1e-05
  %v37 = vrsqrt.pop %v36
  %v38 = vmul.f32 %v30, %v37
  %v40 = vlaneseq
  %v41 = vshrl.u32 %v40, 7
  %v42 = vsub.s32 0, %v41
  %v43 = vrot.slane %v22, %v42
  %v45 = vmul.f32 %v38, %v43
  %v47 = vlaneseq
  %v48 = vshrl.u32 %v47, 7
  %v49 = vsub.s32 0, %v48
  %v50 = vrot.slane %v23, %v49
  %v52 = vadd.f32 %v45, %v50
  %v53 = vld [vmem:[%s3] sm:$0xf]
  %v54 = vld [vmem:[%s3 + $0x4] sm:$0xf]
  %v55 = vld [vmem:[%s3 + $0x8] sm:$0xf]
  %v56 = vld [vmem:[%s3 + $0xc] sm:$0xf]
  %v57 = vld [vmem:[%s3 + $0x10] sm:$0xf]
  %v58 = vld [vmem:[%s3 + $0x14] sm:$0xf]
  %v59 = vld [vmem:[%s3 + $0x18] sm:$0xf]
  %v60 = vld [vmem:[%s3 + $0x1c] sm:$0xf]
  %v61 = vpack.c.bf16 %v52, %v52
  %v62 = vld [vmem:[%s4] sm:$0x1]
  %v64 = vlaneseq
  %v65 = vshrl.u32 %v64, 7
  %v66 = vsub.s32 0, %v65
  %v67 = vrot.slane %v62, %v66
  %v77 = vunpack.c.l.b16 %v53
  %v78 = vunpack.c.l.b16 %v54
  %v79 = vunpack.c.l.b16 %v55
  %v80 = vunpack.c.l.b16 %v56
  %v81 = vunpack.c.l.b16 %v57
  %v82 = vunpack.c.l.b16 %v58
  %v83 = vunpack.c.l.b16 %v59
  %v84 = vunpack.c.l.b16 %v60
  %v85 = vpack.c.b16 %v78, %v77
  %v86 = vpack.c.b16 %v80, %v79
  %v87 = vpack.c.b16 %v82, %v81
  %v88 = vpack.c.b16 %v84, %v83
  %vm93 = vcmask 523264
  %v95 = vsel %vm93, %v61, 0
  %97 = vmatprep.subr.bf16.mxu0 0
  %98 = vmatpush1.bf16.msra.mxu0 %v85
  %99 = vmatprep.subr.bf16.mxu0 0
  %100 = vmatpush1.bf16.msra.mxu0 %v86
  %101 = vmatprep.subr.bf16.mxu0 0
  %102 = vmatpush1.bf16.msra.mxu0 %v87
  %103 = vmatprep.subr.bf16.mxu0 0
  %104 = vmatpush1.bf16.msra.mxu0 %v88
  %105 = vmatprep.subr.bf16.mxu0 0
  %106 = vmatpush1.bf16.msra.mxu0 0
  %107 = vmatprep.subr.bf16.mxu0 0
  %108 = vmatpush1.bf16.msra.mxu0 0
  %109 = vmatprep.subr.bf16.mxu0 0
  %110 = vmatpush1.bf16.msra.mxu0 0
  %111 = vmatprep.subr.bf16.mxu0 0
  %112 = vmatpush1.bf16.msra.mxu0 0
  %113 = vmatprep.subr.bf16.mxu0 0
  %114 = vmatpush1.bf16.msra.mxu0 0
  %115 = vmatprep.subr.bf16.mxu0 0
  %116 = vmatpush1.bf16.msra.mxu0 0
  %117 = vmatprep.subr.bf16.mxu0 0
  %118 = vmatpush1.bf16.msra.mxu0 0
  %119 = vmatprep.subr.bf16.mxu0 0
  %120 = vmatpush1.bf16.msra.mxu0 0
  %121 = vmatprep.subr.bf16.mxu0 0
  %122 = vmatpush1.bf16.msra.mxu0 0
  %123 = vmatprep.subr.bf16.mxu0 0
  %124 = vmatpush1.bf16.msra.mxu0 0
  %125 = vmatprep.subr.bf16.mxu0 0
  %126 = vmatpush1.bf16.msra.mxu0 0
  %127 = vmatprep.subr.bf16.mxu0 0
  %128 = vmatpush1.bf16.msra.mxu0 0
  %129 = vmatprep.mubr.bf16.mxu0 0
  %130 = vmatmul.mubr.bf16.gmra.mrb[0].mxu0 %v95
  %v131 = vpop.f32.mrb[0].mxu0
  %v132 = vadd.f32 %v67, %v131
  %v133 = vpop.f32.mrb[0].mxu0
  %v134 = vpop.f32.mrb[0].mxu0
  %v135 = vpop.f32.mrb[0].mxu0
  %136 = vdwg.mxu0
  %137 = vst [vmem:[%s5] sm:$0x3] %v132
  // Predicated region
  $region22: #{_lambda_.25} parent=0 // pred_check
    _
  $region23: #{_lambda_.25} parent=0 // pred_check_branch
    %139 = sbr.rel (0) target = $region25
  $region24: #{_lambda_.25} parent=0 // pred_region
    _
  $region25: #{_lambda_.25} parent=0 // pred_fallthru
    _
  // Predicated region
  $region26: #{_lambda_.25} parent=0 // pred_check
    _
  $region27: #{_lambda_.25} parent=0 // pred_check_branch
    %141 = sbr.rel (0) target = $region29
  $region28: #{_lambda_.25} parent=0 // pred_region
    _
  $region29: #{_lambda_.25} parent=0 // pred_fallthru
    _

// kernel: _lambda_.24
$region0: #{_lambda_.24}
  #allocation0 [shape = 'u32[]', space=smem, size = 0x4, offset = 0x4, fixed_abs, tag = 'smem constant byte address 0x4 - core index']
  #allocation1 [shape = 'u32[144,128]{1,0:T(1,128)}', space=vmem, size = 0x12000, scoped, tag = 'internal scratch']
  %s0 = inlined_call_operand.vmem [shape: f32[2,32], index: 0, kind: input, shape index: {}]
  %s1 = inlined_call_operand.vmem [shape: f32[1,32], index: 1, kind: input, shape index: {}]
  %s2 = inlined_call_operand.vmem [shape: f32[1,32], index: 2, kind: input, shape index: {}]
  %s3 = inlined_call_operand.vmem [shape: bf16[32,128], index: 3, kind: input, shape index: {}]
  %s4 = inlined_call_operand.vmem [shape: f32[1,128], index: 4, kind: input, shape index: {}]
  %s5 = inlined_call_operand.vmem [shape: f32[2,128], index: 5, kind: output, shape index: {}]
  %s6 = sld [smem:[#allocation0]]
  $region30: #{_lambda_.24} parent=0
    _
  %s8 = ssub.s32 1, %s6
  %s9 = scalar_select 0, %s8, %s6
  // Predicated region
  $region2: #{_lambda_.24} parent=0 // pred_check
    _
  $region3: #{_lambda_.24} parent=0 // pred_check_branch
    %11 = sbr.rel (0) target = $region5
  $region4: #{_lambda_.24} parent=0 // pred_region
    _
  $region5: #{_lambda_.24} parent=0 // pred_fallthru
    _
  // Predicated region
  $region6: #{_lambda_.24} parent=0 // pred_check
    _
  $region7: #{_lambda_.24} parent=0 // pred_check_branch
    %13 = sbr.rel (0) target = $region9
  $region8: #{_lambda_.24} parent=0 // pred_region
    _
  $region9: #{_lambda_.24} parent=0 // pred_fallthru
    _
  // Predicated region
  $region10: #{_lambda_.24} parent=0 // pred_check
    _
  $region11: #{_lambda_.24} parent=0 // pred_check_branch
    %15 = sbr.rel (0) target = $region13
  $region12: #{_lambda_.24} parent=0 // pred_region
    _
  $region13: #{_lambda_.24} parent=0 // pred_fallthru
    _
  // Predicated region
  $region14: #{_lambda_.24} parent=0 // pred_check
    _
  $region15: #{_lambda_.24} parent=0 // pred_check_branch
    %17 = sbr.rel (0) target = $region17
  $region16: #{_lambda_.24} parent=0 // pred_region
    _
  $region17: #{_lambda_.24} parent=0 // pred_fallthru
    _
  // Predicated region
  $region18: #{_lambda_.24} parent=0 // pred_check
    _
  $region19: #{_lambda_.24} parent=0 // pred_check_branch
    %19 = sbr.rel (0) target = $region21
  $region20: #{_lambda_.24} parent=0 // pred_region
    _
  $region21: #{_lambda_.24} parent=0 // pred_fallthru
    _
  %v21 = vld [vmem:[%s0] sm:$0x3]
  %v22 = vld [vmem:[%s1] sm:$0x1]
  %v23 = vld [vmem:[%s2] sm:$0x1]
  %vm24 = vcmask 254976
  %v25 = vsel %vm24, %v21, 0.0
  %26 = vadd.xlane.f32.xlu0 %v25
  %v27 = vpop.xlane.xlu0 %26
  %v28 = vrcp.pop 32.0
  %v29 = vmul.f32 %v27, %v28
  %v30 = vsub.f32 %v21, %v29
  %v31 = vmul.f32 %v30, %v30
  %v32 = vsel %vm24, %v31, 0.0
  %33 = vadd.xlane.f32.xlu0 %v32
  %v34 = vpop.xlane.xlu0 %33
  %v35 = vmul.f32 %v34, %v28
  %v36 = vadd.f32 %v35, 1e-05
  %v37 = vrsqrt.pop %v36
  %v38 = vmul.f32 %v30, %v37
  %v40 = vlaneseq
  %v41 = vshrl.u32 %v40, 7
  %v42 = vsub.s32 0, %v41
  %v43 = vrot.slane %v22, %v42
  %v45 = vmul.f32 %v38, %v43
  %v47 = vlaneseq
  %v48 = vshrl.u32 %v47, 7
  %v49 = vsub.s32 0, %v48
  %v50 = vrot.slane %v23, %v49
  %v52 = vadd.f32 %v45, %v50
  %v53 = vld [vmem:[%s3] sm:$0xf]
  %v54 = vld [vmem:[%s3 + $0x4] sm:$0xf]
  %v55 = vld [vmem:[%s3 + $0x8] sm:$0xf]
  %v56 = vld [vmem:[%s3 + $0xc] sm:$0xf]
  %v57 = vpack.c.bf16 %v52, %v52
  %v58 = vld [vmem:[%s4] sm:$0x1]
  %v60 = vlaneseq
  %v61 = vshrl.u32 %v60, 7
  %v62 = vsub.s32 0, %v61
  %v63 = vrot.slane %v58, %v62
  %v69 = vunpack.c.l.b16 %v53
  %v70 = vunpack.c.l.b16 %v54
  %v71 = vunpack.c.l.b16 %v55
  %v72 = vunpack.c.l.b16 %v56
  %v73 = vpack.c.b16 %v70, %v69
  %v74 = vpack.c.b16 %v72, %v71
  %vm77 = vcmask 261120
  %v79 = vsel %vm77, %v57, 0
  %81 = vmatprep.subr.bf16.mxu0 0
  %82 = vmatpush1.bf16.msra.mxu0 %v73
  %83 = vmatprep.subr.bf16.mxu0 0
  %84 = vmatpush1.bf16.msra.mxu0 %v74
  %85 = vmatprep.subr.bf16.mxu0 0
  %86 = vmatpush1.bf16.msra.mxu0 0
  %87 = vmatprep.subr.bf16.mxu0 0
  %88 = vmatpush1.bf16.msra.mxu0 0
  %89 = vmatprep.subr.bf16.mxu0 0
  %90 = vmatpush1.bf16.msra.mxu0 0
  %91 = vmatprep.subr.bf16.mxu0 0
  %92 = vmatpush1.bf16.msra.mxu0 0
  %93 = vmatprep.subr.bf16.mxu0 0
  %94 = vmatpush1.bf16.msra.mxu0 0
  %95 = vmatprep.subr.bf16.mxu0 0
  %96 = vmatpush1.bf16.msra.mxu0 0
  %97 = vmatprep.subr.bf16.mxu0 0
  %98 = vmatpush1.bf16.msra.mxu0 0
  %99 = vmatprep.subr.bf16.mxu0 0
  %100 = vmatpush1.bf16.msra.mxu0 0
  %101 = vmatprep.subr.bf16.mxu0 0
  %102 = vmatpush1.bf16.msra.mxu0 0
  %103 = vmatprep.subr.bf16.mxu0 0
  %104 = vmatpush1.bf16.msra.mxu0 0
  %105 = vmatprep.subr.bf16.mxu0 0
  %106 = vmatpush1.bf16.msra.mxu0 0
  %107 = vmatprep.subr.bf16.mxu0 0
  %108 = vmatpush1.bf16.msra.mxu0 0
  %109 = vmatprep.subr.bf16.mxu0 0
  %110 = vmatpush1.bf16.msra.mxu0 0
  %111 = vmatprep.subr.bf16.mxu0 0
  %112 = vmatpush1.bf16.msra.mxu0 0
  %113 = vmatprep.mubr.bf16.mxu0 0
  %114 = vmatmul.mubr.bf16.gmra.mrb[0].mxu0 %v79
  %v115 = vpop.f32.mrb[0].mxu0
  %v116 = vadd.f32 %v63, %v115
  %v117 = vpop.f32.mrb[0].mxu0
  %v118 = vpop.f32.mrb[0].mxu0
  %v119 = vpop.f32.mrb[0].mxu0
  %120 = vdwg.mxu0
  %121 = vst [vmem:[%s5] sm:$0x3] %v116
  // Predicated region
  $region22: #{_lambda_.24} parent=0 // pred_check
    _
  $region23: #{_lambda_.24} parent=0 // pred_check_branch
    %123 = sbr.rel (0) target = $region25
  $region24: #{_lambda_.24} parent=0 // pred_region
    _
  $region25: #{_lambda_.24} parent=0 // pred_fallthru
    _
  // Predicated region
  $region26: #{_lambda_.24} parent=0 // pred_check
    _
  $region27: #{_lambda_.24} parent=0 // pred_check_branch
    %125 = sbr.rel (0) target = $region29
  $region28: #{_lambda_.24} parent=0 // pred_region
    _
  $region29: #{_lambda_.24} parent=0 // pred_fallthru
    _

// kernel: _lambda_.20
$region0: #{_lambda_.20}
  #allocation0 [shape = 'u32[]', space=smem, size = 0x4, offset = 0x4, fixed_abs, tag = 'smem constant byte address 0x4 - core index']
  #allocation1 [shape = 'u32[144,128]{1,0:T(1,128)}', space=vmem, size = 0x12000, scoped, tag = 'internal scratch']
  %s0 = inlined_call_operand.vmem [shape: f32[2,5,64], index: 0, kind: input, shape index: {}]
  %s1 = inlined_call_operand.vmem [shape: f32[1,64], index: 1, kind: input, shape index: {}]
  %s2 = inlined_call_operand.vmem [shape: f32[1,64], index: 2, kind: input, shape index: {}]
  %s3 = inlined_call_operand.vmem [shape: bf16[64,64], index: 3, kind: input, shape index: {}]
  %s4 = inlined_call_operand.vmem [shape: f32[1,64], index: 4, kind: input, shape index: {}]
  %s5 = inlined_call_operand.vmem [shape: bf16[64,128], index: 5, kind: input, shape index: {}]
  %s6 = inlined_call_operand.vmem [shape: f32[1,128], index: 6, kind: input, shape index: {}]
  %s7 = inlined_call_operand.vmem [shape: f32[64,64], index: 7, kind: input, shape index: {}]
  %s8 = inlined_call_operand.vmem [shape: f32[1,64], index: 8, kind: input, shape index: {}]
  %s9 = inlined_call_operand.vmem [shape: f32[2,1,64], index: 9, kind: output, shape index: {}]
  %s10 = sld [smem:[#allocation0]]
  $region69: #{_lambda_.20} parent=0
    _
  %s12 = ssub.s32 1, %s10
  %s13 = scalar_select 0, %s12, %s10
  loop: start=0, step=1, limit=4
  $region2: #{_lambda_.20} parent=0 // loop_pre_header
    _
  $region3: #{_lambda_.20} parent=0 // loop_header
    %s15 = sphi 0, %s19
    %p16 = scmp.ge.s32.totalorder %s15, 4
    %s25 = sphi 0, %s27
    %s28 = sphi 0, %s25
    %s29 = sphi 0, %s28
    %s45 = sphi 0, %s29
    %s49 = sphi 0, %s49
    %s51 = sphi 0, %s49
    %s52 = sphi 0, %s51
    %s66 = sphi 0, %s52
    %s70 = sphi 0, %s70
    %s72 = sphi 0, %s70
    %s73 = sphi 0, %s72
    %s87 = sphi 0, %s73
    %s91 = sphi 0, %s91
    %s93 = sphi 0, %s91
    %s94 = sphi 0, %s93
    %s108 = sphi 0, %s94
    %s112 = sphi 0, %s112
    %s114 = sphi 0, %s112
    %s115 = sphi 0, %s114
    %s129 = sphi 0, %s115
    %s133 = sphi 0, %s133
    %s135 = sphi 0, %s133
    %s136 = sphi 0, %s135
    %s150 = sphi 0, %s136
    %s154 = sphi 0, %s154
    %s156 = sphi 0, %s154
    %s157 = sphi 0, %s156
    %s171 = sphi 0, %s157
    %s175 = sphi 0, %s175
    %s177 = sphi 0, %s175
    %s178 = sphi 0, %s177
    %s192 = sphi 0, %s178
    %s196 = sphi 0, %s196
    %s198 = sphi 0, %s196
    %s199 = sphi 0, %s198
    %s213 = sphi 0, %s199
    %s219 = sphi 0, %s221
    %s222 = sphi 0, %s219
    %s223 = sphi 0, %s222
    %s239 = sphi 0, %s223
  $region4: #{_lambda_.20} parent=0 // loop_header_branch
    %18 = sbr.rel (%p16) target = $region8
  $region5: #{_lambda_.20} parent=0 // loop_body
    %s20 = ssub.s32 %s15, 1
    %s21 = ssub.s32 %s15, 2
    %s22 = sadd.s32 %s15, 1
    %s23 = ssub.s32 %s15, %s22
    %p24 = scmp.eq.s32.totalorder %s23, 0
    %s26 = sadd.s32 %s25, 1
    %s27 = scalar_select %p24, %s25, %s26
    %p30 = pneg %p24
    %p31 = scmp.eq.s32.totalorder %s15, 1
    %p32 = por %p30, %p31
    %p33 = scmp.ne.s32.totalorder %s25, %s28
    %p34 = scmp.eq.s32.totalorder %s15, 0
    %p35 = por %p33, %p34
    %p36 = scmp.ne.s32.totalorder %s25, %s28
    %p37 = scmp.eq.s32.totalorder %s20, 1
    %p38 = por %p36, %p37
    %p39 = scmp.ne.s32.totalorder %s28, %s29
    %p40 = scmp.eq.s32.totalorder %s20, 0
    %p41 = por %p39, %p40
    %p42 = scmp.ne.s32.totalorder %s28, %s29
    %p43 = scmp.eq.s32.totalorder %s21, 1
    %p44 = por %p42, %p43
    %p46 = scmp.ne.s32.totalorder %s29, %s45
    %p47 = scmp.eq.s32.totalorder %s21, 0
    %p48 = por %p46, %p47
    %s50 = sadd.s32 %s49, 1
    %p53 = scmp.eq.s32.totalorder %s15, 1
    %p54 = scmp.ne.s32.totalorder %s49, %s51
    %p55 = scmp.eq.s32.totalorder %s15, 0
    %p56 = por %p54, %p55
    %p57 = scmp.ne.s32.totalorder %s49, %s51
    %p58 = scmp.eq.s32.totalorder %s20, 1
    %p59 = por %p57, %p58
    %p60 = scmp.ne.s32.totalorder %s51, %s52
    %p61 = scmp.eq.s32.totalorder %s20, 0
    %p62 = por %p60, %p61
    %p63 = scmp.ne.s32.totalorder %s51, %s52
    %p64 = scmp.eq.s32.totalorder %s21, 1
    %p65 = por %p63, %p64
    %p67 = scmp.ne.s32.totalorder %s52, %s66
    %p68 = scmp.eq.s32.totalorder %s21, 0
    %p69 = por %p67, %p68
    %s71 = sadd.s32 %s70, 1
    %p74 = scmp.eq.s32.totalorder %s15, 1
    %p75 = scmp.ne.s32.totalorder %s70, %s72
    %p76 = scmp.eq.s32.totalorder %s15, 0
    %p77 = por %p75, %p76
    %p78 = scmp.ne.s32.totalorder %s70, %s72
    %p79 = scmp.eq.s32.totalorder %s20, 1
    %p80 = por %p78, %p79
    %p81 = scmp.ne.s32.totalorder %s72, %s73
    %p82 = scmp.eq.s32.totalorder %s20, 0
    %p83 = por %p81, %p82
    %p84 = scmp.ne.s32.totalorder %s72, %s73
    %p85 = scmp.eq.s32.totalorder %s21, 1
    %p86 = por %p84, %p85
    %p88 = scmp.ne.s32.totalorder %s73, %s87
    %p89 = scmp.eq.s32.totalorder %s21, 0
    %p90 = por %p88, %p89
    %s92 = sadd.s32 %s91, 1
    %p95 = scmp.eq.s32.totalorder %s15, 1
    %p96 = scmp.ne.s32.totalorder %s91, %s93
    %p97 = scmp.eq.s32.totalorder %s15, 0
    %p98 = por %p96, %p97
    %p99 = scmp.ne.s32.totalorder %s91, %s93
    %p100 = scmp.eq.s32.totalorder %s20, 1
    %p101 = por %p99, %p100
    %p102 = scmp.ne.s32.totalorder %s93, %s94
    %p103 = scmp.eq.s32.totalorder %s20, 0
    %p104 = por %p102, %p103
    %p105 = scmp.ne.s32.totalorder %s93, %s94
    %p106 = scmp.eq.s32.totalorder %s21, 1
    %p107 = por %p105, %p106
    %p109 = scmp.ne.s32.totalorder %s94, %s108
    %p110 = scmp.eq.s32.totalorder %s21, 0
    %p111 = por %p109, %p110
    %s113 = sadd.s32 %s112, 1
    %p116 = scmp.eq.s32.totalorder %s15, 1
    %p117 = scmp.ne.s32.totalorder %s112, %s114
    %p118 = scmp.eq.s32.totalorder %s15, 0
    %p119 = por %p117, %p118
    %p120 = scmp.ne.s32.totalorder %s112, %s114
    %p121 = scmp.eq.s32.totalorder %s20, 1
    %p122 = por %p120, %p121
    %p123 = scmp.ne.s32.totalorder %s114, %s115
    %p124 = scmp.eq.s32.totalorder %s20, 0
    %p125 = por %p123, %p124
    %p126 = scmp.ne.s32.totalorder %s114, %s115
    %p127 = scmp.eq.s32.totalorder %s21, 1
    %p128 = por %p126, %p127
    %p130 = scmp.ne.s32.totalorder %s115, %s129
    %p131 = scmp.eq.s32.totalorder %s21, 0
    %p132 = por %p130, %p131
    %s134 = sadd.s32 %s133, 1
    %p137 = scmp.eq.s32.totalorder %s15, 1
    %p138 = scmp.ne.s32.totalorder %s133, %s135
    %p139 = scmp.eq.s32.totalorder %s15, 0
    %p140 = por %p138, %p139
    %p141 = scmp.ne.s32.totalorder %s133, %s135
    %p142 = scmp.eq.s32.totalorder %s20, 1
    %p143 = por %p141, %p142
    %p144 = scmp.ne.s32.totalorder %s135, %s136
    %p145 = scmp.eq.s32.totalorder %s20, 0
    %p146 = por %p144, %p145
    %p147 = scmp.ne.s32.totalorder %s135, %s136
    %p148 = scmp.eq.s32.totalorder %s21, 1
    %p149 = por %p147, %p148
    %p151 = scmp.ne.s32.totalorder %s136, %s150
    %p152 = scmp.eq.s32.totalorder %s21, 0
    %p153 = por %p151, %p152
    %s155 = sadd.s32 %s154, 1
    %p158 = scmp.eq.s32.totalorder %s15, 1
    %p159 = scmp.ne.s32.totalorder %s154, %s156
    %p160 = scmp.eq.s32.totalorder %s15, 0
    %p161 = por %p159, %p160
    %p162 = scmp.ne.s32.totalorder %s154, %s156
    %p163 = scmp.eq.s32.totalorder %s20, 1
    %p164 = por %p162, %p163
    %p165 = scmp.ne.s32.totalorder %s156, %s157
    %p166 = scmp.eq.s32.totalorder %s20, 0
    %p167 = por %p165, %p166
    %p168 = scmp.ne.s32.totalorder %s156, %s157
    %p169 = scmp.eq.s32.totalorder %s21, 1
    %p170 = por %p168, %p169
    %p172 = scmp.ne.s32.totalorder %s157, %s171
    %p173 = scmp.eq.s32.totalorder %s21, 0
    %p174 = por %p172, %p173
    %s176 = sadd.s32 %s175, 1
    %p179 = scmp.eq.s32.totalorder %s15, 1
    %p180 = scmp.ne.s32.totalorder %s175, %s177
    %p181 = scmp.eq.s32.totalorder %s15, 0
    %p182 = por %p180, %p181
    %p183 = scmp.ne.s32.totalorder %s175, %s177
    %p184 = scmp.eq.s32.totalorder %s20, 1
    %p185 = por %p183, %p184
    %p186 = scmp.ne.s32.totalorder %s177, %s178
    %p187 = scmp.eq.s32.totalorder %s20, 0
    %p188 = por %p186, %p187
    %p189 = scmp.ne.s32.totalorder %s177, %s178
    %p190 = scmp.eq.s32.totalorder %s21, 1
    %p191 = por %p189, %p190
    %p193 = scmp.ne.s32.totalorder %s178, %s192
    %p194 = scmp.eq.s32.totalorder %s21, 0
    %p195 = por %p193, %p194
    %s197 = sadd.s32 %s196, 1
    %p200 = scmp.eq.s32.totalorder %s15, 1
    %p201 = scmp.ne.s32.totalorder %s196, %s198
    %p202 = scmp.eq.s32.totalorder %s15, 0
    %p203 = por %p201, %p202
    %p204 = scmp.ne.s32.totalorder %s196, %s198
    %p205 = scmp.eq.s32.totalorder %s20, 1
    %p206 = por %p204, %p205
    %p207 = scmp.ne.s32.totalorder %s198, %s199
    %p208 = scmp.eq.s32.totalorder %s20, 0
    %p209 = por %p207, %p208
    %p210 = scmp.ne.s32.totalorder %s198, %s199
    %p211 = scmp.eq.s32.totalorder %s21, 1
    %p212 = por %p210, %p211
    %p214 = scmp.ne.s32.totalorder %s199, %s213
    %p215 = scmp.eq.s32.totalorder %s21, 0
    %p216 = por %p214, %p215
    %s217 = ssub.s32 %s15, %s22
    %p218 = scmp.eq.s32.totalorder %s217, 0
    %s220 = sadd.s32 %s219, 1
    %s221 = scalar_select %p218, %s219, %s220
    %p224 = pneg %p218
    %p225 = scmp.eq.s32.totalorder %s15, 1
    %p226 = por %p224, %p225
    %p227 = scmp.ne.s32.totalorder %s219, %s222
    %p228 = scmp.eq.s32.totalorder %s15, 0
    %p229 = por %p227, %p228
    %p230 = scmp.ne.s32.totalorder %s219, %s222
    %p231 = scmp.eq.s32.totalorder %s20, 1
    %p232 = por %p230, %p231
    %p233 = scmp.ne.s32.totalorder %s222, %s223
    %p234 = scmp.eq.s32.totalorder %s20, 0
    %p235 = por %p233, %p234
    %p236 = scmp.ne.s32.totalorder %s222, %s223
    %p237 = scmp.eq.s32.totalorder %s21, 1
    %p238 = por %p236, %p237
    %p240 = scmp.ne.s32.totalorder %s223, %s239
    %p241 = scmp.eq.s32.totalorder %s21, 0
    %p242 = por %p240, %p241
    %p243 = scmp.le.s32.totalorder 1, %s15
    %p244 = scmp.lt.s32.totalorder %s15, 3
    %p245 = pnand %p243, %p244
    %p246 = pneg %p245
    // Predicated region
    $region9: #{_lambda_.20} parent=5 // pred_check
      _
    $region10: #{_lambda_.20} parent=5 // pred_check_branch
      %248 = sbr.rel (%p245) target = $region12
    $region11: #{_lambda_.20} parent=5 // pred_region
      %s249 = ssub.s32 %s15, 1
      // Predicated region
      $region13: #{_lambda_.20} parent=11 // pred_check
        %p250 = pneg %p62
      $region14: #{_lambda_.20} parent=11 // pred_check_branch
        %252 = sbr.rel (%p250) target = $region16
      $region15: #{_lambda_.20} parent=11 // pred_region
        _
      $region16: #{_lambda_.20} parent=11 // pred_fallthru
        _
      // Predicated region
      $region17: #{_lambda_.20} parent=11 // pred_check
        %p253 = pneg %p83
      $region18: #{_lambda_.20} parent=11 // pred_check_branch
        %255 = sbr.rel (%p253) target = $region20
      $region19: #{_lambda_.20} parent=11 // pred_region
        _
      $region20: #{_lambda_.20} parent=11 // pred_fallthru
        _
      // Predicated region
      $region21: #{_lambda_.20} parent=11 // pred_check
        %p256 = pneg %p104
      $region22: #{_lambda_.20} parent=11 // pred_check_branch
        %258 = sbr.rel (%p256) target = $region24
      $region23: #{_lambda_.20} parent=11 // pred_region
        _
      $region24: #{_lambda_.20} parent=11 // pred_fallthru
        _
      // Predicated region
      $region25: #{_lambda_.20} parent=11 // pred_check
        %p259 = pneg %p125
      $region26: #{_lambda_.20} parent=11 // pred_check_branch
        %261 = sbr.rel (%p259) target = $region28
      $region27: #{_lambda_.20} parent=11 // pred_region
        _
      $region28: #{_lambda_.20} parent=11 // pred_fallthru
        _
      // Predicated region
      $region29: #{_lambda_.20} parent=11 // pred_check
        %p262 = pneg %p146
      $region30: #{_lambda_.20} parent=11 // pred_check_branch
        %264 = sbr.rel (%p262) target = $region32
      $region31: #{_lambda_.20} parent=11 // pred_region
        _
      $region32: #{_lambda_.20} parent=11 // pred_fallthru
        _
      // Predicated region
      $region33: #{_lambda_.20} parent=11 // pred_check
        %p265 = pneg %p167
      $region34: #{_lambda_.20} parent=11 // pred_check_branch
        %267 = sbr.rel (%p265) target = $region36
      $region35: #{_lambda_.20} parent=11 // pred_region
        _
      $region36: #{_lambda_.20} parent=11 // pred_fallthru
        _
      // Predicated region
      $region37: #{_lambda_.20} parent=11 // pred_check
        %p268 = pneg %p188
      $region38: #{_lambda_.20} parent=11 // pred_check_branch
        %270 = sbr.rel (%p268) target = $region40
      $region39: #{_lambda_.20} parent=11 // pred_region
        _
      $region40: #{_lambda_.20} parent=11 // pred_fallthru
        _
      // Predicated region
      $region41: #{_lambda_.20} parent=11 // pred_check
        %p271 = pneg %p209
      $region42: #{_lambda_.20} parent=11 // pred_check_branch
        %273 = sbr.rel (%p271) target = $region44
      $region43: #{_lambda_.20} parent=11 // pred_region
        _
      $region44: #{_lambda_.20} parent=11 // pred_fallthru
        _
    $region12: #{_lambda_.20} parent=5 // pred_fallthru
      _
    %p274 = scmp.lt.s32.totalorder %s15, 2
    // Predicated region
    $region45: #{_lambda_.20} parent=5 // pred_check
      %p275 = pneg %p274
    $region46: #{_lambda_.20} parent=5 // pred_check_branch
      %277 = sbr.rel (%p275) target = $region48
    $region47: #{_lambda_.20} parent=5 // pred_region
      // Predicated region
      $region49: #{_lambda_.20} parent=47 // pred_check
        %p278 = pneg %p35
      $region50: #{_lambda_.20} parent=47 // pred_check_branch
        %280 = sbr.rel (%p278) target = $region52
      $region51: #{_lambda_.20} parent=47 // pred_region
        %p281 = scmp.lt.s32.totalorder %s15, 1
        %s282 = scalar_select %p281, %s15, 1
        %s283 = smul.addr %s282, 8
        %s284 = scalar_lea.vmem %s0, %s283
      $region52: #{_lambda_.20} parent=47 // pred_fallthru
        _
    $region48: #{_lambda_.20} parent=5 // pred_fallthru
      _
    %p285 = scmp.le.s32.totalorder 1, %s15
    %p286 = scmp.lt.s32.totalorder %s15, 3
    %p287 = pnand %p285, %p286
    %p288 = pneg %p287
    // Predicated region
    $region53: #{_lambda_.20} parent=5 // pred_check
      _
    $region54: #{_lambda_.20} parent=5 // pred_check_branch
      %290 = sbr.rel (%p287) target = $region56
    $region55: #{_lambda_.20} parent=5 // pred_region
      %s291 = ssub.s32 %s15, 1
      %p292 = scmp.lt.s32.totalorder %s20, 1
      %s293 = scalar_select %p292, %s20, 1
      %s294 = smul.addr %s293, 8
      %s295 = scalar_lea.vmem %s0, %s294
      %p296 = pneg %p41
      %p297 = pneg %p38
      %p298 = pneg %p62
      %p299 = pneg %p59
      %p300 = pneg %p83
      %p301 = pneg %p80
      %p302 = pneg %p104
      %p303 = pneg %p101
      %p304 = pneg %p125
      %p305 = pneg %p122
      %p306 = pneg %p146
      %p307 = pneg %p143
      %p308 = pneg %p167
      %p309 = pneg %p164
      %p310 = pneg %p188
      %p311 = pneg %p185
      %p312 = pneg %p209
      %p313 = pneg %p206
      %p314 = pneg %p235
      %p315 = pneg %p232
      %p316 = scmp.lt.s32.totalorder %s20, 1
      %s317 = scalar_select %p316, %s20, 1
      %s318 = scalar_lea.vmem %s9, %s317
      %p319 = scmp.lt.s32.totalorder %s20, 1
      %s320 = scalar_select %p319, %s20, 1
      %s321 = smul.addr %s320, 8
      %s322 = scalar_lea.vmem %s0, %s321
      %p323 = scmp.lt.s32.totalorder %s20, 1
      %s324 = scalar_select %p323, %s20, 1
      %s325 = scalar_lea.vmem %s9, %s324
      %v327 = vld [vmem:[%s322] sm:$0x1f]
      %v328 = vld [vmem:[%s1] sm:$0x1]
      %v329 = vld [vmem:[%s2] sm:$0x1]
      %vm330 = vcmask 520192
      %v331 = vsel %vm330, %v327, 0.0
      %332 = vadd.xlane.f32.xlu0 %v331
      %v333 = vpop.xlane.xlu0 %332
      %v334 = vrcp.pop 64.0
      %v335 = vmul.f32 %v333, %v334
      %v336 = vsub.f32 %v327, %v335
      %v337 = vmul.f32 %v336, %v336
      %v338 = vsel %vm330, %v337, 0.0
      %339 = vadd.xlane.f32.xlu0 %v338
      %v340 = vpop.xlane.xlu0 %339
      %v341 = vmul.f32 %v340, %v334
      %v342 = vadd.f32 %v341, 1e-05
      %v343 = vrsqrt.pop %v342
      %v344 = vmul.f32 %v336, %v343
      %v346 = vlaneseq
      %v347 = vshrl.u32 %v346, 7
      %v348 = vsub.s32 0, %v347
      %v349 = vrot.slane %v328, %v348
      %v351 = vmul.f32 %v344, %v349
      %v353 = vlaneseq
      %v354 = vshrl.u32 %v353, 7
      %v355 = vsub.s32 0, %v354
      %v356 = vrot.slane %v329, %v355
      %v358 = vadd.f32 %v351, %v356
      %v359 = vld [vmem:[%s3] sm:$0xf]
      %v360 = vld [vmem:[%s3 + $0x4] sm:$0xf]
      %v361 = vld [vmem:[%s3 + $0x8] sm:$0xf]
      %v362 = vld [vmem:[%s3 + $0xc] sm:$0xf]
      %v363 = vld [vmem:[%s3 + $0x10] sm:$0xf]
      %v364 = vld [vmem:[%s3 + $0x14] sm:$0xf]
      %v365 = vld [vmem:[%s3 + $0x18] sm:$0xf]
      %v366 = vld [vmem:[%s3 + $0x1c] sm:$0xf]
      %v367 = vpack.c.bf16 %v358, %v358
      %v368 = vld [vmem:[%s4] sm:$0x1]
      %v377 = vunpack.c.l.b16 %v359
      %v378 = vunpack.c.l.b16 %v360
      %v379 = vunpack.c.l.b16 %v361
      %v380 = vunpack.c.l.b16 %v362
      %v381 = vunpack.c.l.b16 %v363
      %v382 = vunpack.c.l.b16 %v364
      %v383 = vunpack.c.l.b16 %v365
      %v384 = vunpack.c.l.b16 %v366
      %v385 = vpack.c.b16 %v378, %v377
      %v386 = vpack.c.b16 %v380, %v379
      %v387 = vpack.c.b16 %v382, %v381
      %v388 = vpack.c.b16 %v384, %v383
      %vm393 = vcmask 523264
      %v395 = vsel %vm393, %v367, 0
      %397 = vmatprep.subr.bf16.mxu0 0
      %398 = vmatpush1.bf16.msra.mxu0 %v385
      %399 = vmatprep.subr.bf16.mxu0 0
      %400 = vmatpush1.bf16.msra.mxu0 %v386
      %401 = vmatprep.subr.bf16.mxu0 0
      %402 = vmatpush1.bf16.msra.mxu0 %v387
      %403 = vmatprep.subr.bf16.mxu0 0
      %404 = vmatpush1.bf16.msra.mxu0 %v388
      %405 = vmatprep.subr.bf16.mxu0 0
      %406 = vmatpush1.bf16.msra.mxu0 0
      %407 = vmatprep.subr.bf16.mxu0 0
      %408 = vmatpush1.bf16.msra.mxu0 0
      %409 = vmatprep.subr.bf16.mxu0 0
      %410 = vmatpush1.bf16.msra.mxu0 0
      %411 = vmatprep.subr.bf16.mxu0 0
      %412 = vmatpush1.bf16.msra.mxu0 0
      %413 = vmatprep.subr.bf16.mxu0 0
      %414 = vmatpush1.bf16.msra.mxu0 0
      %415 = vmatprep.subr.bf16.mxu0 0
      %416 = vmatpush1.bf16.msra.mxu0 0
      %417 = vmatprep.subr.bf16.mxu0 0
      %418 = vmatpush1.bf16.msra.mxu0 0
      %419 = vmatprep.subr.bf16.mxu0 0
      %420 = vmatpush1.bf16.msra.mxu0 0
      %421 = vmatprep.subr.bf16.mxu0 0
      %422 = vmatpush1.bf16.msra.mxu0 0
      %423 = vmatprep.subr.bf16.mxu0 0
      %424 = vmatpush1.bf16.msra.mxu0 0
      %425 = vmatprep.subr.bf16.mxu0 0
      %426 = vmatpush1.bf16.msra.mxu0 0
      %427 = vmatprep.subr.bf16.mxu0 0
      %428 = vmatpush1.bf16.msra.mxu0 0
      %429 = vmatprep.mubr.bf16.mxu0 0
      %430 = vmatmul.mubr.bf16.gmra.mrb[0].mxu0 %v395
      %v431 = vpop.f32.mrb[0].mxu0
      %v432 = vadd.f32 %v368, %v431
      %v433 = vpop.f32.mrb[0].mxu0
      %v434 = vpop.f32.mrb[0].mxu0
      %v435 = vpop.f32.mrb[0].mxu0
      %436 = vdwg.mxu0
      %v437 = vmul.f32 %v432, 0.35355338
      %v438 = vld [vmem:[%s5] sm:$0xf]
      %v439 = vld [vmem:[%s5 + $0x4] sm:$0xf]
      %v440 = vld [vmem:[%s5 + $0x8] sm:$0xf]
      %v441 = vld [vmem:[%s5 + $0xc] sm:$0xf]
      %v442 = vld [vmem:[%s5 + $0x10] sm:$0xf]
      %v443 = vld [vmem:[%s5 + $0x14] sm:$0xf]
      %v444 = vld [vmem:[%s5 + $0x18] sm:$0xf]
      %v445 = vld [vmem:[%s5 + $0x1c] sm:$0xf]
      %v446 = vld [vmem:[%s6] sm:$0x1]
      %v448 = vlaneseq
      %v449 = vshrl.u32 %v448, 7
      %v450 = vsub.s32 0, %v449
      %v451 = vrot.slane %v446, %v450
      %v461 = vunpack.c.l.b16 %v438
      %v462 = vunpack.c.l.b16 %v439
      %v463 = vunpack.c.l.b16 %v440
      %v464 = vunpack.c.l.b16 %v441
      %v465 = vunpack.c.l.b16 %v442
      %v466 = vunpack.c.l.b16 %v443
      %v467 = vunpack.c.l.b16 %v444
      %v468 = vunpack.c.l.b16 %v445
      %v469 = vpack.c.b16 %v462, %v461
      %v470 = vpack.c.b16 %v464, %v463
      %v471 = vpack.c.b16 %v466, %v465
      %v472 = vpack.c.b16 %v468, %v467
      %477 = vmatprep.subr.bf16.mxu0 0
      %478 = vmatpush1.bf16.msra.mxu0 %v469
      %479 = vmatprep.subr.bf16.mxu0 0
      %480 = vmatpush1.bf16.msra.mxu0 %v470
      %481 = vmatprep.subr.bf16.mxu0 0
      %482 = vmatpush1.bf16.msra.mxu0 %v471
      %483 = vmatprep.subr.bf16.mxu0 0
      %484 = vmatpush1.bf16.msra.mxu0 %v472
      %485 = vmatprep.subr.bf16.mxu0 0
      %486 = vmatpush1.bf16.msra.mxu0 0
      %487 = vmatprep.subr.bf16.mxu0 0
      %488 = vmatpush1.bf16.msra.mxu0 0
      %489 = vmatprep.subr.bf16.mxu0 0
      %490 = vmatpush1.bf16.msra.mxu0 0
      %491 = vmatprep.subr.bf16.mxu0 0
      %492 = vmatpush1.bf16.msra.mxu0 0
      %493 = vmatprep.subr.bf16.mxu0 0
      %494 = vmatpush1.bf16.msra.mxu0 0
      %495 = vmatprep.subr.bf16.mxu0 0
      %496 = vmatpush1.bf16.msra.mxu0 0
      %497 = vmatprep.subr.bf16.mxu0 0
      %498 = vmatpush1.bf16.msra.mxu0 0
      %499 = vmatprep.subr.bf16.mxu0 0
      %500 = vmatpush1.bf16.msra.mxu0 0
      %501 = vmatprep.subr.bf16.mxu0 0
      %502 = vmatpush1.bf16.msra.mxu0 0
      %503 = vmatprep.subr.bf16.mxu0 0
      %504 = vmatpush1.bf16.msra.mxu0 0
      %505 = vmatprep.subr.bf16.mxu0 0
      %506 = vmatpush1.bf16.msra.mxu0 0
      %507 = vmatprep.subr.bf16.mxu0 0
      %508 = vmatpush1.bf16.msra.mxu0 0
      %509 = vmatprep.mubr.bf16.mxu0 0
      %510 = vmatmul.mubr.bf16.gmra.mrb[0].mxu0 %v395
      %v511 = vpop.f32.mrb[0].mxu0
      %v512 = vadd.f32 %v451, %v511
      %v513 = vpop.f32.mrb[0].mxu0
      %v514 = vpop.f32.mrb[0].mxu0
      %v515 = vpop.f32.mrb[0].mxu0
      %516 = vdwg.mxu0
      %v517 = vld [vmem:[%s7] sm:$0xff]
      %v518 = vld [vmem:[%s7 + $0x8] sm:$0xff]
      %v519 = vld [vmem:[%s7 + $0x10] sm:$0xff]
      %v520 = vld [vmem:[%s7 + $0x18] sm:$0xff]
      %v521 = vld [vmem:[%s7 + $0x20] sm:$0xff]
      %v522 = vld [vmem:[%s7 + $0x28] sm:$0xff]
      %v523 = vld [vmem:[%s7 + $0x30] sm:$0xff]
      %v524 = vld [vmem:[%s7 + $0x38] sm:$0xff]
      %v525 = vpack.c.bf16 %v437, %v437
      %v526 = vpack.c.bf16 %v512, %v512
      %vm527 = vcmask 64512
      %v529 = vsel %vm527, %v525, 0
      %v532 = vsel %vm527, %v526, 0
      %534 = vmatprep.subr.bf16.mxu0 0
      %535 = vmatpush1.bf16.xpose.msra.mxu0 %v532
      %536 = vmatprep.subr.bf16.mxu0 0
      %537 = vmatpush1.bf16.xpose.msra.mxu0 0
      %538 = vmatprep.subr.bf16.mxu0 0
      %539 = vmatpush1.bf16.xpose.msra.mxu0 0
      %540 = vmatprep.subr.bf16.mxu0 0
      %541 = vmatpush1.bf16.xpose.msra.mxu0 0
      %542 = vmatprep.subr.bf16.mxu0 0
      %543 = vmatpush1.bf16.xpose.msra.mxu0 0
      %544 = vmatprep.subr.bf16.mxu0 0
      %545 = vmatpush1.bf16.xpose.msra.mxu0 0
      %546 = vmatprep.subr.bf16.mxu0 0
      %547 = vmatpush1.bf16.xpose.msra.mxu0 0
      %548 = vmatprep.subr.bf16.mxu0 0
      %549 = vmatpush1.bf16.xpose.msra.mxu0 0
      %550 = vmatprep.subr.bf16.mxu0 0
      %551 = vmatpush1.bf16.xpose.msra.mxu0 0
      %552 = vmatprep.subr.bf16.mxu0 0
      %553 = vmatpush1.bf16.xpose.msra.mxu0 0
      %554 = vmatprep.subr.bf16.mxu0 0
      %555 = vmatpush1.bf16.xpose.msra.mxu0 0
      %556 = vmatprep.subr.bf16.mxu0 0
      %557 = vmatpush1.bf16.xpose.msra.mxu0 0
      %558 = vmatprep.subr.bf16.mxu0 0
      %559 = vmatpush1.bf16.xpose.msra.mxu0 0
      %560 = vmatprep.subr.bf16.mxu0 0
      %561 = vmatpush1.bf16.xpose.msra.mxu0 0
      %562 = vmatprep.subr.bf16.mxu0 0
      %563 = vmatpush1.bf16.xpose.msra.mxu0 0
      %564 = vmatprep.subr.bf16.mxu0 0
      %565 = vmatpush1.bf16.xpose.msra.mxu0 0
      %566 = vmatprep.mubr.bf16.mxu0 0
      %567 = vmatmul.mubr.bf16.gmra.mrb[0].mxu0 %v529
      %v568 = vpop.f32.mrb[0].mxu0
      %v569 = vadd.f32 0.0, %v568
      %v570 = vpop.f32.mrb[0].mxu0
      %v571 = vpop.f32.mrb[0].mxu0
      %v572 = vpop.f32.mrb[0].mxu0
      %573 = vdwg.mxu0
      %vm574 = vcmask 32768
      %v575 = vsel %vm574, %v569, -inf
      %576 = vmax.xlane.f32.xlu0 %v575
      %v577 = vpop.xlane.xlu0 %576
      %v578 = vsub.f32 %v569, %v577
      %v579 = vmul.f32 %v578, 1.442695
      %v580 = vpow.pop %v579
      %v581 = vsel %vm574, %v580, 0.0
      %582 = vadd.xlane.f32.xlu0 %v581
      %v583 = vpop.xlane.xlu0 %582
      %v584 = vrcp.pop %v583
      %v585 = vmul.f32 %v580, %v584
      %v586 = vpack.c.bf16 %v585, %v585
      %588 = vrot.lane.b32.xlu0 %v526, 64
      %v589 = vpop.permute.xlu0 %588
      %vm590 = vcmask 39936
      %v592 = vsel %vm590, %v586, 0
      %vm594 = vcmask 1041408
      %vm595 = vcmask 1042432
      %v596 = vsel %vm594, 4294967295, 65535
      %v597 = vsel %vm595, %v596, 0
      %v599 = vand.u32 %v589, %v597
      %601 = vmatprep.subr.bf16.mxu0 0
      %602 = vmatpush1.bf16.msra.mxu0 %v599
      %603 = vmatprep.subr.bf16.mxu0 0
      %604 = vmatpush1.bf16.msra.mxu0 0
      %605 = vmatprep.subr.bf16.mxu0 0
      %606 = vmatpush1.bf16.msra.mxu0 0
      %607 = vmatprep.subr.bf16.mxu0 0
      %608 = vmatpush1.bf16.msra.mxu0 0
      %609 = vmatprep.subr.bf16.mxu0 0
      %610 = vmatpush1.bf16.msra.mxu0 0
      %611 = vmatprep.subr.bf16.mxu0 0
      %612 = vmatpush1.bf16.msra.mxu0 0
      %613 = vmatprep.subr.bf16.mxu0 0
      %614 = vmatpush1.bf16.msra.mxu0 0
      %615 = vmatprep.subr.bf16.mxu0 0
      %616 = vmatpush1.bf16.msra.mxu0 0
      %617 = vmatprep.subr.bf16.mxu0 0
      %618 = vmatpush1.bf16.msra.mxu0 0
      %619 = vmatprep.subr.bf16.mxu0 0
      %620 = vmatpush1.bf16.msra.mxu0 0
      %621 = vmatprep.subr.bf16.mxu0 0
      %622 = vmatpush1.bf16.msra.mxu0 0
      %623 = vmatprep.subr.bf16.mxu0 0
      %624 = vmatpush1.bf16.msra.mxu0 0
      %625 = vmatprep.subr.bf16.mxu0 0
      %626 = vmatpush1.bf16.msra.mxu0 0
      %627 = vmatprep.subr.bf16.mxu0 0
      %628 = vmatpush1.bf16.msra.mxu0 0
      %629 = vmatprep.subr.bf16.mxu0 0
      %630 = vmatpush1.bf16.msra.mxu0 0
      %631 = vmatprep.subr.bf16.mxu0 0
      %632 = vmatpush1.bf16.msra.mxu0 0
      %633 = vmatprep.mubr.bf16.mxu0 0
      %634 = vmatmul.mubr.bf16.gmra.mrb[0].mxu0 %v592
      %v635 = vpop.f32.mrb[0].mxu0
      %v636 = vadd.f32 0.0, %v635
      %v637 = vpop.f32.mrb[0].mxu0
      %v638 = vpop.f32.mrb[0].mxu0
      %v639 = vpop.f32.mrb[0].mxu0
      %640 = vdwg.mxu0
      %v641 = vpack.c.bf16 %v636, %v636
      %v642 = vpack.c.bf16 %v517, %v517
      %644 = vrot.lane.b32.xlu0 %v525, 120
      %v645 = vpop.permute.xlu0 %644
      %646 = vrot.lane.b32.xlu0 %v526, 120
      %v647 = vpop.permute.xlu0 %646
      %v649 = vsel %vm527, %v645, 0
      %v652 = vsel %vm527, %v647, 0
      %654 = vmatprep.subr.bf16.mxu0 0
      %655 = vmatpush1.bf16.xpose.msra.mxu0 %v652
      %656 = vmatprep.subr.bf16.mxu0 0
      %657 = vmatpush1.bf16.xpose.msra.mxu0 0
      %658 = vmatprep.subr.bf16.mxu0 0
      %659 = vmatpush1.bf16.xpose.msra.mxu0 0
      %660 = vmatprep.subr.bf16.mxu0 0
      %661 = vmatpush1.bf16.xpose.msra.mxu0 0
      %662 = vmatprep.subr.bf16.mxu0 0
      %663 = vmatpush1.bf16.xpose.msra.mxu0 0
      %664 = vmatprep.subr.bf16.mxu0 0
      %665 = vmatpush1.bf16.xpose.msra.mxu0 0
      %666 = vmatprep.subr.bf16.mxu0 0
      %667 = vmatpush1.bf16.xpose.msra.mxu0 0
      %668 = vmatprep.subr.bf16.mxu0 0
      %669 = vmatpush1.bf16.xpose.msra.mxu0 0
      %670 = vmatprep.subr.bf16.mxu0 0
      %671 = vmatpush1.bf16.xpose.msra.mxu0 0
      %672 = vmatprep.subr.bf16.mxu0 0
      %673 = vmatpush1.bf16.xpose.msra.mxu0 0
      %674 = vmatprep.subr.bf16.mxu0 0
      %675 = vmatpush1.bf16.xpose.msra.mxu0 0
      %676 = vmatprep.subr.bf16.mxu0 0
      %677 = vmatpush1.bf16.xpose.msra.mxu0 0
      %678 = vmatprep.subr.bf16.mxu0 0
      %679 = vmatpush1.bf16.xpose.msra.mxu0 0
      %680 = vmatprep.subr.bf16.mxu0 0
      %681 = vmatpush1.bf16.xpose.msra.mxu0 0
      %682 = vmatprep.subr.bf16.mxu0 0
      %683 = vmatpush1.bf16.xpose.msra.mxu0 0
      %684 = vmatprep.subr.bf16.mxu0 0
      %685 = vmatpush1.bf16.xpose.msra.mxu0 0
      %686 = vmatprep.mubr.bf16.mxu0 0
      %687 = vmatmul.mubr.bf16.gmra.mrb[0].mxu0 %v649
      %v688 = vpop.f32.mrb[0].mxu0
      %v689 = vadd.f32 0.0, %v688
      %v690 = vpop.f32.mrb[0].mxu0
      %v691 = vpop.f32.mrb[0].mxu0
      %v692 = vpop.f32.mrb[0].mxu0
      %693 = vdwg.mxu0
      %v694 = vsel %vm574, %v689, -inf
      %695 = vmax.xlane.f32.xlu0 %v694
      %v696 = vpop.xlane.xlu0 %695
      %v697 = vsub.f32 %v689, %v696
      %v698 = vmul.f32 %v697, 1.442695
      %v699 = vpow.pop %v698
      %v700 = vsel %vm574, %v699, 0.0
      %701 = vadd.xlane.f32.xlu0 %v700
      %v702 = vpop.xlane.xlu0 %701
      %v703 = vrcp.pop %v702
      %v704 = vmul.f32 %v699, %v703
      %v705 = vpack.c.bf16 %v704, %v704
      %706 = vrot.lane.b32.xlu0 %v526, 56
      %v707 = vpop.permute.xlu0 %706
      %v709 = vsel %vm590, %v705, 0
      %v712 = vand.u32 %v707, %v597
      %714 = vmatprep.subr.bf16.mxu0 0
      %715 = vmatpush1.bf16.msra.mxu0 %v712
      %716 = vmatprep.subr.bf16.mxu0 0
      %717 = vmatpush1.bf16.msra.mxu0 0
      %718 = vmatprep.subr.bf16.mxu0 0
      %719 = vmatpush1.bf16.msra.mxu0 0
      %720 = vmatprep.subr.bf16.mxu0 0
      %721 = vmatpush1.bf16.msra.mxu0 0
      %722 = vmatprep.subr.bf16.mxu0 0
      %723 = vmatpush1.bf16.msra.mxu0 0
      %724 = vmatprep.subr.bf16.mxu0 0
      %725 = vmatpush1.bf16.msra.mxu0 0
      %726 = vmatprep.subr.bf16.mxu0 0
      %727 = vmatpush1.bf16.msra.mxu0 0
      %728 = vmatprep.subr.bf16.mxu0 0
      %729 = vmatpush1.bf16.msra.mxu0 0
      %730 = vmatprep.subr.bf16.mxu0 0
      %731 = vmatpush1.bf16.msra.mxu0 0
      %732 = vmatprep.subr.bf16.mxu0 0
      %733 = vmatpush1.bf16.msra.mxu0 0
      %734 = vmatprep.subr.bf16.mxu0 0
      %735 = vmatpush1.bf16.msra.mxu0 0
      %736 = vmatprep.subr.bf16.mxu0 0
      %737 = vmatpush1.bf16.msra.mxu0 0
      %738 = vmatprep.subr.bf16.mxu0 0
      %739 = vmatpush1.bf16.msra.mxu0 0
      %740 = vmatprep.subr.bf16.mxu0 0
      %741 = vmatpush1.bf16.msra.mxu0 0
      %742 = vmatprep.subr.bf16.mxu0 0
      %743 = vmatpush1.bf16.msra.mxu0 0
      %744 = vmatprep.subr.bf16.mxu0 0
      %745 = vmatpush1.bf16.msra.mxu0 0
      %746 = vmatprep.mubr.bf16.mxu0 0
      %747 = vmatmul.mubr.bf16.gmra.mrb[0].mxu0 %v709
      %v748 = vpop.f32.mrb[0].mxu0
      %v749 = vadd.f32 0.0, %v748
      %v750 = vpop.f32.mrb[0].mxu0
      %v751 = vpop.f32.mrb[0].mxu0
      %v752 = vpop.f32.mrb[0].mxu0
      %753 = vdwg.mxu0
      %v754 = vpack.c.bf16 %v749, %v749
      %v755 = vpack.c.bf16 %v518, %v518
      %v757 = vsel %vm527, %v754, 0
      %vm759 = vcmask 1043456
      %v761 = vsel %vm759, %v755, 0
      %763 = vmatprep.subr.bf16.mxu0 0
      %764 = vmatpush1.bf16.msra.mxu0 %v761
      %765 = vmatprep.subr.bf16.mxu0 0
      %766 = vmatpush1.bf16.msra.mxu0 0
      %767 = vmatprep.subr.bf16.mxu0 0
      %768 = vmatpush1.bf16.msra.mxu0 0
      %769 = vmatprep.subr.bf16.mxu0 0
      %770 = vmatpush1.bf16.msra.mxu0 0
      %771 = vmatprep.subr.bf16.mxu0 0
      %772 = vmatpush1.bf16.msra.mxu0 0
      %773 = vmatprep.subr.bf16.mxu0 0
      %774 = vmatpush1.bf16.msra.mxu0 0
      %775 = vmatprep.subr.bf16.mxu0 0
      %776 = vmatpush1.bf16.msra.mxu0 0
      %777 = vmatprep.subr.bf16.mxu0 0
      %778 = vmatpush1.bf16.msra.mxu0 0
      %779 = vmatprep.subr.bf16.mxu0 0
      %780 = vmatpush1.bf16.msra.mxu0 0
      %781 = vmatprep.subr.bf16.mxu0 0
      %782 = vmatpush1.bf16.msra.mxu0 0
      %783 = vmatprep.subr.bf16.mxu0 0
      %784 = vmatpush1.bf16.msra.mxu0 0
      %785 = vmatprep.subr.bf16.mxu0 0
      %786 = vmatpush1.bf16.msra.mxu0 0
      %787 = vmatprep.subr.bf16.mxu0 0
      %788 = vmatpush1.bf16.msra.mxu0 0
      %789 = vmatprep.subr.bf16.mxu0 0
      %790 = vmatpush1.bf16.msra.mxu0 0
      %791 = vmatprep.subr.bf16.mxu0 0
      %792 = vmatpush1.bf16.msra.mxu0 0
      %793 = vmatprep.subr.bf16.mxu0 0
      %794 = vmatpush1.bf16.msra.mxu0 0
      %795 = vmatprep.mubr.bf16.mxu0 0
      %796 = vmatmul.mubr.bf16.gmra.mrb[0].mxu0 %v757
      %v797 = vpop.f32.mrb[0].mxu0
      %v798 = vadd.f32 0.0, %v797
      %v799 = vpop.f32.mrb[0].mxu0
      %v800 = vpop.f32.mrb[0].mxu0
      %v801 = vpop.f32.mrb[0].mxu0
      %802 = vdwg.mxu0
      %v804 = vsel %vm527, %v641, 0
      %v807 = vsel %vm759, %v642, 0
      %809 = vmatprep.subr.bf16.mxu0 0
      %810 = vmatpush1.bf16.msra.mxu0 %v807
      %811 = vmatprep.subr.bf16.mxu0 0
      %812 = vmatpush1.bf16.msra.mxu0 0
      %813 = vmatprep.subr.bf16.mxu0 0
      %814 = vmatpush1.bf16.msra.mxu0 0
      %815 = vmatprep.subr.bf16.mxu0 0
      %816 = vmatpush1.bf16.msra.mxu0 0
      %817 = vmatprep.subr.bf16.mxu0 0
      %818 = vmatpush1.bf16.msra.mxu0 0
      %819 = vmatprep.subr.bf16.mxu0 0
      %820 = vmatpush1.bf16.msra.mxu0 0
      %821 = vmatprep.subr.bf16.mxu0 0
      %822 = vmatpush1.bf16.msra.mxu0 0
      %823 = vmatprep.subr.bf16.mxu0 0
      %824 = vmatpush1.bf16.msra.mxu0 0
      %825 = vmatprep.subr.bf16.mxu0 0
      %826 = vmatpush1.bf16.msra.mxu0 0
      %827 = vmatprep.subr.bf16.mxu0 0
      %828 = vmatpush1.bf16.msra.mxu0 0
      %829 = vmatprep.subr.bf16.mxu0 0
      %830 = vmatpush1.bf16.msra.mxu0 0
      %831 = vmatprep.subr.bf16.mxu0 0
      %832 = vmatpush1.bf16.msra.mxu0 0
      %833 = vmatprep.subr.bf16.mxu0 0
      %834 = vmatpush1.bf16.msra.mxu0 0
      %835 = vmatprep.subr.bf16.mxu0 0
      %836 = vmatpush1.bf16.msra.mxu0 0
      %837 = vmatprep.subr.bf16.mxu0 0
      %838 = vmatpush1.bf16.msra.mxu0 0
      %839 = vmatprep.subr.bf16.mxu0 0
      %840 = vmatpush1.bf16.msra.mxu0 0
      %841 = vmatprep.mubr.bf16.mxu0 0
      %842 = vmatmul.mubr.bf16.gmra.mrb[0].mxu0 %v804
      %v843 = vpop.f32.mrb[0].mxu0
      %v844 = vadd.f32 %v798, %v843
      %v845 = vpop.f32.mrb[0].mxu0
      %v846 = vpop.f32.mrb[0].mxu0
      %v847 = vpop.f32.mrb[0].mxu0
      %848 = vdwg.mxu0
      %849 = vrot.lane.b32.xlu0 %v525, 112
      %v850 = vpop.permute.xlu0 %849
      %851 = vrot.lane.b32.xlu0 %v526, 112
      %v852 = vpop.permute.xlu0 %851
      %v854 = vsel %vm527, %v850, 0
      %v857 = vsel %vm527, %v852, 0
      %859 = vmatprep.subr.bf16.mxu0 0
      %860 = vmatpush1.bf16.xpose.msra.mxu0 %v857
      %861 = vmatprep.subr.bf16.mxu0 0
      %862 = vmatpush1.bf16.xpose.msra.mxu0 0
      %863 = vmatprep.subr.bf16.mxu0 0
      %864 = vmatpush1.bf16.xpose.msra.mxu0 0
      %865 = vmatprep.subr.bf16.mxu0 0
      %866 = vmatpush1.bf16.xpose.msra.mxu0 0
      %867 = vmatprep.subr.bf16.mxu0 0
      %868 = vmatpush1.bf16.xpose.msra.mxu0 0
      %869 = vmatprep.subr.bf16.mxu0 0
      %870 = vmatpush1.bf16.xpose.msra.mxu0 0
      %871 = vmatprep.subr.bf16.mxu0 0
      %872 = vmatpush1.bf16.xpose.msra.mxu0 0
      %873 = vmatprep.subr.bf16.mxu0 0
      %874 = vmatpush1.bf16.xpose.msra.mxu0 0
      %875 = vmatprep.subr.bf16.mxu0 0
      %876 = vmatpush1.bf16.xpose.msra.mxu0 0
      %877 = vmatprep.subr.bf16.mxu0 0
      %878 = vmatpush1.bf16.xpose.msra.mxu0 0
      %879 = vmatprep.subr.bf16.mxu0 0
      %880 = vmatpush1.bf16.xpose.msra.mxu0 0
      %881 = vmatprep.subr.bf16.mxu0 0
      %882 = vmatpush1.bf16.xpose.msra.mxu0 0
      %883 = vmatprep.subr.bf16.mxu0 0
      %884 = vmatpush1.bf16.xpose.msra.mxu0 0
      %885 = vmatprep.subr.bf16.mxu0 0
      %886 = vmatpush1.bf16.xpose.msra.mxu0 0
      %887 = vmatprep.subr.bf16.mxu0 0
      %888 = vmatpush1.bf16.xpose.msra.mxu0 0
      %889 = vmatprep.subr.bf16.mxu0 0
      %890 = vmatpush1.bf16.xpose.msra.mxu0 0
      %891 = vmatprep.mubr.bf16.mxu0 0
      %892 = vmatmul.mubr.bf16.gmra.mrb[0].mxu0 %v854
      %v893 = vpop.f32.mrb[0].mxu0
      %v894 = vadd.f32 0.0, %v893
      %v895 = vpop.f32.mrb[0].mxu0
      %v896 = vpop.f32.mrb[0].mxu0
      %v897 = vpop.f32.mrb[0].mxu0
      %898 = vdwg.mxu0
      %v899 = vsel %vm574, %v894, -inf
      %900 = vmax.xlane.f32.xlu0 %v899
      %v901 = vpop.xlane.xlu0 %900
      %v902 = vsub.f32 %v894, %v901
      %v903 = vmul.f32 %v902, 1.442695
      %v904 = vpow.pop %v903
      %v905 = vsel %vm574, %v904, 0.0
      %906 = vadd.xlane.f32.xlu0 %v905
      %v907 = vpop.xlane.xlu0 %906
      %v908 = vrcp.pop %v907
      %v909 = vmul.f32 %v904, %v908
      %v910 = vpack.c.bf16 %v909, %v909
      %911 = vrot.lane.b32.xlu0 %v526, 48
      %v912 = vpop.permute.xlu0 %911
      %v914 = vsel %vm590, %v910, 0
      %v917 = vand.u32 %v912, %v597
      %919 = vmatprep.subr.bf16.mxu0 0
      %920 = vmatpush1.bf16.msra.mxu0 %v917
      %921 = vmatprep.subr.bf16.mxu0 0
      %922 = vmatpush1.bf16.msra.mxu0 0
      %923 = vmatprep.subr.bf16.mxu0 0
      %924 = vmatpush1.bf16.msra.mxu0 0
      %925 = vmatprep.subr.bf16.mxu0 0
      %926 = vmatpush1.bf16.msra.mxu0 0
      %927 = vmatprep.subr.bf16.mxu0 0
      %928 = vmatpush1.bf16.msra.mxu0 0
      %929 = vmatprep.subr.bf16.mxu0 0
      %930 = vmatpush1.bf16.msra.mxu0 0
      %931 = vmatprep.subr.bf16.mxu0 0
      %932 = vmatpush1.bf16.msra.mxu0 0
      %933 = vmatprep.subr.bf16.mxu0 0
      %934 = vmatpush1.bf16.msra.mxu0 0
      %935 = vmatprep.subr.bf16.mxu0 0
      %936 = vmatpush1.bf16.msra.mxu0 0
      %937 = vmatprep.subr.bf16.mxu0 0
      %938 = vmatpush1.bf16.msra.mxu0 0
      %939 = vmatprep.subr.bf16.mxu0 0
      %940 = vmatpush1.bf16.msra.mxu0 0
      %941 = vmatprep.subr.bf16.mxu0 0
      %942 = vmatpush1.bf16.msra.mxu0 0
      %943 = vmatprep.subr.bf16.mxu0 0
      %944 = vmatpush1.bf16.msra.mxu0 0
      %945 = vmatprep.subr.bf16.mxu0 0
      %946 = vmatpush1.bf16.msra.mxu0 0
      %947 = vmatprep.subr.bf16.mxu0 0
      %948 = vmatpush1.bf16.msra.mxu0 0
      %949 = vmatprep.subr.bf16.mxu0 0
      %950 = vmatpush1.bf16.msra.mxu0 0
      %951 = vmatprep.mubr.bf16.mxu0 0
      %952 = vmatmul.mubr.bf16.gmra.mrb[0].mxu0 %v914
      %v953 = vpop.f32.mrb[0].mxu0
      %v954 = vadd.f32 0.0, %v953
      %v955 = vpop.f32.mrb[0].mxu0
      %v956 = vpop.f32.mrb[0].mxu0
      %v957 = vpop.f32.mrb[0].mxu0
      %958 = vdwg.mxu0
      %v959 = vpack.c.bf16 %v954, %v954
      %v960 = vpack.c.bf16 %v519, %v519
      %v962 = vsel %vm527, %v959, 0
      %v965 = vsel %vm759, %v960, 0
      %967 = vmatprep.subr.bf16.mxu0 0
      %968 = vmatpush1.bf16.msra.mxu0 %v965
      %969 = vmatprep.subr.bf16.mxu0 0
      %970 = vmatpush1.bf16.msra.mxu0 0
      %971 = vmatprep.subr.bf16.mxu0 0
      %972 = vmatpush1.bf16.msra.mxu0 0
      %973 = vmatprep.subr.bf16.mxu0 0
      %974 = vmatpush1.bf16.msra.mxu0 0
      %975 = vmatprep.subr.bf16.mxu0 0
      %976 = vmatpush1.bf16.msra.mxu0 0
      %977 = vmatprep.subr.bf16.mxu0 0
      %978 = vmatpush1.bf16.msra.mxu0 0
      %979 = vmatprep.subr.bf16.mxu0 0
      %980 = vmatpush1.bf16.msra.mxu0 0
      %981 = vmatprep.subr.bf16.mxu0 0
      %982 = vmatpush1.bf16.msra.mxu0 0
      %983 = vmatprep.subr.bf16.mxu0 0
      %984 = vmatpush1.bf16.msra.mxu0 0
      %985 = vmatprep.subr.bf16.mxu0 0
      %986 = vmatpush1.bf16.msra.mxu0 0
      %987 = vmatprep.subr.bf16.mxu0 0
      %988 = vmatpush1.bf16.msra.mxu0 0
      %989 = vmatprep.subr.bf16.mxu0 0
      %990 = vmatpush1.bf16.msra.mxu0 0
      %991 = vmatprep.subr.bf16.mxu0 0
      %992 = vmatpush1.bf16.msra.mxu0 0
      %993 = vmatprep.subr.bf16.mxu0 0
      %994 = vmatpush1.bf16.msra.mxu0 0
      %995 = vmatprep.subr.bf16.mxu0 0
      %996 = vmatpush1.bf16.msra.mxu0 0
      %997 = vmatprep.subr.bf16.mxu0 0
      %998 = vmatpush1.bf16.msra.mxu0 0
      %999 = vmatprep.mubr.bf16.mxu0 0
      %1000 = vmatmul.mubr.bf16.gmra.mrb[0].mxu0 %v962
      %v1001 = vpop.f32.mrb[0].mxu0
      %v1002 = vadd.f32 0.0, %v1001
      %v1003 = vpop.f32.mrb[0].mxu0
      %v1004 = vpop.f32.mrb[0].mxu0
      %v1005 = vpop.f32.mrb[0].mxu0
      %1006 = vdwg.mxu0
      %v1007 = vadd.f32 %v844, %v1002
      %1008 = vrot.lane.b32.xlu0 %v525, 104
      %v1009 = vpop.permute.xlu0 %1008
      %1010 = vrot.lane.b32.xlu0 %v526, 104
      %v1011 = vpop.permute.xlu0 %1010
      %v1013 = vsel %vm527, %v1009, 0
      %v1016 = vsel %vm527, %v1011, 0
      %1018 = vmatprep.subr.bf16.mxu0 0
      %1019 = vmatpush1.bf16.xpose.msra.mxu0 %v1016
      %1020 = vmatprep.subr.bf16.mxu0 0
      %1021 = vmatpush1.bf16.xpose.msra.mxu0 0
      %1022 = vmatprep.subr.bf16.mxu0 0
      %1023 = vmatpush1.bf16.xpose.msra.mxu0 0
      %1024 = vmatprep.subr.bf16.mxu0 0
      %1025 = vmatpush1.bf16.xpose.msra.mxu0 0
      %1026 = vmatprep.subr.bf16.mxu0 0
      %1027 = vmatpush1.bf16.xpose.msra.mxu0 0
      %1028 = vmatprep.subr.bf16.mxu0 0
      %1029 = vmatpush1.bf16.xpose.msra.mxu0 0
      %1030 = vmatprep.subr.bf16.mxu0 0
      %1031 = vmatpush1.bf16.xpose.msra.mxu0 0
      %1032 = vmatprep.subr.bf16.mxu0 0
      %1033 = vmatpush1.bf16.xpose.msra.mxu0 0
      %1034 = vmatprep.subr.bf16.mxu0 0
      %1035 = vmatpush1.bf16.xpose.msra.mxu0 0
      %1036 = vmatprep.subr.bf16.mxu0 0
      %1037 = vmatpush1.bf16.xpose.msra.mxu0 0
      %1038 = vmatprep.subr.bf16.mxu0 0
      %1039 = vmatpush1.bf16.xpose.msra.mxu0 0
      %1040 = vmatprep.subr.bf16.mxu0 0
      %1041 = vmatpush1.bf16.xpose.msra.mxu0 0
      %1042 = vmatprep.subr.bf16.mxu0 0
      %1043 = vmatpush1.bf16.xpose.msra.mxu0 0
      %1044 = vmatprep.subr.bf16.mxu0 0
      %1045 = vmatpush1.bf16.xpose.msra.mxu0 0
      %1046 = vmatprep.subr.bf16.mxu0 0
      %1047 = vmatpush1.bf16.xpose.msra.mxu0 0
      %1048 = vmatprep.subr.bf16.mxu0 0
      %1049 = vmatpush1.bf16.xpose.msra.mxu0 0
      %1050 = vmatprep.mubr.bf16.mxu0 0
      %1051 = vmatmul.mubr.bf16.gmra.mrb[0].mxu0 %v1013
      %v1052 = vpop.f32.mrb[0].mxu0
      %v1053 = vadd.f32 0.0, %v1052
      %v1054 = vpop.f32.mrb[0].mxu0
      %v1055 = vpop.f32.mrb[0].mxu0
      %v1056 = vpop.f32.mrb[0].mxu0
      %1057 = vdwg.mxu0
      %v1058 = vsel %vm574, %v1053, -inf
      %1059 = vmax.xlane.f32.xlu0 %v1058
      %v1060 = vpop.xlane.xlu0 %1059
      %v1061 = vsub.f32 %v1053, %v1060
      %v1062 = vmul.f32 %v1061, 1.442695
      %v1063 = vpow.pop %v1062
      %v1064 = vsel %vm574, %v1063, 0.0
      %1065 = vadd.xlane.f32.xlu0 %v1064
      %v1066 = vpop.xlane.xlu0 %1065
      %v1067 = vrcp.pop %v1066
      %v1068 = vmul.f32 %v1063, %v1067
      %v1069 = vpack.c.bf16 %v1068, %v1068
      %1070 = vrot.lane.b32.xlu0 %v526, 40
      %v1071 = vpop.permute.xlu0 %1070
      %v1073 = vsel %vm590, %v1069, 0
      %v1076 = vand.u32 %v1071, %v597
      %1078 = vmatprep.subr.bf16.mxu0 0
      %1079 = vmatpush1.bf16.msra.mxu0 %v1076
      %1080 = vmatprep.subr.bf16.mxu0 0
      %1081 = vmatpush1.bf16.msra.mxu0 0
      %1082 = vmatprep.subr.bf16.mxu0 0
      %1083 = vmatpush1.bf16.msra.mxu0 0
      %1084 = vmatprep.subr.bf16.mxu0 0
      %1085 = vmatpush1.bf16.msra.mxu0 0
      %1086 = vmatprep.subr.bf16.mxu0 0
      %1087 = vmatpush1.bf16.msra.mxu0 0
      %1088 = vmatprep.subr.bf16.mxu0 0
      %1089 = vmatpush1.bf16.msra.mxu0 0
      %1090 = vmatprep.subr.bf16.mxu0 0
      %1091 = vmatpush1.bf16.msra.mxu0 0
      %1092 = vmatprep.subr.bf16.mxu0 0
      %1093 = vmatpush1.bf16.msra.mxu0 0
      %1094 = vmatprep.subr.bf16.mxu0 0
      %1095 = vmatpush1.bf16.msra.mxu0 0
      %1096 = vmatprep.subr.bf16.mxu0 0
      %1097 = vmatpush1.bf16.msra.mxu0 0
      %1098 = vmatprep.subr.bf16.mxu0 0
      %1099 = vmatpush1.bf16.msra.mxu0 0
      %1100 = vmatprep.subr.bf16.mxu0 0
      %1101 = vmatpush1.bf16.msra.mxu0 0
      %1102 = vmatprep.subr.bf16.mxu0 0
      %1103 = vmatpush1.bf16.msra.mxu0 0
      %1104 = vmatprep.subr.bf16.mxu0 0
      %1105 = vmatpush1.bf16.msra.mxu0 0
      %1106 = vmatprep.subr.bf16.mxu0 0
      %1107 = vmatpush1.bf16.msra.mxu0 0
      %1108 = vmatprep.subr.bf16.mxu0 0
      %1109 = vmatpush1.bf16.msra.mxu0 0
      %1110 = vmatprep.mubr.bf16.mxu0 0
      %1111 = vmatmul.mubr.bf16.gmra.mrb[0].mxu0 %v1073
      %v1112 = vpop.f32.mrb[0].mxu0
      %v1113 = vadd.f32 0.0, %v1112
      %v1114 = vpop.f32.mrb[0].mxu0
      %v1115 = vpop.f32.mrb[0].mxu0
      %v1116 = vpop.f32.mrb[0].mxu0
      %1117 = vdwg.mxu0
      %v1118 = vpack.c.bf16 %v1113, %v1113
      %v1119 = vpack.c.bf16 %v520, %v520
      %v1121 = vsel %vm527, %v1118, 0
      %v1124 = vsel %vm759, %v1119, 0
      %1126 = vmatprep.subr.bf16.mxu0 0
      %1127 = vmatpush1.bf16.msra.mxu0 %v1124
      %1128 = vmatprep.subr.bf16.mxu0 0
      %1129 = vmatpush1.bf16.msra.mxu0 0
      %1130 = vmatprep.subr.bf16.mxu0 0
      %1131 = vmatpush1.bf16.msra.mxu0 0
      %1132 = vmatprep.subr.bf16.mxu0 0
      %1133 = vmatpush1.bf16.msra.mxu0 0
      %1134 = vmatprep.subr.bf16.mxu0 0
      %1135 = vmatpush1.bf16.msra.mxu0 0
      %1136 = vmatprep.subr.bf16.mxu0 0
      %1137 = vmatpush1.bf16.msra.mxu0 0
      %1138 = vmatprep.subr.bf16.mxu0 0
      %1139 = vmatpush1.bf16.msra.mxu0 0
      %1140 = vmatprep.subr.bf16.mxu0 0
      %1141 = vmatpush1.bf16.msra.mxu0 0
      %1142 = vmatprep.subr.bf16.mxu0 0
      %1143 = vmatpush1.bf16.msra.mxu0 0
      %1144 = vmatprep.subr.bf16.mxu0 0
      %1145 = vmatpush1.bf16.msra.mxu0 0
      %1146 = vmatprep.subr.bf16.mxu0 0
      %1147 = vmatpush1.bf16.msra.mxu0 0
      %1148 = vmatprep.subr.bf16.mxu0 0
      %1149 = vmatpush1.bf16.msra.mxu0 0
      %1150 = vmatprep.subr.bf16.mxu0 0
      %1151 = vmatpush1.bf16.msra.mxu0 0
      %1152 = vmatprep.subr.bf16.mxu0 0
      %1153 = vmatpush1.bf16.msra.mxu0 0
      %1154 = vmatprep.subr.bf16.mxu0 0
      %1155 = vmatpush1.bf16.msra.mxu0 0
      %1156 = vmatprep.subr.bf16.mxu0 0
      %1157 = vmatpush1.bf16.msra.mxu0 0
      %1158 = vmatprep.mubr.bf16.mxu0 0
      %1159 = vmatmul.mubr.bf16.gmra.mrb[0].mxu0 %v1121
      %v1160 = vpop.f32.mrb[0].mxu0
      %v1161 = vadd.f32 0.0, %v1160
      %v1162 = vpop.f32.mrb[0].mxu0
      %v1163 = vpop.f32.mrb[0].mxu0
      %v1164 = vpop.f32.mrb[0].mxu0
      %1165 = vdwg.mxu0
      %v1166 = vadd.f32 %v1007, %v1161
      %1167 = vrot.lane.b32.xlu0 %v525, 96
      %v1168 = vpop.permute.xlu0 %1167
      %1169 = vrot.lane.b32.xlu0 %v526, 96
      %v1170 = vpop.permute.xlu0 %1169
      %v1172 = vsel %vm527, %v1168, 0
      %v1175 = vsel %vm527, %v1170, 0
      %1177 = vmatprep.subr.bf16.mxu0 0
      %1178 = vmatpush1.bf16.xpose.msra.mxu0 %v1175
      %1179 = vmatprep.subr.bf16.mxu0 0
      %1180 = vmatpush1.bf16.xpose.msra.mxu0 0
      %1181 = vmatprep.subr.bf16.mxu0 0
      %1182 = vmatpush1.bf16.xpose.msra.mxu0 0
      %1183 = vmatprep.subr.bf16.mxu0 0
      %1184 = vmatpush1.bf16.xpose.msra.mxu0 0
      %1185 = vmatprep.subr.bf16.mxu0 0
      %1186 = vmatpush1.bf16.xpose.msra.mxu0 0
      %1187 = vmatprep.subr.bf16.mxu0 0
      %1188 = vmatpush1.bf16.xpose.msra.mxu0 0
      %1189 = vmatprep.subr.bf16.mxu0 0
      %1190 = vmatpush1.bf16.xpose.msra.mxu0 0
      %1191 = vmatprep.subr.bf16.mxu0 0
      %1192 = vmatpush1.bf16.xpose.msra.mxu0 0
      %1193 = vmatprep.subr.bf16.mxu0 0
      %1194 = vmatpush1.bf16.xpose.msra.mxu0 0
      %1195 = vmatprep.subr.bf16.mxu0 0
      %1196 = vmatpush1.bf16.xpose.msra.mxu0 0
      %1197 = vmatprep.subr.bf16.mxu0 0
      %1198 = vmatpush1.bf16.xpose.msra.mxu0 0
      %1199 = vmatprep.subr.bf16.mxu0 0
      %1200 = vmatpush1.bf16.xpose.msra.mxu0 0
      %1201 = vmatprep.subr.bf16.mxu0 0
      %1202 = vmatpush1.bf16.xpose.msra.mxu0 0
      %1203 = vmatprep.subr.bf16.mxu0 0
      %1204 = vmatpush1.bf16.xpose.msra.mxu0 0
      %1205 = vmatprep.subr.bf16.mxu0 0
      %1206 = vmatpush1.bf16.xpose.msra.mxu0 0
      %1207 = vmatprep.subr.bf16.mxu0 0
      %1208 = vmatpush1.bf16.xpose.msra.mxu0 0
      %1209 = vmatprep.mubr.bf16.mxu0 0
      %1210 = vmatmul.mubr.bf16.gmra.mrb[0].mxu0 %v1172
      %v1211 = vpop.f32.mrb[0].mxu0
      %v1212 = vadd.f32 0.0, %v1211
      %v1213 = vpop.f32.mrb[0].mxu0
      %v1214 = vpop.f32.mrb[0].mxu0
      %v1215 = vpop.f32.mrb[0].mxu0
      %1216 = vdwg.mxu0
      %v1217 = vsel %vm574, %v1212, -inf
      %1218 = vmax.xlane.f32.xlu0 %v1217
      %v1219 = vpop.xlane.xlu0 %1218
      %v1220 = vsub.f32 %v1212, %v1219
      %v1221 = vmul.f32 %v1220, 1.442695
      %v1222 = vpow.pop %v1221
      %v1223 = vsel %vm574, %v1222, 0.0
      %1224 = vadd.xlane.f32.xlu0 %v1223
      %v1225 = vpop.xlane.xlu0 %1224
      %v1226 = vrcp.pop %v1225
      %v1227 = vmul.f32 %v1222, %v1226
      %v1228 = vpack.c.bf16 %v1227, %v1227
      %1229 = vrot.lane.b32.xlu0 %v526, 32
      %v1230 = vpop.permute.xlu0 %1229
      %v1232 = vsel %vm590, %v1228, 0
      %v1235 = vand.u32 %v1230, %v597
      %1237 = vmatprep.subr.bf16.mxu0 0
      %1238 = vmatpush1.bf16.msra.mxu0 %v1235
      %1239 = vmatprep.subr.bf16.mxu0 0
      %1240 = vmatpush1.bf16.msra.mxu0 0
      %1241 = vmatprep.subr.bf16.mxu0 0
      %1242 = vmatpush1.bf16.msra.mxu0 0
      %1243 = vmatprep.subr.bf16.mxu0 0
      %1244 = vmatpush1.bf16.msra.mxu0 0
      %1245 = vmatprep.subr.bf16.mxu0 0
      %1246 = vmatpush1.bf16.msra.mxu0 0
      %1247 = vmatprep.subr.bf16.mxu0 0
      %1248 = vmatpush1.bf16.msra.mxu0 0
      %1249 = vmatprep.subr.bf16.mxu0 0
      %1250 = vmatpush1.bf16.msra.mxu0 0
      %1251 = vmatprep.subr.bf16.mxu0 0
      %1252 = vmatpush1.bf16.msra.mxu0 0
      %1253 = vmatprep.subr.bf16.mxu0 0
      %1254 = vmatpush1.bf16.msra.mxu0 0
      %1255 = vmatprep.subr.bf16.mxu0 0
      %1256 = vmatpush1.bf16.msra.mxu0 0
      %1257 = vmatprep.subr.bf16.mxu0 0
      %1258 = vmatpush1.bf16.msra.mxu0 0
      %1259 = vmatprep.subr.bf16.mxu0 0
      %1260 = vmatpush1.bf16.msra.mxu0 0
      %1261 = vmatprep.subr.bf16.mxu0 0
      %1262 = vmatpush1.bf16.msra.mxu0 0
      %1263 = vmatprep.subr.bf16.mxu0 0
      %1264 = vmatpush1.bf16.msra.mxu0 0
      %1265 = vmatprep.subr.bf16.mxu0 0
      %1266 = vmatpush1.bf16.msra.mxu0 0
      %1267 = vmatprep.subr.bf16.mxu0 0
      %1268 = vmatpush1.bf16.msra.mxu0 0
      %1269 = vmatprep.mubr.bf16.mxu0 0
      %1270 = vmatmul.mubr.bf16.gmra.mrb[0].mxu0 %v1232
      %v1271 = vpop.f32.mrb[0].mxu0
      %v1272 = vadd.f32 0.0, %v1271
      %v1273 = vpop.f32.mrb[0].mxu0
      %v1274 = vpop.f32.mrb[0].mxu0
      %v1275 = vpop.f32.mrb[0].mxu0
      %1276 = vdwg.mxu0
      %v1277 = vpack.c.bf16 %v1272, %v1272
      %v1278 = vpack.c.bf16 %v521, %v521
      %v1280 = vsel %vm527, %v1277, 0
      %v1283 = vsel %vm759, %v1278, 0
      %1285 = vmatprep.subr.bf16.mxu0 0
      %1286 = vmatpush1.bf16.msra.mxu0 %v1283
      %1287 = vmatprep.subr.bf16.mxu0 0
      %1288 = vmatpush1.bf16.msra.mxu0 0
      %1289 = vmatprep.subr.bf16.mxu0 0
      %1290 = vmatpush1.bf16.msra.mxu0 0
      %1291 = vmatprep.subr.bf16.mxu0 0
      %1292 = vmatpush1.bf16.msra.mxu0 0
      %1293 = vmatprep.subr.bf16.mxu0 0
      %1294 = vmatpush1.bf16.msra.mxu0 0
      %1295 = vmatprep.subr.bf16.mxu0 0
      %1296 = vmatpush1.bf16.msra.mxu0 0
      %1297 = vmatprep.subr.bf16.mxu0 0
      %1298 = vmatpush1.bf16.msra.mxu0 0
      %1299 = vmatprep.subr.bf16.mxu0 0
      %1300 = vmatpush1.bf16.msra.mxu0 0
      %1301 = vmatprep.subr.bf16.mxu0 0
      %1302 = vmatpush1.bf16.msra.mxu0 0
      %1303 = vmatprep.subr.bf16.mxu0 0
      %1304 = vmatpush1.bf16.msra.mxu0 0
      %1305 = vmatprep.subr.bf16.mxu0 0
      %1306 = vmatpush1.bf16.msra.mxu0 0
      %1307 = vmatprep.subr.bf16.mxu0 0
      %1308 = vmatpush1.bf16.msra.mxu0 0
      %1309 = vmatprep.subr.bf16.mxu0 0
      %1310 = vmatpush1.bf16.msra.mxu0 0
      %1311 = vmatprep.subr.bf16.mxu0 0
      %1312 = vmatpush1.bf16.msra.mxu0 0
      %1313 = vmatprep.subr.bf16.mxu0 0
      %1314 = vmatpush1.bf16.msra.mxu0 0
      %1315 = vmatprep.subr.bf16.mxu0 0
      %1316 = vmatpush1.bf16.msra.mxu0 0
      %1317 = vmatprep.mubr.bf16.mxu0 0
      %1318 = vmatmul.mubr.bf16.gmra.mrb[0].mxu0 %v1280
      %v1319 = vpop.f32.mrb[0].mxu0
      %v1320 = vadd.f32 0.0, %v1319
      %v1321 = vpop.f32.mrb[0].mxu0
      %v1322 = vpop.f32.mrb[0].mxu0
      %v1323 = vpop.f32.mrb[0].mxu0
      %1324 = vdwg.mxu0
      %v1325 = vadd.f32 %v1166, %v1320
      %1326 = vrot.lane.b32.xlu0 %v525, 88
      %v1327 = vpop.permute.xlu0 %1326
      %1328 = vrot.lane.b32.xlu0 %v526, 88
      %v1329 = vpop.permute.xlu0 %1328
      %v1331 = vsel %vm527, %v1327, 0
      %v1334 = vsel %vm527, %v1329, 0
      %1336 = vmatprep.subr.bf16.mxu0 0
      %1337 = vmatpush1.bf16.xpose.msra.mxu0 %v1334
      %1338 = vmatprep.subr.bf16.mxu0 0
      %1339 = vmatpush1.bf16.xpose.msra.mxu0 0
      %1340 = vmatprep.subr.bf16.mxu0 0
      %1341 = vmatpush1.bf16.xpose.msra.mxu0 0
      %1342 = vmatprep.subr.bf16.mxu0 0
      %1343 = vmatpush1.bf16.xpose.msra.mxu0 0
      %1344 = vmatprep.subr.bf16.mxu0 0
      %1345 = vmatpush1.bf16.xpose.msra.mxu0 0
      %1346 = vmatprep.subr.bf16.mxu0 0
      %1347 = vmatpush1.bf16.xpose.msra.mxu0 0
      %1348 = vmatprep.subr.bf16.mxu0 0
      %1349 = vmatpush1.bf16.xpose.msra.mxu0 0
      %1350 = vmatprep.subr.bf16.mxu0 0
      %1351 = vmatpush1.bf16.xpose.msra.mxu0 0
      %1352 = vmatprep.subr.bf16.mxu0 0
      %1353 = vmatpush1.bf16.xpose.msra.mxu0 0
      %1354 = vmatprep.subr.bf16.mxu0 0
      %1355 = vmatpush1.bf16.xpose.msra.mxu0 0
      %1356 = vmatprep.subr.bf16.mxu0 0
      %1357 = vmatpush1.bf16.xpose.msra.mxu0 0
      %1358 = vmatprep.subr.bf16.mxu0 0
      %1359 = vmatpush1.bf16.xpose.msra.mxu0 0
      %1360 = vmatprep.subr.bf16.mxu0 0
      %1361 = vmatpush1.bf16.xpose.msra.mxu0 0
      %1362 = vmatprep.subr.bf16.mxu0 0
      %1363 = vmatpush1.bf16.xpose.msra.mxu0 0
      %1364 = vmatprep.subr.bf16.mxu0 0
      %1365 = vmatpush1.bf16.xpose.msra.mxu0 0
      %1366 = vmatprep.subr.bf16.mxu0 0
      %1367 = vmatpush1.bf16.xpose.msra.mxu0 0
      %1368 = vmatprep.mubr.bf16.mxu0 0
      %1369 = vmatmul.mubr.bf16.gmra.mrb[0].mxu0 %v1331
      %v1370 = vpop.f32.mrb[0].mxu0
      %v1371 = vadd.f32 0.0, %v1370
      %v1372 = vpop.f32.mrb[0].mxu0
      %v1373 = vpop.f32.mrb[0].mxu0
      %v1374 = vpop.f32.mrb[0].mxu0
      %1375 = vdwg.mxu0
      %v1376 = vsel %vm574, %v1371, -inf
      %1377 = vmax.xlane.f32.xlu0 %v1376
      %v1378 = vpop.xlane.xlu0 %1377
      %v1379 = vsub.f32 %v1371, %v1378
      %v1380 = vmul.f32 %v1379, 1.442695
      %v1381 = vpow.pop %v1380
      %v1382 = vsel %vm574, %v1381, 0.0
      %1383 = vadd.xlane.f32.xlu0 %v1382
      %v1384 = vpop.xlane.xlu0 %1383
      %v1385 = vrcp.pop %v1384
      %v1386 = vmul.f32 %v1381, %v1385
      %v1387 = vpack.c.bf16 %v1386, %v1386
      %1388 = vrot.lane.b32.xlu0 %v526, 24
      %v1389 = vpop.permute.xlu0 %1388
      %v1391 = vsel %vm590, %v1387, 0
      %v1394 = vand.u32 %v1389, %v597
      %1396 = vmatprep.subr.bf16.mxu0 0
      %1397 = vmatpush1.bf16.msra.mxu0 %v1394
      %1398 = vmatprep.subr.bf16.mxu0 0
      %1399 = vmatpush1.bf16.msra.mxu0 0
      %1400 = vmatprep.subr.bf16.mxu0 0
      %1401 = vmatpush1.bf16.msra.mxu0 0
      %1402 = vmatprep.subr.bf16.mxu0 0
      %1403 = vmatpush1.bf16.msra.mxu0 0
      %1404 = vmatprep.subr.bf16.mxu0 0
      %1405 = vmatpush1.bf16.msra.mxu0 0
      %1406 = vmatprep.subr.bf16.mxu0 0
      %1407 = vmatpush1.bf16.msra.mxu0 0
      %1408 = vmatprep.subr.bf16.mxu0 0
      %1409 = vmatpush1.bf16.msra.mxu0 0
      %1410 = vmatprep.subr.bf16.mxu0 0
      %1411 = vmatpush1.bf16.msra.mxu0 0
      %1412 = vmatprep.subr.bf16.mxu0 0
      %1413 = vmatpush1.bf16.msra.mxu0 0
      %1414 = vmatprep.subr.bf16.mxu0 0
      %1415 = vmatpush1.bf16.msra.mxu0 0
      %1416 = vmatprep.subr.bf16.mxu0 0
      %1417 = vmatpush1.bf16.msra.mxu0 0
      %1418 = vmatprep.subr.bf16.mxu0 0
      %1419 = vmatpush1.bf16.msra.mxu0 0
      %1420 = vmatprep.subr.bf16.mxu0 0
      %1421 = vmatpush1.bf16.msra.mxu0 0
      %1422 = vmatprep.subr.bf16.mxu0 0
      %1423 = vmatpush1.bf16.msra.mxu0 0
      %1424 = vmatprep.subr.bf16.mxu0 0
      %1425 = vmatpush1.bf16.msra.mxu0 0
      %1426 = vmatprep.subr.bf16.mxu0 0
      %1427 = vmatpush1.bf16.msra.mxu0 0
      %1428 = vmatprep.mubr.bf16.mxu0 0
      %1429 = vmatmul.mubr.bf16.gmra.mrb[0].mxu0 %v1391
      %v1430 = vpop.f32.mrb[0].mxu0
      %v1431 = vadd.f32 0.0, %v1430
      %v1432 = vpop.f32.mrb[0].mxu0
      %v1433 = vpop.f32.mrb[0].mxu0
      %v1434 = vpop.f32.mrb[0].mxu0
      %1435 = vdwg.mxu0
      %v1436 = vpack.c.bf16 %v1431, %v1431
      %v1437 = vpack.c.bf16 %v522, %v522
      %v1439 = vsel %vm527, %v1436, 0
      %v1442 = vsel %vm759, %v1437, 0
      %1444 = vmatprep.subr.bf16.mxu0 0
      %1445 = vmatpush1.bf16.msra.mxu0 %v1442
      %1446 = vmatprep.subr.bf16.mxu0 0
      %1447 = vmatpush1.bf16.msra.mxu0 0
      %1448 = vmatprep.subr.bf16.mxu0 0
      %1449 = vmatpush1.bf16.msra.mxu0 0
      %1450 = vmatprep.subr.bf16.mxu0 0
      %1451 = vmatpush1.bf16.msra.mxu0 0
      %1452 = vmatprep.subr.bf16.mxu0 0
      %1453 = vmatpush1.bf16.msra.mxu0 0
      %1454 = vmatprep.subr.bf16.mxu0 0
      %1455 = vmatpush1.bf16.msra.mxu0 0
      %1456 = vmatprep.subr.bf16.mxu0 0
      %1457 = vmatpush1.bf16.msra.mxu0 0
      %1458 = vmatprep.subr.bf16.mxu0 0
      %1459 = vmatpush1.bf16.msra.mxu0 0
      %1460 = vmatprep.subr.bf16.mxu0 0
      %1461 = vmatpush1.bf16.msra.mxu0 0
      %1462 = vmatprep.subr.bf16.mxu0 0
      %1463 = vmatpush1.bf16.msra.mxu0 0
      %1464 = vmatprep.subr.bf16.mxu0 0
      %1465 = vmatpush1.bf16.msra.mxu0 0
      %1466 = vmatprep.subr.bf16.mxu0 0
      %1467 = vmatpush1.bf16.msra.mxu0 0
      %1468 = vmatprep.subr.bf16.mxu0 0
      %1469 = vmatpush1.bf16.msra.mxu0 0
      %1470 = vmatprep.subr.bf16.mxu0 0
      %1471 = vmatpush1.bf16.msra.mxu0 0
      %1472 = vmatprep.subr.bf16.mxu0 0
      %1473 = vmatpush1.bf16.msra.mxu0 0
      %1474 = vmatprep.subr.bf16.mxu0 0
      %1475 = vmatpush1.bf16.msra.mxu0 0
      %1476 = vmatprep.mubr.bf16.mxu0 0
      %1477 = vmatmul.mubr.bf16.gmra.mrb[0].mxu0 %v1439
      %v1478 = vpop.f32.mrb[0].mxu0
      %v1479 = vadd.f32 0.0, %v1478
      %v1480 = vpop.f32.mrb[0].mxu0
      %v1481 = vpop.f32.mrb[0].mxu0
      %v1482 = vpop.f32.mrb[0].mxu0
      %1483 = vdwg.mxu0
      %v1484 = vadd.f32 %v1325, %v1479
      %1485 = vrot.lane.b32.xlu0 %v525, 80
      %v1486 = vpop.permute.xlu0 %1485
      %1487 = vrot.lane.b32.xlu0 %v526, 80
      %v1488 = vpop.permute.xlu0 %1487
      %v1490 = vsel %vm527, %v1486, 0
      %v1493 = vsel %vm527, %v1488, 0
      %1495 = vmatprep.subr.bf16.mxu0 0
      %1496 = vmatpush1.bf16.xpose.msra.mxu0 %v1493
      %1497 = vmatprep.subr.bf16.mxu0 0
      %1498 = vmatpush1.bf16.xpose.msra.mxu0 0
      %1499 = vmatprep.subr.bf16.mxu0 0
      %1500 = vmatpush1.bf16.xpose.msra.mxu0 0
      %1501 = vmatprep.subr.bf16.mxu0 0
      %1502 = vmatpush1.bf16.xpose.msra.mxu0 0
      %1503 = vmatprep.subr.bf16.mxu0 0
      %1504 = vmatpush1.bf16.xpose.msra.mxu0 0
      %1505 = vmatprep.subr.bf16.mxu0 0
      %1506 = vmatpush1.bf16.xpose.msra.mxu0 0
      %1507 = vmatprep.subr.bf16.mxu0 0
      %1508 = vmatpush1.bf16.xpose.msra.mxu0 0
      %1509 = vmatprep.subr.bf16.mxu0 0
      %1510 = vmatpush1.bf16.xpose.msra.mxu0 0
      %1511 = vmatprep.subr.bf16.mxu0 0
      %1512 = vmatpush1.bf16.xpose.msra.mxu0 0
      %1513 = vmatprep.subr.bf16.mxu0 0
      %1514 = vmatpush1.bf16.xpose.msra.mxu0 0
      %1515 = vmatprep.subr.bf16.mxu0 0
      %1516 = vmatpush1.bf16.xpose.msra.mxu0 0
      %1517 = vmatprep.subr.bf16.mxu0 0
      %1518 = vmatpush1.bf16.xpose.msra.mxu0 0
      %1519 = vmatprep.subr.bf16.mxu0 0
      %1520 = vmatpush1.bf16.xpose.msra.mxu0 0
      %1521 = vmatprep.subr.bf16.mxu0 0
      %1522 = vmatpush1.bf16.xpose.msra.mxu0 0
      %1523 = vmatprep.subr.bf16.mxu0 0
      %1524 = vmatpush1.bf16.xpose.msra.mxu0 0
      %1525 = vmatprep.subr.bf16.mxu0 0
      %1526 = vmatpush1.bf16.xpose.msra.mxu0 0
      %1527 = vmatprep.mubr.bf16.mxu0 0
      %1528 = vmatmul.mubr.bf16.gmra.mrb[0].mxu0 %v1490
      %v1529 = vpop.f32.mrb[0].mxu0
      %v1530 = vadd.f32 0.0, %v1529
      %v1531 = vpop.f32.mrb[0].mxu0
      %v1532 = vpop.f32.mrb[0].mxu0
      %v1533 = vpop.f32.mrb[0].mxu0
      %1534 = vdwg.mxu0
      %v1535 = vsel %vm574, %v1530, -inf
      %1536 = vmax.xlane.f32.xlu0 %v1535
      %v1537 = vpop.xlane.xlu0 %1536
      %v1538 = vsub.f32 %v1530, %v1537
      %v1539 = vmul.f32 %v1538, 1.442695
      %v1540 = vpow.pop %v1539
      %v1541 = vsel %vm574, %v1540, 0.0
      %1542 = vadd.xlane.f32.xlu0 %v1541
      %v1543 = vpop.xlane.xlu0 %1542
      %v1544 = vrcp.pop %v1543
      %v1545 = vmul.f32 %v1540, %v1544
      %v1546 = vpack.c.bf16 %v1545, %v1545
      %1547 = vrot.lane.b32.xlu0 %v526, 16
      %v1548 = vpop.permute.xlu0 %1547
      %v1550 = vsel %vm590, %v1546, 0
      %v1553 = vand.u32 %v1548, %v597
      %1555 = vmatprep.subr.bf16.mxu0 0
      %1556 = vmatpush1.bf16.msra.mxu0 %v1553
      %1557 = vmatprep.subr.bf16.mxu0 0
      %1558 = vmatpush1.bf16.msra.mxu0 0
      %1559 = vmatprep.subr.bf16.mxu0 0
      %1560 = vmatpush1.bf16.msra.mxu0 0
      %1561 = vmatprep.subr.bf16.mxu0 0
      %1562 = vmatpush1.bf16.msra.mxu0 0
      %1563 = vmatprep.subr.bf16.mxu0 0
      %1564 = vmatpush1.bf16.msra.mxu0 0
      %1565 = vmatprep.subr.bf16.mxu0 0
      %1566 = vmatpush1.bf16.msra.mxu0 0
      %1567 = vmatprep.subr.bf16.mxu0 0
      %1568 = vmatpush1.bf16.msra.mxu0 0
      %1569 = vmatprep.subr.bf16.mxu0 0
      %1570 = vmatpush1.bf16.msra.mxu0 0
      %1571 = vmatprep.subr.bf16.mxu0 0
      %1572 = vmatpush1.bf16.msra.mxu0 0
      %1573 = vmatprep.subr.bf16.mxu0 0
      %1574 = vmatpush1.bf16.msra.mxu0 0
      %1575 = vmatprep.subr.bf16.mxu0 0
      %1576 = vmatpush1.bf16.msra.mxu0 0
      %1577 = vmatprep.subr.bf16.mxu0 0
      %1578 = vmatpush1.bf16.msra.mxu0 0
      %1579 = vmatprep.subr.bf16.mxu0 0
      %1580 = vmatpush1.bf16.msra.mxu0 0
      %1581 = vmatprep.subr.bf16.mxu0 0
      %1582 = vmatpush1.bf16.msra.mxu0 0
      %1583 = vmatprep.subr.bf16.mxu0 0
      %1584 = vmatpush1.bf16.msra.mxu0 0
      %1585 = vmatprep.subr.bf16.mxu0 0
      %1586 = vmatpush1.bf16.msra.mxu0 0
      %1587 = vmatprep.mubr.bf16.mxu0 0
      %1588 = vmatmul.mubr.bf16.gmra.mrb[0].mxu0 %v1550
      %v1589 = vpop.f32.mrb[0].mxu0
      %v1590 = vadd.f32 0.0, %v1589
      %v1591 = vpop.f32.mrb[0].mxu0
      %v1592 = vpop.f32.mrb[0].mxu0
      %v1593 = vpop.f32.mrb[0].mxu0
      %1594 = vdwg.mxu0
      %v1595 = vpack.c.bf16 %v1590, %v1590
      %v1596 = vpack.c.bf16 %v523, %v523
      %v1598 = vsel %vm527, %v1595, 0
      %v1601 = vsel %vm759, %v1596, 0
      %1603 = vmatprep.subr.bf16.mxu0 0
      %1604 = vmatpush1.bf16.msra.mxu0 %v1601
      %1605 = vmatprep.subr.bf16.mxu0 0
      %1606 = vmatpush1.bf16.msra.mxu0 0
      %1607 = vmatprep.subr.bf16.mxu0 0
      %1608 = vmatpush1.bf16.msra.mxu0 0
      %1609 = vmatprep.subr.bf16.mxu0 0
      %1610 = vmatpush1.bf16.msra.mxu0 0
      %1611 = vmatprep.subr.bf16.mxu0 0
      %1612 = vmatpush1.bf16.msra.mxu0 0
      %1613 = vmatprep.subr.bf16.mxu0 0
      %1614 = vmatpush1.bf16.msra.mxu0 0
      %1615 = vmatprep.subr.bf16.mxu0 0
      %1616 = vmatpush1.bf16.msra.mxu0 0
      %1617 = vmatprep.subr.bf16.mxu0 0
      %1618 = vmatpush1.bf16.msra.mxu0 0
      %1619 = vmatprep.subr.bf16.mxu0 0
      %1620 = vmatpush1.bf16.msra.mxu0 0
      %1621 = vmatprep.subr.bf16.mxu0 0
      %1622 = vmatpush1.bf16.msra.mxu0 0
      %1623 = vmatprep.subr.bf16.mxu0 0
      %1624 = vmatpush1.bf16.msra.mxu0 0
      %1625 = vmatprep.subr.bf16.mxu0 0
      %1626 = vmatpush1.bf16.msra.mxu0 0
      %1627 = vmatprep.subr.bf16.mxu0 0
      %1628 = vmatpush1.bf16.msra.mxu0 0
      %1629 = vmatprep.subr.bf16.mxu0 0
      %1630 = vmatpush1.bf16.msra.mxu0 0
      %1631 = vmatprep.subr.bf16.mxu0 0
      %1632 = vmatpush1.bf16.msra.mxu0 0
      %1633 = vmatprep.subr.bf16.mxu0 0
      %1634 = vmatpush1.bf16.msra.mxu0 0
      %1635 = vmatprep.mubr.bf16.mxu0 0
      %1636 = vmatmul.mubr.bf16.gmra.mrb[0].mxu0 %v1598
      %v1637 = vpop.f32.mrb[0].mxu0
      %v1638 = vadd.f32 0.0, %v1637
      %v1639 = vpop.f32.mrb[0].mxu0
      %v1640 = vpop.f32.mrb[0].mxu0
      %v1641 = vpop.f32.mrb[0].mxu0
      %1642 = vdwg.mxu0
      %v1643 = vadd.f32 %v1484, %v1638
      %1644 = vrot.lane.b32.xlu0 %v525, 72
      %v1645 = vpop.permute.xlu0 %1644
      %1646 = vrot.lane.b32.xlu0 %v526, 72
      %v1647 = vpop.permute.xlu0 %1646
      %v1649 = vsel %vm527, %v1645, 0
      %v1652 = vsel %vm527, %v1647, 0
      %1654 = vmatprep.subr.bf16.mxu0 0
      %1655 = vmatpush1.bf16.xpose.msra.mxu0 %v1652
      %1656 = vmatprep.subr.bf16.mxu0 0
      %1657 = vmatpush1.bf16.xpose.msra.mxu0 0
      %1658 = vmatprep.subr.bf16.mxu0 0
      %1659 = vmatpush1.bf16.xpose.msra.mxu0 0
      %1660 = vmatprep.subr.bf16.mxu0 0
      %1661 = vmatpush1.bf16.xpose.msra.mxu0 0
      %1662 = vmatprep.subr.bf16.mxu0 0
      %1663 = vmatpush1.bf16.xpose.msra.mxu0 0
      %1664 = vmatprep.subr.bf16.mxu0 0
      %1665 = vmatpush1.bf16.xpose.msra.mxu0 0
      %1666 = vmatprep.subr.bf16.mxu0 0
      %1667 = vmatpush1.bf16.xpose.msra.mxu0 0
      %1668 = vmatprep.subr.bf16.mxu0 0
      %1669 = vmatpush1.bf16.xpose.msra.mxu0 0
      %1670 = vmatprep.subr.bf16.mxu0 0
      %1671 = vmatpush1.bf16.xpose.msra.mxu0 0
      %1672 = vmatprep.subr.bf16.mxu0 0
      %1673 = vmatpush1.bf16.xpose.msra.mxu0 0
      %1674 = vmatprep.subr.bf16.mxu0 0
      %1675 = vmatpush1.bf16.xpose.msra.mxu0 0
      %1676 = vmatprep.subr.bf16.mxu0 0
      %1677 = vmatpush1.bf16.xpose.msra.mxu0 0
      %1678 = vmatprep.subr.bf16.mxu0 0
      %1679 = vmatpush1.bf16.xpose.msra.mxu0 0
      %1680 = vmatprep.subr.bf16.mxu0 0
      %1681 = vmatpush1.bf16.xpose.msra.mxu0 0
      %1682 = vmatprep.subr.bf16.mxu0 0
      %1683 = vmatpush1.bf16.xpose.msra.mxu0 0
      %1684 = vmatprep.subr.bf16.mxu0 0
      %1685 = vmatpush1.bf16.xpose.msra.mxu0 0
      %1686 = vmatprep.mubr.bf16.mxu0 0
      %1687 = vmatmul.mubr.bf16.gmra.mrb[0].mxu0 %v1649
      %v1688 = vpop.f32.mrb[0].mxu0
      %v1689 = vadd.f32 0.0, %v1688
      %v1690 = vpop.f32.mrb[0].mxu0
      %v1691 = vpop.f32.mrb[0].mxu0
      %v1692 = vpop.f32.mrb[0].mxu0
      %1693 = vdwg.mxu0
      %v1694 = vsel %vm574, %v1689, -inf
      %1695 = vmax.xlane.f32.xlu0 %v1694
      %v1696 = vpop.xlane.xlu0 %1695
      %v1697 = vsub.f32 %v1689, %v1696
      %v1698 = vmul.f32 %v1697, 1.442695
      %v1699 = vpow.pop %v1698
      %v1700 = vsel %vm574, %v1699, 0.0
      %1701 = vadd.xlane.f32.xlu0 %v1700
      %v1702 = vpop.xlane.xlu0 %1701
      %v1703 = vrcp.pop %v1702
      %v1704 = vmul.f32 %v1699, %v1703
      %v1705 = vpack.c.bf16 %v1704, %v1704
      %1706 = vrot.lane.b32.xlu0 %v526, 8
      %v1707 = vpop.permute.xlu0 %1706
      %v1709 = vsel %vm590, %v1705, 0
      %v1712 = vand.u32 %v1707, %v597
      %1714 = vmatprep.subr.bf16.mxu0 0
      %1715 = vmatpush1.bf16.msra.mxu0 %v1712
      %1716 = vmatprep.subr.bf16.mxu0 0
      %1717 = vmatpush1.bf16.msra.mxu0 0
      %1718 = vmatprep.subr.bf16.mxu0 0
      %1719 = vmatpush1.bf16.msra.mxu0 0
      %1720 = vmatprep.subr.bf16.mxu0 0
      %1721 = vmatpush1.bf16.msra.mxu0 0
      %1722 = vmatprep.subr.bf16.mxu0 0
      %1723 = vmatpush1.bf16.msra.mxu0 0
      %1724 = vmatprep.subr.bf16.mxu0 0
      %1725 = vmatpush1.bf16.msra.mxu0 0
      %1726 = vmatprep.subr.bf16.mxu0 0
      %1727 = vmatpush1.bf16.msra.mxu0 0
      %1728 = vmatprep.subr.bf16.mxu0 0
      %1729 = vmatpush1.bf16.msra.mxu0 0
      %1730 = vmatprep.subr.bf16.mxu0 0
      %1731 = vmatpush1.bf16.msra.mxu0 0
      %1732 = vmatprep.subr.bf16.mxu0 0
      %1733 = vmatpush1.bf16.msra.mxu0 0
      %1734 = vmatprep.subr.bf16.mxu0 0
      %1735 = vmatpush1.bf16.msra.mxu0 0
      %1736 = vmatprep.subr.bf16.mxu0 0
      %1737 = vmatpush1.bf16.msra.mxu0 0
      %1738 = vmatprep.subr.bf16.mxu0 0
      %1739 = vmatpush1.bf16.msra.mxu0 0
      %1740 = vmatprep.subr.bf16.mxu0 0
      %1741 = vmatpush1.bf16.msra.mxu0 0
      %1742 = vmatprep.subr.bf16.mxu0 0
      %1743 = vmatpush1.bf16.msra.mxu0 0
      %1744 = vmatprep.subr.bf16.mxu0 0
      %1745 = vmatpush1.bf16.msra.mxu0 0
      %1746 = vmatprep.mubr.bf16.mxu0 0
      %1747 = vmatmul.mubr.bf16.gmra.mrb[0].mxu0 %v1709
      %v1748 = vpop.f32.mrb[0].mxu0
      %v1749 = vadd.f32 0.0, %v1748
      %v1750 = vpop.f32.mrb[0].mxu0
      %v1751 = vpop.f32.mrb[0].mxu0
      %v1752 = vpop.f32.mrb[0].mxu0
      %1753 = vdwg.mxu0
      %v1754 = vpack.c.bf16 %v1749, %v1749
      %v1755 = vpack.c.bf16 %v524, %v524
      %v1757 = vsel %vm527, %v1754, 0
      %v1760 = vsel %vm759, %v1755, 0
      %1762 = vmatprep.subr.bf16.mxu0 0
      %1763 = vmatpush1.bf16.msra.mxu0 %v1760
      %1764 = vmatprep.subr.bf16.mxu0 0
      %1765 = vmatpush1.bf16.msra.mxu0 0
      %1766 = vmatprep.subr.bf16.mxu0 0
      %1767 = vmatpush1.bf16.msra.mxu0 0
      %1768 = vmatprep.subr.bf16.mxu0 0
      %1769 = vmatpush1.bf16.msra.mxu0 0
      %1770 = vmatprep.subr.bf16.mxu0 0
      %1771 = vmatpush1.bf16.msra.mxu0 0
      %1772 = vmatprep.subr.bf16.mxu0 0
      %1773 = vmatpush1.bf16.msra.mxu0 0
      %1774 = vmatprep.subr.bf16.mxu0 0
      %1775 = vmatpush1.bf16.msra.mxu0 0
      %1776 = vmatprep.subr.bf16.mxu0 0
      %1777 = vmatpush1.bf16.msra.mxu0 0
      %1778 = vmatprep.subr.bf16.mxu0 0
      %1779 = vmatpush1.bf16.msra.mxu0 0
      %1780 = vmatprep.subr.bf16.mxu0 0
      %1781 = vmatpush1.bf16.msra.mxu0 0
      %1782 = vmatprep.subr.bf16.mxu0 0
      %1783 = vmatpush1.bf16.msra.mxu0 0
      %1784 = vmatprep.subr.bf16.mxu0 0
      %1785 = vmatpush1.bf16.msra.mxu0 0
      %1786 = vmatprep.subr.bf16.mxu0 0
      %1787 = vmatpush1.bf16.msra.mxu0 0
      %1788 = vmatprep.subr.bf16.mxu0 0
      %1789 = vmatpush1.bf16.msra.mxu0 0
      %1790 = vmatprep.subr.bf16.mxu0 0
      %1791 = vmatpush1.bf16.msra.mxu0 0
      %1792 = vmatprep.subr.bf16.mxu0 0
      %1793 = vmatpush1.bf16.msra.mxu0 0
      %1794 = vmatprep.mubr.bf16.mxu0 0
      %1795 = vmatmul.mubr.bf16.gmra.mrb[0].mxu0 %v1757
      %v1796 = vpop.f32.mrb[0].mxu0
      %v1797 = vadd.f32 0.0, %v1796
      %v1798 = vpop.f32.mrb[0].mxu0
      %v1799 = vpop.f32.mrb[0].mxu0
      %v1800 = vpop.f32.mrb[0].mxu0
      %1801 = vdwg.mxu0
      %v1802 = vadd.f32 %v1643, %v1797
      %v1803 = vadd.f32 %v327, %v1802
      %v1804 = vld [vmem:[%s8] sm:$0x1]
      %v1805 = vadd.f32 %v1803, %v1804
      %vm1806 = vcmask 516096
      %1807 = vst.msk [vmem:[%s325] sm:$0x1] %vm1806, %v1805
      %p1808 = scmp.lt.s32.totalorder %s20, 1
      %s1809 = scalar_select %p1808, %s20, 1
      %s1810 = scalar_lea.vmem %s9, %s1809
      // Predicated region
      $region57: #{_lambda_.20} parent=55 // pred_check
        %p1811 = pneg %p232
      $region58: #{_lambda_.20} parent=55 // pred_check_branch
        %1813 = sbr.rel (%p1811) target = $region60
      $region59: #{_lambda_.20} parent=55 // pred_region
        _
      $region60: #{_lambda_.20} parent=55 // pred_fallthru
        _
    $region56: #{_lambda_.20} parent=5 // pred_fallthru
      _
    %p1814 = scmp.le.s32.totalorder 2, %s15
    // Predicated region
    $region61: #{_lambda_.20} parent=5 // pred_check
      %p1815 = pneg %p1814
    $region62: #{_lambda_.20} parent=5 // pred_check_branch
      %1817 = sbr.rel (%p1815) target = $region64
    $region63: #{_lambda_.20} parent=5 // pred_region
      %s1818 = ssub.s32 %s15, 2
      // Predicated region
      $region65: #{_lambda_.20} parent=63 // pred_check
        %p1819 = pneg %p238
      $region66: #{_lambda_.20} parent=63 // pred_check_branch
        %1821 = sbr.rel (%p1819) target = $region68
      $region67: #{_lambda_.20} parent=63 // pred_region
        %p1822 = scmp.lt.s32.totalorder %s21, 1
        %s1823 = scalar_select %p1822, %s21, 1
        %s1824 = scalar_lea.vmem %s9, %s1823
      $region68: #{_lambda_.20} parent=63 // pred_fallthru
        _
    $region64: #{_lambda_.20} parent=5 // pred_fallthru
      _
  $region6: #{_lambda_.20} parent=0 // loop_footer
    %s19 = sadd.s32 1, %s15
  $region7: #{_lambda_.20} parent=0 // loop_footer_branch
    %14 = sbr.rel target = $region3
  $region8: #{_lambda_.20} parent=0 // loop_exit
    _

</llo_original>
